<compile_context>
chip_gen: v7x
topology: tpu7x:2x2x1
jax: 0.10.0
libtpu: 0.0.40
codegen_flags: <defaults>
</compile_context>

<pallas_src>
import jax
import jax.numpy as jnp
from jax import lax
from jax.experimental import pallas as pl
from jax.experimental.pallas import tpu as pltpu

EPS = 1e-5  # PyTorch BatchNorm2d default eps


# ----------------------------------------------------------------------------- kernel helpers
def _conv3x3_bn_relu(x, w_flat, b, gamma, beta):
    """x: (B, H, W, Cin) f32, w_flat: (9*Cin, Cout) bf16 in (ki, kj, ci) row order.

    Valid 3x3 conv as a single im2col bf16 matmul (f32 accumulation), then train-mode
    BatchNorm (batch stats, shifted two-pass variance) and ReLU.
    Returns (B, H-2, W-2, Cout) f32.
    """
    B, H, W, Cin = x.shape
    Cout = w_flat.shape[-1]
    Ho, Wo = H - 2, W - 2

    # im2col: gather the 9 taps and concatenate along the lane axis -> one MXU matmul.
    # (Slices stay f32 -- the proven lowering path -- and are cast to bf16 per-tap; a
    #  further win would be slicing an already-bf16 x, at the cost of packed-sublane slices.)
    taps = []
    for ki in range(3):                      # static unroll: 9 tap gathers, 1 matmul
        for kj in range(3):
            taps.append(
                x[:, ki:ki + Ho, kj:kj + Wo, :]
                .reshape(B * Ho * Wo, Cin)
                .astype(jnp.bfloat16))
    patches = jnp.concatenate(taps, axis=-1)            # (B*Ho*Wo, 9*Cin) bf16, lane-dense

    acc = jnp.dot(patches, w_flat, preferred_element_type=jnp.float32)  # (B*Ho*Wo, Cout) f32
    acc = acc + b                                        # conv bias, b: (1, Cout)

    # BatchNorm2d forward in training mode: per-channel batch mean / biased variance,
    # computed with the numerically safe shifted two-pass formula.
    mean = jnp.mean(acc, axis=0, keepdims=True)
    ctr = acc - mean
    var = jnp.mean(ctr * ctr, axis=0, keepdims=True)
    y = ctr * (gamma * lax.rsqrt(var + EPS)) + beta
    y = jnp.maximum(y, 0.0)
    return y.reshape(B, Ho, Wo, Cout)


def _maxpool2x2(x):
    """2x2 max pool, stride 2, on (B, H, W, C).

    Pools H first (H sits above the (W, C) = (sublane, lane) tile -> cheap plane selects),
    so the sublane-side W pooling only touches half the data. Rank<=5 reshapes keep the
    lane (channel) dim intact.
    """
    B, H, W, C = x.shape
    u = x.reshape(B, H // 2, 2, W, C)
    th = jnp.maximum(u[:, :, 0, :, :], u[:, :, 1, :, :])          # pool H -> (B, H/2, W, C)
    t = th.reshape(B, H // 2, W // 2, 2, C)
    return jnp.maximum(t[:, :, :, 0, :], t[:, :, :, 1, :])        # pool W -> (B, H/2, W/2, C)


# ----------------------------------------------------------------------------- Pallas kernel
def relation_kernel(x_ref, w1_ref, b1_ref, g1_ref, be1_ref,
                    w2_ref, b2_ref, g2_ref, be2_ref,
                    fw1_ref, fb1_ref, fw2_ref, fb2_ref, o_ref):
    x = x_ref[...]                                                # (B, 18, 18, 128) f32

    # layer1: conv(one bf16 im2col matmul) + BN + ReLU + maxpool
    y1 = _conv3x3_bn_relu(x, w1_ref[...], b1_ref[...], g1_ref[...], be1_ref[...])  # (B,16,16,64)
    p1 = _maxpool2x2(y1)                                                           # (B, 8, 8,64)

    # layer2: conv(one bf16 im2col matmul) + BN + ReLU + maxpool
    y2 = _conv3x3_bn_relu(p1, w2_ref[...], b2_ref[...], g2_ref[...], be2_ref[...]) # (B, 6, 6,64)
    p2 = _maxpool2x2(y2)                                                           # (B, 3, 3,64)

    # fc1: build a lane-dense (B, 576) feature row ((H, W, C) order) and do ONE matmul.
    feat = jnp.concatenate([p2[:, i, j, :] for i in range(3) for j in range(3)],
                           axis=-1)                                                # (B, 576)
    h = jnp.dot(feat, fw1_ref[...], preferred_element_type=jnp.float32) + fb1_ref[...]
    h = jnp.maximum(h, 0.0)                                                        # (B, 8)

    # fc2 (8 -> 1) as an elementwise mul + lane reduction (VPU), then sigmoid.
    logits = jnp.sum(h * fw2_ref[...], axis=-1, keepdims=True) + fb2_ref[...]      # (B, 1)
    o_ref[...] = 1.0 / (1.0 + jnp.exp(-logits))


# ----------------------------------------------------------------------------- wrapper
def relation_network(x_nhwc, p):
    """x_nhwc: (B, 18, 18, 128) float32 (channel-last; no per-call NCHW transpose).

    Returns (B, 1) float32 sigmoid scores.
    """
    x = x_nhwc.astype(jnp.float32)
    B = x.shape[0]
    # One-time weight layout glue (tiny): flatten conv weights to (9*Cin, Cout) in the same
    # (ki, kj, ci) order the kernel's im2col uses, and cast matmul operands to bf16.
    w1 = p["w1"].reshape(9 * 128, 64).astype(jnp.bfloat16)
    w2 = p["w2"].reshape(9 * 64, 64).astype(jnp.bfloat16)
    fw1 = p["fw1"].reshape(576, 8)
    args = (x,
            w1, p["b1"], p["g1"], p["be1"],
            w2, p["b2"], p["g2"], p["be2"],
            fw1, p["fb1"], p["fw2"], p["fb2"])
    vmem = lambda: pl.BlockSpec(memory_space=pltpu.MemorySpace.VMEM)
    return pl.pallas_call(
        relation_kernel,
        out_shape=jax.ShapeDtypeStruct((B, 1), jnp.float32),
        in_specs=[vmem() for _ in args],
        out_specs=vmem(),
        # Explicit VMEM budget (kernel peak is ~5 MiB at B=2; well under every chip's limit).
        compiler_params=pltpu.CompilerParams(vmem_limit_bytes=32 * 1024 * 1024),
    )(*args)


# ----------------------------------------------------------------------------- params / reference
def init_params(key):
    ks = jax.random.split(key, 12)
    p = {}
    p["w1"] = 0.05 * jax.random.normal(ks[0], (3, 3, 128, 64), jnp.float32)   # conv1 HWIO
    p["b1"] = 0.05 * jax.random.normal(ks[1], (1, 64), jnp.float32)
    p["g1"] = 1.0 + 0.1 * jax.random.normal(ks[2], (1, 64), jnp.float32)      # bn1 gamma
    p["be1"] = 0.1 * jax.random.normal(ks[3], (1, 64), jnp.float32)           # bn1 beta
    p["w2"] = 0.05 * jax.random.normal(ks[4], (3, 3, 64, 64), jnp.float32)    # conv2 HWIO
    p["b2"] = 0.05 * jax.random.normal(ks[5], (1, 64), jnp.float32)
    p["g2"] = 1.0 + 0.1 * jax.random.normal(ks[6], (1, 64), jnp.float32)
    p["be2"] = 0.1 * jax.random.normal(ks[7], (1, 64), jnp.float32)
    p["fw1"] = 0.05 * jax.random.normal(ks[8], (3, 3, 64, 8), jnp.float32)    # fc1 (576->8), HWC order
    p["fb1"] = 0.05 * jax.random.normal(ks[9], (1, 8), jnp.float32)
    p["fw2"] = 0.05 * jax.random.normal(ks[10], (1, 8), jnp.float32)          # fc2 (8->1)
    p["fb2"] = 0.05 * jax.random.normal(ks[11], (1, 1), jnp.float32)
    return p


def reference(x_nhwc, p):
    """Pure-JAX f32 reference of the same forward pass (verification only)."""
    x = x_nhwc.astype(jnp.float32)

    def block(x, w, b, g, be):
        y = lax.conv_general_dilated(x, w, (1, 1), "VALID",
                                     dimension_numbers=("NHWC", "HWIO", "NHWC"))
        y = y + b.reshape(1, 1, 1, -1)
        m = jnp.mean(y, axis=(0, 1, 2), keepdims=True)
        v = jnp.mean((y - m) ** 2, axis=(0, 1, 2), keepdims=True)
        y = (y - m) * g.reshape(1, 1, 1, -1) / jnp.sqrt(v + EPS) + be.reshape(1, 1, 1, -1)
        y = jnp.maximum(y, 0.0)
        return lax.reduce_window(y, -jnp.inf, lax.max, (1, 2, 2, 1), (1, 2, 2, 1), "VALID")

    y = block(x, p["w1"], p["b1"], p["g1"], p["be1"])
    y = block(y, p["w2"], p["b2"], p["g2"], p["be2"])
    feat = y.reshape(y.shape[0], -1)                               # (H, W, C) flatten
    h = jnp.maximum(feat @ p["fw1"].reshape(576, 8) + p["fb1"], 0.0)
    logits = jnp.sum(h * p["fw2"], axis=-1, keepdims=True) + p["fb2"]
    return jax.nn.sigmoid(logits)


# ----------------------------------------------------------------------------- main
if __name__ == "__main__":
    key = jax.random.PRNGKey(0)
    kx, kp = jax.random.split(key)
    # Channel-last activations (B=2, 18, 18, 128). 18 -conv-> 16 -pool-> 8 -conv-> 6 -pool-> 3,
    # matching the module's fc1 = Linear(64*3*3, 8). A PyTorch NCHW tensor would be permuted
    # once upstream instead of doing an HBM->HBM transpose in front of every kernel call.
    x = jax.random.normal(kx, (2, 18, 18, 128), jnp.float32)
    params = init_params(kp)

    out = jax.block_until_ready(relation_network(x, params))
    ref = jax.block_until_ready(reference(x, params))

    assert out.shape == (2, 1), out.shape
    # Tolerance slightly relaxed vs pure-f32 because conv matmuls now use bf16 operands
    # (f32 accumulation); observed error stays well inside this bound.
    err = float(jnp.max(jnp.abs(out - ref)))
    assert jnp.allclose(out, ref, atol=2e-3, rtol=2e-3), (out, ref, err)
    print("KERNEL_OK")
</pallas_src>

<mosaic_0001>
module attributes {stable_mosaic.version = 11 : i64} {
  func.func @relation_kernel(%arg0: memref<2x18x18x128xf32, #tpu.memory_space<vmem>>, %arg1: memref<1152x64xbf16, #tpu.memory_space<vmem>>, %arg2: memref<1x64xf32, #tpu.memory_space<vmem>>, %arg3: memref<1x64xf32, #tpu.memory_space<vmem>>, %arg4: memref<1x64xf32, #tpu.memory_space<vmem>>, %arg5: memref<576x64xbf16, #tpu.memory_space<vmem>>, %arg6: memref<1x64xf32, #tpu.memory_space<vmem>>, %arg7: memref<1x64xf32, #tpu.memory_space<vmem>>, %arg8: memref<1x64xf32, #tpu.memory_space<vmem>>, %arg9: memref<576x8xf32, #tpu.memory_space<vmem>>, %arg10: memref<1x8xf32, #tpu.memory_space<vmem>>, %arg11: memref<1x8xf32, #tpu.memory_space<vmem>>, %arg12: memref<1x1xf32, #tpu.memory_space<vmem>>, %arg13: memref<2x1xf32, #tpu.memory_space<vmem>>) attributes {dimension_semantics = [], scalar_prefetch = 0 : i64, scratch_operands = 0 : i64, tpu.core_type = #tpu.core_type<tc>} {
    %c0 = arith.constant 0 : index
    %c0_0 = arith.constant 0 : index
    %c0_1 = arith.constant 0 : index
    %c0_2 = arith.constant 0 : index
    %0 = vector.load %arg0[%c0, %c0_0, %c0_1, %c0_2] : memref<2x18x18x128xf32, #tpu.memory_space<vmem>>, vector<2x18x18x128xf32>
    %c0_3 = arith.constant 0 : index
    %c0_4 = arith.constant 0 : index
    %1 = vector.load %arg1[%c0_3, %c0_4] : memref<1152x64xbf16, #tpu.memory_space<vmem>>, vector<1152x64xbf16>
    %c0_5 = arith.constant 0 : index
    %c0_6 = arith.constant 0 : index
    %2 = vector.load %arg2[%c0_5, %c0_6] : memref<1x64xf32, #tpu.memory_space<vmem>>, vector<1x64xf32>
    %c0_7 = arith.constant 0 : index
    %c0_8 = arith.constant 0 : index
    %3 = vector.load %arg3[%c0_7, %c0_8] : memref<1x64xf32, #tpu.memory_space<vmem>>, vector<1x64xf32>
    %c0_9 = arith.constant 0 : index
    %c0_10 = arith.constant 0 : index
    %4 = vector.load %arg4[%c0_9, %c0_10] : memref<1x64xf32, #tpu.memory_space<vmem>>, vector<1x64xf32>
    %5 = vector.extract_strided_slice %0 {offsets = [0, 0, 0, 0], sizes = [2, 16, 16, 128], strides = [1, 1, 1, 1]} : vector<2x18x18x128xf32> to vector<2x16x16x128xf32>
    %6 = vector.shape_cast %5 : vector<2x16x16x128xf32> to vector<512x128xf32>
    %7 = arith.truncf %6 : vector<512x128xf32> to vector<512x128xbf16>
    %8 = vector.extract_strided_slice %0 {offsets = [0, 0, 1, 0], sizes = [2, 16, 16, 128], strides = [1, 1, 1, 1]} : vector<2x18x18x128xf32> to vector<2x16x16x128xf32>
    %9 = vector.shape_cast %8 : vector<2x16x16x128xf32> to vector<512x128xf32>
    %10 = arith.truncf %9 : vector<512x128xf32> to vector<512x128xbf16>
    %11 = vector.extract_strided_slice %0 {offsets = [0, 0, 2, 0], sizes = [2, 16, 16, 128], strides = [1, 1, 1, 1]} : vector<2x18x18x128xf32> to vector<2x16x16x128xf32>
    %12 = vector.shape_cast %11 : vector<2x16x16x128xf32> to vector<512x128xf32>
    %13 = arith.truncf %12 : vector<512x128xf32> to vector<512x128xbf16>
    %14 = vector.extract_strided_slice %0 {offsets = [0, 1, 0, 0], sizes = [2, 16, 16, 128], strides = [1, 1, 1, 1]} : vector<2x18x18x128xf32> to vector<2x16x16x128xf32>
    %15 = vector.shape_cast %14 : vector<2x16x16x128xf32> to vector<512x128xf32>
    %16 = arith.truncf %15 : vector<512x128xf32> to vector<512x128xbf16>
    %17 = vector.extract_strided_slice %0 {offsets = [0, 1, 1, 0], sizes = [2, 16, 16, 128], strides = [1, 1, 1, 1]} : vector<2x18x18x128xf32> to vector<2x16x16x128xf32>
    %18 = vector.shape_cast %17 : vector<2x16x16x128xf32> to vector<512x128xf32>
    %19 = arith.truncf %18 : vector<512x128xf32> to vector<512x128xbf16>
    %20 = vector.extract_strided_slice %0 {offsets = [0, 1, 2, 0], sizes = [2, 16, 16, 128], strides = [1, 1, 1, 1]} : vector<2x18x18x128xf32> to vector<2x16x16x128xf32>
    %21 = vector.shape_cast %20 : vector<2x16x16x128xf32> to vector<512x128xf32>
    %22 = arith.truncf %21 : vector<512x128xf32> to vector<512x128xbf16>
    %23 = vector.extract_strided_slice %0 {offsets = [0, 2, 0, 0], sizes = [2, 16, 16, 128], strides = [1, 1, 1, 1]} : vector<2x18x18x128xf32> to vector<2x16x16x128xf32>
    %24 = vector.shape_cast %23 : vector<2x16x16x128xf32> to vector<512x128xf32>
    %25 = arith.truncf %24 : vector<512x128xf32> to vector<512x128xbf16>
    %26 = vector.extract_strided_slice %0 {offsets = [0, 2, 1, 0], sizes = [2, 16, 16, 128], strides = [1, 1, 1, 1]} : vector<2x18x18x128xf32> to vector<2x16x16x128xf32>
    %27 = vector.shape_cast %26 : vector<2x16x16x128xf32> to vector<512x128xf32>
    %28 = arith.truncf %27 : vector<512x128xf32> to vector<512x128xbf16>
    %29 = vector.extract_strided_slice %0 {offsets = [0, 2, 2, 0], sizes = [2, 16, 16, 128], strides = [1, 1, 1, 1]} : vector<2x18x18x128xf32> to vector<2x16x16x128xf32>
    %30 = vector.shape_cast %29 : vector<2x16x16x128xf32> to vector<512x128xf32>
    %31 = arith.truncf %30 : vector<512x128xf32> to vector<512x128xbf16>
    %32 = tpu.concatenate %7, %10, %13, %16, %19, %22, %25, %28, %31 in 1 : vector<512x128xbf16>, vector<512x128xbf16>, vector<512x128xbf16>, vector<512x128xbf16>, vector<512x128xbf16>, vector<512x128xbf16>, vector<512x128xbf16>, vector<512x128xbf16>, vector<512x128xbf16> -> vector<512x1152xbf16>
    %cst = arith.constant dense<0.000000e+00> : vector<512x64xf32>
    %33 = tpu.matmul %32, %1, %cst {dimension_numbers = #tpu.dot_dimension_numbers<[1], [0], [0], [1], [0, 0, 1, 1], [], []>} : vector<512x1152xbf16>, vector<1152x64xbf16>, vector<512x64xf32> -> vector<512x64xf32>
    %34 = vector.broadcast %2 : vector<1x64xf32> to vector<512x64xf32>
    %35 = arith.addf %33, %34 : vector<512x64xf32>
    %cst_11 = arith.constant dense<0.000000e+00> : vector<64xf32>
    %36 = vector.multi_reduction <add>, %35, %cst_11 [0] : vector<512x64xf32> to vector<64xf32>
    %37 = vector.shape_cast %36 : vector<64xf32> to vector<1x64xf32>
    %cst_12 = arith.constant 5.120000e+02 : f32
    %38 = vector.broadcast %cst_12 : f32 to vector<1x64xf32>
    %39 = arith.divf %37, %38 : vector<1x64xf32>
    %40 = vector.broadcast %39 : vector<1x64xf32> to vector<512x64xf32>
    %41 = arith.subf %35, %40 : vector<512x64xf32>
    %42 = arith.mulf %41, %41 : vector<512x64xf32>
    %cst_13 = arith.constant dense<0.000000e+00> : vector<64xf32>
    %43 = vector.multi_reduction <add>, %42, %cst_13 [0] : vector<512x64xf32> to vector<64xf32>
    %44 = vector.shape_cast %43 : vector<64xf32> to vector<1x64xf32>
    %cst_14 = arith.constant 5.120000e+02 : f32
    %45 = vector.broadcast %cst_14 : f32 to vector<1x64xf32>
    %46 = arith.divf %44, %45 : vector<1x64xf32>
    %cst_15 = arith.constant 9.99999974E-6 : f32
    %47 = vector.broadcast %cst_15 : f32 to vector<1x64xf32>
    %48 = arith.addf %46, %47 : vector<1x64xf32>
    %49 = math.rsqrt %48 : vector<1x64xf32>
    %50 = arith.mulf %3, %49 : vector<1x64xf32>
    %51 = vector.broadcast %50 : vector<1x64xf32> to vector<512x64xf32>
    %52 = arith.mulf %41, %51 : vector<512x64xf32>
    %53 = vector.broadcast %4 : vector<1x64xf32> to vector<512x64xf32>
    %54 = arith.addf %52, %53 : vector<512x64xf32>
    %cst_16 = arith.constant 0.000000e+00 : f32
    %55 = vector.broadcast %cst_16 : f32 to vector<512x64xf32>
    %56 = arith.maximumf %54, %55 : vector<512x64xf32>
    %57 = vector.shape_cast %56 : vector<512x64xf32> to vector<2x16x16x64xf32>
    %58 = vector.shape_cast %57 : vector<2x16x16x64xf32> to vector<2x8x2x16x64xf32>
    %59 = vector.extract_strided_slice %58 {offsets = [0, 0, 0, 0, 0], sizes = [2, 8, 1, 16, 64], strides = [1, 1, 1, 1, 1]} : vector<2x8x2x16x64xf32> to vector<2x8x1x16x64xf32>
    %60 = vector.shape_cast %59 : vector<2x8x1x16x64xf32> to vector<2x8x16x64xf32>
    %61 = vector.extract_strided_slice %58 {offsets = [0, 0, 1, 0, 0], sizes = [2, 8, 1, 16, 64], strides = [1, 1, 1, 1, 1]} : vector<2x8x2x16x64xf32> to vector<2x8x1x16x64xf32>
    %62 = vector.shape_cast %61 : vector<2x8x1x16x64xf32> to vector<2x8x16x64xf32>
    %63 = arith.maximumf %60, %62 : vector<2x8x16x64xf32>
    %64 = vector.shape_cast %63 : vector<2x8x16x64xf32> to vector<2x8x8x2x64xf32>
    %65 = vector.extract_strided_slice %64 {offsets = [0, 0, 0, 0, 0], sizes = [2, 8, 8, 1, 64], strides = [1, 1, 1, 1, 1]} : vector<2x8x8x2x64xf32> to vector<2x8x8x1x64xf32>
    %66 = vector.shape_cast %65 : vector<2x8x8x1x64xf32> to vector<2x8x8x64xf32>
    %67 = vector.extract_strided_slice %64 {offsets = [0, 0, 0, 1, 0], sizes = [2, 8, 8, 1, 64], strides = [1, 1, 1, 1, 1]} : vector<2x8x8x2x64xf32> to vector<2x8x8x1x64xf32>
    %68 = vector.shape_cast %67 : vector<2x8x8x1x64xf32> to vector<2x8x8x64xf32>
    %69 = arith.maximumf %66, %68 : vector<2x8x8x64xf32>
    %c0_17 = arith.constant 0 : index
    %c0_18 = arith.constant 0 : index
    %70 = vector.load %arg5[%c0_17, %c0_18] : memref<576x64xbf16, #tpu.memory_space<vmem>>, vector<576x64xbf16>
    %c0_19 = arith.constant 0 : index
    %c0_20 = arith.constant 0 : index
    %71 = vector.load %arg6[%c0_19, %c0_20] : memref<1x64xf32, #tpu.memory_space<vmem>>, vector<1x64xf32>
    %c0_21 = arith.constant 0 : index
    %c0_22 = arith.constant 0 : index
    %72 = vector.load %arg7[%c0_21, %c0_22] : memref<1x64xf32, #tpu.memory_space<vmem>>, vector<1x64xf32>
    %c0_23 = arith.constant 0 : index
    %c0_24 = arith.constant 0 : index
    %73 = vector.load %arg8[%c0_23, %c0_24] : memref<1x64xf32, #tpu.memory_space<vmem>>, vector<1x64xf32>
    %74 = vector.extract_strided_slice %69 {offsets = [0, 0, 0, 0], sizes = [2, 6, 6, 64], strides = [1, 1, 1, 1]} : vector<2x8x8x64xf32> to vector<2x6x6x64xf32>
    %75 = vector.shape_cast %74 : vector<2x6x6x64xf32> to vector<72x64xf32>
    %76 = arith.truncf %75 : vector<72x64xf32> to vector<72x64xbf16>
    %77 = vector.extract_strided_slice %69 {offsets = [0, 0, 1, 0], sizes = [2, 6, 6, 64], strides = [1, 1, 1, 1]} : vector<2x8x8x64xf32> to vector<2x6x6x64xf32>
    %78 = vector.shape_cast %77 : vector<2x6x6x64xf32> to vector<72x64xf32>
    %79 = arith.truncf %78 : vector<72x64xf32> to vector<72x64xbf16>
    %80 = vector.extract_strided_slice %69 {offsets = [0, 0, 2, 0], sizes = [2, 6, 6, 64], strides = [1, 1, 1, 1]} : vector<2x8x8x64xf32> to vector<2x6x6x64xf32>
    %81 = vector.shape_cast %80 : vector<2x6x6x64xf32> to vector<72x64xf32>
    %82 = arith.truncf %81 : vector<72x64xf32> to vector<72x64xbf16>
    %83 = vector.extract_strided_slice %69 {offsets = [0, 1, 0, 0], sizes = [2, 6, 6, 64], strides = [1, 1, 1, 1]} : vector<2x8x8x64xf32> to vector<2x6x6x64xf32>
    %84 = vector.shape_cast %83 : vector<2x6x6x64xf32> to vector<72x64xf32>
    %85 = arith.truncf %84 : vector<72x64xf32> to vector<72x64xbf16>
    %86 = vector.extract_strided_slice %69 {offsets = [0, 1, 1, 0], sizes = [2, 6, 6, 64], strides = [1, 1, 1, 1]} : vector<2x8x8x64xf32> to vector<2x6x6x64xf32>
    %87 = vector.shape_cast %86 : vector<2x6x6x64xf32> to vector<72x64xf32>
    %88 = arith.truncf %87 : vector<72x64xf32> to vector<72x64xbf16>
    %89 = vector.extract_strided_slice %69 {offsets = [0, 1, 2, 0], sizes = [2, 6, 6, 64], strides = [1, 1, 1, 1]} : vector<2x8x8x64xf32> to vector<2x6x6x64xf32>
    %90 = vector.shape_cast %89 : vector<2x6x6x64xf32> to vector<72x64xf32>
    %91 = arith.truncf %90 : vector<72x64xf32> to vector<72x64xbf16>
    %92 = vector.extract_strided_slice %69 {offsets = [0, 2, 0, 0], sizes = [2, 6, 6, 64], strides = [1, 1, 1, 1]} : vector<2x8x8x64xf32> to vector<2x6x6x64xf32>
    %93 = vector.shape_cast %92 : vector<2x6x6x64xf32> to vector<72x64xf32>
    %94 = arith.truncf %93 : vector<72x64xf32> to vector<72x64xbf16>
    %95 = vector.extract_strided_slice %69 {offsets = [0, 2, 1, 0], sizes = [2, 6, 6, 64], strides = [1, 1, 1, 1]} : vector<2x8x8x64xf32> to vector<2x6x6x64xf32>
    %96 = vector.shape_cast %95 : vector<2x6x6x64xf32> to vector<72x64xf32>
    %97 = arith.truncf %96 : vector<72x64xf32> to vector<72x64xbf16>
    %98 = vector.extract_strided_slice %69 {offsets = [0, 2, 2, 0], sizes = [2, 6, 6, 64], strides = [1, 1, 1, 1]} : vector<2x8x8x64xf32> to vector<2x6x6x64xf32>
    %99 = vector.shape_cast %98 : vector<2x6x6x64xf32> to vector<72x64xf32>
    %100 = arith.truncf %99 : vector<72x64xf32> to vector<72x64xbf16>
    %101 = tpu.concatenate %76, %79, %82, %85, %88, %91, %94, %97, %100 in 1 : vector<72x64xbf16>, vector<72x64xbf16>, vector<72x64xbf16>, vector<72x64xbf16>, vector<72x64xbf16>, vector<72x64xbf16>, vector<72x64xbf16>, vector<72x64xbf16>, vector<72x64xbf16> -> vector<72x576xbf16>
    %cst_25 = arith.constant dense<0.000000e+00> : vector<72x64xf32>
    %102 = tpu.matmul %101, %70, %cst_25 {dimension_numbers = #tpu.dot_dimension_numbers<[1], [0], [0], [1], [0, 0, 1, 1], [], []>} : vector<72x576xbf16>, vector<576x64xbf16>, vector<72x64xf32> -> vector<72x64xf32>
    %103 = vector.broadcast %71 : vector<1x64xf32> to vector<72x64xf32>
    %104 = arith.addf %102, %103 : vector<72x64xf32>
    %cst_26 = arith.constant dense<0.000000e+00> : vector<64xf32>
    %105 = vector.multi_reduction <add>, %104, %cst_26 [0] : vector<72x64xf32> to vector<64xf32>
    %106 = vector.shape_cast %105 : vector<64xf32> to vector<1x64xf32>
    %cst_27 = arith.constant 7.200000e+01 : f32
    %107 = vector.broadcast %cst_27 : f32 to vector<1x64xf32>
    %108 = arith.divf %106, %107 : vector<1x64xf32>
    %109 = vector.broadcast %108 : vector<1x64xf32> to vector<72x64xf32>
    %110 = arith.subf %104, %109 : vector<72x64xf32>
    %111 = arith.mulf %110, %110 : vector<72x64xf32>
    %cst_28 = arith.constant dense<0.000000e+00> : vector<64xf32>
    %112 = vector.multi_reduction <add>, %111, %cst_28 [0] : vector<72x64xf32> to vector<64xf32>
    %113 = vector.shape_cast %112 : vector<64xf32> to vector<1x64xf32>
    %cst_29 = arith.constant 7.200000e+01 : f32
    %114 = vector.broadcast %cst_29 : f32 to vector<1x64xf32>
    %115 = arith.divf %113, %114 : vector<1x64xf32>
    %cst_30 = arith.constant 9.99999974E-6 : f32
    %116 = vector.broadcast %cst_30 : f32 to vector<1x64xf32>
    %117 = arith.addf %115, %116 : vector<1x64xf32>
    %118 = math.rsqrt %117 : vector<1x64xf32>
    %119 = arith.mulf %72, %118 : vector<1x64xf32>
    %120 = vector.broadcast %119 : vector<1x64xf32> to vector<72x64xf32>
    %121 = arith.mulf %110, %120 : vector<72x64xf32>
    %122 = vector.broadcast %73 : vector<1x64xf32> to vector<72x64xf32>
    %123 = arith.addf %121, %122 : vector<72x64xf32>
    %cst_31 = arith.constant 0.000000e+00 : f32
    %124 = vector.broadcast %cst_31 : f32 to vector<72x64xf32>
    %125 = arith.maximumf %123, %124 : vector<72x64xf32>
    %126 = vector.shape_cast %125 : vector<72x64xf32> to vector<2x6x6x64xf32>
    %127 = vector.shape_cast %126 : vector<2x6x6x64xf32> to vector<2x3x2x6x64xf32>
    %128 = vector.extract_strided_slice %127 {offsets = [0, 0, 0, 0, 0], sizes = [2, 3, 1, 6, 64], strides = [1, 1, 1, 1, 1]} : vector<2x3x2x6x64xf32> to vector<2x3x1x6x64xf32>
    %129 = vector.shape_cast %128 : vector<2x3x1x6x64xf32> to vector<2x3x6x64xf32>
    %130 = vector.extract_strided_slice %127 {offsets = [0, 0, 1, 0, 0], sizes = [2, 3, 1, 6, 64], strides = [1, 1, 1, 1, 1]} : vector<2x3x2x6x64xf32> to vector<2x3x1x6x64xf32>
    %131 = vector.shape_cast %130 : vector<2x3x1x6x64xf32> to vector<2x3x6x64xf32>
    %132 = arith.maximumf %129, %131 : vector<2x3x6x64xf32>
    %133 = vector.shape_cast %132 : vector<2x3x6x64xf32> to vector<2x3x3x2x64xf32>
    %134 = vector.extract_strided_slice %133 {offsets = [0, 0, 0, 0, 0], sizes = [2, 3, 3, 1, 64], strides = [1, 1, 1, 1, 1]} : vector<2x3x3x2x64xf32> to vector<2x3x3x1x64xf32>
    %135 = vector.shape_cast %134 : vector<2x3x3x1x64xf32> to vector<2x3x3x64xf32>
    %136 = vector.extract_strided_slice %133 {offsets = [0, 0, 0, 1, 0], sizes = [2, 3, 3, 1, 64], strides = [1, 1, 1, 1, 1]} : vector<2x3x3x2x64xf32> to vector<2x3x3x1x64xf32>
    %137 = vector.shape_cast %136 : vector<2x3x3x1x64xf32> to vector<2x3x3x64xf32>
    %138 = arith.maximumf %135, %137 : vector<2x3x3x64xf32>
    %139 = vector.extract_strided_slice %138 {offsets = [0, 0, 0, 0], sizes = [2, 1, 1, 64], strides = [1, 1, 1, 1]} : vector<2x3x3x64xf32> to vector<2x1x1x64xf32>
    %140 = vector.shape_cast %139 : vector<2x1x1x64xf32> to vector<2x64xf32>
    %141 = vector.extract_strided_slice %138 {offsets = [0, 0, 1, 0], sizes = [2, 1, 1, 64], strides = [1, 1, 1, 1]} : vector<2x3x3x64xf32> to vector<2x1x1x64xf32>
    %142 = vector.shape_cast %141 : vector<2x1x1x64xf32> to vector<2x64xf32>
    %143 = vector.extract_strided_slice %138 {offsets = [0, 0, 2, 0], sizes = [2, 1, 1, 64], strides = [1, 1, 1, 1]} : vector<2x3x3x64xf32> to vector<2x1x1x64xf32>
    %144 = vector.shape_cast %143 : vector<2x1x1x64xf32> to vector<2x64xf32>
    %145 = vector.extract_strided_slice %138 {offsets = [0, 1, 0, 0], sizes = [2, 1, 1, 64], strides = [1, 1, 1, 1]} : vector<2x3x3x64xf32> to vector<2x1x1x64xf32>
    %146 = vector.shape_cast %145 : vector<2x1x1x64xf32> to vector<2x64xf32>
    %147 = vector.extract_strided_slice %138 {offsets = [0, 1, 1, 0], sizes = [2, 1, 1, 64], strides = [1, 1, 1, 1]} : vector<2x3x3x64xf32> to vector<2x1x1x64xf32>
    %148 = vector.shape_cast %147 : vector<2x1x1x64xf32> to vector<2x64xf32>
    %149 = vector.extract_strided_slice %138 {offsets = [0, 1, 2, 0], sizes = [2, 1, 1, 64], strides = [1, 1, 1, 1]} : vector<2x3x3x64xf32> to vector<2x1x1x64xf32>
    %150 = vector.shape_cast %149 : vector<2x1x1x64xf32> to vector<2x64xf32>
    %151 = vector.extract_strided_slice %138 {offsets = [0, 2, 0, 0], sizes = [2, 1, 1, 64], strides = [1, 1, 1, 1]} : vector<2x3x3x64xf32> to vector<2x1x1x64xf32>
    %152 = vector.shape_cast %151 : vector<2x1x1x64xf32> to vector<2x64xf32>
    %153 = vector.extract_strided_slice %138 {offsets = [0, 2, 1, 0], sizes = [2, 1, 1, 64], strides = [1, 1, 1, 1]} : vector<2x3x3x64xf32> to vector<2x1x1x64xf32>
    %154 = vector.shape_cast %153 : vector<2x1x1x64xf32> to vector<2x64xf32>
    %155 = vector.extract_strided_slice %138 {offsets = [0, 2, 2, 0], sizes = [2, 1, 1, 64], strides = [1, 1, 1, 1]} : vector<2x3x3x64xf32> to vector<2x1x1x64xf32>
    %156 = vector.shape_cast %155 : vector<2x1x1x64xf32> to vector<2x64xf32>
    %157 = tpu.concatenate %140, %142, %144, %146, %148, %150, %152, %154, %156 in 1 : vector<2x64xf32>, vector<2x64xf32>, vector<2x64xf32>, vector<2x64xf32>, vector<2x64xf32>, vector<2x64xf32>, vector<2x64xf32>, vector<2x64xf32>, vector<2x64xf32> -> vector<2x576xf32>
    %c0_32 = arith.constant 0 : index
    %c0_33 = arith.constant 0 : index
    %158 = vector.load %arg9[%c0_32, %c0_33] : memref<576x8xf32, #tpu.memory_space<vmem>>, vector<576x8xf32>
    %cst_34 = arith.constant dense<0.000000e+00> : vector<2x8xf32>
    %159 = tpu.matmul %157, %158, %cst_34 {dimension_numbers = #tpu.dot_dimension_numbers<[1], [0], [0], [1], [0, 0, 1, 1], [], []>} : vector<2x576xf32>, vector<576x8xf32>, vector<2x8xf32> -> vector<2x8xf32>
    %c0_35 = arith.constant 0 : index
    %c0_36 = arith.constant 0 : index
    %160 = vector.load %arg10[%c0_35, %c0_36] : memref<1x8xf32, #tpu.memory_space<vmem>>, vector<1x8xf32>
    %161 = vector.broadcast %160 : vector<1x8xf32> to vector<2x8xf32>
    %162 = arith.addf %159, %161 : vector<2x8xf32>
    %cst_37 = arith.constant 0.000000e+00 : f32
    %163 = vector.broadcast %cst_37 : f32 to vector<2x8xf32>
    %164 = arith.maximumf %162, %163 : vector<2x8xf32>
    %c0_38 = arith.constant 0 : index
    %c0_39 = arith.constant 0 : index
    %165 = vector.load %arg11[%c0_38, %c0_39] : memref<1x8xf32, #tpu.memory_space<vmem>>, vector<1x8xf32>
    %166 = vector.broadcast %165 : vector<1x8xf32> to vector<2x8xf32>
    %167 = arith.mulf %164, %166 : vector<2x8xf32>
    %cst_40 = arith.constant dense<0.000000e+00> : vector<2xf32>
    %168 = vector.multi_reduction <add>, %167, %cst_40 [1] : vector<2x8xf32> to vector<2xf32>
    %169 = vector.shape_cast %168 : vector<2xf32> to vector<2x1xf32>
    %c0_41 = arith.constant 0 : index
    %c0_42 = arith.constant 0 : index
    %170 = vector.load %arg12[%c0_41, %c0_42] : memref<1x1xf32, #tpu.memory_space<vmem>>, vector<1x1xf32>
    %171 = vector.broadcast %170 : vector<1x1xf32> to vector<2x1xf32>
    %172 = arith.addf %169, %171 : vector<2x1xf32>
    %cst_43 = arith.constant 0.000000e+00 : f32
    %173 = vector.broadcast %cst_43 : f32 to vector<2x1xf32>
    %174 = arith.subf %173, %172 : vector<2x1xf32>
    %175 = math.exp %174 : vector<2x1xf32>
    %cst_44 = arith.constant 1.000000e+00 : f32
    %176 = vector.broadcast %cst_44 : f32 to vector<2x1xf32>
    %177 = arith.addf %176, %175 : vector<2x1xf32>
    %cst_45 = arith.constant 1.000000e+00 : f32
    %178 = vector.broadcast %cst_45 : f32 to vector<2x1xf32>
    %179 = arith.divf %178, %177 : vector<2x1xf32>
    %c0_46 = arith.constant 0 : index
    %c0_47 = arith.constant 0 : index
    %180 = vector.load %arg13[%c0_46, %c0_47] : memref<2x1xf32, #tpu.memory_space<vmem>>, vector<2x1xf32>
    tpu.vector_store %arg13[%c0_46, %c0_47], %179 {strides = array<i32>} : memref<2x1xf32, #tpu.memory_space<vmem>>, vector<2x1xf32>,
    return
  }
}

</mosaic_0001>

<llo_original>
// kernel: tpu_custom_call.1
$region0: #{tpu_custom_call.1}
  #allocation0 [shape = 'u32[]', space=smem, size = 0x4, offset = 0x4, fixed_abs, tag = 'smem constant byte address 0x4 - core index']
  #allocation1 [shape = 'u32[144,128]{1,0:T(1,128)}', space=vmem, size = 0x12000, scoped, tag = 'internal scratch']
  #allocation2 [shape = 'f32[1,1]{1,0:T(1,128)S(1)}', space=vmem, size = 0x200, scoped, tag = 'scoped memory for tpu_custom_call.1']
  %s0 = inlined_call_operand.vmem [shape: f32[2,18,18,128], index: 0, kind: input, shape index: {}]
  %s1 = inlined_call_operand.vmem [shape: bf16[1152,64], index: 1, kind: input, shape index: {}]
  %s2 = inlined_call_operand.vmem [shape: f32[1,64], index: 2, kind: input, shape index: {}]
  %s3 = inlined_call_operand.vmem [shape: f32[1,64], index: 3, kind: input, shape index: {}]
  %s4 = inlined_call_operand.vmem [shape: f32[1,64], index: 4, kind: input, shape index: {}]
  %s5 = inlined_call_operand.vmem [shape: bf16[576,64], index: 5, kind: input, shape index: {}]
  %s6 = inlined_call_operand.vmem [shape: f32[1,64], index: 6, kind: input, shape index: {}]
  %s7 = inlined_call_operand.vmem [shape: f32[1,64], index: 7, kind: input, shape index: {}]
  %s8 = inlined_call_operand.vmem [shape: f32[1,64], index: 8, kind: input, shape index: {}]
  %s9 = inlined_call_operand.vmem [shape: f32[576,8], index: 9, kind: input, shape index: {}]
  %s10 = inlined_call_operand.vmem [shape: f32[1,8], index: 10, kind: input, shape index: {}]
  %s11 = inlined_call_operand.vmem [shape: f32[1,8], index: 11, kind: input, shape index: {}]
  %s12 = inlined_call_operand.<no memory space> [shape: f32[1,1], index: 12, kind: input, shape index: {}]
  %s13 = inlined_call_operand.vmem [shape: f32[2,1], index: 13, kind: output, shape index: {}]
  %s14 = sld [smem:[#allocation0]]
  $region62: #{tpu_custom_call.1} parent=0
    _
  %s16 = ssub.s32 1, %s14
  %s17 = scalar_select 0, %s16, %s14
  %v18 = vstv %s12
  %19 = vst [vmem:[#allocation2] sm:$0x1] %v18
  // Predicated region
  $region2: #{tpu_custom_call.1} parent=0 // pred_check
    _
  $region3: #{tpu_custom_call.1} parent=0 // pred_check_branch
    %21 = sbr.rel (0) target = $region5
  $region4: #{tpu_custom_call.1} parent=0 // pred_region
    _
  $region5: #{tpu_custom_call.1} parent=0 // pred_fallthru
    _
  // Predicated region
  $region6: #{tpu_custom_call.1} parent=0 // pred_check
    _
  $region7: #{tpu_custom_call.1} parent=0 // pred_check_branch
    %23 = sbr.rel (0) target = $region9
  $region8: #{tpu_custom_call.1} parent=0 // pred_region
    _
  $region9: #{tpu_custom_call.1} parent=0 // pred_fallthru
    _
  // Predicated region
  $region10: #{tpu_custom_call.1} parent=0 // pred_check
    _
  $region11: #{tpu_custom_call.1} parent=0 // pred_check_branch
    %25 = sbr.rel (0) target = $region13
  $region12: #{tpu_custom_call.1} parent=0 // pred_region
    _
  $region13: #{tpu_custom_call.1} parent=0 // pred_fallthru
    _
  // Predicated region
  $region14: #{tpu_custom_call.1} parent=0 // pred_check
    _
  $region15: #{tpu_custom_call.1} parent=0 // pred_check_branch
    %27 = sbr.rel (0) target = $region17
  $region16: #{tpu_custom_call.1} parent=0 // pred_region
    _
  $region17: #{tpu_custom_call.1} parent=0 // pred_fallthru
    _
  // Predicated region
  $region18: #{tpu_custom_call.1} parent=0 // pred_check
    _
  $region19: #{tpu_custom_call.1} parent=0 // pred_check_branch
    %29 = sbr.rel (0) target = $region21
  $region20: #{tpu_custom_call.1} parent=0 // pred_region
    _
  $region21: #{tpu_custom_call.1} parent=0 // pred_fallthru
    _
  // Predicated region
  $region22: #{tpu_custom_call.1} parent=0 // pred_check
    _
  $region23: #{tpu_custom_call.1} parent=0 // pred_check_branch
    %31 = sbr.rel (0) target = $region25
  $region24: #{tpu_custom_call.1} parent=0 // pred_region
    _
  $region25: #{tpu_custom_call.1} parent=0 // pred_fallthru
    _
  // Predicated region
  $region26: #{tpu_custom_call.1} parent=0 // pred_check
    _
  $region27: #{tpu_custom_call.1} parent=0 // pred_check_branch
    %33 = sbr.rel (0) target = $region29
  $region28: #{tpu_custom_call.1} parent=0 // pred_region
    _
  $region29: #{tpu_custom_call.1} parent=0 // pred_fallthru
    _
  // Predicated region
  $region30: #{tpu_custom_call.1} parent=0 // pred_check
    _
  $region31: #{tpu_custom_call.1} parent=0 // pred_check_branch
    %35 = sbr.rel (0) target = $region33
  $region32: #{tpu_custom_call.1} parent=0 // pred_region
    _
  $region33: #{tpu_custom_call.1} parent=0 // pred_fallthru
    _
  // Predicated region
  $region34: #{tpu_custom_call.1} parent=0 // pred_check
    _
  $region35: #{tpu_custom_call.1} parent=0 // pred_check_branch
    %37 = sbr.rel (0) target = $region37
  $region36: #{tpu_custom_call.1} parent=0 // pred_region
    _
  $region37: #{tpu_custom_call.1} parent=0 // pred_fallthru
    _
  // Predicated region
  $region38: #{tpu_custom_call.1} parent=0 // pred_check
    _
  $region39: #{tpu_custom_call.1} parent=0 // pred_check_branch
    %39 = sbr.rel (0) target = $region41
  $region40: #{tpu_custom_call.1} parent=0 // pred_region
    _
  $region41: #{tpu_custom_call.1} parent=0 // pred_fallthru
    _
  // Predicated region
  $region42: #{tpu_custom_call.1} parent=0 // pred_check
    _
  $region43: #{tpu_custom_call.1} parent=0 // pred_check_branch
    %41 = sbr.rel (0) target = $region45
  $region44: #{tpu_custom_call.1} parent=0 // pred_region
    _
  $region45: #{tpu_custom_call.1} parent=0 // pred_fallthru
    _
  // Predicated region
  $region46: #{tpu_custom_call.1} parent=0 // pred_check
    _
  $region47: #{tpu_custom_call.1} parent=0 // pred_check_branch
    %43 = sbr.rel (0) target = $region49
  $region48: #{tpu_custom_call.1} parent=0 // pred_region
    _
  $region49: #{tpu_custom_call.1} parent=0 // pred_fallthru
    _
  // Predicated region
  $region50: #{tpu_custom_call.1} parent=0 // pred_check
    _
  $region51: #{tpu_custom_call.1} parent=0 // pred_check_branch
    %45 = sbr.rel (0) target = $region53
  $region52: #{tpu_custom_call.1} parent=0 // pred_region
    _
  $region53: #{tpu_custom_call.1} parent=0 // pred_fallthru
    _
  %v47 = vld [vmem:[%s0] sm:$0xff]
  %v48 = vld [vmem:[%s0 + $0x8] sm:$0xff]
  %v49 = vld [vmem:[%s0 + $0x10] sm:$0x3]
  %v50 = vld [vmem:[%s0 + $0x18] sm:$0xff]
  %v51 = vld [vmem:[%s0 + $0x20] sm:$0xff]
  %v52 = vld [vmem:[%s0 + $0x28] sm:$0x3]
  %v53 = vld [vmem:[%s0 + $0x30] sm:$0xff]
  %v54 = vld [vmem:[%s0 + $0x38] sm:$0xff]
  %v55 = vld [vmem:[%s0 + $0x40] sm:$0x3]
  %v56 = vld [vmem:[%s0 + $0x48] sm:$0xff]
  %v57 = vld [vmem:[%s0 + $0x50] sm:$0xff]
  %v58 = vld [vmem:[%s0 + $0x58] sm:$0x3]
  %v59 = vld [vmem:[%s0 + $0x60] sm:$0xff]
  %v60 = vld [vmem:[%s0 + $0x68] sm:$0xff]
  %v61 = vld [vmem:[%s0 + $0x70] sm:$0x3]
  %v62 = vld [vmem:[%s0 + $0x78] sm:$0xff]
  %v63 = vld [vmem:[%s0 + $0x80] sm:$0xff]
  %v64 = vld [vmem:[%s0 + $0x88] sm:$0x3]
  %v65 = vld [vmem:[%s0 + $0x90] sm:$0xff]
  %v66 = vld [vmem:[%s0 + $0x98] sm:$0xff]
  %v67 = vld [vmem:[%s0 + $0xa0] sm:$0x3]
  %v68 = vld [vmem:[%s0 + $0xa8] sm:$0xff]
  %v69 = vld [vmem:[%s0 + $0xb0] sm:$0xff]
  %v70 = vld [vmem:[%s0 + $0xb8] sm:$0x3]
  %v71 = vld [vmem:[%s0 + $0xc0] sm:$0xff]
  %v72 = vld [vmem:[%s0 + $0xc8] sm:$0xff]
  %v73 = vld [vmem:[%s0 + $0xd0] sm:$0x3]
  %v74 = vld [vmem:[%s0 + $0xd8] sm:$0xff]
  %v75 = vld [vmem:[%s0 + $0xe0] sm:$0xff]
  %v76 = vld [vmem:[%s0 + $0xe8] sm:$0x3]
  %v77 = vld [vmem:[%s0 + $0xf0] sm:$0xff]
  %v78 = vld [vmem:[%s0 + $0xf8] sm:$0xff]
  %v79 = vld [vmem:[%s0 + $0x100] sm:$0x3]
  %v80 = vld [vmem:[%s0 + $0x108] sm:$0xff]
  %v81 = vld [vmem:[%s0 + $0x110] sm:$0xff]
  %v82 = vld [vmem:[%s0 + $0x118] sm:$0x3]
  %v83 = vld [vmem:[%s0 + $0x120] sm:$0xff]
  %v84 = vld [vmem:[%s0 + $0x128] sm:$0xff]
  %v85 = vld [vmem:[%s0 + $0x130] sm:$0x3]
  %v86 = vld [vmem:[%s0 + $0x138] sm:$0xff]
  %v87 = vld [vmem:[%s0 + $0x140] sm:$0xff]
  %v88 = vld [vmem:[%s0 + $0x148] sm:$0x3]
  %v89 = vld [vmem:[%s0 + $0x150] sm:$0xff]
  %v90 = vld [vmem:[%s0 + $0x158] sm:$0xff]
  %v91 = vld [vmem:[%s0 + $0x160] sm:$0x3]
  %v92 = vld [vmem:[%s0 + $0x168] sm:$0xff]
  %v93 = vld [vmem:[%s0 + $0x170] sm:$0xff]
  %v94 = vld [vmem:[%s0 + $0x178] sm:$0x3]
  %v95 = vld [vmem:[%s0 + $0x180] sm:$0xff]
  %v96 = vld [vmem:[%s0 + $0x188] sm:$0xff]
  %v97 = vld [vmem:[%s0 + $0x190] sm:$0x3]
  %v98 = vld [vmem:[%s0 + $0x198] sm:$0xff]
  %v99 = vld [vmem:[%s0 + $0x1a0] sm:$0xff]
  %v100 = vld [vmem:[%s0 + $0x1a8] sm:$0x3]
  %v101 = vld [vmem:[%s0 + $0x1b0] sm:$0xff]
  %v102 = vld [vmem:[%s0 + $0x1b8] sm:$0xff]
  %v103 = vld [vmem:[%s0 + $0x1c0] sm:$0x3]
  %v104 = vld [vmem:[%s0 + $0x1c8] sm:$0xff]
  %v105 = vld [vmem:[%s0 + $0x1d0] sm:$0xff]
  %v106 = vld [vmem:[%s0 + $0x1d8] sm:$0x3]
  %v107 = vld [vmem:[%s0 + $0x1e0] sm:$0xff]
  %v108 = vld [vmem:[%s0 + $0x1e8] sm:$0xff]
  %v109 = vld [vmem:[%s0 + $0x1f0] sm:$0x3]
  %v110 = vld [vmem:[%s0 + $0x1f8] sm:$0xff]
  %v111 = vld [vmem:[%s0 + $0x200] sm:$0xff]
  %v112 = vld [vmem:[%s0 + $0x208] sm:$0x3]
  %v113 = vld [vmem:[%s0 + $0x210] sm:$0xff]
  %v114 = vld [vmem:[%s0 + $0x218] sm:$0xff]
  %v115 = vld [vmem:[%s0 + $0x220] sm:$0x3]
  %v116 = vld [vmem:[%s0 + $0x228] sm:$0xff]
  %v117 = vld [vmem:[%s0 + $0x230] sm:$0xff]
  %v118 = vld [vmem:[%s0 + $0x238] sm:$0x3]
  %v119 = vld [vmem:[%s0 + $0x240] sm:$0xff]
  %v120 = vld [vmem:[%s0 + $0x248] sm:$0xff]
  %v121 = vld [vmem:[%s0 + $0x250] sm:$0x3]
  %v122 = vld [vmem:[%s0 + $0x258] sm:$0xff]
  %v123 = vld [vmem:[%s0 + $0x260] sm:$0xff]
  %v124 = vld [vmem:[%s0 + $0x268] sm:$0x3]
  %v125 = vld [vmem:[%s0 + $0x270] sm:$0xff]
  %v126 = vld [vmem:[%s0 + $0x278] sm:$0xff]
  %v127 = vld [vmem:[%s0 + $0x280] sm:$0x3]
  %v128 = vld [vmem:[%s0 + $0x288] sm:$0xff]
  %v129 = vld [vmem:[%s0 + $0x290] sm:$0xff]
  %v130 = vld [vmem:[%s0 + $0x298] sm:$0x3]
  %v131 = vld [vmem:[%s0 + $0x2a0] sm:$0xff]
  %v132 = vld [vmem:[%s0 + $0x2a8] sm:$0xff]
  %v133 = vld [vmem:[%s0 + $0x2b0] sm:$0x3]
  %v134 = vld [vmem:[%s0 + $0x2b8] sm:$0xff]
  %v135 = vld [vmem:[%s0 + $0x2c0] sm:$0xff]
  %v136 = vld [vmem:[%s0 + $0x2c8] sm:$0x3]
  %v137 = vld [vmem:[%s0 + $0x2d0] sm:$0xff]
  %v138 = vld [vmem:[%s0 + $0x2d8] sm:$0xff]
  %v139 = vld [vmem:[%s0 + $0x2e0] sm:$0x3]
  %v140 = vld [vmem:[%s0 + $0x2e8] sm:$0xff]
  %v141 = vld [vmem:[%s0 + $0x2f0] sm:$0xff]
  %v142 = vld [vmem:[%s0 + $0x2f8] sm:$0x3]
  %v143 = vld [vmem:[%s0 + $0x300] sm:$0xff]
  %v144 = vld [vmem:[%s0 + $0x308] sm:$0xff]
  %v145 = vld [vmem:[%s0 + $0x310] sm:$0x3]
  %v146 = vld [vmem:[%s0 + $0x318] sm:$0xff]
  %v147 = vld [vmem:[%s0 + $0x320] sm:$0xff]
  %v148 = vld [vmem:[%s0 + $0x328] sm:$0x3]
  %v149 = vld [vmem:[%s0 + $0x330] sm:$0xff]
  %v150 = vld [vmem:[%s0 + $0x338] sm:$0xff]
  %v151 = vld [vmem:[%s0 + $0x340] sm:$0x3]
  %v152 = vld [vmem:[%s0 + $0x348] sm:$0xff]
  %v153 = vld [vmem:[%s0 + $0x350] sm:$0xff]
  %v154 = vld [vmem:[%s0 + $0x358] sm:$0x3]
  %v155 = vld [vmem:[%s1] sm:$0xf]
  %v156 = vld [vmem:[%s1 + $0x4] sm:$0xf]
  %v157 = vld [vmem:[%s1 + $0x8] sm:$0xf]
  %v158 = vld [vmem:[%s1 + $0xc] sm:$0xf]
  %v159 = vld [vmem:[%s1 + $0x10] sm:$0xf]
  %v160 = vld [vmem:[%s1 + $0x14] sm:$0xf]
  %v161 = vld [vmem:[%s1 + $0x18] sm:$0xf]
  %v162 = vld [vmem:[%s1 + $0x1c] sm:$0xf]
  %v163 = vld [vmem:[%s1 + $0x20] sm:$0xf]
  %v164 = vld [vmem:[%s1 + $0x24] sm:$0xf]
  %v165 = vld [vmem:[%s1 + $0x28] sm:$0xf]
  %v166 = vld [vmem:[%s1 + $0x2c] sm:$0xf]
  %v167 = vld [vmem:[%s1 + $0x30] sm:$0xf]
  %v168 = vld [vmem:[%s1 + $0x34] sm:$0xf]
  %v169 = vld [vmem:[%s1 + $0x38] sm:$0xf]
  %v170 = vld [vmem:[%s1 + $0x3c] sm:$0xf]
  %v171 = vld [vmem:[%s1 + $0x40] sm:$0xf]
  %v172 = vld [vmem:[%s1 + $0x44] sm:$0xf]
  %v173 = vld [vmem:[%s1 + $0x48] sm:$0xf]
  %v174 = vld [vmem:[%s1 + $0x4c] sm:$0xf]
  %v175 = vld [vmem:[%s1 + $0x50] sm:$0xf]
  %v176 = vld [vmem:[%s1 + $0x54] sm:$0xf]
  %v177 = vld [vmem:[%s1 + $0x58] sm:$0xf]
  %v178 = vld [vmem:[%s1 + $0x5c] sm:$0xf]
  %v179 = vld [vmem:[%s1 + $0x60] sm:$0xf]
  %v180 = vld [vmem:[%s1 + $0x64] sm:$0xf]
  %v181 = vld [vmem:[%s1 + $0x68] sm:$0xf]
  %v182 = vld [vmem:[%s1 + $0x6c] sm:$0xf]
  %v183 = vld [vmem:[%s1 + $0x70] sm:$0xf]
  %v184 = vld [vmem:[%s1 + $0x74] sm:$0xf]
  %v185 = vld [vmem:[%s1 + $0x78] sm:$0xf]
  %v186 = vld [vmem:[%s1 + $0x7c] sm:$0xf]
  %v187 = vld [vmem:[%s1 + $0x80] sm:$0xf]
  %v188 = vld [vmem:[%s1 + $0x84] sm:$0xf]
  %v189 = vld [vmem:[%s1 + $0x88] sm:$0xf]
  %v190 = vld [vmem:[%s1 + $0x8c] sm:$0xf]
  %v191 = vld [vmem:[%s1 + $0x90] sm:$0xf]
  %v192 = vld [vmem:[%s1 + $0x94] sm:$0xf]
  %v193 = vld [vmem:[%s1 + $0x98] sm:$0xf]
  %v194 = vld [vmem:[%s1 + $0x9c] sm:$0xf]
  %v195 = vld [vmem:[%s1 + $0xa0] sm:$0xf]
  %v196 = vld [vmem:[%s1 + $0xa4] sm:$0xf]
  %v197 = vld [vmem:[%s1 + $0xa8] sm:$0xf]
  %v198 = vld [vmem:[%s1 + $0xac] sm:$0xf]
  %v199 = vld [vmem:[%s1 + $0xb0] sm:$0xf]
  %v200 = vld [vmem:[%s1 + $0xb4] sm:$0xf]
  %v201 = vld [vmem:[%s1 + $0xb8] sm:$0xf]
  %v202 = vld [vmem:[%s1 + $0xbc] sm:$0xf]
  %v203 = vld [vmem:[%s1 + $0xc0] sm:$0xf]
  %v204 = vld [vmem:[%s1 + $0xc4] sm:$0xf]
  %v205 = vld [vmem:[%s1 + $0xc8] sm:$0xf]
  %v206 = vld [vmem:[%s1 + $0xcc] sm:$0xf]
  %v207 = vld [vmem:[%s1 + $0xd0] sm:$0xf]
  %v208 = vld [vmem:[%s1 + $0xd4] sm:$0xf]
  %v209 = vld [vmem:[%s1 + $0xd8] sm:$0xf]
  %v210 = vld [vmem:[%s1 + $0xdc] sm:$0xf]
  %v211 = vld [vmem:[%s1 + $0xe0] sm:$0xf]
  %v212 = vld [vmem:[%s1 + $0xe4] sm:$0xf]
  %v213 = vld [vmem:[%s1 + $0xe8] sm:$0xf]
  %v214 = vld [vmem:[%s1 + $0xec] sm:$0xf]
  %v215 = vld [vmem:[%s1 + $0xf0] sm:$0xf]
  %v216 = vld [vmem:[%s1 + $0xf4] sm:$0xf]
  %v217 = vld [vmem:[%s1 + $0xf8] sm:$0xf]
  %v218 = vld [vmem:[%s1 + $0xfc] sm:$0xf]
  %v219 = vld [vmem:[%s1 + $0x100] sm:$0xf]
  %v220 = vld [vmem:[%s1 + $0x104] sm:$0xf]
  %v221 = vld [vmem:[%s1 + $0x108] sm:$0xf]
  %v222 = vld [vmem:[%s1 + $0x10c] sm:$0xf]
  %v223 = vld [vmem:[%s1 + $0x110] sm:$0xf]
  %v224 = vld [vmem:[%s1 + $0x114] sm:$0xf]
  %v225 = vld [vmem:[%s1 + $0x118] sm:$0xf]
  %v226 = vld [vmem:[%s1 + $0x11c] sm:$0xf]
  %v227 = vld [vmem:[%s1 + $0x120] sm:$0xf]
  %v228 = vld [vmem:[%s1 + $0x124] sm:$0xf]
  %v229 = vld [vmem:[%s1 + $0x128] sm:$0xf]
  %v230 = vld [vmem:[%s1 + $0x12c] sm:$0xf]
  %v231 = vld [vmem:[%s1 + $0x130] sm:$0xf]
  %v232 = vld [vmem:[%s1 + $0x134] sm:$0xf]
  %v233 = vld [vmem:[%s1 + $0x138] sm:$0xf]
  %v234 = vld [vmem:[%s1 + $0x13c] sm:$0xf]
  %v235 = vld [vmem:[%s1 + $0x140] sm:$0xf]
  %v236 = vld [vmem:[%s1 + $0x144] sm:$0xf]
  %v237 = vld [vmem:[%s1 + $0x148] sm:$0xf]
  %v238 = vld [vmem:[%s1 + $0x14c] sm:$0xf]
  %v239 = vld [vmem:[%s1 + $0x150] sm:$0xf]
  %v240 = vld [vmem:[%s1 + $0x154] sm:$0xf]
  %v241 = vld [vmem:[%s1 + $0x158] sm:$0xf]
  %v242 = vld [vmem:[%s1 + $0x15c] sm:$0xf]
  %v243 = vld [vmem:[%s1 + $0x160] sm:$0xf]
  %v244 = vld [vmem:[%s1 + $0x164] sm:$0xf]
  %v245 = vld [vmem:[%s1 + $0x168] sm:$0xf]
  %v246 = vld [vmem:[%s1 + $0x16c] sm:$0xf]
  %v247 = vld [vmem:[%s1 + $0x170] sm:$0xf]
  %v248 = vld [vmem:[%s1 + $0x174] sm:$0xf]
  %v249 = vld [vmem:[%s1 + $0x178] sm:$0xf]
  %v250 = vld [vmem:[%s1 + $0x17c] sm:$0xf]
  %v251 = vld [vmem:[%s1 + $0x180] sm:$0xf]
  %v252 = vld [vmem:[%s1 + $0x184] sm:$0xf]
  %v253 = vld [vmem:[%s1 + $0x188] sm:$0xf]
  %v254 = vld [vmem:[%s1 + $0x18c] sm:$0xf]
  %v255 = vld [vmem:[%s1 + $0x190] sm:$0xf]
  %v256 = vld [vmem:[%s1 + $0x194] sm:$0xf]
  %v257 = vld [vmem:[%s1 + $0x198] sm:$0xf]
  %v258 = vld [vmem:[%s1 + $0x19c] sm:$0xf]
  %v259 = vld [vmem:[%s1 + $0x1a0] sm:$0xf]
  %v260 = vld [vmem:[%s1 + $0x1a4] sm:$0xf]
  %v261 = vld [vmem:[%s1 + $0x1a8] sm:$0xf]
  %v262 = vld [vmem:[%s1 + $0x1ac] sm:$0xf]
  %v263 = vld [vmem:[%s1 + $0x1b0] sm:$0xf]
  %v264 = vld [vmem:[%s1 + $0x1b4] sm:$0xf]
  %v265 = vld [vmem:[%s1 + $0x1b8] sm:$0xf]
  %v266 = vld [vmem:[%s1 + $0x1bc] sm:$0xf]
  %v267 = vld [vmem:[%s1 + $0x1c0] sm:$0xf]
  %v268 = vld [vmem:[%s1 + $0x1c4] sm:$0xf]
  %v269 = vld [vmem:[%s1 + $0x1c8] sm:$0xf]
  %v270 = vld [vmem:[%s1 + $0x1cc] sm:$0xf]
  %v271 = vld [vmem:[%s1 + $0x1d0] sm:$0xf]
  %v272 = vld [vmem:[%s1 + $0x1d4] sm:$0xf]
  %v273 = vld [vmem:[%s1 + $0x1d8] sm:$0xf]
  %v274 = vld [vmem:[%s1 + $0x1dc] sm:$0xf]
  %v275 = vld [vmem:[%s1 + $0x1e0] sm:$0xf]
  %v276 = vld [vmem:[%s1 + $0x1e4] sm:$0xf]
  %v277 = vld [vmem:[%s1 + $0x1e8] sm:$0xf]
  %v278 = vld [vmem:[%s1 + $0x1ec] sm:$0xf]
  %v279 = vld [vmem:[%s1 + $0x1f0] sm:$0xf]
  %v280 = vld [vmem:[%s1 + $0x1f4] sm:$0xf]
  %v281 = vld [vmem:[%s1 + $0x1f8] sm:$0xf]
  %v282 = vld [vmem:[%s1 + $0x1fc] sm:$0xf]
  %v283 = vld [vmem:[%s1 + $0x200] sm:$0xf]
  %v284 = vld [vmem:[%s1 + $0x204] sm:$0xf]
  %v285 = vld [vmem:[%s1 + $0x208] sm:$0xf]
  %v286 = vld [vmem:[%s1 + $0x20c] sm:$0xf]
  %v287 = vld [vmem:[%s1 + $0x210] sm:$0xf]
  %v288 = vld [vmem:[%s1 + $0x214] sm:$0xf]
  %v289 = vld [vmem:[%s1 + $0x218] sm:$0xf]
  %v290 = vld [vmem:[%s1 + $0x21c] sm:$0xf]
  %v291 = vld [vmem:[%s1 + $0x220] sm:$0xf]
  %v292 = vld [vmem:[%s1 + $0x224] sm:$0xf]
  %v293 = vld [vmem:[%s1 + $0x228] sm:$0xf]
  %v294 = vld [vmem:[%s1 + $0x22c] sm:$0xf]
  %v295 = vld [vmem:[%s1 + $0x230] sm:$0xf]
  %v296 = vld [vmem:[%s1 + $0x234] sm:$0xf]
  %v297 = vld [vmem:[%s1 + $0x238] sm:$0xf]
  %v298 = vld [vmem:[%s1 + $0x23c] sm:$0xf]
  %v299 = vld [vmem:[%s2] sm:$0x1]
  %v300 = vld [vmem:[%s3] sm:$0x1]
  %v301 = vld [vmem:[%s4] sm:$0x1]
  %v302 = vpack.c.bf16 %v48, %v47
  %v303 = vpack.c.bf16 %v51, %v50
  %v304 = vpack.c.bf16 %v54, %v53
  %v305 = vpack.c.bf16 %v57, %v56
  %v306 = vpack.c.bf16 %v60, %v59
  %v307 = vpack.c.bf16 %v63, %v62
  %v308 = vpack.c.bf16 %v66, %v65
  %v309 = vpack.c.bf16 %v69, %v68
  %v310 = vpack.c.bf16 %v72, %v71
  %v311 = vpack.c.bf16 %v75, %v74
  %v312 = vpack.c.bf16 %v78, %v77
  %v313 = vpack.c.bf16 %v81, %v80
  %v314 = vpack.c.bf16 %v84, %v83
  %v315 = vpack.c.bf16 %v87, %v86
  %v316 = vpack.c.bf16 %v90, %v89
  %v317 = vpack.c.bf16 %v93, %v92
  %v318 = vpack.c.bf16 %v102, %v101
  %v319 = vpack.c.bf16 %v105, %v104
  %v320 = vpack.c.bf16 %v108, %v107
  %v321 = vpack.c.bf16 %v111, %v110
  %v322 = vpack.c.bf16 %v114, %v113
  %v323 = vpack.c.bf16 %v117, %v116
  %v324 = vpack.c.bf16 %v120, %v119
  %v325 = vpack.c.bf16 %v123, %v122
  %v326 = vpack.c.bf16 %v126, %v125
  %v327 = vpack.c.bf16 %v129, %v128
  %v328 = vpack.c.bf16 %v132, %v131
  %v329 = vpack.c.bf16 %v135, %v134
  %v330 = vpack.c.bf16 %v138, %v137
  %v331 = vpack.c.bf16 %v141, %v140
  %v332 = vpack.c.bf16 %v144, %v143
  %v333 = vpack.c.bf16 %v147, %v146
  %vm430 = vcmask 1046528
  %v431 = vrot.slane %v47, 1
  %v432 = vrot.slane %v48, 1
  %v433 = vsel %vm430, %v431, %v432
  %v434 = vrot.slane %v49, 1
  %v435 = vsel %vm430, %v432, %v434
  %v436 = vrot.slane %v50, 1
  %v437 = vrot.slane %v51, 1
  %v438 = vsel %vm430, %v436, %v437
  %v439 = vrot.slane %v52, 1
  %v440 = vsel %vm430, %v437, %v439
  %v441 = vrot.slane %v53, 1
  %v442 = vrot.slane %v54, 1
  %v443 = vsel %vm430, %v441, %v442
  %v444 = vrot.slane %v55, 1
  %v445 = vsel %vm430, %v442, %v444
  %v446 = vrot.slane %v56, 1
  %v447 = vrot.slane %v57, 1
  %v448 = vsel %vm430, %v446, %v447
  %v449 = vrot.slane %v58, 1
  %v450 = vsel %vm430, %v447, %v449
  %v451 = vrot.slane %v59, 1
  %v452 = vrot.slane %v60, 1
  %v453 = vsel %vm430, %v451, %v452
  %v454 = vrot.slane %v61, 1
  %v455 = vsel %vm430, %v452, %v454
  %v456 = vrot.slane %v62, 1
  %v457 = vrot.slane %v63, 1
  %v458 = vsel %vm430, %v456, %v457
  %v459 = vrot.slane %v64, 1
  %v460 = vsel %vm430, %v457, %v459
  %v461 = vrot.slane %v65, 1
  %v462 = vrot.slane %v66, 1
  %v463 = vsel %vm430, %v461, %v462
  %v464 = vrot.slane %v67, 1
  %v465 = vsel %vm430, %v462, %v464
  %v466 = vrot.slane %v68, 1
  %v467 = vrot.slane %v69, 1
  %v468 = vsel %vm430, %v466, %v467
  %v469 = vrot.slane %v70, 1
  %v470 = vsel %vm430, %v467, %v469
  %v471 = vrot.slane %v71, 1
  %v472 = vrot.slane %v72, 1
  %v473 = vsel %vm430, %v471, %v472
  %v474 = vrot.slane %v73, 1
  %v475 = vsel %vm430, %v472, %v474
  %v476 = vrot.slane %v74, 1
  %v477 = vrot.slane %v75, 1
  %v478 = vsel %vm430, %v476, %v477
  %v479 = vrot.slane %v76, 1
  %v480 = vsel %vm430, %v477, %v479
  %v481 = vrot.slane %v77, 1
  %v482 = vrot.slane %v78, 1
  %v483 = vsel %vm430, %v481, %v482
  %v484 = vrot.slane %v79, 1
  %v485 = vsel %vm430, %v482, %v484
  %v486 = vrot.slane %v80, 1
  %v487 = vrot.slane %v81, 1
  %v488 = vsel %vm430, %v486, %v487
  %v489 = vrot.slane %v82, 1
  %v490 = vsel %vm430, %v487, %v489
  %v491 = vrot.slane %v83, 1
  %v492 = vrot.slane %v84, 1
  %v493 = vsel %vm430, %v491, %v492
  %v494 = vrot.slane %v85, 1
  %v495 = vsel %vm430, %v492, %v494
  %v496 = vrot.slane %v86, 1
  %v497 = vrot.slane %v87, 1
  %v498 = vsel %vm430, %v496, %v497
  %v499 = vrot.slane %v88, 1
  %v500 = vsel %vm430, %v497, %v499
  %v501 = vrot.slane %v89, 1
  %v502 = vrot.slane %v90, 1
  %v503 = vsel %vm430, %v501, %v502
  %v504 = vrot.slane %v91, 1
  %v505 = vsel %vm430, %v502, %v504
  %v506 = vrot.slane %v92, 1
  %v507 = vrot.slane %v93, 1
  %v508 = vsel %vm430, %v506, %v507
  %v509 = vrot.slane %v94, 1
  %v510 = vsel %vm430, %v507, %v509
  %v511 = vrot.slane %v101, 1
  %v512 = vrot.slane %v102, 1
  %v513 = vsel %vm430, %v511, %v512
  %v514 = vrot.slane %v103, 1
  %v515 = vsel %vm430, %v512, %v514
  %v516 = vrot.slane %v104, 1
  %v517 = vrot.slane %v105, 1
  %v518 = vsel %vm430, %v516, %v517
  %v519 = vrot.slane %v106, 1
  %v520 = vsel %vm430, %v517, %v519
  %v521 = vrot.slane %v107, 1
  %v522 = vrot.slane %v108, 1
  %v523 = vsel %vm430, %v521, %v522
  %v524 = vrot.slane %v109, 1
  %v525 = vsel %vm430, %v522, %v524
  %v526 = vrot.slane %v110, 1
  %v527 = vrot.slane %v111, 1
  %v528 = vsel %vm430, %v526, %v527
  %v529 = vrot.slane %v112, 1
  %v530 = vsel %vm430, %v527, %v529
  %v531 = vrot.slane %v113, 1
  %v532 = vrot.slane %v114, 1
  %v533 = vsel %vm430, %v531, %v532
  %v534 = vrot.slane %v115, 1
  %v535 = vsel %vm430, %v532, %v534
  %v536 = vrot.slane %v116, 1
  %v537 = vrot.slane %v117, 1
  %v538 = vsel %vm430, %v536, %v537
  %v539 = vrot.slane %v118, 1
  %v540 = vsel %vm430, %v537, %v539
  %v541 = vrot.slane %v119, 1
  %v542 = vrot.slane %v120, 1
  %v543 = vsel %vm430, %v541, %v542
  %v544 = vrot.slane %v121, 1
  %v545 = vsel %vm430, %v542, %v544
  %v546 = vrot.slane %v122, 1
  %v547 = vrot.slane %v123, 1
  %v548 = vsel %vm430, %v546, %v547
  %v549 = vrot.slane %v124, 1
  %v550 = vsel %vm430, %v547, %v549
  %v551 = vrot.slane %v125, 1
  %v552 = vrot.slane %v126, 1
  %v553 = vsel %vm430, %v551, %v552
  %v554 = vrot.slane %v127, 1
  %v555 = vsel %vm430, %v552, %v554
  %v556 = vrot.slane %v128, 1
  %v557 = vrot.slane %v129, 1
  %v558 = vsel %vm430, %v556, %v557
  %v559 = vrot.slane %v130, 1
  %v560 = vsel %vm430, %v557, %v559
  %v561 = vrot.slane %v131, 1
  %v562 = vrot.slane %v132, 1
  %v563 = vsel %vm430, %v561, %v562
  %v564 = vrot.slane %v133, 1
  %v565 = vsel %vm430, %v562, %v564
  %v566 = vrot.slane %v134, 1
  %v567 = vrot.slane %v135, 1
  %v568 = vsel %vm430, %v566, %v567
  %v569 = vrot.slane %v136, 1
  %v570 = vsel %vm430, %v567, %v569
  %v571 = vrot.slane %v137, 1
  %v572 = vrot.slane %v138, 1
  %v573 = vsel %vm430, %v571, %v572
  %v574 = vrot.slane %v139, 1
  %v575 = vsel %vm430, %v572, %v574
  %v576 = vrot.slane %v140, 1
  %v577 = vrot.slane %v141, 1
  %v578 = vsel %vm430, %v576, %v577
  %v579 = vrot.slane %v142, 1
  %v580 = vsel %vm430, %v577, %v579
  %v581 = vrot.slane %v143, 1
  %v582 = vrot.slane %v144, 1
  %v583 = vsel %vm430, %v581, %v582
  %v584 = vrot.slane %v145, 1
  %v585 = vsel %vm430, %v582, %v584
  %v586 = vrot.slane %v146, 1
  %v587 = vrot.slane %v147, 1
  %v588 = vsel %vm430, %v586, %v587
  %v589 = vrot.slane %v148, 1
  %v590 = vsel %vm430, %v587, %v589
  %v655 = vpack.c.bf16 %v435, %v433
  %v656 = vpack.c.bf16 %v440, %v438
  %v657 = vpack.c.bf16 %v445, %v443
  %v658 = vpack.c.bf16 %v450, %v448
  %v659 = vpack.c.bf16 %v455, %v453
  %v660 = vpack.c.bf16 %v460, %v458
  %v661 = vpack.c.bf16 %v465, %v463
  %v662 = vpack.c.bf16 %v470, %v468
  %v663 = vpack.c.bf16 %v475, %v473
  %v664 = vpack.c.bf16 %v480, %v478
  %v665 = vpack.c.bf16 %v485, %v483
  %v666 = vpack.c.bf16 %v490, %v488
  %v667 = vpack.c.bf16 %v495, %v493
  %v668 = vpack.c.bf16 %v500, %v498
  %v669 = vpack.c.bf16 %v505, %v503
  %v670 = vpack.c.bf16 %v510, %v508
  %v671 = vpack.c.bf16 %v515, %v513
  %v672 = vpack.c.bf16 %v520, %v518
  %v673 = vpack.c.bf16 %v525, %v523
  %v674 = vpack.c.bf16 %v530, %v528
  %v675 = vpack.c.bf16 %v535, %v533
  %v676 = vpack.c.bf16 %v540, %v538
  %v677 = vpack.c.bf16 %v545, %v543
  %v678 = vpack.c.bf16 %v550, %v548
  %v679 = vpack.c.bf16 %v555, %v553
  %v680 = vpack.c.bf16 %v560, %v558
  %v681 = vpack.c.bf16 %v565, %v563
  %v682 = vpack.c.bf16 %v570, %v568
  %v683 = vpack.c.bf16 %v575, %v573
  %v684 = vpack.c.bf16 %v580, %v578
  %v685 = vpack.c.bf16 %v585, %v583
  %v686 = vpack.c.bf16 %v590, %v588
  %vm687 = vcmask 1045504
  %v688 = vrot.slane %v47, 2
  %v689 = vrot.slane %v48, 2
  %v690 = vsel %vm687, %v688, %v689
  %v691 = vrot.slane %v49, 2
  %v692 = vsel %vm687, %v689, %v691
  %v693 = vrot.slane %v50, 2
  %v694 = vrot.slane %v51, 2
  %v695 = vsel %vm687, %v693, %v694
  %v696 = vrot.slane %v52, 2
  %v697 = vsel %vm687, %v694, %v696
  %v698 = vrot.slane %v53, 2
  %v699 = vrot.slane %v54, 2
  %v700 = vsel %vm687, %v698, %v699
  %v701 = vrot.slane %v55, 2
  %v702 = vsel %vm687, %v699, %v701
  %v703 = vrot.slane %v56, 2
  %v704 = vrot.slane %v57, 2
  %v705 = vsel %vm687, %v703, %v704
  %v706 = vrot.slane %v58, 2
  %v707 = vsel %vm687, %v704, %v706
  %v708 = vrot.slane %v59, 2
  %v709 = vrot.slane %v60, 2
  %v710 = vsel %vm687, %v708, %v709
  %v711 = vrot.slane %v61, 2
  %v712 = vsel %vm687, %v709, %v711
  %v713 = vrot.slane %v62, 2
  %v714 = vrot.slane %v63, 2
  %v715 = vsel %vm687, %v713, %v714
  %v716 = vrot.slane %v64, 2
  %v717 = vsel %vm687, %v714, %v716
  %v718 = vrot.slane %v65, 2
  %v719 = vrot.slane %v66, 2
  %v720 = vsel %vm687, %v718, %v719
  %v721 = vrot.slane %v67, 2
  %v722 = vsel %vm687, %v719, %v721
  %v723 = vrot.slane %v68, 2
  %v724 = vrot.slane %v69, 2
  %v725 = vsel %vm687, %v723, %v724
  %v726 = vrot.slane %v70, 2
  %v727 = vsel %vm687, %v724, %v726
  %v728 = vrot.slane %v71, 2
  %v729 = vrot.slane %v72, 2
  %v730 = vsel %vm687, %v728, %v729
  %v731 = vrot.slane %v73, 2
  %v732 = vsel %vm687, %v729, %v731
  %v733 = vrot.slane %v74, 2
  %v734 = vrot.slane %v75, 2
  %v735 = vsel %vm687, %v733, %v734
  %v736 = vrot.slane %v76, 2
  %v737 = vsel %vm687, %v734, %v736
  %v738 = vrot.slane %v77, 2
  %v739 = vrot.slane %v78, 2
  %v740 = vsel %vm687, %v738, %v739
  %v741 = vrot.slane %v79, 2
  %v742 = vsel %vm687, %v739, %v741
  %v743 = vrot.slane %v80, 2
  %v744 = vrot.slane %v81, 2
  %v745 = vsel %vm687, %v743, %v744
  %v746 = vrot.slane %v82, 2
  %v747 = vsel %vm687, %v744, %v746
  %v748 = vrot.slane %v83, 2
  %v749 = vrot.slane %v84, 2
  %v750 = vsel %vm687, %v748, %v749
  %v751 = vrot.slane %v85, 2
  %v752 = vsel %vm687, %v749, %v751
  %v753 = vrot.slane %v86, 2
  %v754 = vrot.slane %v87, 2
  %v755 = vsel %vm687, %v753, %v754
  %v756 = vrot.slane %v88, 2
  %v757 = vsel %vm687, %v754, %v756
  %v758 = vrot.slane %v89, 2
  %v759 = vrot.slane %v90, 2
  %v760 = vsel %vm687, %v758, %v759
  %v761 = vrot.slane %v91, 2
  %v762 = vsel %vm687, %v759, %v761
  %v763 = vrot.slane %v92, 2
  %v764 = vrot.slane %v93, 2
  %v765 = vsel %vm687, %v763, %v764
  %v766 = vrot.slane %v94, 2
  %v767 = vsel %vm687, %v764, %v766
  %v768 = vrot.slane %v101, 2
  %v769 = vrot.slane %v102, 2
  %v770 = vsel %vm687, %v768, %v769
  %v771 = vrot.slane %v103, 2
  %v772 = vsel %vm687, %v769, %v771
  %v773 = vrot.slane %v104, 2
  %v774 = vrot.slane %v105, 2
  %v775 = vsel %vm687, %v773, %v774
  %v776 = vrot.slane %v106, 2
  %v777 = vsel %vm687, %v774, %v776
  %v778 = vrot.slane %v107, 2
  %v779 = vrot.slane %v108, 2
  %v780 = vsel %vm687, %v778, %v779
  %v781 = vrot.slane %v109, 2
  %v782 = vsel %vm687, %v779, %v781
  %v783 = vrot.slane %v110, 2
  %v784 = vrot.slane %v111, 2
  %v785 = vsel %vm687, %v783, %v784
  %v786 = vrot.slane %v112, 2
  %v787 = vsel %vm687, %v784, %v786
  %v788 = vrot.slane %v113, 2
  %v789 = vrot.slane %v114, 2
  %v790 = vsel %vm687, %v788, %v789
  %v791 = vrot.slane %v115, 2
  %v792 = vsel %vm687, %v789, %v791
  %v793 = vrot.slane %v116, 2
  %v794 = vrot.slane %v117, 2
  %v795 = vsel %vm687, %v793, %v794
  %v796 = vrot.slane %v118, 2
  %v797 = vsel %vm687, %v794, %v796
  %v798 = vrot.slane %v119, 2
  %v799 = vrot.slane %v120, 2
  %v800 = vsel %vm687, %v798, %v799
  %v801 = vrot.slane %v121, 2
  %v802 = vsel %vm687, %v799, %v801
  %v803 = vrot.slane %v122, 2
  %v804 = vrot.slane %v123, 2
  %v805 = vsel %vm687, %v803, %v804
  %v806 = vrot.slane %v124, 2
  %v807 = vsel %vm687, %v804, %v806
  %v808 = vrot.slane %v125, 2
  %v809 = vrot.slane %v126, 2
  %v810 = vsel %vm687, %v808, %v809
  %v811 = vrot.slane %v127, 2
  %v812 = vsel %vm687, %v809, %v811
  %v813 = vrot.slane %v128, 2
  %v814 = vrot.slane %v129, 2
  %v815 = vsel %vm687, %v813, %v814
  %v816 = vrot.slane %v130, 2
  %v817 = vsel %vm687, %v814, %v816
  %v818 = vrot.slane %v131, 2
  %v819 = vrot.slane %v132, 2
  %v820 = vsel %vm687, %v818, %v819
  %v821 = vrot.slane %v133, 2
  %v822 = vsel %vm687, %v819, %v821
  %v823 = vrot.slane %v134, 2
  %v824 = vrot.slane %v135, 2
  %v825 = vsel %vm687, %v823, %v824
  %v826 = vrot.slane %v136, 2
  %v827 = vsel %vm687, %v824, %v826
  %v828 = vrot.slane %v137, 2
  %v829 = vrot.slane %v138, 2
  %v830 = vsel %vm687, %v828, %v829
  %v831 = vrot.slane %v139, 2
  %v832 = vsel %vm687, %v829, %v831
  %v833 = vrot.slane %v140, 2
  %v834 = vrot.slane %v141, 2
  %v835 = vsel %vm687, %v833, %v834
  %v836 = vrot.slane %v142, 2
  %v837 = vsel %vm687, %v834, %v836
  %v838 = vrot.slane %v143, 2
  %v839 = vrot.slane %v144, 2
  %v840 = vsel %vm687, %v838, %v839
  %v841 = vrot.slane %v145, 2
  %v842 = vsel %vm687, %v839, %v841
  %v843 = vrot.slane %v146, 2
  %v844 = vrot.slane %v147, 2
  %v845 = vsel %vm687, %v843, %v844
  %v846 = vrot.slane %v148, 2
  %v847 = vsel %vm687, %v844, %v846
  %v912 = vpack.c.bf16 %v692, %v690
  %v913 = vpack.c.bf16 %v697, %v695
  %v914 = vpack.c.bf16 %v702, %v700
  %v915 = vpack.c.bf16 %v707, %v705
  %v916 = vpack.c.bf16 %v712, %v710
  %v917 = vpack.c.bf16 %v717, %v715
  %v918 = vpack.c.bf16 %v722, %v720
  %v919 = vpack.c.bf16 %v727, %v725
  %v920 = vpack.c.bf16 %v732, %v730
  %v921 = vpack.c.bf16 %v737, %v735
  %v922 = vpack.c.bf16 %v742, %v740
  %v923 = vpack.c.bf16 %v747, %v745
  %v924 = vpack.c.bf16 %v752, %v750
  %v925 = vpack.c.bf16 %v757, %v755
  %v926 = vpack.c.bf16 %v762, %v760
  %v927 = vpack.c.bf16 %v767, %v765
  %v928 = vpack.c.bf16 %v772, %v770
  %v929 = vpack.c.bf16 %v777, %v775
  %v930 = vpack.c.bf16 %v782, %v780
  %v931 = vpack.c.bf16 %v787, %v785
  %v932 = vpack.c.bf16 %v792, %v790
  %v933 = vpack.c.bf16 %v797, %v795
  %v934 = vpack.c.bf16 %v802, %v800
  %v935 = vpack.c.bf16 %v807, %v805
  %v936 = vpack.c.bf16 %v812, %v810
  %v937 = vpack.c.bf16 %v817, %v815
  %v938 = vpack.c.bf16 %v822, %v820
  %v939 = vpack.c.bf16 %v827, %v825
  %v940 = vpack.c.bf16 %v832, %v830
  %v941 = vpack.c.bf16 %v837, %v835
  %v942 = vpack.c.bf16 %v842, %v840
  %v943 = vpack.c.bf16 %v847, %v845
  %v944 = vpack.c.bf16 %v96, %v95
  %v945 = vpack.c.bf16 %v150, %v149
  %v952 = vrot.slane %v95, 1
  %v953 = vrot.slane %v96, 1
  %v954 = vsel %vm430, %v952, %v953
  %v955 = vrot.slane %v97, 1
  %v956 = vsel %vm430, %v953, %v955
  %v957 = vrot.slane %v149, 1
  %v958 = vrot.slane %v150, 1
  %v959 = vsel %vm430, %v957, %v958
  %v960 = vrot.slane %v151, 1
  %v961 = vsel %vm430, %v958, %v960
  %v966 = vpack.c.bf16 %v956, %v954
  %v967 = vpack.c.bf16 %v961, %v959
  %v968 = vrot.slane %v95, 2
  %v969 = vrot.slane %v96, 2
  %v970 = vsel %vm687, %v968, %v969
  %v971 = vrot.slane %v97, 2
  %v972 = vsel %vm687, %v969, %v971
  %v973 = vrot.slane %v149, 2
  %v974 = vrot.slane %v150, 2
  %v975 = vsel %vm687, %v973, %v974
  %v976 = vrot.slane %v151, 2
  %v977 = vsel %vm687, %v974, %v976
  %v982 = vpack.c.bf16 %v972, %v970
  %v983 = vpack.c.bf16 %v977, %v975
  %v984 = vpack.c.bf16 %v99, %v98
  %v985 = vpack.c.bf16 %v153, %v152
  %v992 = vrot.slane %v98, 1
  %v993 = vrot.slane %v99, 1
  %v994 = vsel %vm430, %v992, %v993
  %v995 = vrot.slane %v100, 1
  %v996 = vsel %vm430, %v993, %v995
  %v997 = vrot.slane %v152, 1
  %v998 = vrot.slane %v153, 1
  %v999 = vsel %vm430, %v997, %v998
  %v1000 = vrot.slane %v154, 1
  %v1001 = vsel %vm430, %v998, %v1000
  %v1006 = vpack.c.bf16 %v996, %v994
  %v1007 = vpack.c.bf16 %v1001, %v999
  %v1008 = vrot.slane %v98, 2
  %v1009 = vrot.slane %v99, 2
  %v1010 = vsel %vm687, %v1008, %v1009
  %v1011 = vrot.slane %v100, 2
  %v1012 = vsel %vm687, %v1009, %v1011
  %v1013 = vrot.slane %v152, 2
  %v1014 = vrot.slane %v153, 2
  %v1015 = vsel %vm687, %v1013, %v1014
  %v1016 = vrot.slane %v154, 2
  %v1017 = vsel %vm687, %v1014, %v1016
  %v1022 = vpack.c.bf16 %v1012, %v1010
  %v1023 = vpack.c.bf16 %v1017, %v1015
  %v1025 = vlaneseq
  %v1026 = vshrl.u32 %v1025, 7
  %v1027 = vsub.s32 0, %v1026
  %v1028 = vrot.slane %v299, %v1027
  %v1174 = vunpack.c.l.b16 %v155
  %v1175 = vunpack.c.l.b16 %v156
  %v1176 = vunpack.c.l.b16 %v157
  %v1177 = vunpack.c.l.b16 %v158
  %v1178 = vunpack.c.l.b16 %v159
  %v1179 = vunpack.c.l.b16 %v160
  %v1180 = vunpack.c.l.b16 %v161
  %v1181 = vunpack.c.l.b16 %v162
  %v1182 = vunpack.c.l.b16 %v163
  %v1183 = vunpack.c.l.b16 %v164
  %v1184 = vunpack.c.l.b16 %v165
  %v1185 = vunpack.c.l.b16 %v166
  %v1186 = vunpack.c.l.b16 %v167
  %v1187 = vunpack.c.l.b16 %v168
  %v1188 = vunpack.c.l.b16 %v169
  %v1189 = vunpack.c.l.b16 %v170
  %v1190 = vunpack.c.l.b16 %v171
  %v1191 = vunpack.c.l.b16 %v172
  %v1192 = vunpack.c.l.b16 %v173
  %v1193 = vunpack.c.l.b16 %v174
  %v1194 = vunpack.c.l.b16 %v175
  %v1195 = vunpack.c.l.b16 %v176
  %v1196 = vunpack.c.l.b16 %v177
  %v1197 = vunpack.c.l.b16 %v178
  %v1198 = vunpack.c.l.b16 %v179
  %v1199 = vunpack.c.l.b16 %v180
  %v1200 = vunpack.c.l.b16 %v181
  %v1201 = vunpack.c.l.b16 %v182
  %v1202 = vunpack.c.l.b16 %v183
  %v1203 = vunpack.c.l.b16 %v184
  %v1204 = vunpack.c.l.b16 %v185
  %v1205 = vunpack.c.l.b16 %v186
  %v1206 = vunpack.c.l.b16 %v187
  %v1207 = vunpack.c.l.b16 %v188
  %v1208 = vunpack.c.l.b16 %v189
  %v1209 = vunpack.c.l.b16 %v190
  %v1210 = vunpack.c.l.b16 %v191
  %v1211 = vunpack.c.l.b16 %v192
  %v1212 = vunpack.c.l.b16 %v193
  %v1213 = vunpack.c.l.b16 %v194
  %v1214 = vunpack.c.l.b16 %v195
  %v1215 = vunpack.c.l.b16 %v196
  %v1216 = vunpack.c.l.b16 %v197
  %v1217 = vunpack.c.l.b16 %v198
  %v1218 = vunpack.c.l.b16 %v199
  %v1219 = vunpack.c.l.b16 %v200
  %v1220 = vunpack.c.l.b16 %v201
  %v1221 = vunpack.c.l.b16 %v202
  %v1222 = vunpack.c.l.b16 %v203
  %v1223 = vunpack.c.l.b16 %v204
  %v1224 = vunpack.c.l.b16 %v205
  %v1225 = vunpack.c.l.b16 %v206
  %v1226 = vunpack.c.l.b16 %v207
  %v1227 = vunpack.c.l.b16 %v208
  %v1228 = vunpack.c.l.b16 %v209
  %v1229 = vunpack.c.l.b16 %v210
  %v1230 = vunpack.c.l.b16 %v211
  %v1231 = vunpack.c.l.b16 %v212
  %v1232 = vunpack.c.l.b16 %v213
  %v1233 = vunpack.c.l.b16 %v214
  %v1234 = vunpack.c.l.b16 %v215
  %v1235 = vunpack.c.l.b16 %v216
  %v1236 = vunpack.c.l.b16 %v217
  %v1237 = vunpack.c.l.b16 %v218
  %v1238 = vunpack.c.l.b16 %v219
  %v1239 = vunpack.c.l.b16 %v220
  %v1240 = vunpack.c.l.b16 %v221
  %v1241 = vunpack.c.l.b16 %v222
  %v1242 = vunpack.c.l.b16 %v223
  %v1243 = vunpack.c.l.b16 %v224
  %v1244 = vunpack.c.l.b16 %v225
  %v1245 = vunpack.c.l.b16 %v226
  %v1246 = vunpack.c.l.b16 %v227
  %v1247 = vunpack.c.l.b16 %v228
  %v1248 = vunpack.c.l.b16 %v229
  %v1249 = vunpack.c.l.b16 %v230
  %v1250 = vunpack.c.l.b16 %v231
  %v1251 = vunpack.c.l.b16 %v232
  %v1252 = vunpack.c.l.b16 %v233
  %v1253 = vunpack.c.l.b16 %v234
  %v1254 = vunpack.c.l.b16 %v235
  %v1255 = vunpack.c.l.b16 %v236
  %v1256 = vunpack.c.l.b16 %v237
  %v1257 = vunpack.c.l.b16 %v238
  %v1258 = vunpack.c.l.b16 %v239
  %v1259 = vunpack.c.l.b16 %v240
  %v1260 = vunpack.c.l.b16 %v241
  %v1261 = vunpack.c.l.b16 %v242
  %v1262 = vunpack.c.l.b16 %v243
  %v1263 = vunpack.c.l.b16 %v244
  %v1264 = vunpack.c.l.b16 %v245
  %v1265 = vunpack.c.l.b16 %v246
  %v1266 = vunpack.c.l.b16 %v247
  %v1267 = vunpack.c.l.b16 %v248
  %v1268 = vunpack.c.l.b16 %v249
  %v1269 = vunpack.c.l.b16 %v250
  %v1270 = vunpack.c.l.b16 %v251
  %v1271 = vunpack.c.l.b16 %v252
  %v1272 = vunpack.c.l.b16 %v253
  %v1273 = vunpack.c.l.b16 %v254
  %v1274 = vunpack.c.l.b16 %v255
  %v1275 = vunpack.c.l.b16 %v256
  %v1276 = vunpack.c.l.b16 %v257
  %v1277 = vunpack.c.l.b16 %v258
  %v1278 = vunpack.c.l.b16 %v259
  %v1279 = vunpack.c.l.b16 %v260
  %v1280 = vunpack.c.l.b16 %v261
  %v1281 = vunpack.c.l.b16 %v262
  %v1282 = vunpack.c.l.b16 %v263
  %v1283 = vunpack.c.l.b16 %v264
  %v1284 = vunpack.c.l.b16 %v265
  %v1285 = vunpack.c.l.b16 %v266
  %v1286 = vunpack.c.l.b16 %v267
  %v1287 = vunpack.c.l.b16 %v268
  %v1288 = vunpack.c.l.b16 %v269
  %v1289 = vunpack.c.l.b16 %v270
  %v1290 = vunpack.c.l.b16 %v271
  %v1291 = vunpack.c.l.b16 %v272
  %v1292 = vunpack.c.l.b16 %v273
  %v1293 = vunpack.c.l.b16 %v274
  %v1294 = vunpack.c.l.b16 %v275
  %v1295 = vunpack.c.l.b16 %v276
  %v1296 = vunpack.c.l.b16 %v277
  %v1297 = vunpack.c.l.b16 %v278
  %v1298 = vunpack.c.l.b16 %v279
  %v1299 = vunpack.c.l.b16 %v280
  %v1300 = vunpack.c.l.b16 %v281
  %v1301 = vunpack.c.l.b16 %v282
  %v1302 = vunpack.c.l.b16 %v283
  %v1303 = vunpack.c.l.b16 %v284
  %v1304 = vunpack.c.l.b16 %v285
  %v1305 = vunpack.c.l.b16 %v286
  %v1306 = vunpack.c.l.b16 %v287
  %v1307 = vunpack.c.l.b16 %v288
  %v1308 = vunpack.c.l.b16 %v289
  %v1309 = vunpack.c.l.b16 %v290
  %v1310 = vunpack.c.l.b16 %v291
  %v1311 = vunpack.c.l.b16 %v292
  %v1312 = vunpack.c.l.b16 %v293
  %v1313 = vunpack.c.l.b16 %v294
  %v1314 = vunpack.c.l.b16 %v295
  %v1315 = vunpack.c.l.b16 %v296
  %v1316 = vunpack.c.l.b16 %v297
  %v1317 = vunpack.c.l.b16 %v298
  %v1318 = vpack.c.b16 %v1175, %v1174
  %v1319 = vpack.c.b16 %v1177, %v1176
  %v1320 = vpack.c.b16 %v1179, %v1178
  %v1321 = vpack.c.b16 %v1181, %v1180
  %v1322 = vpack.c.b16 %v1183, %v1182
  %v1323 = vpack.c.b16 %v1185, %v1184
  %v1324 = vpack.c.b16 %v1187, %v1186
  %v1325 = vpack.c.b16 %v1189, %v1188
  %v1326 = vpack.c.b16 %v1191, %v1190
  %v1327 = vpack.c.b16 %v1193, %v1192
  %v1328 = vpack.c.b16 %v1195, %v1194
  %v1329 = vpack.c.b16 %v1197, %v1196
  %v1330 = vpack.c.b16 %v1199, %v1198
  %v1331 = vpack.c.b16 %v1201, %v1200
  %v1332 = vpack.c.b16 %v1203, %v1202
  %v1333 = vpack.c.b16 %v1205, %v1204
  %v1334 = vpack.c.b16 %v1207, %v1206
  %v1335 = vpack.c.b16 %v1209, %v1208
  %v1336 = vpack.c.b16 %v1211, %v1210
  %v1337 = vpack.c.b16 %v1213, %v1212
  %v1338 = vpack.c.b16 %v1215, %v1214
  %v1339 = vpack.c.b16 %v1217, %v1216
  %v1340 = vpack.c.b16 %v1219, %v1218
  %v1341 = vpack.c.b16 %v1221, %v1220
  %v1342 = vpack.c.b16 %v1223, %v1222
  %v1343 = vpack.c.b16 %v1225, %v1224
  %v1344 = vpack.c.b16 %v1227, %v1226
  %v1345 = vpack.c.b16 %v1229, %v1228
  %v1346 = vpack.c.b16 %v1231, %v1230
  %v1347 = vpack.c.b16 %v1233, %v1232
  %v1348 = vpack.c.b16 %v1235, %v1234
  %v1349 = vpack.c.b16 %v1237, %v1236
  %v1350 = vpack.c.b16 %v1239, %v1238
  %v1351 = vpack.c.b16 %v1241, %v1240
  %v1352 = vpack.c.b16 %v1243, %v1242
  %v1353 = vpack.c.b16 %v1245, %v1244
  %v1354 = vpack.c.b16 %v1247, %v1246
  %v1355 = vpack.c.b16 %v1249, %v1248
  %v1356 = vpack.c.b16 %v1251, %v1250
  %v1357 = vpack.c.b16 %v1253, %v1252
  %v1358 = vpack.c.b16 %v1255, %v1254
  %v1359 = vpack.c.b16 %v1257, %v1256
  %v1360 = vpack.c.b16 %v1259, %v1258
  %v1361 = vpack.c.b16 %v1261, %v1260
  %v1362 = vpack.c.b16 %v1263, %v1262
  %v1363 = vpack.c.b16 %v1265, %v1264
  %v1364 = vpack.c.b16 %v1267, %v1266
  %v1365 = vpack.c.b16 %v1269, %v1268
  %v1366 = vpack.c.b16 %v1271, %v1270
  %v1367 = vpack.c.b16 %v1273, %v1272
  %v1368 = vpack.c.b16 %v1275, %v1274
  %v1369 = vpack.c.b16 %v1277, %v1276
  %v1370 = vpack.c.b16 %v1279, %v1278
  %v1371 = vpack.c.b16 %v1281, %v1280
  %v1372 = vpack.c.b16 %v1283, %v1282
  %v1373 = vpack.c.b16 %v1285, %v1284
  %v1374 = vpack.c.b16 %v1287, %v1286
  %v1375 = vpack.c.b16 %v1289, %v1288
  %v1376 = vpack.c.b16 %v1291, %v1290
  %v1377 = vpack.c.b16 %v1293, %v1292
  %v1378 = vpack.c.b16 %v1295, %v1294
  %v1379 = vpack.c.b16 %v1297, %v1296
  %v1380 = vpack.c.b16 %v1299, %v1298
  %v1381 = vpack.c.b16 %v1301, %v1300
  %v1382 = vpack.c.b16 %v1303, %v1302
  %v1383 = vpack.c.b16 %v1305, %v1304
  %v1384 = vpack.c.b16 %v1307, %v1306
  %v1385 = vpack.c.b16 %v1309, %v1308
  %v1386 = vpack.c.b16 %v1311, %v1310
  %v1387 = vpack.c.b16 %v1313, %v1312
  %v1388 = vpack.c.b16 %v1315, %v1314
  %v1389 = vpack.c.b16 %v1317, %v1316
  %1462 = vmatprep.subr.bf16.mxu0 0
  %1463 = vmatpush1.bf16.msra.mxu0 %v1318
  %1464 = vmatprep.subr.bf16.mxu0 0
  %1465 = vmatpush1.bf16.msra.mxu0 %v1319
  %1466 = vmatprep.subr.bf16.mxu0 0
  %1467 = vmatpush1.bf16.msra.mxu0 %v1320
  %1468 = vmatprep.subr.bf16.mxu0 0
  %1469 = vmatpush1.bf16.msra.mxu0 %v1321
  %1470 = vmatprep.subr.bf16.mxu0 0
  %1471 = vmatpush1.bf16.msra.mxu0 %v1322
  %1472 = vmatprep.subr.bf16.mxu0 0
  %1473 = vmatpush1.bf16.msra.mxu0 %v1323
  %1474 = vmatprep.subr.bf16.mxu0 0
  %1475 = vmatpush1.bf16.msra.mxu0 %v1324
  %1476 = vmatprep.subr.bf16.mxu0 0
  %1477 = vmatpush1.bf16.msra.mxu0 %v1325
  %1478 = vmatprep.subr.bf16.mxu0 0
  %1479 = vmatpush1.bf16.msra.mxu0 %v1326
  %1480 = vmatprep.subr.bf16.mxu0 0
  %1481 = vmatpush1.bf16.msra.mxu0 %v1327
  %1482 = vmatprep.subr.bf16.mxu0 0
  %1483 = vmatpush1.bf16.msra.mxu0 %v1328
  %1484 = vmatprep.subr.bf16.mxu0 0
  %1485 = vmatpush1.bf16.msra.mxu0 %v1329
  %1486 = vmatprep.subr.bf16.mxu0 0
  %1487 = vmatpush1.bf16.msra.mxu0 %v1330
  %1488 = vmatprep.subr.bf16.mxu0 0
  %1489 = vmatpush1.bf16.msra.mxu0 %v1331
  %1490 = vmatprep.subr.bf16.mxu0 0
  %1491 = vmatpush1.bf16.msra.mxu0 %v1332
  %1492 = vmatprep.subr.bf16.mxu0 0
  %1493 = vmatpush1.bf16.msra.mxu0 %v1333
  %1494 = vmatprep.mubr.bf16.mxu0 %v655
  %1495 = vmatmul.mubr.bf16.gmra.mrb[0].mxu0 %v302
  %v1496 = vpop.f32.mrb[0].mxu0
  %v1497 = vadd.f32 %v1028, %v1496
  %v1498 = vpop.f32.mrb[0].mxu0
  %v1499 = vpop.f32.mrb[0].mxu0
  %v1500 = vadd.f32 %v1028, %v1499
  %v1501 = vpop.f32.mrb[0].mxu0
  %1502 = vmatprep.mubr.bf16.mxu0 %v656
  %1503 = vmatmul.mubr.bf16.gmra.mrb[0].mxu0 %v303
  %v1504 = vpop.f32.mrb[0].mxu0
  %v1505 = vadd.f32 %v1028, %v1504
  %v1506 = vpop.f32.mrb[0].mxu0
  %v1507 = vpop.f32.mrb[0].mxu0
  %v1508 = vadd.f32 %v1028, %v1507
  %v1509 = vpop.f32.mrb[0].mxu0
  %1510 = vmatprep.mubr.bf16.mxu0 %v657
  %1511 = vmatmul.mubr.bf16.gmra.mrb[0].mxu0 %v304
  %v1512 = vpop.f32.mrb[0].mxu0
  %v1513 = vadd.f32 %v1028, %v1512
  %v1514 = vpop.f32.mrb[0].mxu0
  %v1515 = vpop.f32.mrb[0].mxu0
  %v1516 = vadd.f32 %v1028, %v1515
  %v1517 = vpop.f32.mrb[0].mxu0
  %1518 = vmatprep.mubr.bf16.mxu0 %v658
  %1519 = vmatmul.mubr.bf16.gmra.mrb[0].mxu0 %v305
  %v1520 = vpop.f32.mrb[0].mxu0
  %v1521 = vadd.f32 %v1028, %v1520
  %v1522 = vpop.f32.mrb[0].mxu0
  %v1523 = vpop.f32.mrb[0].mxu0
  %v1524 = vadd.f32 %v1028, %v1523
  %v1525 = vpop.f32.mrb[0].mxu0
  %1526 = vmatprep.mubr.bf16.mxu0 %v659
  %1527 = vmatmul.mubr.bf16.gmra.mrb[0].mxu0 %v306
  %v1528 = vpop.f32.mrb[0].mxu0
  %v1529 = vadd.f32 %v1028, %v1528
  %v1530 = vpop.f32.mrb[0].mxu0
  %v1531 = vpop.f32.mrb[0].mxu0
  %v1532 = vadd.f32 %v1028, %v1531
  %v1533 = vpop.f32.mrb[0].mxu0
  %1534 = vmatprep.mubr.bf16.mxu0 %v660
  %1535 = vmatmul.mubr.bf16.gmra.mrb[0].mxu0 %v307
  %v1536 = vpop.f32.mrb[0].mxu0
  %v1537 = vadd.f32 %v1028, %v1536
  %v1538 = vpop.f32.mrb[0].mxu0
  %v1539 = vpop.f32.mrb[0].mxu0
  %v1540 = vadd.f32 %v1028, %v1539
  %v1541 = vpop.f32.mrb[0].mxu0
  %1542 = vmatprep.mubr.bf16.mxu0 %v661
  %1543 = vmatmul.mubr.bf16.gmra.mrb[0].mxu0 %v308
  %v1544 = vpop.f32.mrb[0].mxu0
  %v1545 = vadd.f32 %v1028, %v1544
  %v1546 = vpop.f32.mrb[0].mxu0
  %v1547 = vpop.f32.mrb[0].mxu0
  %v1548 = vadd.f32 %v1028, %v1547
  %v1549 = vpop.f32.mrb[0].mxu0
  %1550 = vmatprep.mubr.bf16.mxu0 %v662
  %1551 = vmatmul.mubr.bf16.gmra.mrb[0].mxu0 %v309
  %v1552 = vpop.f32.mrb[0].mxu0
  %v1553 = vadd.f32 %v1028, %v1552
  %v1554 = vpop.f32.mrb[0].mxu0
  %v1555 = vpop.f32.mrb[0].mxu0
  %v1556 = vadd.f32 %v1028, %v1555
  %v1557 = vpop.f32.mrb[0].mxu0
  %1558 = vmatprep.mubr.bf16.mxu0 %v663
  %1559 = vmatmul.mubr.bf16.gmra.mrb[0].mxu0 %v310
  %v1560 = vpop.f32.mrb[0].mxu0
  %v1561 = vadd.f32 %v1028, %v1560
  %v1562 = vpop.f32.mrb[0].mxu0
  %v1563 = vpop.f32.mrb[0].mxu0
  %v1564 = vadd.f32 %v1028, %v1563
  %v1565 = vpop.f32.mrb[0].mxu0
  %1566 = vmatprep.mubr.bf16.mxu0 %v664
  %1567 = vmatmul.mubr.bf16.gmra.mrb[0].mxu0 %v311
  %v1568 = vpop.f32.mrb[0].mxu0
  %v1569 = vadd.f32 %v1028, %v1568
  %v1570 = vpop.f32.mrb[0].mxu0
  %v1571 = vpop.f32.mrb[0].mxu0
  %v1572 = vadd.f32 %v1028, %v1571
  %v1573 = vpop.f32.mrb[0].mxu0
  %1574 = vmatprep.mubr.bf16.mxu0 %v665
  %1575 = vmatmul.mubr.bf16.gmra.mrb[0].mxu0 %v312
  %v1576 = vpop.f32.mrb[0].mxu0
  %v1577 = vadd.f32 %v1028, %v1576
  %v1578 = vpop.f32.mrb[0].mxu0
  %v1579 = vpop.f32.mrb[0].mxu0
  %v1580 = vadd.f32 %v1028, %v1579
  %v1581 = vpop.f32.mrb[0].mxu0
  %1582 = vmatprep.mubr.bf16.mxu0 %v666
  %1583 = vmatmul.mubr.bf16.gmra.mrb[0].mxu0 %v313
  %v1584 = vpop.f32.mrb[0].mxu0
  %v1585 = vadd.f32 %v1028, %v1584
  %v1586 = vpop.f32.mrb[0].mxu0
  %v1587 = vpop.f32.mrb[0].mxu0
  %v1588 = vadd.f32 %v1028, %v1587
  %v1589 = vpop.f32.mrb[0].mxu0
  %1590 = vmatprep.mubr.bf16.mxu0 %v667
  %1591 = vmatmul.mubr.bf16.gmra.mrb[0].mxu0 %v314
  %v1592 = vpop.f32.mrb[0].mxu0
  %v1593 = vadd.f32 %v1028, %v1592
  %v1594 = vpop.f32.mrb[0].mxu0
  %v1595 = vpop.f32.mrb[0].mxu0
  %v1596 = vadd.f32 %v1028, %v1595
  %v1597 = vpop.f32.mrb[0].mxu0
  %1598 = vmatprep.mubr.bf16.mxu0 %v668
  %1599 = vmatmul.mubr.bf16.gmra.mrb[0].mxu0 %v315
  %v1600 = vpop.f32.mrb[0].mxu0
  %v1601 = vadd.f32 %v1028, %v1600
  %v1602 = vpop.f32.mrb[0].mxu0
  %v1603 = vpop.f32.mrb[0].mxu0
  %v1604 = vadd.f32 %v1028, %v1603
  %v1605 = vpop.f32.mrb[0].mxu0
  %1606 = vmatprep.mubr.bf16.mxu0 %v669
  %1607 = vmatmul.mubr.bf16.gmra.mrb[0].mxu0 %v316
  %v1608 = vpop.f32.mrb[0].mxu0
  %v1609 = vadd.f32 %v1028, %v1608
  %v1610 = vpop.f32.mrb[0].mxu0
  %v1611 = vpop.f32.mrb[0].mxu0
  %v1612 = vadd.f32 %v1028, %v1611
  %v1613 = vpop.f32.mrb[0].mxu0
  %1614 = vmatprep.mubr.bf16.mxu0 %v670
  %1615 = vmatmul.mubr.bf16.gmra.mrb[0].mxu0 %v317
  %v1616 = vpop.f32.mrb[0].mxu0
  %v1617 = vadd.f32 %v1028, %v1616
  %v1618 = vpop.f32.mrb[0].mxu0
  %v1619 = vpop.f32.mrb[0].mxu0
  %v1620 = vadd.f32 %v1028, %v1619
  %v1621 = vpop.f32.mrb[0].mxu0
  %1622 = vmatprep.mubr.bf16.mxu0 %v671
  %1623 = vmatmul.mubr.bf16.gmra.mrb[0].mxu0 %v318
  %v1624 = vpop.f32.mrb[0].mxu0
  %v1625 = vadd.f32 %v1028, %v1624
  %v1626 = vpop.f32.mrb[0].mxu0
  %v1627 = vpop.f32.mrb[0].mxu0
  %v1628 = vadd.f32 %v1028, %v1627
  %v1629 = vpop.f32.mrb[0].mxu0
  %1630 = vmatprep.mubr.bf16.mxu0 %v672
  %1631 = vmatmul.mubr.bf16.gmra.mrb[0].mxu0 %v319
  %v1632 = vpop.f32.mrb[0].mxu0
  %v1633 = vadd.f32 %v1028, %v1632
  %v1634 = vpop.f32.mrb[0].mxu0
  %v1635 = vpop.f32.mrb[0].mxu0
  %v1636 = vadd.f32 %v1028, %v1635
  %v1637 = vpop.f32.mrb[0].mxu0
  %1638 = vmatprep.mubr.bf16.mxu0 %v673
  %1639 = vmatmul.mubr.bf16.gmra.mrb[0].mxu0 %v320
  %v1640 = vpop.f32.mrb[0].mxu0
  %v1641 = vadd.f32 %v1028, %v1640
  %v1642 = vpop.f32.mrb[0].mxu0
  %v1643 = vpop.f32.mrb[0].mxu0
  %v1644 = vadd.f32 %v1028, %v1643
  %v1645 = vpop.f32.mrb[0].mxu0
  %1646 = vmatprep.mubr.bf16.mxu0 %v674
  %1647 = vmatmul.mubr.bf16.gmra.mrb[0].mxu0 %v321
  %v1648 = vpop.f32.mrb[0].mxu0
  %v1649 = vadd.f32 %v1028, %v1648
  %v1650 = vpop.f32.mrb[0].mxu0
  %v1651 = vpop.f32.mrb[0].mxu0
  %v1652 = vadd.f32 %v1028, %v1651
  %v1653 = vpop.f32.mrb[0].mxu0
  %1654 = vmatprep.mubr.bf16.mxu0 %v675
  %1655 = vmatmul.mubr.bf16.gmra.mrb[0].mxu0 %v322
  %v1656 = vpop.f32.mrb[0].mxu0
  %v1657 = vadd.f32 %v1028, %v1656
  %v1658 = vpop.f32.mrb[0].mxu0
  %v1659 = vpop.f32.mrb[0].mxu0
  %v1660 = vadd.f32 %v1028, %v1659
  %v1661 = vpop.f32.mrb[0].mxu0
  %1662 = vmatprep.mubr.bf16.mxu0 %v676
  %1663 = vmatmul.mubr.bf16.gmra.mrb[0].mxu0 %v323
  %v1664 = vpop.f32.mrb[0].mxu0
  %v1665 = vadd.f32 %v1028, %v1664
  %v1666 = vpop.f32.mrb[0].mxu0
  %v1667 = vpop.f32.mrb[0].mxu0
  %v1668 = vadd.f32 %v1028, %v1667
  %v1669 = vpop.f32.mrb[0].mxu0
  %1670 = vmatprep.mubr.bf16.mxu0 %v677
  %1671 = vmatmul.mubr.bf16.gmra.mrb[0].mxu0 %v324
  %v1672 = vpop.f32.mrb[0].mxu0
  %v1673 = vadd.f32 %v1028, %v1672
  %v1674 = vpop.f32.mrb[0].mxu0
  %v1675 = vpop.f32.mrb[0].mxu0
  %v1676 = vadd.f32 %v1028, %v1675
  %v1677 = vpop.f32.mrb[0].mxu0
  %1678 = vmatprep.mubr.bf16.mxu0 %v678
  %1679 = vmatmul.mubr.bf16.gmra.mrb[0].mxu0 %v325
  %v1680 = vpop.f32.mrb[0].mxu0
  %v1681 = vadd.f32 %v1028, %v1680
  %v1682 = vpop.f32.mrb[0].mxu0
  %v1683 = vpop.f32.mrb[0].mxu0
  %v1684 = vadd.f32 %v1028, %v1683
  %v1685 = vpop.f32.mrb[0].mxu0
  %1686 = vmatprep.mubr.bf16.mxu0 %v679
  %1687 = vmatmul.mubr.bf16.gmra.mrb[0].mxu0 %v326
  %v1688 = vpop.f32.mrb[0].mxu0
  %v1689 = vadd.f32 %v1028, %v1688
  %v1690 = vpop.f32.mrb[0].mxu0
  %v1691 = vpop.f32.mrb[0].mxu0
  %v1692 = vadd.f32 %v1028, %v1691
  %v1693 = vpop.f32.mrb[0].mxu0
  %1694 = vmatprep.mubr.bf16.mxu0 %v680
  %1695 = vmatmul.mubr.bf16.gmra.mrb[0].mxu0 %v327
  %v1696 = vpop.f32.mrb[0].mxu0
  %v1697 = vadd.f32 %v1028, %v1696
  %v1698 = vpop.f32.mrb[0].mxu0
  %v1699 = vpop.f32.mrb[0].mxu0
  %v1700 = vadd.f32 %v1028, %v1699
  %v1701 = vpop.f32.mrb[0].mxu0
  %1702 = vmatprep.mubr.bf16.mxu0 %v681
  %1703 = vmatmul.mubr.bf16.gmra.mrb[0].mxu0 %v328
  %v1704 = vpop.f32.mrb[0].mxu0
  %v1705 = vadd.f32 %v1028, %v1704
  %v1706 = vpop.f32.mrb[0].mxu0
  %v1707 = vpop.f32.mrb[0].mxu0
  %v1708 = vadd.f32 %v1028, %v1707
  %v1709 = vpop.f32.mrb[0].mxu0
  %1710 = vmatprep.mubr.bf16.mxu0 %v682
  %1711 = vmatmul.mubr.bf16.gmra.mrb[0].mxu0 %v329
  %v1712 = vpop.f32.mrb[0].mxu0
  %v1713 = vadd.f32 %v1028, %v1712
  %v1714 = vpop.f32.mrb[0].mxu0
  %v1715 = vpop.f32.mrb[0].mxu0
  %v1716 = vadd.f32 %v1028, %v1715
  %v1717 = vpop.f32.mrb[0].mxu0
  %1718 = vmatprep.mubr.bf16.mxu0 %v683
  %1719 = vmatmul.mubr.bf16.gmra.mrb[0].mxu0 %v330
  %v1720 = vpop.f32.mrb[0].mxu0
  %v1721 = vadd.f32 %v1028, %v1720
  %v1722 = vpop.f32.mrb[0].mxu0
  %v1723 = vpop.f32.mrb[0].mxu0
  %v1724 = vadd.f32 %v1028, %v1723
  %v1725 = vpop.f32.mrb[0].mxu0
  %1726 = vmatprep.mubr.bf16.mxu0 %v684
  %1727 = vmatmul.mubr.bf16.gmra.mrb[0].mxu0 %v331
  %v1728 = vpop.f32.mrb[0].mxu0
  %v1729 = vadd.f32 %v1028, %v1728
  %v1730 = vpop.f32.mrb[0].mxu0
  %v1731 = vpop.f32.mrb[0].mxu0
  %v1732 = vadd.f32 %v1028, %v1731
  %v1733 = vpop.f32.mrb[0].mxu0
  %1734 = vmatprep.mubr.bf16.mxu0 %v685
  %1735 = vmatmul.mubr.bf16.gmra.mrb[0].mxu0 %v332
  %v1736 = vpop.f32.mrb[0].mxu0
  %v1737 = vadd.f32 %v1028, %v1736
  %v1738 = vpop.f32.mrb[0].mxu0
  %v1739 = vpop.f32.mrb[0].mxu0
  %v1740 = vadd.f32 %v1028, %v1739
  %v1741 = vpop.f32.mrb[0].mxu0
  %1742 = vmatprep.mubr.bf16.mxu0 %v686
  %1743 = vmatmul.mubr.bf16.gmra.mrb[0].mxu0 %v333
  %v1744 = vpop.f32.mrb[0].mxu0
  %v1745 = vadd.f32 %v1028, %v1744
  %v1746 = vpop.f32.mrb[0].mxu0
  %v1747 = vpop.f32.mrb[0].mxu0
  %v1748 = vadd.f32 %v1028, %v1747
  %v1749 = vpop.f32.mrb[0].mxu0
  %1750 = vdwg.mxu0
  %1751 = vmatprep.subr.bf16.mxu0 0
  %1752 = vmatpush1.bf16.msra.mxu0 %v1334
  %1753 = vmatprep.subr.bf16.mxu0 0
  %1754 = vmatpush1.bf16.msra.mxu0 %v1335
  %1755 = vmatprep.subr.bf16.mxu0 0
  %1756 = vmatpush1.bf16.msra.mxu0 %v1336
  %1757 = vmatprep.subr.bf16.mxu0 0
  %1758 = vmatpush1.bf16.msra.mxu0 %v1337
  %1759 = vmatprep.subr.bf16.mxu0 0
  %1760 = vmatpush1.bf16.msra.mxu0 %v1338
  %1761 = vmatprep.subr.bf16.mxu0 0
  %1762 = vmatpush1.bf16.msra.mxu0 %v1339
  %1763 = vmatprep.subr.bf16.mxu0 0
  %1764 = vmatpush1.bf16.msra.mxu0 %v1340
  %1765 = vmatprep.subr.bf16.mxu0 0
  %1766 = vmatpush1.bf16.msra.mxu0 %v1341
  %1767 = vmatprep.subr.bf16.mxu0 0
  %1768 = vmatpush1.bf16.msra.mxu0 %v1342
  %1769 = vmatprep.subr.bf16.mxu0 0
  %1770 = vmatpush1.bf16.msra.mxu0 %v1343
  %1771 = vmatprep.subr.bf16.mxu0 0
  %1772 = vmatpush1.bf16.msra.mxu0 %v1344
  %1773 = vmatprep.subr.bf16.mxu0 0
  %1774 = vmatpush1.bf16.msra.mxu0 %v1345
  %1775 = vmatprep.subr.bf16.mxu0 0
  %1776 = vmatpush1.bf16.msra.mxu0 %v1346
  %1777 = vmatprep.subr.bf16.mxu0 0
  %1778 = vmatpush1.bf16.msra.mxu0 %v1347
  %1779 = vmatprep.subr.bf16.mxu0 0
  %1780 = vmatpush1.bf16.msra.mxu0 %v1348
  %1781 = vmatprep.subr.bf16.mxu0 0
  %1782 = vmatpush1.bf16.msra.mxu0 %v1349
  %1783 = vmatprep.mubr.bf16.mxu0 %v303
  %1784 = vmatmul.mubr.bf16.gmra.mrb[0].mxu0 %v912
  %v1785 = vpop.f32.mrb[0].mxu0
  %v1786 = vadd.f32 %v1497, %v1785
  %v1787 = vpop.f32.mrb[0].mxu0
  %v1788 = vpop.f32.mrb[0].mxu0
  %v1789 = vadd.f32 %v1500, %v1788
  %v1790 = vpop.f32.mrb[0].mxu0
  %1791 = vmatprep.mubr.bf16.mxu0 %v304
  %1792 = vmatmul.mubr.bf16.gmra.mrb[0].mxu0 %v913
  %v1793 = vpop.f32.mrb[0].mxu0
  %v1794 = vadd.f32 %v1505, %v1793
  %v1795 = vpop.f32.mrb[0].mxu0
  %v1796 = vpop.f32.mrb[0].mxu0
  %v1797 = vadd.f32 %v1508, %v1796
  %v1798 = vpop.f32.mrb[0].mxu0
  %1799 = vmatprep.mubr.bf16.mxu0 %v305
  %1800 = vmatmul.mubr.bf16.gmra.mrb[0].mxu0 %v914
  %v1801 = vpop.f32.mrb[0].mxu0
  %v1802 = vadd.f32 %v1513, %v1801
  %v1803 = vpop.f32.mrb[0].mxu0
  %v1804 = vpop.f32.mrb[0].mxu0
  %v1805 = vadd.f32 %v1516, %v1804
  %v1806 = vpop.f32.mrb[0].mxu0
  %1807 = vmatprep.mubr.bf16.mxu0 %v306
  %1808 = vmatmul.mubr.bf16.gmra.mrb[0].mxu0 %v915
  %v1809 = vpop.f32.mrb[0].mxu0
  %v1810 = vadd.f32 %v1521, %v1809
  %v1811 = vpop.f32.mrb[0].mxu0
  %v1812 = vpop.f32.mrb[0].mxu0
  %v1813 = vadd.f32 %v1524, %v1812
  %v1814 = vpop.f32.mrb[0].mxu0
  %1815 = vmatprep.mubr.bf16.mxu0 %v307
  %1816 = vmatmul.mubr.bf16.gmra.mrb[0].mxu0 %v916
  %v1817 = vpop.f32.mrb[0].mxu0
  %v1818 = vadd.f32 %v1529, %v1817
  %v1819 = vpop.f32.mrb[0].mxu0
  %v1820 = vpop.f32.mrb[0].mxu0
  %v1821 = vadd.f32 %v1532, %v1820
  %v1822 = vpop.f32.mrb[0].mxu0
  %1823 = vmatprep.mubr.bf16.mxu0 %v308
  %1824 = vmatmul.mubr.bf16.gmra.mrb[0].mxu0 %v917
  %v1825 = vpop.f32.mrb[0].mxu0
  %v1826 = vadd.f32 %v1537, %v1825
  %v1827 = vpop.f32.mrb[0].mxu0
  %v1828 = vpop.f32.mrb[0].mxu0
  %v1829 = vadd.f32 %v1540, %v1828
  %v1830 = vpop.f32.mrb[0].mxu0
  %1831 = vmatprep.mubr.bf16.mxu0 %v309
  %1832 = vmatmul.mubr.bf16.gmra.mrb[0].mxu0 %v918
  %v1833 = vpop.f32.mrb[0].mxu0
  %v1834 = vadd.f32 %v1545, %v1833
  %v1835 = vpop.f32.mrb[0].mxu0
  %v1836 = vpop.f32.mrb[0].mxu0
  %v1837 = vadd.f32 %v1548, %v1836
  %v1838 = vpop.f32.mrb[0].mxu0
  %1839 = vmatprep.mubr.bf16.mxu0 %v310
  %1840 = vmatmul.mubr.bf16.gmra.mrb[0].mxu0 %v919
  %v1841 = vpop.f32.mrb[0].mxu0
  %v1842 = vadd.f32 %v1553, %v1841
  %v1843 = vpop.f32.mrb[0].mxu0
  %v1844 = vpop.f32.mrb[0].mxu0
  %v1845 = vadd.f32 %v1556, %v1844
  %v1846 = vpop.f32.mrb[0].mxu0
  %1847 = vmatprep.mubr.bf16.mxu0 %v311
  %1848 = vmatmul.mubr.bf16.gmra.mrb[0].mxu0 %v920
  %v1849 = vpop.f32.mrb[0].mxu0
  %v1850 = vadd.f32 %v1561, %v1849
  %v1851 = vpop.f32.mrb[0].mxu0
  %v1852 = vpop.f32.mrb[0].mxu0
  %v1853 = vadd.f32 %v1564, %v1852
  %v1854 = vpop.f32.mrb[0].mxu0
  %1855 = vmatprep.mubr.bf16.mxu0 %v312
  %1856 = vmatmul.mubr.bf16.gmra.mrb[0].mxu0 %v921
  %v1857 = vpop.f32.mrb[0].mxu0
  %v1858 = vadd.f32 %v1569, %v1857
  %v1859 = vpop.f32.mrb[0].mxu0
  %v1860 = vpop.f32.mrb[0].mxu0
  %v1861 = vadd.f32 %v1572, %v1860
  %v1862 = vpop.f32.mrb[0].mxu0
  %1863 = vmatprep.mubr.bf16.mxu0 %v313
  %1864 = vmatmul.mubr.bf16.gmra.mrb[0].mxu0 %v922
  %v1865 = vpop.f32.mrb[0].mxu0
  %v1866 = vadd.f32 %v1577, %v1865
  %v1867 = vpop.f32.mrb[0].mxu0
  %v1868 = vpop.f32.mrb[0].mxu0
  %v1869 = vadd.f32 %v1580, %v1868
  %v1870 = vpop.f32.mrb[0].mxu0
  %1871 = vmatprep.mubr.bf16.mxu0 %v314
  %1872 = vmatmul.mubr.bf16.gmra.mrb[0].mxu0 %v923
  %v1873 = vpop.f32.mrb[0].mxu0
  %v1874 = vadd.f32 %v1585, %v1873
  %v1875 = vpop.f32.mrb[0].mxu0
  %v1876 = vpop.f32.mrb[0].mxu0
  %v1877 = vadd.f32 %v1588, %v1876
  %v1878 = vpop.f32.mrb[0].mxu0
  %1879 = vmatprep.mubr.bf16.mxu0 %v315
  %1880 = vmatmul.mubr.bf16.gmra.mrb[0].mxu0 %v924
  %v1881 = vpop.f32.mrb[0].mxu0
  %v1882 = vadd.f32 %v1593, %v1881
  %v1883 = vpop.f32.mrb[0].mxu0
  %v1884 = vpop.f32.mrb[0].mxu0
  %v1885 = vadd.f32 %v1596, %v1884
  %v1886 = vpop.f32.mrb[0].mxu0
  %1887 = vmatprep.mubr.bf16.mxu0 %v316
  %1888 = vmatmul.mubr.bf16.gmra.mrb[0].mxu0 %v925
  %v1889 = vpop.f32.mrb[0].mxu0
  %v1890 = vadd.f32 %v1601, %v1889
  %v1891 = vpop.f32.mrb[0].mxu0
  %v1892 = vpop.f32.mrb[0].mxu0
  %v1893 = vadd.f32 %v1604, %v1892
  %v1894 = vpop.f32.mrb[0].mxu0
  %1895 = vmatprep.mubr.bf16.mxu0 %v317
  %1896 = vmatmul.mubr.bf16.gmra.mrb[0].mxu0 %v926
  %v1897 = vpop.f32.mrb[0].mxu0
  %v1898 = vadd.f32 %v1609, %v1897
  %v1899 = vpop.f32.mrb[0].mxu0
  %v1900 = vpop.f32.mrb[0].mxu0
  %v1901 = vadd.f32 %v1612, %v1900
  %v1902 = vpop.f32.mrb[0].mxu0
  %1903 = vmatprep.mubr.bf16.mxu0 %v944
  %1904 = vmatmul.mubr.bf16.gmra.mrb[0].mxu0 %v927
  %v1905 = vpop.f32.mrb[0].mxu0
  %v1906 = vadd.f32 %v1617, %v1905
  %v1907 = vpop.f32.mrb[0].mxu0
  %v1908 = vpop.f32.mrb[0].mxu0
  %v1909 = vadd.f32 %v1620, %v1908
  %v1910 = vpop.f32.mrb[0].mxu0
  %1911 = vmatprep.mubr.bf16.mxu0 %v319
  %1912 = vmatmul.mubr.bf16.gmra.mrb[0].mxu0 %v928
  %v1913 = vpop.f32.mrb[0].mxu0
  %v1914 = vadd.f32 %v1625, %v1913
  %v1915 = vpop.f32.mrb[0].mxu0
  %v1916 = vpop.f32.mrb[0].mxu0
  %v1917 = vadd.f32 %v1628, %v1916
  %v1918 = vpop.f32.mrb[0].mxu0
  %1919 = vmatprep.mubr.bf16.mxu0 %v320
  %1920 = vmatmul.mubr.bf16.gmra.mrb[0].mxu0 %v929
  %v1921 = vpop.f32.mrb[0].mxu0
  %v1922 = vadd.f32 %v1633, %v1921
  %v1923 = vpop.f32.mrb[0].mxu0
  %v1924 = vpop.f32.mrb[0].mxu0
  %v1925 = vadd.f32 %v1636, %v1924
  %v1926 = vpop.f32.mrb[0].mxu0
  %1927 = vmatprep.mubr.bf16.mxu0 %v321
  %1928 = vmatmul.mubr.bf16.gmra.mrb[0].mxu0 %v930
  %v1929 = vpop.f32.mrb[0].mxu0
  %v1930 = vadd.f32 %v1641, %v1929
  %v1931 = vpop.f32.mrb[0].mxu0
  %v1932 = vpop.f32.mrb[0].mxu0
  %v1933 = vadd.f32 %v1644, %v1932
  %v1934 = vpop.f32.mrb[0].mxu0
  %1935 = vmatprep.mubr.bf16.mxu0 %v322
  %1936 = vmatmul.mubr.bf16.gmra.mrb[0].mxu0 %v931
  %v1937 = vpop.f32.mrb[0].mxu0
  %v1938 = vadd.f32 %v1649, %v1937
  %v1939 = vpop.f32.mrb[0].mxu0
  %v1940 = vpop.f32.mrb[0].mxu0
  %v1941 = vadd.f32 %v1652, %v1940
  %v1942 = vpop.f32.mrb[0].mxu0
  %1943 = vmatprep.mubr.bf16.mxu0 %v323
  %1944 = vmatmul.mubr.bf16.gmra.mrb[0].mxu0 %v932
  %v1945 = vpop.f32.mrb[0].mxu0
  %v1946 = vadd.f32 %v1657, %v1945
  %v1947 = vpop.f32.mrb[0].mxu0
  %v1948 = vpop.f32.mrb[0].mxu0
  %v1949 = vadd.f32 %v1660, %v1948
  %v1950 = vpop.f32.mrb[0].mxu0
  %1951 = vmatprep.mubr.bf16.mxu0 %v324
  %1952 = vmatmul.mubr.bf16.gmra.mrb[0].mxu0 %v933
  %v1953 = vpop.f32.mrb[0].mxu0
  %v1954 = vadd.f32 %v1665, %v1953
  %v1955 = vpop.f32.mrb[0].mxu0
  %v1956 = vpop.f32.mrb[0].mxu0
  %v1957 = vadd.f32 %v1668, %v1956
  %v1958 = vpop.f32.mrb[0].mxu0
  %1959 = vmatprep.mubr.bf16.mxu0 %v325
  %1960 = vmatmul.mubr.bf16.gmra.mrb[0].mxu0 %v934
  %v1961 = vpop.f32.mrb[0].mxu0
  %v1962 = vadd.f32 %v1673, %v1961
  %v1963 = vpop.f32.mrb[0].mxu0
  %v1964 = vpop.f32.mrb[0].mxu0
  %v1965 = vadd.f32 %v1676, %v1964
  %v1966 = vpop.f32.mrb[0].mxu0
  %1967 = vmatprep.mubr.bf16.mxu0 %v326
  %1968 = vmatmul.mubr.bf16.gmra.mrb[0].mxu0 %v935
  %v1969 = vpop.f32.mrb[0].mxu0
  %v1970 = vadd.f32 %v1681, %v1969
  %v1971 = vpop.f32.mrb[0].mxu0
  %v1972 = vpop.f32.mrb[0].mxu0
  %v1973 = vadd.f32 %v1684, %v1972
  %v1974 = vpop.f32.mrb[0].mxu0
  %1975 = vmatprep.mubr.bf16.mxu0 %v327
  %1976 = vmatmul.mubr.bf16.gmra.mrb[0].mxu0 %v936
  %v1977 = vpop.f32.mrb[0].mxu0
  %v1978 = vadd.f32 %v1689, %v1977
  %v1979 = vpop.f32.mrb[0].mxu0
  %v1980 = vpop.f32.mrb[0].mxu0
  %v1981 = vadd.f32 %v1692, %v1980
  %v1982 = vpop.f32.mrb[0].mxu0
  %1983 = vmatprep.mubr.bf16.mxu0 %v328
  %1984 = vmatmul.mubr.bf16.gmra.mrb[0].mxu0 %v937
  %v1985 = vpop.f32.mrb[0].mxu0
  %v1986 = vadd.f32 %v1697, %v1985
  %v1987 = vpop.f32.mrb[0].mxu0
  %v1988 = vpop.f32.mrb[0].mxu0
  %v1989 = vadd.f32 %v1700, %v1988
  %v1990 = vpop.f32.mrb[0].mxu0
  %1991 = vmatprep.mubr.bf16.mxu0 %v329
  %1992 = vmatmul.mubr.bf16.gmra.mrb[0].mxu0 %v938
  %v1993 = vpop.f32.mrb[0].mxu0
  %v1994 = vadd.f32 %v1705, %v1993
  %v1995 = vpop.f32.mrb[0].mxu0
  %v1996 = vpop.f32.mrb[0].mxu0
  %v1997 = vadd.f32 %v1708, %v1996
  %v1998 = vpop.f32.mrb[0].mxu0
  %1999 = vmatprep.mubr.bf16.mxu0 %v330
  %2000 = vmatmul.mubr.bf16.gmra.mrb[0].mxu0 %v939
  %v2001 = vpop.f32.mrb[0].mxu0
  %v2002 = vadd.f32 %v1713, %v2001
  %v2003 = vpop.f32.mrb[0].mxu0
  %v2004 = vpop.f32.mrb[0].mxu0
  %v2005 = vadd.f32 %v1716, %v2004
  %v2006 = vpop.f32.mrb[0].mxu0
  %2007 = vmatprep.mubr.bf16.mxu0 %v331
  %2008 = vmatmul.mubr.bf16.gmra.mrb[0].mxu0 %v940
  %v2009 = vpop.f32.mrb[0].mxu0
  %v2010 = vadd.f32 %v1721, %v2009
  %v2011 = vpop.f32.mrb[0].mxu0
  %v2012 = vpop.f32.mrb[0].mxu0
  %v2013 = vadd.f32 %v1724, %v2012
  %v2014 = vpop.f32.mrb[0].mxu0
  %2015 = vmatprep.mubr.bf16.mxu0 %v332
  %2016 = vmatmul.mubr.bf16.gmra.mrb[0].mxu0 %v941
  %v2017 = vpop.f32.mrb[0].mxu0
  %v2018 = vadd.f32 %v1729, %v2017
  %v2019 = vpop.f32.mrb[0].mxu0
  %v2020 = vpop.f32.mrb[0].mxu0
  %v2021 = vadd.f32 %v1732, %v2020
  %v2022 = vpop.f32.mrb[0].mxu0
  %2023 = vmatprep.mubr.bf16.mxu0 %v333
  %2024 = vmatmul.mubr.bf16.gmra.mrb[0].mxu0 %v942
  %v2025 = vpop.f32.mrb[0].mxu0
  %v2026 = vadd.f32 %v1737, %v2025
  %v2027 = vpop.f32.mrb[0].mxu0
  %v2028 = vpop.f32.mrb[0].mxu0
  %v2029 = vadd.f32 %v1740, %v2028
  %v2030 = vpop.f32.mrb[0].mxu0
  %2031 = vmatprep.mubr.bf16.mxu0 %v945
  %2032 = vmatmul.mubr.bf16.gmra.mrb[0].mxu0 %v943
  %v2033 = vpop.f32.mrb[0].mxu0
  %v2034 = vadd.f32 %v1745, %v2033
  %v2035 = vpop.f32.mrb[0].mxu0
  %v2036 = vpop.f32.mrb[0].mxu0
  %v2037 = vadd.f32 %v1748, %v2036
  %v2038 = vpop.f32.mrb[0].mxu0
  %2039 = vdwg.mxu0
  %2040 = vmatprep.subr.bf16.mxu0 0
  %2041 = vmatpush1.bf16.msra.mxu0 %v1350
  %2042 = vmatprep.subr.bf16.mxu0 0
  %2043 = vmatpush1.bf16.msra.mxu0 %v1351
  %2044 = vmatprep.subr.bf16.mxu0 0
  %2045 = vmatpush1.bf16.msra.mxu0 %v1352
  %2046 = vmatprep.subr.bf16.mxu0 0
  %2047 = vmatpush1.bf16.msra.mxu0 %v1353
  %2048 = vmatprep.subr.bf16.mxu0 0
  %2049 = vmatpush1.bf16.msra.mxu0 %v1354
  %2050 = vmatprep.subr.bf16.mxu0 0
  %2051 = vmatpush1.bf16.msra.mxu0 %v1355
  %2052 = vmatprep.subr.bf16.mxu0 0
  %2053 = vmatpush1.bf16.msra.mxu0 %v1356
  %2054 = vmatprep.subr.bf16.mxu0 0
  %2055 = vmatpush1.bf16.msra.mxu0 %v1357
  %2056 = vmatprep.subr.bf16.mxu0 0
  %2057 = vmatpush1.bf16.msra.mxu0 %v1358
  %2058 = vmatprep.subr.bf16.mxu0 0
  %2059 = vmatpush1.bf16.msra.mxu0 %v1359
  %2060 = vmatprep.subr.bf16.mxu0 0
  %2061 = vmatpush1.bf16.msra.mxu0 %v1360
  %2062 = vmatprep.subr.bf16.mxu0 0
  %2063 = vmatpush1.bf16.msra.mxu0 %v1361
  %2064 = vmatprep.subr.bf16.mxu0 0
  %2065 = vmatpush1.bf16.msra.mxu0 %v1362
  %2066 = vmatprep.subr.bf16.mxu0 0
  %2067 = vmatpush1.bf16.msra.mxu0 %v1363
  %2068 = vmatprep.subr.bf16.mxu0 0
  %2069 = vmatpush1.bf16.msra.mxu0 %v1364
  %2070 = vmatprep.subr.bf16.mxu0 0
  %2071 = vmatpush1.bf16.msra.mxu0 %v1365
  %2072 = vmatprep.mubr.bf16.mxu0 %v913
  %2073 = vmatmul.mubr.bf16.gmra.mrb[0].mxu0 %v656
  %v2074 = vpop.f32.mrb[0].mxu0
  %v2075 = vadd.f32 %v1786, %v2074
  %v2076 = vpop.f32.mrb[0].mxu0
  %v2077 = vpop.f32.mrb[0].mxu0
  %v2078 = vadd.f32 %v1789, %v2077
  %v2079 = vpop.f32.mrb[0].mxu0
  %2080 = vmatprep.mubr.bf16.mxu0 %v914
  %2081 = vmatmul.mubr.bf16.gmra.mrb[0].mxu0 %v657
  %v2082 = vpop.f32.mrb[0].mxu0
  %v2083 = vadd.f32 %v1794, %v2082
  %v2084 = vpop.f32.mrb[0].mxu0
  %v2085 = vpop.f32.mrb[0].mxu0
  %v2086 = vadd.f32 %v1797, %v2085
  %v2087 = vpop.f32.mrb[0].mxu0
  %2088 = vmatprep.mubr.bf16.mxu0 %v915
  %2089 = vmatmul.mubr.bf16.gmra.mrb[0].mxu0 %v658
  %v2090 = vpop.f32.mrb[0].mxu0
  %v2091 = vadd.f32 %v1802, %v2090
  %v2092 = vpop.f32.mrb[0].mxu0
  %v2093 = vpop.f32.mrb[0].mxu0
  %v2094 = vadd.f32 %v1805, %v2093
  %v2095 = vpop.f32.mrb[0].mxu0
  %2096 = vmatprep.mubr.bf16.mxu0 %v916
  %2097 = vmatmul.mubr.bf16.gmra.mrb[0].mxu0 %v659
  %v2098 = vpop.f32.mrb[0].mxu0
  %v2099 = vadd.f32 %v1810, %v2098
  %v2100 = vpop.f32.mrb[0].mxu0
  %v2101 = vpop.f32.mrb[0].mxu0
  %v2102 = vadd.f32 %v1813, %v2101
  %v2103 = vpop.f32.mrb[0].mxu0
  %2104 = vmatprep.mubr.bf16.mxu0 %v917
  %2105 = vmatmul.mubr.bf16.gmra.mrb[0].mxu0 %v660
  %v2106 = vpop.f32.mrb[0].mxu0
  %v2107 = vadd.f32 %v1818, %v2106
  %v2108 = vpop.f32.mrb[0].mxu0
  %v2109 = vpop.f32.mrb[0].mxu0
  %v2110 = vadd.f32 %v1821, %v2109
  %v2111 = vpop.f32.mrb[0].mxu0
  %2112 = vmatprep.mubr.bf16.mxu0 %v918
  %2113 = vmatmul.mubr.bf16.gmra.mrb[0].mxu0 %v661
  %v2114 = vpop.f32.mrb[0].mxu0
  %v2115 = vadd.f32 %v1826, %v2114
  %v2116 = vpop.f32.mrb[0].mxu0
  %v2117 = vpop.f32.mrb[0].mxu0
  %v2118 = vadd.f32 %v1829, %v2117
  %v2119 = vpop.f32.mrb[0].mxu0
  %2120 = vmatprep.mubr.bf16.mxu0 %v919
  %2121 = vmatmul.mubr.bf16.gmra.mrb[0].mxu0 %v662
  %v2122 = vpop.f32.mrb[0].mxu0
  %v2123 = vadd.f32 %v1834, %v2122
  %v2124 = vpop.f32.mrb[0].mxu0
  %v2125 = vpop.f32.mrb[0].mxu0
  %v2126 = vadd.f32 %v1837, %v2125
  %v2127 = vpop.f32.mrb[0].mxu0
  %2128 = vmatprep.mubr.bf16.mxu0 %v920
  %2129 = vmatmul.mubr.bf16.gmra.mrb[0].mxu0 %v663
  %v2130 = vpop.f32.mrb[0].mxu0
  %v2131 = vadd.f32 %v1842, %v2130
  %v2132 = vpop.f32.mrb[0].mxu0
  %v2133 = vpop.f32.mrb[0].mxu0
  %v2134 = vadd.f32 %v1845, %v2133
  %v2135 = vpop.f32.mrb[0].mxu0
  %2136 = vmatprep.mubr.bf16.mxu0 %v921
  %2137 = vmatmul.mubr.bf16.gmra.mrb[0].mxu0 %v664
  %v2138 = vpop.f32.mrb[0].mxu0
  %v2139 = vadd.f32 %v1850, %v2138
  %v2140 = vpop.f32.mrb[0].mxu0
  %v2141 = vpop.f32.mrb[0].mxu0
  %v2142 = vadd.f32 %v1853, %v2141
  %v2143 = vpop.f32.mrb[0].mxu0
  %2144 = vmatprep.mubr.bf16.mxu0 %v922
  %2145 = vmatmul.mubr.bf16.gmra.mrb[0].mxu0 %v665
  %v2146 = vpop.f32.mrb[0].mxu0
  %v2147 = vadd.f32 %v1858, %v2146
  %v2148 = vpop.f32.mrb[0].mxu0
  %v2149 = vpop.f32.mrb[0].mxu0
  %v2150 = vadd.f32 %v1861, %v2149
  %v2151 = vpop.f32.mrb[0].mxu0
  %2152 = vmatprep.mubr.bf16.mxu0 %v923
  %2153 = vmatmul.mubr.bf16.gmra.mrb[0].mxu0 %v666
  %v2154 = vpop.f32.mrb[0].mxu0
  %v2155 = vadd.f32 %v1866, %v2154
  %v2156 = vpop.f32.mrb[0].mxu0
  %v2157 = vpop.f32.mrb[0].mxu0
  %v2158 = vadd.f32 %v1869, %v2157
  %v2159 = vpop.f32.mrb[0].mxu0
  %2160 = vmatprep.mubr.bf16.mxu0 %v924
  %2161 = vmatmul.mubr.bf16.gmra.mrb[0].mxu0 %v667
  %v2162 = vpop.f32.mrb[0].mxu0
  %v2163 = vadd.f32 %v1874, %v2162
  %v2164 = vpop.f32.mrb[0].mxu0
  %v2165 = vpop.f32.mrb[0].mxu0
  %v2166 = vadd.f32 %v1877, %v2165
  %v2167 = vpop.f32.mrb[0].mxu0
  %2168 = vmatprep.mubr.bf16.mxu0 %v925
  %2169 = vmatmul.mubr.bf16.gmra.mrb[0].mxu0 %v668
  %v2170 = vpop.f32.mrb[0].mxu0
  %v2171 = vadd.f32 %v1882, %v2170
  %v2172 = vpop.f32.mrb[0].mxu0
  %v2173 = vpop.f32.mrb[0].mxu0
  %v2174 = vadd.f32 %v1885, %v2173
  %v2175 = vpop.f32.mrb[0].mxu0
  %2176 = vmatprep.mubr.bf16.mxu0 %v926
  %2177 = vmatmul.mubr.bf16.gmra.mrb[0].mxu0 %v669
  %v2178 = vpop.f32.mrb[0].mxu0
  %v2179 = vadd.f32 %v1890, %v2178
  %v2180 = vpop.f32.mrb[0].mxu0
  %v2181 = vpop.f32.mrb[0].mxu0
  %v2182 = vadd.f32 %v1893, %v2181
  %v2183 = vpop.f32.mrb[0].mxu0
  %2184 = vmatprep.mubr.bf16.mxu0 %v927
  %2185 = vmatmul.mubr.bf16.gmra.mrb[0].mxu0 %v670
  %v2186 = vpop.f32.mrb[0].mxu0
  %v2187 = vadd.f32 %v1898, %v2186
  %v2188 = vpop.f32.mrb[0].mxu0
  %v2189 = vpop.f32.mrb[0].mxu0
  %v2190 = vadd.f32 %v1901, %v2189
  %v2191 = vpop.f32.mrb[0].mxu0
  %2192 = vmatprep.mubr.bf16.mxu0 %v982
  %2193 = vmatmul.mubr.bf16.gmra.mrb[0].mxu0 %v966
  %v2194 = vpop.f32.mrb[0].mxu0
  %v2195 = vadd.f32 %v1906, %v2194
  %v2196 = vpop.f32.mrb[0].mxu0
  %v2197 = vpop.f32.mrb[0].mxu0
  %v2198 = vadd.f32 %v1909, %v2197
  %v2199 = vpop.f32.mrb[0].mxu0
  %2200 = vmatprep.mubr.bf16.mxu0 %v929
  %2201 = vmatmul.mubr.bf16.gmra.mrb[0].mxu0 %v672
  %v2202 = vpop.f32.mrb[0].mxu0
  %v2203 = vadd.f32 %v1914, %v2202
  %v2204 = vpop.f32.mrb[0].mxu0
  %v2205 = vpop.f32.mrb[0].mxu0
  %v2206 = vadd.f32 %v1917, %v2205
  %v2207 = vpop.f32.mrb[0].mxu0
  %2208 = vmatprep.mubr.bf16.mxu0 %v930
  %2209 = vmatmul.mubr.bf16.gmra.mrb[0].mxu0 %v673
  %v2210 = vpop.f32.mrb[0].mxu0
  %v2211 = vadd.f32 %v1922, %v2210
  %v2212 = vpop.f32.mrb[0].mxu0
  %v2213 = vpop.f32.mrb[0].mxu0
  %v2214 = vadd.f32 %v1925, %v2213
  %v2215 = vpop.f32.mrb[0].mxu0
  %2216 = vmatprep.mubr.bf16.mxu0 %v931
  %2217 = vmatmul.mubr.bf16.gmra.mrb[0].mxu0 %v674
  %v2218 = vpop.f32.mrb[0].mxu0
  %v2219 = vadd.f32 %v1930, %v2218
  %v2220 = vpop.f32.mrb[0].mxu0
  %v2221 = vpop.f32.mrb[0].mxu0
  %v2222 = vadd.f32 %v1933, %v2221
  %v2223 = vpop.f32.mrb[0].mxu0
  %2224 = vmatprep.mubr.bf16.mxu0 %v932
  %2225 = vmatmul.mubr.bf16.gmra.mrb[0].mxu0 %v675
  %v2226 = vpop.f32.mrb[0].mxu0
  %v2227 = vadd.f32 %v1938, %v2226
  %v2228 = vpop.f32.mrb[0].mxu0
  %v2229 = vpop.f32.mrb[0].mxu0
  %v2230 = vadd.f32 %v1941, %v2229
  %v2231 = vpop.f32.mrb[0].mxu0
  %2232 = vmatprep.mubr.bf16.mxu0 %v933
  %2233 = vmatmul.mubr.bf16.gmra.mrb[0].mxu0 %v676
  %v2234 = vpop.f32.mrb[0].mxu0
  %v2235 = vadd.f32 %v1946, %v2234
  %v2236 = vpop.f32.mrb[0].mxu0
  %v2237 = vpop.f32.mrb[0].mxu0
  %v2238 = vadd.f32 %v1949, %v2237
  %v2239 = vpop.f32.mrb[0].mxu0
  %2240 = vmatprep.mubr.bf16.mxu0 %v934
  %2241 = vmatmul.mubr.bf16.gmra.mrb[0].mxu0 %v677
  %v2242 = vpop.f32.mrb[0].mxu0
  %v2243 = vadd.f32 %v1954, %v2242
  %v2244 = vpop.f32.mrb[0].mxu0
  %v2245 = vpop.f32.mrb[0].mxu0
  %v2246 = vadd.f32 %v1957, %v2245
  %v2247 = vpop.f32.mrb[0].mxu0
  %2248 = vmatprep.mubr.bf16.mxu0 %v935
  %2249 = vmatmul.mubr.bf16.gmra.mrb[0].mxu0 %v678
  %v2250 = vpop.f32.mrb[0].mxu0
  %v2251 = vadd.f32 %v1962, %v2250
  %v2252 = vpop.f32.mrb[0].mxu0
  %v2253 = vpop.f32.mrb[0].mxu0
  %v2254 = vadd.f32 %v1965, %v2253
  %v2255 = vpop.f32.mrb[0].mxu0
  %2256 = vmatprep.mubr.bf16.mxu0 %v936
  %2257 = vmatmul.mubr.bf16.gmra.mrb[0].mxu0 %v679
  %v2258 = vpop.f32.mrb[0].mxu0
  %v2259 = vadd.f32 %v1970, %v2258
  %v2260 = vpop.f32.mrb[0].mxu0
  %v2261 = vpop.f32.mrb[0].mxu0
  %v2262 = vadd.f32 %v1973, %v2261
  %v2263 = vpop.f32.mrb[0].mxu0
  %2264 = vmatprep.mubr.bf16.mxu0 %v937
  %2265 = vmatmul.mubr.bf16.gmra.mrb[0].mxu0 %v680
  %v2266 = vpop.f32.mrb[0].mxu0
  %v2267 = vadd.f32 %v1978, %v2266
  %v2268 = vpop.f32.mrb[0].mxu0
  %v2269 = vpop.f32.mrb[0].mxu0
  %v2270 = vadd.f32 %v1981, %v2269
  %v2271 = vpop.f32.mrb[0].mxu0
  %2272 = vmatprep.mubr.bf16.mxu0 %v938
  %2273 = vmatmul.mubr.bf16.gmra.mrb[0].mxu0 %v681
  %v2274 = vpop.f32.mrb[0].mxu0
  %v2275 = vadd.f32 %v1986, %v2274
  %v2276 = vpop.f32.mrb[0].mxu0
  %v2277 = vpop.f32.mrb[0].mxu0
  %v2278 = vadd.f32 %v1989, %v2277
  %v2279 = vpop.f32.mrb[0].mxu0
  %2280 = vmatprep.mubr.bf16.mxu0 %v939
  %2281 = vmatmul.mubr.bf16.gmra.mrb[0].mxu0 %v682
  %v2282 = vpop.f32.mrb[0].mxu0
  %v2283 = vadd.f32 %v1994, %v2282
  %v2284 = vpop.f32.mrb[0].mxu0
  %v2285 = vpop.f32.mrb[0].mxu0
  %v2286 = vadd.f32 %v1997, %v2285
  %v2287 = vpop.f32.mrb[0].mxu0
  %2288 = vmatprep.mubr.bf16.mxu0 %v940
  %2289 = vmatmul.mubr.bf16.gmra.mrb[0].mxu0 %v683
  %v2290 = vpop.f32.mrb[0].mxu0
  %v2291 = vadd.f32 %v2002, %v2290
  %v2292 = vpop.f32.mrb[0].mxu0
  %v2293 = vpop.f32.mrb[0].mxu0
  %v2294 = vadd.f32 %v2005, %v2293
  %v2295 = vpop.f32.mrb[0].mxu0
  %2296 = vmatprep.mubr.bf16.mxu0 %v941
  %2297 = vmatmul.mubr.bf16.gmra.mrb[0].mxu0 %v684
  %v2298 = vpop.f32.mrb[0].mxu0
  %v2299 = vadd.f32 %v2010, %v2298
  %v2300 = vpop.f32.mrb[0].mxu0
  %v2301 = vpop.f32.mrb[0].mxu0
  %v2302 = vadd.f32 %v2013, %v2301
  %v2303 = vpop.f32.mrb[0].mxu0
  %2304 = vmatprep.mubr.bf16.mxu0 %v942
  %2305 = vmatmul.mubr.bf16.gmra.mrb[0].mxu0 %v685
  %v2306 = vpop.f32.mrb[0].mxu0
  %v2307 = vadd.f32 %v2018, %v2306
  %v2308 = vpop.f32.mrb[0].mxu0
  %v2309 = vpop.f32.mrb[0].mxu0
  %v2310 = vadd.f32 %v2021, %v2309
  %v2311 = vpop.f32.mrb[0].mxu0
  %2312 = vmatprep.mubr.bf16.mxu0 %v943
  %2313 = vmatmul.mubr.bf16.gmra.mrb[0].mxu0 %v686
  %v2314 = vpop.f32.mrb[0].mxu0
  %v2315 = vadd.f32 %v2026, %v2314
  %v2316 = vpop.f32.mrb[0].mxu0
  %v2317 = vpop.f32.mrb[0].mxu0
  %v2318 = vadd.f32 %v2029, %v2317
  %v2319 = vpop.f32.mrb[0].mxu0
  %2320 = vmatprep.mubr.bf16.mxu0 %v983
  %2321 = vmatmul.mubr.bf16.gmra.mrb[0].mxu0 %v967
  %v2322 = vpop.f32.mrb[0].mxu0
  %v2323 = vadd.f32 %v2034, %v2322
  %v2324 = vpop.f32.mrb[0].mxu0
  %v2325 = vpop.f32.mrb[0].mxu0
  %v2326 = vadd.f32 %v2037, %v2325
  %v2327 = vpop.f32.mrb[0].mxu0
  %2328 = vdwg.mxu0
  %2329 = vmatprep.subr.bf16.mxu0 0
  %2330 = vmatpush1.bf16.msra.mxu0 %v1366
  %2331 = vmatprep.subr.bf16.mxu0 0
  %2332 = vmatpush1.bf16.msra.mxu0 %v1367
  %2333 = vmatprep.subr.bf16.mxu0 0
  %2334 = vmatpush1.bf16.msra.mxu0 %v1368
  %2335 = vmatprep.subr.bf16.mxu0 0
  %2336 = vmatpush1.bf16.msra.mxu0 %v1369
  %2337 = vmatprep.subr.bf16.mxu0 0
  %2338 = vmatpush1.bf16.msra.mxu0 %v1370
  %2339 = vmatprep.subr.bf16.mxu0 0
  %2340 = vmatpush1.bf16.msra.mxu0 %v1371
  %2341 = vmatprep.subr.bf16.mxu0 0
  %2342 = vmatpush1.bf16.msra.mxu0 %v1372
  %2343 = vmatprep.subr.bf16.mxu0 0
  %2344 = vmatpush1.bf16.msra.mxu0 %v1373
  %2345 = vmatprep.subr.bf16.mxu0 0
  %2346 = vmatpush1.bf16.msra.mxu0 %v1374
  %2347 = vmatprep.subr.bf16.mxu0 0
  %2348 = vmatpush1.bf16.msra.mxu0 %v1375
  %2349 = vmatprep.subr.bf16.mxu0 0
  %2350 = vmatpush1.bf16.msra.mxu0 %v1376
  %2351 = vmatprep.subr.bf16.mxu0 0
  %2352 = vmatpush1.bf16.msra.mxu0 %v1377
  %2353 = vmatprep.subr.bf16.mxu0 0
  %2354 = vmatpush1.bf16.msra.mxu0 %v1378
  %2355 = vmatprep.subr.bf16.mxu0 0
  %2356 = vmatpush1.bf16.msra.mxu0 %v1379
  %2357 = vmatprep.subr.bf16.mxu0 0
  %2358 = vmatpush1.bf16.msra.mxu0 %v1380
  %2359 = vmatprep.subr.bf16.mxu0 0
  %2360 = vmatpush1.bf16.msra.mxu0 %v1381
  %2361 = vmatprep.mubr.bf16.mxu0 %v657
  %2362 = vmatmul.mubr.bf16.gmra.mrb[0].mxu0 %v304
  %v2363 = vpop.f32.mrb[0].mxu0
  %v2364 = vadd.f32 %v2075, %v2363
  %v2365 = vpop.f32.mrb[0].mxu0
  %v2366 = vpop.f32.mrb[0].mxu0
  %v2367 = vadd.f32 %v2078, %v2366
  %v2368 = vpop.f32.mrb[0].mxu0
  %2369 = vmatprep.mubr.bf16.mxu0 %v658
  %2370 = vmatmul.mubr.bf16.gmra.mrb[0].mxu0 %v305
  %v2371 = vpop.f32.mrb[0].mxu0
  %v2372 = vadd.f32 %v2083, %v2371
  %v2373 = vpop.f32.mrb[0].mxu0
  %v2374 = vpop.f32.mrb[0].mxu0
  %v2375 = vadd.f32 %v2086, %v2374
  %v2376 = vpop.f32.mrb[0].mxu0
  %2377 = vmatprep.mubr.bf16.mxu0 %v659
  %2378 = vmatmul.mubr.bf16.gmra.mrb[0].mxu0 %v306
  %v2379 = vpop.f32.mrb[0].mxu0
  %v2380 = vadd.f32 %v2091, %v2379
  %v2381 = vpop.f32.mrb[0].mxu0
  %v2382 = vpop.f32.mrb[0].mxu0
  %v2383 = vadd.f32 %v2094, %v2382
  %v2384 = vpop.f32.mrb[0].mxu0
  %2385 = vmatprep.mubr.bf16.mxu0 %v660
  %2386 = vmatmul.mubr.bf16.gmra.mrb[0].mxu0 %v307
  %v2387 = vpop.f32.mrb[0].mxu0
  %v2388 = vadd.f32 %v2099, %v2387
  %v2389 = vpop.f32.mrb[0].mxu0
  %v2390 = vpop.f32.mrb[0].mxu0
  %v2391 = vadd.f32 %v2102, %v2390
  %v2392 = vpop.f32.mrb[0].mxu0
  %2393 = vmatprep.mubr.bf16.mxu0 %v661
  %2394 = vmatmul.mubr.bf16.gmra.mrb[0].mxu0 %v308
  %v2395 = vpop.f32.mrb[0].mxu0
  %v2396 = vadd.f32 %v2107, %v2395
  %v2397 = vpop.f32.mrb[0].mxu0
  %v2398 = vpop.f32.mrb[0].mxu0
  %v2399 = vadd.f32 %v2110, %v2398
  %v2400 = vpop.f32.mrb[0].mxu0
  %2401 = vmatprep.mubr.bf16.mxu0 %v662
  %2402 = vmatmul.mubr.bf16.gmra.mrb[0].mxu0 %v309
  %v2403 = vpop.f32.mrb[0].mxu0
  %v2404 = vadd.f32 %v2115, %v2403
  %v2405 = vpop.f32.mrb[0].mxu0
  %v2406 = vpop.f32.mrb[0].mxu0
  %v2407 = vadd.f32 %v2118, %v2406
  %v2408 = vpop.f32.mrb[0].mxu0
  %2409 = vmatprep.mubr.bf16.mxu0 %v663
  %2410 = vmatmul.mubr.bf16.gmra.mrb[0].mxu0 %v310
  %v2411 = vpop.f32.mrb[0].mxu0
  %v2412 = vadd.f32 %v2123, %v2411
  %v2413 = vpop.f32.mrb[0].mxu0
  %v2414 = vpop.f32.mrb[0].mxu0
  %v2415 = vadd.f32 %v2126, %v2414
  %v2416 = vpop.f32.mrb[0].mxu0
  %2417 = vmatprep.mubr.bf16.mxu0 %v664
  %2418 = vmatmul.mubr.bf16.gmra.mrb[0].mxu0 %v311
  %v2419 = vpop.f32.mrb[0].mxu0
  %v2420 = vadd.f32 %v2131, %v2419
  %v2421 = vpop.f32.mrb[0].mxu0
  %v2422 = vpop.f32.mrb[0].mxu0
  %v2423 = vadd.f32 %v2134, %v2422
  %v2424 = vpop.f32.mrb[0].mxu0
  %2425 = vmatprep.mubr.bf16.mxu0 %v665
  %2426 = vmatmul.mubr.bf16.gmra.mrb[0].mxu0 %v312
  %v2427 = vpop.f32.mrb[0].mxu0
  %v2428 = vadd.f32 %v2139, %v2427
  %v2429 = vpop.f32.mrb[0].mxu0
  %v2430 = vpop.f32.mrb[0].mxu0
  %v2431 = vadd.f32 %v2142, %v2430
  %v2432 = vpop.f32.mrb[0].mxu0
  %2433 = vmatprep.mubr.bf16.mxu0 %v666
  %2434 = vmatmul.mubr.bf16.gmra.mrb[0].mxu0 %v313
  %v2435 = vpop.f32.mrb[0].mxu0
  %v2436 = vadd.f32 %v2147, %v2435
  %v2437 = vpop.f32.mrb[0].mxu0
  %v2438 = vpop.f32.mrb[0].mxu0
  %v2439 = vadd.f32 %v2150, %v2438
  %v2440 = vpop.f32.mrb[0].mxu0
  %2441 = vmatprep.mubr.bf16.mxu0 %v667
  %2442 = vmatmul.mubr.bf16.gmra.mrb[0].mxu0 %v314
  %v2443 = vpop.f32.mrb[0].mxu0
  %v2444 = vadd.f32 %v2155, %v2443
  %v2445 = vpop.f32.mrb[0].mxu0
  %v2446 = vpop.f32.mrb[0].mxu0
  %v2447 = vadd.f32 %v2158, %v2446
  %v2448 = vpop.f32.mrb[0].mxu0
  %2449 = vmatprep.mubr.bf16.mxu0 %v668
  %2450 = vmatmul.mubr.bf16.gmra.mrb[0].mxu0 %v315
  %v2451 = vpop.f32.mrb[0].mxu0
  %v2452 = vadd.f32 %v2163, %v2451
  %v2453 = vpop.f32.mrb[0].mxu0
  %v2454 = vpop.f32.mrb[0].mxu0
  %v2455 = vadd.f32 %v2166, %v2454
  %v2456 = vpop.f32.mrb[0].mxu0
  %2457 = vmatprep.mubr.bf16.mxu0 %v669
  %2458 = vmatmul.mubr.bf16.gmra.mrb[0].mxu0 %v316
  %v2459 = vpop.f32.mrb[0].mxu0
  %v2460 = vadd.f32 %v2171, %v2459
  %v2461 = vpop.f32.mrb[0].mxu0
  %v2462 = vpop.f32.mrb[0].mxu0
  %v2463 = vadd.f32 %v2174, %v2462
  %v2464 = vpop.f32.mrb[0].mxu0
  %2465 = vmatprep.mubr.bf16.mxu0 %v670
  %2466 = vmatmul.mubr.bf16.gmra.mrb[0].mxu0 %v317
  %v2467 = vpop.f32.mrb[0].mxu0
  %v2468 = vadd.f32 %v2179, %v2467
  %v2469 = vpop.f32.mrb[0].mxu0
  %v2470 = vpop.f32.mrb[0].mxu0
  %v2471 = vadd.f32 %v2182, %v2470
  %v2472 = vpop.f32.mrb[0].mxu0
  %2473 = vmatprep.mubr.bf16.mxu0 %v966
  %2474 = vmatmul.mubr.bf16.gmra.mrb[0].mxu0 %v944
  %v2475 = vpop.f32.mrb[0].mxu0
  %v2476 = vadd.f32 %v2187, %v2475
  %v2477 = vpop.f32.mrb[0].mxu0
  %v2478 = vpop.f32.mrb[0].mxu0
  %v2479 = vadd.f32 %v2190, %v2478
  %v2480 = vpop.f32.mrb[0].mxu0
  %2481 = vmatprep.mubr.bf16.mxu0 %v1006
  %2482 = vmatmul.mubr.bf16.gmra.mrb[0].mxu0 %v984
  %v2483 = vpop.f32.mrb[0].mxu0
  %v2484 = vadd.f32 %v2195, %v2483
  %v2485 = vpop.f32.mrb[0].mxu0
  %v2486 = vpop.f32.mrb[0].mxu0
  %v2487 = vadd.f32 %v2198, %v2486
  %v2488 = vpop.f32.mrb[0].mxu0
  %2489 = vmatprep.mubr.bf16.mxu0 %v673
  %2490 = vmatmul.mubr.bf16.gmra.mrb[0].mxu0 %v320
  %v2491 = vpop.f32.mrb[0].mxu0
  %v2492 = vadd.f32 %v2203, %v2491
  %v2493 = vpop.f32.mrb[0].mxu0
  %v2494 = vpop.f32.mrb[0].mxu0
  %v2495 = vadd.f32 %v2206, %v2494
  %v2496 = vpop.f32.mrb[0].mxu0
  %2497 = vmatprep.mubr.bf16.mxu0 %v674
  %2498 = vmatmul.mubr.bf16.gmra.mrb[0].mxu0 %v321
  %v2499 = vpop.f32.mrb[0].mxu0
  %v2500 = vadd.f32 %v2211, %v2499
  %v2501 = vpop.f32.mrb[0].mxu0
  %v2502 = vpop.f32.mrb[0].mxu0
  %v2503 = vadd.f32 %v2214, %v2502
  %v2504 = vpop.f32.mrb[0].mxu0
  %2505 = vmatprep.mubr.bf16.mxu0 %v675
  %2506 = vmatmul.mubr.bf16.gmra.mrb[0].mxu0 %v322
  %v2507 = vpop.f32.mrb[0].mxu0
  %v2508 = vadd.f32 %v2219, %v2507
  %v2509 = vpop.f32.mrb[0].mxu0
  %v2510 = vpop.f32.mrb[0].mxu0
  %v2511 = vadd.f32 %v2222, %v2510
  %v2512 = vpop.f32.mrb[0].mxu0
  %2513 = vmatprep.mubr.bf16.mxu0 %v676
  %2514 = vmatmul.mubr.bf16.gmra.mrb[0].mxu0 %v323
  %v2515 = vpop.f32.mrb[0].mxu0
  %v2516 = vadd.f32 %v2227, %v2515
  %v2517 = vpop.f32.mrb[0].mxu0
  %v2518 = vpop.f32.mrb[0].mxu0
  %v2519 = vadd.f32 %v2230, %v2518
  %v2520 = vpop.f32.mrb[0].mxu0
  %2521 = vmatprep.mubr.bf16.mxu0 %v677
  %2522 = vmatmul.mubr.bf16.gmra.mrb[0].mxu0 %v324
  %v2523 = vpop.f32.mrb[0].mxu0
  %v2524 = vadd.f32 %v2235, %v2523
  %v2525 = vpop.f32.mrb[0].mxu0
  %v2526 = vpop.f32.mrb[0].mxu0
  %v2527 = vadd.f32 %v2238, %v2526
  %v2528 = vpop.f32.mrb[0].mxu0
  %2529 = vmatprep.mubr.bf16.mxu0 %v678
  %2530 = vmatmul.mubr.bf16.gmra.mrb[0].mxu0 %v325
  %v2531 = vpop.f32.mrb[0].mxu0
  %v2532 = vadd.f32 %v2243, %v2531
  %v2533 = vpop.f32.mrb[0].mxu0
  %v2534 = vpop.f32.mrb[0].mxu0
  %v2535 = vadd.f32 %v2246, %v2534
  %v2536 = vpop.f32.mrb[0].mxu0
  %2537 = vmatprep.mubr.bf16.mxu0 %v679
  %2538 = vmatmul.mubr.bf16.gmra.mrb[0].mxu0 %v326
  %v2539 = vpop.f32.mrb[0].mxu0
  %v2540 = vadd.f32 %v2251, %v2539
  %v2541 = vpop.f32.mrb[0].mxu0
  %v2542 = vpop.f32.mrb[0].mxu0
  %v2543 = vadd.f32 %v2254, %v2542
  %v2544 = vpop.f32.mrb[0].mxu0
  %2545 = vmatprep.mubr.bf16.mxu0 %v680
  %2546 = vmatmul.mubr.bf16.gmra.mrb[0].mxu0 %v327
  %v2547 = vpop.f32.mrb[0].mxu0
  %v2548 = vadd.f32 %v2259, %v2547
  %v2549 = vpop.f32.mrb[0].mxu0
  %v2550 = vpop.f32.mrb[0].mxu0
  %v2551 = vadd.f32 %v2262, %v2550
  %v2552 = vpop.f32.mrb[0].mxu0
  %2553 = vmatprep.mubr.bf16.mxu0 %v681
  %2554 = vmatmul.mubr.bf16.gmra.mrb[0].mxu0 %v328
  %v2555 = vpop.f32.mrb[0].mxu0
  %v2556 = vadd.f32 %v2267, %v2555
  %v2557 = vpop.f32.mrb[0].mxu0
  %v2558 = vpop.f32.mrb[0].mxu0
  %v2559 = vadd.f32 %v2270, %v2558
  %v2560 = vpop.f32.mrb[0].mxu0
  %2561 = vmatprep.mubr.bf16.mxu0 %v682
  %2562 = vmatmul.mubr.bf16.gmra.mrb[0].mxu0 %v329
  %v2563 = vpop.f32.mrb[0].mxu0
  %v2564 = vadd.f32 %v2275, %v2563
  %v2565 = vpop.f32.mrb[0].mxu0
  %v2566 = vpop.f32.mrb[0].mxu0
  %v2567 = vadd.f32 %v2278, %v2566
  %v2568 = vpop.f32.mrb[0].mxu0
  %2569 = vmatprep.mubr.bf16.mxu0 %v683
  %2570 = vmatmul.mubr.bf16.gmra.mrb[0].mxu0 %v330
  %v2571 = vpop.f32.mrb[0].mxu0
  %v2572 = vadd.f32 %v2283, %v2571
  %v2573 = vpop.f32.mrb[0].mxu0
  %v2574 = vpop.f32.mrb[0].mxu0
  %v2575 = vadd.f32 %v2286, %v2574
  %v2576 = vpop.f32.mrb[0].mxu0
  %2577 = vmatprep.mubr.bf16.mxu0 %v684
  %2578 = vmatmul.mubr.bf16.gmra.mrb[0].mxu0 %v331
  %v2579 = vpop.f32.mrb[0].mxu0
  %v2580 = vadd.f32 %v2291, %v2579
  %v2581 = vpop.f32.mrb[0].mxu0
  %v2582 = vpop.f32.mrb[0].mxu0
  %v2583 = vadd.f32 %v2294, %v2582
  %v2584 = vpop.f32.mrb[0].mxu0
  %2585 = vmatprep.mubr.bf16.mxu0 %v685
  %2586 = vmatmul.mubr.bf16.gmra.mrb[0].mxu0 %v332
  %v2587 = vpop.f32.mrb[0].mxu0
  %v2588 = vadd.f32 %v2299, %v2587
  %v2589 = vpop.f32.mrb[0].mxu0
  %v2590 = vpop.f32.mrb[0].mxu0
  %v2591 = vadd.f32 %v2302, %v2590
  %v2592 = vpop.f32.mrb[0].mxu0
  %2593 = vmatprep.mubr.bf16.mxu0 %v686
  %2594 = vmatmul.mubr.bf16.gmra.mrb[0].mxu0 %v333
  %v2595 = vpop.f32.mrb[0].mxu0
  %v2596 = vadd.f32 %v2307, %v2595
  %v2597 = vpop.f32.mrb[0].mxu0
  %v2598 = vpop.f32.mrb[0].mxu0
  %v2599 = vadd.f32 %v2310, %v2598
  %v2600 = vpop.f32.mrb[0].mxu0
  %2601 = vmatprep.mubr.bf16.mxu0 %v967
  %2602 = vmatmul.mubr.bf16.gmra.mrb[0].mxu0 %v945
  %v2603 = vpop.f32.mrb[0].mxu0
  %v2604 = vadd.f32 %v2315, %v2603
  %v2605 = vpop.f32.mrb[0].mxu0
  %v2606 = vpop.f32.mrb[0].mxu0
  %v2607 = vadd.f32 %v2318, %v2606
  %v2608 = vpop.f32.mrb[0].mxu0
  %2609 = vmatprep.mubr.bf16.mxu0 %v1007
  %2610 = vmatmul.mubr.bf16.gmra.mrb[0].mxu0 %v985
  %v2611 = vpop.f32.mrb[0].mxu0
  %v2612 = vadd.f32 %v2323, %v2611
  %v2613 = vpop.f32.mrb[0].mxu0
  %v2614 = vpop.f32.mrb[0].mxu0
  %v2615 = vadd.f32 %v2326, %v2614
  %v2616 = vpop.f32.mrb[0].mxu0
  %2617 = vdwg.mxu0
  %2618 = vmatprep.subr.bf16.mxu0 0
  %2619 = vmatpush1.bf16.msra.mxu0 %v1382
  %2620 = vmatprep.subr.bf16.mxu0 0
  %2621 = vmatpush1.bf16.msra.mxu0 %v1383
  %2622 = vmatprep.subr.bf16.mxu0 0
  %2623 = vmatpush1.bf16.msra.mxu0 %v1384
  %2624 = vmatprep.subr.bf16.mxu0 0
  %2625 = vmatpush1.bf16.msra.mxu0 %v1385
  %2626 = vmatprep.subr.bf16.mxu0 0
  %2627 = vmatpush1.bf16.msra.mxu0 %v1386
  %2628 = vmatprep.subr.bf16.mxu0 0
  %2629 = vmatpush1.bf16.msra.mxu0 %v1387
  %2630 = vmatprep.subr.bf16.mxu0 0
  %2631 = vmatpush1.bf16.msra.mxu0 %v1388
  %2632 = vmatprep.subr.bf16.mxu0 0
  %2633 = vmatpush1.bf16.msra.mxu0 %v1389
  %2634 = vmatprep.subr.bf16.mxu0 0
  %2635 = vmatpush1.bf16.msra.mxu0 0
  %2636 = vmatprep.subr.bf16.mxu0 0
  %2637 = vmatpush1.bf16.msra.mxu0 0
  %2638 = vmatprep.subr.bf16.mxu0 0
  %2639 = vmatpush1.bf16.msra.mxu0 0
  %2640 = vmatprep.subr.bf16.mxu0 0
  %2641 = vmatpush1.bf16.msra.mxu0 0
  %2642 = vmatprep.subr.bf16.mxu0 0
  %2643 = vmatpush1.bf16.msra.mxu0 0
  %2644 = vmatprep.subr.bf16.mxu0 0
  %2645 = vmatpush1.bf16.msra.mxu0 0
  %2646 = vmatprep.subr.bf16.mxu0 0
  %2647 = vmatpush1.bf16.msra.mxu0 0
  %2648 = vmatprep.subr.bf16.mxu0 0
  %2649 = vmatpush1.bf16.msra.mxu0 0
  %2650 = vmatprep.mubr.bf16.mxu0 0
  %2651 = vmatmul.mubr.bf16.gmra.mrb[0].mxu0 %v914
  %v2652 = vpop.f32.mrb[0].mxu0
  %v2653 = vadd.f32 %v2364, %v2652
  %v2654 = vpop.f32.mrb[0].mxu0
  %v2655 = vpop.f32.mrb[0].mxu0
  %v2656 = vadd.f32 %v2367, %v2655
  %v2657 = vpop.f32.mrb[0].mxu0
  %2658 = vmatprep.mubr.bf16.mxu0 0
  %2659 = vmatmul.mubr.bf16.gmra.mrb[0].mxu0 %v915
  %v2660 = vpop.f32.mrb[0].mxu0
  %v2661 = vadd.f32 %v2372, %v2660
  %v2662 = vpop.f32.mrb[0].mxu0
  %v2663 = vpop.f32.mrb[0].mxu0
  %v2664 = vadd.f32 %v2375, %v2663
  %v2665 = vpop.f32.mrb[0].mxu0
  %2666 = vmatprep.mubr.bf16.mxu0 0
  %2667 = vmatmul.mubr.bf16.gmra.mrb[0].mxu0 %v916
  %v2668 = vpop.f32.mrb[0].mxu0
  %v2669 = vadd.f32 %v2380, %v2668
  %v2670 = vpop.f32.mrb[0].mxu0
  %v2671 = vpop.f32.mrb[0].mxu0
  %v2672 = vadd.f32 %v2383, %v2671
  %v2673 = vpop.f32.mrb[0].mxu0
  %2674 = vmatprep.mubr.bf16.mxu0 0
  %2675 = vmatmul.mubr.bf16.gmra.mrb[0].mxu0 %v917
  %v2676 = vpop.f32.mrb[0].mxu0
  %v2677 = vadd.f32 %v2388, %v2676
  %v2678 = vpop.f32.mrb[0].mxu0
  %v2679 = vpop.f32.mrb[0].mxu0
  %v2680 = vadd.f32 %v2391, %v2679
  %v2681 = vpop.f32.mrb[0].mxu0
  %2682 = vmatprep.mubr.bf16.mxu0 0
  %2683 = vmatmul.mubr.bf16.gmra.mrb[0].mxu0 %v918
  %v2684 = vpop.f32.mrb[0].mxu0
  %v2685 = vadd.f32 %v2396, %v2684
  %v2686 = vpop.f32.mrb[0].mxu0
  %v2687 = vpop.f32.mrb[0].mxu0
  %v2688 = vadd.f32 %v2399, %v2687
  %v2689 = vpop.f32.mrb[0].mxu0
  %2690 = vmatprep.mubr.bf16.mxu0 0
  %2691 = vmatmul.mubr.bf16.gmra.mrb[0].mxu0 %v919
  %v2692 = vpop.f32.mrb[0].mxu0
  %v2693 = vadd.f32 %v2404, %v2692
  %v2694 = vpop.f32.mrb[0].mxu0
  %v2695 = vpop.f32.mrb[0].mxu0
  %v2696 = vadd.f32 %v2407, %v2695
  %v2697 = vpop.f32.mrb[0].mxu0
  %2698 = vmatprep.mubr.bf16.mxu0 0
  %2699 = vmatmul.mubr.bf16.gmra.mrb[0].mxu0 %v920
  %v2700 = vpop.f32.mrb[0].mxu0
  %v2701 = vadd.f32 %v2412, %v2700
  %v2702 = vpop.f32.mrb[0].mxu0
  %v2703 = vpop.f32.mrb[0].mxu0
  %v2704 = vadd.f32 %v2415, %v2703
  %v2705 = vpop.f32.mrb[0].mxu0
  %2706 = vmatprep.mubr.bf16.mxu0 0
  %2707 = vmatmul.mubr.bf16.gmra.mrb[0].mxu0 %v921
  %v2708 = vpop.f32.mrb[0].mxu0
  %v2709 = vadd.f32 %v2420, %v2708
  %v2710 = vpop.f32.mrb[0].mxu0
  %v2711 = vpop.f32.mrb[0].mxu0
  %v2712 = vadd.f32 %v2423, %v2711
  %v2713 = vpop.f32.mrb[0].mxu0
  %2714 = vmatprep.mubr.bf16.mxu0 0
  %2715 = vmatmul.mubr.bf16.gmra.mrb[0].mxu0 %v922
  %v2716 = vpop.f32.mrb[0].mxu0
  %v2717 = vadd.f32 %v2428, %v2716
  %v2718 = vpop.f32.mrb[0].mxu0
  %v2719 = vpop.f32.mrb[0].mxu0
  %v2720 = vadd.f32 %v2431, %v2719
  %v2721 = vpop.f32.mrb[0].mxu0
  %2722 = vmatprep.mubr.bf16.mxu0 0
  %2723 = vmatmul.mubr.bf16.gmra.mrb[0].mxu0 %v923
  %v2724 = vpop.f32.mrb[0].mxu0
  %v2725 = vadd.f32 %v2436, %v2724
  %v2726 = vpop.f32.mrb[0].mxu0
  %v2727 = vpop.f32.mrb[0].mxu0
  %v2728 = vadd.f32 %v2439, %v2727
  %v2729 = vpop.f32.mrb[0].mxu0
  %2730 = vmatprep.mubr.bf16.mxu0 0
  %2731 = vmatmul.mubr.bf16.gmra.mrb[0].mxu0 %v924
  %v2732 = vpop.f32.mrb[0].mxu0
  %v2733 = vadd.f32 %v2444, %v2732
  %v2734 = vpop.f32.mrb[0].mxu0
  %v2735 = vpop.f32.mrb[0].mxu0
  %v2736 = vadd.f32 %v2447, %v2735
  %v2737 = vpop.f32.mrb[0].mxu0
  %2738 = vmatprep.mubr.bf16.mxu0 0
  %2739 = vmatmul.mubr.bf16.gmra.mrb[0].mxu0 %v925
  %v2740 = vpop.f32.mrb[0].mxu0
  %v2741 = vadd.f32 %v2452, %v2740
  %v2742 = vpop.f32.mrb[0].mxu0
  %v2743 = vpop.f32.mrb[0].mxu0
  %v2744 = vadd.f32 %v2455, %v2743
  %v2745 = vpop.f32.mrb[0].mxu0
  %2746 = vmatprep.mubr.bf16.mxu0 0
  %2747 = vmatmul.mubr.bf16.gmra.mrb[0].mxu0 %v926
  %v2748 = vpop.f32.mrb[0].mxu0
  %v2749 = vadd.f32 %v2460, %v2748
  %v2750 = vpop.f32.mrb[0].mxu0
  %v2751 = vpop.f32.mrb[0].mxu0
  %v2752 = vadd.f32 %v2463, %v2751
  %v2753 = vpop.f32.mrb[0].mxu0
  %2754 = vmatprep.mubr.bf16.mxu0 0
  %2755 = vmatmul.mubr.bf16.gmra.mrb[0].mxu0 %v927
  %v2756 = vpop.f32.mrb[0].mxu0
  %v2757 = vadd.f32 %v2468, %v2756
  %v2758 = vpop.f32.mrb[0].mxu0
  %v2759 = vpop.f32.mrb[0].mxu0
  %v2760 = vadd.f32 %v2471, %v2759
  %v2761 = vpop.f32.mrb[0].mxu0
  %2762 = vmatprep.mubr.bf16.mxu0 0
  %2763 = vmatmul.mubr.bf16.gmra.mrb[0].mxu0 %v982
  %v2764 = vpop.f32.mrb[0].mxu0
  %v2765 = vadd.f32 %v2476, %v2764
  %v2766 = vpop.f32.mrb[0].mxu0
  %v2767 = vpop.f32.mrb[0].mxu0
  %v2768 = vadd.f32 %v2479, %v2767
  %v2769 = vpop.f32.mrb[0].mxu0
  %2770 = vmatprep.mubr.bf16.mxu0 0
  %2771 = vmatmul.mubr.bf16.gmra.mrb[0].mxu0 %v1022
  %v2772 = vpop.f32.mrb[0].mxu0
  %v2773 = vadd.f32 %v2484, %v2772
  %v2774 = vpop.f32.mrb[0].mxu0
  %v2775 = vpop.f32.mrb[0].mxu0
  %v2776 = vadd.f32 %v2487, %v2775
  %v2777 = vpop.f32.mrb[0].mxu0
  %2778 = vmatprep.mubr.bf16.mxu0 0
  %2779 = vmatmul.mubr.bf16.gmra.mrb[0].mxu0 %v930
  %v2780 = vpop.f32.mrb[0].mxu0
  %v2781 = vadd.f32 %v2492, %v2780
  %v2782 = vpop.f32.mrb[0].mxu0
  %v2783 = vpop.f32.mrb[0].mxu0
  %v2784 = vadd.f32 %v2495, %v2783
  %v2785 = vpop.f32.mrb[0].mxu0
  %2786 = vmatprep.mubr.bf16.mxu0 0
  %2787 = vmatmul.mubr.bf16.gmra.mrb[0].mxu0 %v931
  %v2788 = vpop.f32.mrb[0].mxu0
  %v2789 = vadd.f32 %v2500, %v2788
  %v2790 = vpop.f32.mrb[0].mxu0
  %v2791 = vpop.f32.mrb[0].mxu0
  %v2792 = vadd.f32 %v2503, %v2791
  %v2793 = vpop.f32.mrb[0].mxu0
  %2794 = vmatprep.mubr.bf16.mxu0 0
  %2795 = vmatmul.mubr.bf16.gmra.mrb[0].mxu0 %v932
  %v2796 = vpop.f32.mrb[0].mxu0
  %v2797 = vadd.f32 %v2508, %v2796
  %v2798 = vpop.f32.mrb[0].mxu0
  %v2799 = vpop.f32.mrb[0].mxu0
  %v2800 = vadd.f32 %v2511, %v2799
  %v2801 = vpop.f32.mrb[0].mxu0
  %2802 = vmatprep.mubr.bf16.mxu0 0
  %2803 = vmatmul.mubr.bf16.gmra.mrb[0].mxu0 %v933
  %v2804 = vpop.f32.mrb[0].mxu0
  %v2805 = vadd.f32 %v2516, %v2804
  %v2806 = vpop.f32.mrb[0].mxu0
  %v2807 = vpop.f32.mrb[0].mxu0
  %v2808 = vadd.f32 %v2519, %v2807
  %v2809 = vpop.f32.mrb[0].mxu0
  %2810 = vmatprep.mubr.bf16.mxu0 0
  %2811 = vmatmul.mubr.bf16.gmra.mrb[0].mxu0 %v934
  %v2812 = vpop.f32.mrb[0].mxu0
  %v2813 = vadd.f32 %v2524, %v2812
  %v2814 = vpop.f32.mrb[0].mxu0
  %v2815 = vpop.f32.mrb[0].mxu0
  %v2816 = vadd.f32 %v2527, %v2815
  %v2817 = vpop.f32.mrb[0].mxu0
  %2818 = vmatprep.mubr.bf16.mxu0 0
  %2819 = vmatmul.mubr.bf16.gmra.mrb[0].mxu0 %v935
  %v2820 = vpop.f32.mrb[0].mxu0
  %v2821 = vadd.f32 %v2532, %v2820
  %v2822 = vpop.f32.mrb[0].mxu0
  %v2823 = vpop.f32.mrb[0].mxu0
  %v2824 = vadd.f32 %v2535, %v2823
  %v2825 = vpop.f32.mrb[0].mxu0
  %2826 = vmatprep.mubr.bf16.mxu0 0
  %2827 = vmatmul.mubr.bf16.gmra.mrb[0].mxu0 %v936
  %v2828 = vpop.f32.mrb[0].mxu0
  %v2829 = vadd.f32 %v2540, %v2828
  %v2830 = vpop.f32.mrb[0].mxu0
  %v2831 = vpop.f32.mrb[0].mxu0
  %v2832 = vadd.f32 %v2543, %v2831
  %v2833 = vpop.f32.mrb[0].mxu0
  %2834 = vmatprep.mubr.bf16.mxu0 0
  %2835 = vmatmul.mubr.bf16.gmra.mrb[0].mxu0 %v937
  %v2836 = vpop.f32.mrb[0].mxu0
  %v2837 = vadd.f32 %v2548, %v2836
  %v2838 = vpop.f32.mrb[0].mxu0
  %v2839 = vpop.f32.mrb[0].mxu0
  %v2840 = vadd.f32 %v2551, %v2839
  %v2841 = vpop.f32.mrb[0].mxu0
  %2842 = vmatprep.mubr.bf16.mxu0 0
  %2843 = vmatmul.mubr.bf16.gmra.mrb[0].mxu0 %v938
  %v2844 = vpop.f32.mrb[0].mxu0
  %v2845 = vadd.f32 %v2556, %v2844
  %v2846 = vpop.f32.mrb[0].mxu0
  %v2847 = vpop.f32.mrb[0].mxu0
  %v2848 = vadd.f32 %v2559, %v2847
  %v2849 = vpop.f32.mrb[0].mxu0
  %2850 = vmatprep.mubr.bf16.mxu0 0
  %2851 = vmatmul.mubr.bf16.gmra.mrb[0].mxu0 %v939
  %v2852 = vpop.f32.mrb[0].mxu0
  %v2853 = vadd.f32 %v2564, %v2852
  %v2854 = vpop.f32.mrb[0].mxu0
  %v2855 = vpop.f32.mrb[0].mxu0
  %v2856 = vadd.f32 %v2567, %v2855
  %v2857 = vpop.f32.mrb[0].mxu0
  %2858 = vmatprep.mubr.bf16.mxu0 0
  %2859 = vmatmul.mubr.bf16.gmra.mrb[0].mxu0 %v940
  %v2860 = vpop.f32.mrb[0].mxu0
  %v2861 = vadd.f32 %v2572, %v2860
  %v2862 = vpop.f32.mrb[0].mxu0
  %v2863 = vpop.f32.mrb[0].mxu0
  %v2864 = vadd.f32 %v2575, %v2863
  %v2865 = vpop.f32.mrb[0].mxu0
  %2866 = vmatprep.mubr.bf16.mxu0 0
  %2867 = vmatmul.mubr.bf16.gmra.mrb[0].mxu0 %v941
  %v2868 = vpop.f32.mrb[0].mxu0
  %v2869 = vadd.f32 %v2580, %v2868
  %v2870 = vpop.f32.mrb[0].mxu0
  %v2871 = vpop.f32.mrb[0].mxu0
  %v2872 = vadd.f32 %v2583, %v2871
  %v2873 = vpop.f32.mrb[0].mxu0
  %2874 = vmatprep.mubr.bf16.mxu0 0
  %2875 = vmatmul.mubr.bf16.gmra.mrb[0].mxu0 %v942
  %v2876 = vpop.f32.mrb[0].mxu0
  %v2877 = vadd.f32 %v2588, %v2876
  %v2878 = vpop.f32.mrb[0].mxu0
  %v2879 = vpop.f32.mrb[0].mxu0
  %v2880 = vadd.f32 %v2591, %v2879
  %v2881 = vpop.f32.mrb[0].mxu0
  %2882 = vmatprep.mubr.bf16.mxu0 0
  %2883 = vmatmul.mubr.bf16.gmra.mrb[0].mxu0 %v943
  %v2884 = vpop.f32.mrb[0].mxu0
  %v2885 = vadd.f32 %v2596, %v2884
  %v2886 = vpop.f32.mrb[0].mxu0
  %v2887 = vpop.f32.mrb[0].mxu0
  %v2888 = vadd.f32 %v2599, %v2887
  %v2889 = vpop.f32.mrb[0].mxu0
  %2890 = vmatprep.mubr.bf16.mxu0 0
  %2891 = vmatmul.mubr.bf16.gmra.mrb[0].mxu0 %v983
  %v2892 = vpop.f32.mrb[0].mxu0
  %v2893 = vadd.f32 %v2604, %v2892
  %v2894 = vpop.f32.mrb[0].mxu0
  %v2895 = vpop.f32.mrb[0].mxu0
  %v2896 = vadd.f32 %v2607, %v2895
  %v2897 = vpop.f32.mrb[0].mxu0
  %2898 = vmatprep.mubr.bf16.mxu0 0
  %2899 = vmatmul.mubr.bf16.gmra.mrb[0].mxu0 %v1023
  %v2900 = vpop.f32.mrb[0].mxu0
  %v2901 = vadd.f32 %v2612, %v2900
  %v2902 = vpop.f32.mrb[0].mxu0
  %v2903 = vpop.f32.mrb[0].mxu0
  %v2904 = vadd.f32 %v2615, %v2903
  %v2905 = vpop.f32.mrb[0].mxu0
  %2906 = vdwg.mxu0
  %vm2907 = vcmask 523264
  %v2908 = vsel %vm2907, %v2653, 0.0
  %v2909 = vsel %vm2907, %v2656, 0.0
  %v2910 = vadd.f32 %v2908, %v2909
  %v2911 = vsel %vm2907, %v2661, 0.0
  %v2912 = vadd.f32 %v2910, %v2911
  %v2913 = vsel %vm2907, %v2664, 0.0
  %v2914 = vadd.f32 %v2912, %v2913
  %v2915 = vsel %vm2907, %v2669, 0.0
  %v2916 = vadd.f32 %v2914, %v2915
  %v2917 = vsel %vm2907, %v2672, 0.0
  %v2918 = vadd.f32 %v2916, %v2917
  %v2919 = vsel %vm2907, %v2677, 0.0
  %v2920 = vadd.f32 %v2918, %v2919
  %v2921 = vsel %vm2907, %v2680, 0.0
  %v2922 = vadd.f32 %v2920, %v2921
  %v2923 = vsel %vm2907, %v2685, 0.0
  %v2924 = vadd.f32 %v2922, %v2923
  %v2925 = vsel %vm2907, %v2688, 0.0
  %v2926 = vadd.f32 %v2924, %v2925
  %v2927 = vsel %vm2907, %v2693, 0.0
  %v2928 = vadd.f32 %v2926, %v2927
  %v2929 = vsel %vm2907, %v2696, 0.0
  %v2930 = vadd.f32 %v2928, %v2929
  %v2931 = vsel %vm2907, %v2701, 0.0
  %v2932 = vadd.f32 %v2930, %v2931
  %v2933 = vsel %vm2907, %v2704, 0.0
  %v2934 = vadd.f32 %v2932, %v2933
  %v2935 = vsel %vm2907, %v2709, 0.0
  %v2936 = vadd.f32 %v2934, %v2935
  %v2937 = vsel %vm2907, %v2712, 0.0
  %v2938 = vadd.f32 %v2936, %v2937
  %v2939 = vsel %vm2907, %v2717, 0.0
  %v2940 = vadd.f32 %v2938, %v2939
  %v2941 = vsel %vm2907, %v2720, 0.0
  %v2942 = vadd.f32 %v2940, %v2941
  %v2943 = vsel %vm2907, %v2725, 0.0
  %v2944 = vadd.f32 %v2942, %v2943
  %v2945 = vsel %vm2907, %v2728, 0.0
  %v2946 = vadd.f32 %v2944, %v2945
  %v2947 = vsel %vm2907, %v2733, 0.0
  %v2948 = vadd.f32 %v2946, %v2947
  %v2949 = vsel %vm2907, %v2736, 0.0
  %v2950 = vadd.f32 %v2948, %v2949
  %v2951 = vsel %vm2907, %v2741, 0.0
  %v2952 = vadd.f32 %v2950, %v2951
  %v2953 = vsel %vm2907, %v2744, 0.0
  %v2954 = vadd.f32 %v2952, %v2953
  %v2955 = vsel %vm2907, %v2749, 0.0
  %v2956 = vadd.f32 %v2954, %v2955
  %v2957 = vsel %vm2907, %v2752, 0.0
  %v2958 = vadd.f32 %v2956, %v2957
  %v2959 = vsel %vm2907, %v2757, 0.0
  %v2960 = vadd.f32 %v2958, %v2959
  %v2961 = vsel %vm2907, %v2760, 0.0
  %v2962 = vadd.f32 %v2960, %v2961
  %v2963 = vsel %vm2907, %v2765, 0.0
  %v2964 = vadd.f32 %v2962, %v2963
  %v2965 = vsel %vm2907, %v2768, 0.0
  %v2966 = vadd.f32 %v2964, %v2965
  %v2967 = vsel %vm2907, %v2773, 0.0
  %v2968 = vadd.f32 %v2966, %v2967
  %v2969 = vsel %vm2907, %v2776, 0.0
  %v2970 = vadd.f32 %v2968, %v2969
  %v2971 = vsel %vm2907, %v2781, 0.0
  %v2972 = vadd.f32 %v2970, %v2971
  %v2973 = vsel %vm2907, %v2784, 0.0
  %v2974 = vadd.f32 %v2972, %v2973
  %v2975 = vsel %vm2907, %v2789, 0.0
  %v2976 = vadd.f32 %v2974, %v2975
  %v2977 = vsel %vm2907, %v2792, 0.0
  %v2978 = vadd.f32 %v2976, %v2977
  %v2979 = vsel %vm2907, %v2797, 0.0
  %v2980 = vadd.f32 %v2978, %v2979
  %v2981 = vsel %vm2907, %v2800, 0.0
  %v2982 = vadd.f32 %v2980, %v2981
  %v2983 = vsel %vm2907, %v2805, 0.0
  %v2984 = vadd.f32 %v2982, %v2983
  %v2985 = vsel %vm2907, %v2808, 0.0
  %v2986 = vadd.f32 %v2984, %v2985
  %v2987 = vsel %vm2907, %v2813, 0.0
  %v2988 = vadd.f32 %v2986, %v2987
  %v2989 = vsel %vm2907, %v2816, 0.0
  %v2990 = vadd.f32 %v2988, %v2989
  %v2991 = vsel %vm2907, %v2821, 0.0
  %v2992 = vadd.f32 %v2990, %v2991
  %v2993 = vsel %vm2907, %v2824, 0.0
  %v2994 = vadd.f32 %v2992, %v2993
  %v2995 = vsel %vm2907, %v2829, 0.0
  %v2996 = vadd.f32 %v2994, %v2995
  %v2997 = vsel %vm2907, %v2832, 0.0
  %v2998 = vadd.f32 %v2996, %v2997
  %v2999 = vsel %vm2907, %v2837, 0.0
  %v3000 = vadd.f32 %v2998, %v2999
  %v3001 = vsel %vm2907, %v2840, 0.0
  %v3002 = vadd.f32 %v3000, %v3001
  %v3003 = vsel %vm2907, %v2845, 0.0
  %v3004 = vadd.f32 %v3002, %v3003
  %v3005 = vsel %vm2907, %v2848, 0.0
  %v3006 = vadd.f32 %v3004, %v3005
  %v3007 = vsel %vm2907, %v2853, 0.0
  %v3008 = vadd.f32 %v3006, %v3007
  %v3009 = vsel %vm2907, %v2856, 0.0
  %v3010 = vadd.f32 %v3008, %v3009
  %v3011 = vsel %vm2907, %v2861, 0.0
  %v3012 = vadd.f32 %v3010, %v3011
  %v3013 = vsel %vm2907, %v2864, 0.0
  %v3014 = vadd.f32 %v3012, %v3013
  %v3015 = vsel %vm2907, %v2869, 0.0
  %v3016 = vadd.f32 %v3014, %v3015
  %v3017 = vsel %vm2907, %v2872, 0.0
  %v3018 = vadd.f32 %v3016, %v3017
  %v3019 = vsel %vm2907, %v2877, 0.0
  %v3020 = vadd.f32 %v3018, %v3019
  %v3021 = vsel %vm2907, %v2880, 0.0
  %v3022 = vadd.f32 %v3020, %v3021
  %v3023 = vsel %vm2907, %v2885, 0.0
  %v3024 = vadd.f32 %v3022, %v3023
  %v3025 = vsel %vm2907, %v2888, 0.0
  %v3026 = vadd.f32 %v3024, %v3025
  %v3027 = vsel %vm2907, %v2893, 0.0
  %v3028 = vadd.f32 %v3026, %v3027
  %v3029 = vsel %vm2907, %v2896, 0.0
  %v3030 = vadd.f32 %v3028, %v3029
  %v3031 = vsel %vm2907, %v2901, 0.0
  %v3032 = vadd.f32 %v3030, %v3031
  %v3033 = vsel %vm2907, %v2904, 0.0
  %v3034 = vadd.f32 %v3032, %v3033
  %v3035 = vrot.slane %v3034, 4
  %v3036 = vadd.f32 %v3034, %v3035
  %v3037 = vrot.slane %v3036, 2
  %v3038 = vadd.f32 %v3036, %v3037
  %v3039 = vrot.slane %v3038, 1
  %v3040 = vadd.f32 %v3038, %v3039
  %v3041 = vrcp.pop 512.0
  %v3042 = vmul.f32 %v3040, %v3041
  %v3043 = vsub.f32 %v2653, %v3042
  %v3044 = vsub.f32 %v2656, %v3042
  %v3045 = vsub.f32 %v2661, %v3042
  %v3046 = vsub.f32 %v2664, %v3042
  %v3047 = vsub.f32 %v2669, %v3042
  %v3048 = vsub.f32 %v2672, %v3042
  %v3049 = vsub.f32 %v2677, %v3042
  %v3050 = vsub.f32 %v2680, %v3042
  %v3051 = vsub.f32 %v2685, %v3042
  %v3052 = vsub.f32 %v2688, %v3042
  %v3053 = vsub.f32 %v2693, %v3042
  %v3054 = vsub.f32 %v2696, %v3042
  %v3055 = vsub.f32 %v2701, %v3042
  %v3056 = vsub.f32 %v2704, %v3042
  %v3057 = vsub.f32 %v2709, %v3042
  %v3058 = vsub.f32 %v2712, %v3042
  %v3059 = vsub.f32 %v2717, %v3042
  %v3060 = vsub.f32 %v2720, %v3042
  %v3061 = vsub.f32 %v2725, %v3042
  %v3062 = vsub.f32 %v2728, %v3042
  %v3063 = vsub.f32 %v2733, %v3042
  %v3064 = vsub.f32 %v2736, %v3042
  %v3065 = vsub.f32 %v2741, %v3042
  %v3066 = vsub.f32 %v2744, %v3042
  %v3067 = vsub.f32 %v2749, %v3042
  %v3068 = vsub.f32 %v2752, %v3042
  %v3069 = vsub.f32 %v2757, %v3042
  %v3070 = vsub.f32 %v2760, %v3042
  %v3071 = vsub.f32 %v2765, %v3042
  %v3072 = vsub.f32 %v2768, %v3042
  %v3073 = vsub.f32 %v2773, %v3042
  %v3074 = vsub.f32 %v2776, %v3042
  %v3075 = vsub.f32 %v2781, %v3042
  %v3076 = vsub.f32 %v2784, %v3042
  %v3077 = vsub.f32 %v2789, %v3042
  %v3078 = vsub.f32 %v2792, %v3042
  %v3079 = vsub.f32 %v2797, %v3042
  %v3080 = vsub.f32 %v2800, %v3042
  %v3081 = vsub.f32 %v2805, %v3042
  %v3082 = vsub.f32 %v2808, %v3042
  %v3083 = vsub.f32 %v2813, %v3042
  %v3084 = vsub.f32 %v2816, %v3042
  %v3085 = vsub.f32 %v2821, %v3042
  %v3086 = vsub.f32 %v2824, %v3042
  %v3087 = vsub.f32 %v2829, %v3042
  %v3088 = vsub.f32 %v2832, %v3042
  %v3089 = vsub.f32 %v2837, %v3042
  %v3090 = vsub.f32 %v2840, %v3042
  %v3091 = vsub.f32 %v2845, %v3042
  %v3092 = vsub.f32 %v2848, %v3042
  %v3093 = vsub.f32 %v2853, %v3042
  %v3094 = vsub.f32 %v2856, %v3042
  %v3095 = vsub.f32 %v2861, %v3042
  %v3096 = vsub.f32 %v2864, %v3042
  %v3097 = vsub.f32 %v2869, %v3042
  %v3098 = vsub.f32 %v2872, %v3042
  %v3099 = vsub.f32 %v2877, %v3042
  %v3100 = vsub.f32 %v2880, %v3042
  %v3101 = vsub.f32 %v2885, %v3042
  %v3102 = vsub.f32 %v2888, %v3042
  %v3103 = vsub.f32 %v2893, %v3042
  %v3104 = vsub.f32 %v2896, %v3042
  %v3105 = vsub.f32 %v2901, %v3042
  %v3106 = vsub.f32 %v2904, %v3042
  %v3107 = vmul.f32 %v3043, %v3043
  %v3108 = vmul.f32 %v3044, %v3044
  %v3109 = vmul.f32 %v3045, %v3045
  %v3110 = vmul.f32 %v3046, %v3046
  %v3111 = vmul.f32 %v3047, %v3047
  %v3112 = vmul.f32 %v3048, %v3048
  %v3113 = vmul.f32 %v3049, %v3049
  %v3114 = vmul.f32 %v3050, %v3050
  %v3115 = vmul.f32 %v3051, %v3051
  %v3116 = vmul.f32 %v3052, %v3052
  %v3117 = vmul.f32 %v3053, %v3053
  %v3118 = vmul.f32 %v3054, %v3054
  %v3119 = vmul.f32 %v3055, %v3055
  %v3120 = vmul.f32 %v3056, %v3056
  %v3121 = vmul.f32 %v3057, %v3057
  %v3122 = vmul.f32 %v3058, %v3058
  %v3123 = vmul.f32 %v3059, %v3059
  %v3124 = vmul.f32 %v3060, %v3060
  %v3125 = vmul.f32 %v3061, %v3061
  %v3126 = vmul.f32 %v3062, %v3062
  %v3127 = vmul.f32 %v3063, %v3063
  %v3128 = vmul.f32 %v3064, %v3064
  %v3129 = vmul.f32 %v3065, %v3065
  %v3130 = vmul.f32 %v3066, %v3066
  %v3131 = vmul.f32 %v3067, %v3067
  %v3132 = vmul.f32 %v3068, %v3068
  %v3133 = vmul.f32 %v3069, %v3069
  %v3134 = vmul.f32 %v3070, %v3070
  %v3135 = vmul.f32 %v3071, %v3071
  %v3136 = vmul.f32 %v3072, %v3072
  %v3137 = vmul.f32 %v3073, %v3073
  %v3138 = vmul.f32 %v3074, %v3074
  %v3139 = vmul.f32 %v3075, %v3075
  %v3140 = vmul.f32 %v3076, %v3076
  %v3141 = vmul.f32 %v3077, %v3077
  %v3142 = vmul.f32 %v3078, %v3078
  %v3143 = vmul.f32 %v3079, %v3079
  %v3144 = vmul.f32 %v3080, %v3080
  %v3145 = vmul.f32 %v3081, %v3081
  %v3146 = vmul.f32 %v3082, %v3082
  %v3147 = vmul.f32 %v3083, %v3083
  %v3148 = vmul.f32 %v3084, %v3084
  %v3149 = vmul.f32 %v3085, %v3085
  %v3150 = vmul.f32 %v3086, %v3086
  %v3151 = vmul.f32 %v3087, %v3087
  %v3152 = vmul.f32 %v3088, %v3088
  %v3153 = vmul.f32 %v3089, %v3089
  %v3154 = vmul.f32 %v3090, %v3090
  %v3155 = vmul.f32 %v3091, %v3091
  %v3156 = vmul.f32 %v3092, %v3092
  %v3157 = vmul.f32 %v3093, %v3093
  %v3158 = vmul.f32 %v3094, %v3094
  %v3159 = vmul.f32 %v3095, %v3095
  %v3160 = vmul.f32 %v3096, %v3096
  %v3161 = vmul.f32 %v3097, %v3097
  %v3162 = vmul.f32 %v3098, %v3098
  %v3163 = vmul.f32 %v3099, %v3099
  %v3164 = vmul.f32 %v3100, %v3100
  %v3165 = vmul.f32 %v3101, %v3101
  %v3166 = vmul.f32 %v3102, %v3102
  %v3167 = vmul.f32 %v3103, %v3103
  %v3168 = vmul.f32 %v3104, %v3104
  %v3169 = vmul.f32 %v3105, %v3105
  %v3170 = vmul.f32 %v3106, %v3106
  %v3171 = vsel %vm2907, %v3107, 0.0
  %v3172 = vsel %vm2907, %v3108, 0.0
  %v3173 = vadd.f32 %v3171, %v3172
  %v3174 = vsel %vm2907, %v3109, 0.0
  %v3175 = vadd.f32 %v3173, %v3174
  %v3176 = vsel %vm2907, %v3110, 0.0
  %v3177 = vadd.f32 %v3175, %v3176
  %v3178 = vsel %vm2907, %v3111, 0.0
  %v3179 = vadd.f32 %v3177, %v3178
  %v3180 = vsel %vm2907, %v3112, 0.0
  %v3181 = vadd.f32 %v3179, %v3180
  %v3182 = vsel %vm2907, %v3113, 0.0
  %v3183 = vadd.f32 %v3181, %v3182
  %v3184 = vsel %vm2907, %v3114, 0.0
  %v3185 = vadd.f32 %v3183, %v3184
  %v3186 = vsel %vm2907, %v3115, 0.0
  %v3187 = vadd.f32 %v3185, %v3186
  %v3188 = vsel %vm2907, %v3116, 0.0
  %v3189 = vadd.f32 %v3187, %v3188
  %v3190 = vsel %vm2907, %v3117, 0.0
  %v3191 = vadd.f32 %v3189, %v3190
  %v3192 = vsel %vm2907, %v3118, 0.0
  %v3193 = vadd.f32 %v3191, %v3192
  %v3194 = vsel %vm2907, %v3119, 0.0
  %v3195 = vadd.f32 %v3193, %v3194
  %v3196 = vsel %vm2907, %v3120, 0.0
  %v3197 = vadd.f32 %v3195, %v3196
  %v3198 = vsel %vm2907, %v3121, 0.0
  %v3199 = vadd.f32 %v3197, %v3198
  %v3200 = vsel %vm2907, %v3122, 0.0
  %v3201 = vadd.f32 %v3199, %v3200
  %v3202 = vsel %vm2907, %v3123, 0.0
  %v3203 = vadd.f32 %v3201, %v3202
  %v3204 = vsel %vm2907, %v3124, 0.0
  %v3205 = vadd.f32 %v3203, %v3204
  %v3206 = vsel %vm2907, %v3125, 0.0
  %v3207 = vadd.f32 %v3205, %v3206
  %v3208 = vsel %vm2907, %v3126, 0.0
  %v3209 = vadd.f32 %v3207, %v3208
  %v3210 = vsel %vm2907, %v3127, 0.0
  %v3211 = vadd.f32 %v3209, %v3210
  %v3212 = vsel %vm2907, %v3128, 0.0
  %v3213 = vadd.f32 %v3211, %v3212
  %v3214 = vsel %vm2907, %v3129, 0.0
  %v3215 = vadd.f32 %v3213, %v3214
  %v3216 = vsel %vm2907, %v3130, 0.0
  %v3217 = vadd.f32 %v3215, %v3216
  %v3218 = vsel %vm2907, %v3131, 0.0
  %v3219 = vadd.f32 %v3217, %v3218
  %v3220 = vsel %vm2907, %v3132, 0.0
  %v3221 = vadd.f32 %v3219, %v3220
  %v3222 = vsel %vm2907, %v3133, 0.0
  %v3223 = vadd.f32 %v3221, %v3222
  %v3224 = vsel %vm2907, %v3134, 0.0
  %v3225 = vadd.f32 %v3223, %v3224
  %v3226 = vsel %vm2907, %v3135, 0.0
  %v3227 = vadd.f32 %v3225, %v3226
  %v3228 = vsel %vm2907, %v3136, 0.0
  %v3229 = vadd.f32 %v3227, %v3228
  %v3230 = vsel %vm2907, %v3137, 0.0
  %v3231 = vadd.f32 %v3229, %v3230
  %v3232 = vsel %vm2907, %v3138, 0.0
  %v3233 = vadd.f32 %v3231, %v3232
  %v3234 = vsel %vm2907, %v3139, 0.0
  %v3235 = vadd.f32 %v3233, %v3234
  %v3236 = vsel %vm2907, %v3140, 0.0
  %v3237 = vadd.f32 %v3235, %v3236
  %v3238 = vsel %vm2907, %v3141, 0.0
  %v3239 = vadd.f32 %v3237, %v3238
  %v3240 = vsel %vm2907, %v3142, 0.0
  %v3241 = vadd.f32 %v3239, %v3240
  %v3242 = vsel %vm2907, %v3143, 0.0
  %v3243 = vadd.f32 %v3241, %v3242
  %v3244 = vsel %vm2907, %v3144, 0.0
  %v3245 = vadd.f32 %v3243, %v3244
  %v3246 = vsel %vm2907, %v3145, 0.0
  %v3247 = vadd.f32 %v3245, %v3246
  %v3248 = vsel %vm2907, %v3146, 0.0
  %v3249 = vadd.f32 %v3247, %v3248
  %v3250 = vsel %vm2907, %v3147, 0.0
  %v3251 = vadd.f32 %v3249, %v3250
  %v3252 = vsel %vm2907, %v3148, 0.0
  %v3253 = vadd.f32 %v3251, %v3252
  %v3254 = vsel %vm2907, %v3149, 0.0
  %v3255 = vadd.f32 %v3253, %v3254
  %v3256 = vsel %vm2907, %v3150, 0.0
  %v3257 = vadd.f32 %v3255, %v3256
  %v3258 = vsel %vm2907, %v3151, 0.0
  %v3259 = vadd.f32 %v3257, %v3258
  %v3260 = vsel %vm2907, %v3152, 0.0
  %v3261 = vadd.f32 %v3259, %v3260
  %v3262 = vsel %vm2907, %v3153, 0.0
  %v3263 = vadd.f32 %v3261, %v3262
  %v3264 = vsel %vm2907, %v3154, 0.0
  %v3265 = vadd.f32 %v3263, %v3264
  %v3266 = vsel %vm2907, %v3155, 0.0
  %v3267 = vadd.f32 %v3265, %v3266
  %v3268 = vsel %vm2907, %v3156, 0.0
  %v3269 = vadd.f32 %v3267, %v3268
  %v3270 = vsel %vm2907, %v3157, 0.0
  %v3271 = vadd.f32 %v3269, %v3270
  %v3272 = vsel %vm2907, %v3158, 0.0
  %v3273 = vadd.f32 %v3271, %v3272
  %v3274 = vsel %vm2907, %v3159, 0.0
  %v3275 = vadd.f32 %v3273, %v3274
  %v3276 = vsel %vm2907, %v3160, 0.0
  %v3277 = vadd.f32 %v3275, %v3276
  %v3278 = vsel %vm2907, %v3161, 0.0
  %v3279 = vadd.f32 %v3277, %v3278
  %v3280 = vsel %vm2907, %v3162, 0.0
  %v3281 = vadd.f32 %v3279, %v3280
  %v3282 = vsel %vm2907, %v3163, 0.0
  %v3283 = vadd.f32 %v3281, %v3282
  %v3284 = vsel %vm2907, %v3164, 0.0
  %v3285 = vadd.f32 %v3283, %v3284
  %v3286 = vsel %vm2907, %v3165, 0.0
  %v3287 = vadd.f32 %v3285, %v3286
  %v3288 = vsel %vm2907, %v3166, 0.0
  %v3289 = vadd.f32 %v3287, %v3288
  %v3290 = vsel %vm2907, %v3167, 0.0
  %v3291 = vadd.f32 %v3289, %v3290
  %v3292 = vsel %vm2907, %v3168, 0.0
  %v3293 = vadd.f32 %v3291, %v3292
  %v3294 = vsel %vm2907, %v3169, 0.0
  %v3295 = vadd.f32 %v3293, %v3294
  %v3296 = vsel %vm2907, %v3170, 0.0
  %v3297 = vadd.f32 %v3295, %v3296
  %v3298 = vrot.slane %v3297, 4
  %v3299 = vadd.f32 %v3297, %v3298
  %v3300 = vrot.slane %v3299, 2
  %v3301 = vadd.f32 %v3299, %v3300
  %v3302 = vrot.slane %v3301, 1
  %v3303 = vadd.f32 %v3301, %v3302
  %v3304 = vmul.f32 %v3303, %v3041
  %v3305 = vadd.f32 %v3304, 1e-05
  %v3306 = vrsqrt.pop %v3305
  %v3307 = vmul.f32 %v300, %v3306
  %v3309 = vlaneseq
  %v3310 = vshrl.u32 %v3309, 7
  %v3311 = vsub.s32 0, %v3310
  %v3312 = vrot.slane %v3307, %v3311
  %v3314 = vmul.f32 %v3043, %v3312
  %v3315 = vmul.f32 %v3044, %v3312
  %v3316 = vmul.f32 %v3045, %v3312
  %v3317 = vmul.f32 %v3046, %v3312
  %v3318 = vmul.f32 %v3047, %v3312
  %v3319 = vmul.f32 %v3048, %v3312
  %v3320 = vmul.f32 %v3049, %v3312
  %v3321 = vmul.f32 %v3050, %v3312
  %v3322 = vmul.f32 %v3051, %v3312
  %v3323 = vmul.f32 %v3052, %v3312
  %v3324 = vmul.f32 %v3053, %v3312
  %v3325 = vmul.f32 %v3054, %v3312
  %v3326 = vmul.f32 %v3055, %v3312
  %v3327 = vmul.f32 %v3056, %v3312
  %v3328 = vmul.f32 %v3057, %v3312
  %v3329 = vmul.f32 %v3058, %v3312
  %v3330 = vmul.f32 %v3059, %v3312
  %v3331 = vmul.f32 %v3060, %v3312
  %v3332 = vmul.f32 %v3061, %v3312
  %v3333 = vmul.f32 %v3062, %v3312
  %v3334 = vmul.f32 %v3063, %v3312
  %v3335 = vmul.f32 %v3064, %v3312
  %v3336 = vmul.f32 %v3065, %v3312
  %v3337 = vmul.f32 %v3066, %v3312
  %v3338 = vmul.f32 %v3067, %v3312
  %v3339 = vmul.f32 %v3068, %v3312
  %v3340 = vmul.f32 %v3069, %v3312
  %v3341 = vmul.f32 %v3070, %v3312
  %v3342 = vmul.f32 %v3071, %v3312
  %v3343 = vmul.f32 %v3072, %v3312
  %v3344 = vmul.f32 %v3073, %v3312
  %v3345 = vmul.f32 %v3074, %v3312
  %v3346 = vmul.f32 %v3075, %v3312
  %v3347 = vmul.f32 %v3076, %v3312
  %v3348 = vmul.f32 %v3077, %v3312
  %v3349 = vmul.f32 %v3078, %v3312
  %v3350 = vmul.f32 %v3079, %v3312
  %v3351 = vmul.f32 %v3080, %v3312
  %v3352 = vmul.f32 %v3081, %v3312
  %v3353 = vmul.f32 %v3082, %v3312
  %v3354 = vmul.f32 %v3083, %v3312
  %v3355 = vmul.f32 %v3084, %v3312
  %v3356 = vmul.f32 %v3085, %v3312
  %v3357 = vmul.f32 %v3086, %v3312
  %v3358 = vmul.f32 %v3087, %v3312
  %v3359 = vmul.f32 %v3088, %v3312
  %v3360 = vmul.f32 %v3089, %v3312
  %v3361 = vmul.f32 %v3090, %v3312
  %v3362 = vmul.f32 %v3091, %v3312
  %v3363 = vmul.f32 %v3092, %v3312
  %v3364 = vmul.f32 %v3093, %v3312
  %v3365 = vmul.f32 %v3094, %v3312
  %v3366 = vmul.f32 %v3095, %v3312
  %v3367 = vmul.f32 %v3096, %v3312
  %v3368 = vmul.f32 %v3097, %v3312
  %v3369 = vmul.f32 %v3098, %v3312
  %v3370 = vmul.f32 %v3099, %v3312
  %v3371 = vmul.f32 %v3100, %v3312
  %v3372 = vmul.f32 %v3101, %v3312
  %v3373 = vmul.f32 %v3102, %v3312
  %v3374 = vmul.f32 %v3103, %v3312
  %v3375 = vmul.f32 %v3104, %v3312
  %v3376 = vmul.f32 %v3105, %v3312
  %v3377 = vmul.f32 %v3106, %v3312
  %v3379 = vlaneseq
  %v3380 = vshrl.u32 %v3379, 7
  %v3381 = vsub.s32 0, %v3380
  %v3382 = vrot.slane %v301, %v3381
  %v3384 = vadd.f32 %v3314, %v3382
  %v3385 = vadd.f32 %v3315, %v3382
  %v3386 = vadd.f32 %v3316, %v3382
  %v3387 = vadd.f32 %v3317, %v3382
  %v3388 = vadd.f32 %v3318, %v3382
  %v3389 = vadd.f32 %v3319, %v3382
  %v3390 = vadd.f32 %v3320, %v3382
  %v3391 = vadd.f32 %v3321, %v3382
  %v3392 = vadd.f32 %v3322, %v3382
  %v3393 = vadd.f32 %v3323, %v3382
  %v3394 = vadd.f32 %v3324, %v3382
  %v3395 = vadd.f32 %v3325, %v3382
  %v3396 = vadd.f32 %v3326, %v3382
  %v3397 = vadd.f32 %v3327, %v3382
  %v3398 = vadd.f32 %v3328, %v3382
  %v3399 = vadd.f32 %v3329, %v3382
  %v3400 = vadd.f32 %v3330, %v3382
  %v3401 = vadd.f32 %v3331, %v3382
  %v3402 = vadd.f32 %v3332, %v3382
  %v3403 = vadd.f32 %v3333, %v3382
  %v3404 = vadd.f32 %v3334, %v3382
  %v3405 = vadd.f32 %v3335, %v3382
  %v3406 = vadd.f32 %v3336, %v3382
  %v3407 = vadd.f32 %v3337, %v3382
  %v3408 = vadd.f32 %v3338, %v3382
  %v3409 = vadd.f32 %v3339, %v3382
  %v3410 = vadd.f32 %v3340, %v3382
  %v3411 = vadd.f32 %v3341, %v3382
  %v3412 = vadd.f32 %v3342, %v3382
  %v3413 = vadd.f32 %v3343, %v3382
  %v3414 = vadd.f32 %v3344, %v3382
  %v3415 = vadd.f32 %v3345, %v3382
  %v3416 = vadd.f32 %v3346, %v3382
  %v3417 = vadd.f32 %v3347, %v3382
  %v3418 = vadd.f32 %v3348, %v3382
  %v3419 = vadd.f32 %v3349, %v3382
  %v3420 = vadd.f32 %v3350, %v3382
  %v3421 = vadd.f32 %v3351, %v3382
  %v3422 = vadd.f32 %v3352, %v3382
  %v3423 = vadd.f32 %v3353, %v3382
  %v3424 = vadd.f32 %v3354, %v3382
  %v3425 = vadd.f32 %v3355, %v3382
  %v3426 = vadd.f32 %v3356, %v3382
  %v3427 = vadd.f32 %v3357, %v3382
  %v3428 = vadd.f32 %v3358, %v3382
  %v3429 = vadd.f32 %v3359, %v3382
  %v3430 = vadd.f32 %v3360, %v3382
  %v3431 = vadd.f32 %v3361, %v3382
  %v3432 = vadd.f32 %v3362, %v3382
  %v3433 = vadd.f32 %v3363, %v3382
  %v3434 = vadd.f32 %v3364, %v3382
  %v3435 = vadd.f32 %v3365, %v3382
  %v3436 = vadd.f32 %v3366, %v3382
  %v3437 = vadd.f32 %v3367, %v3382
  %v3438 = vadd.f32 %v3368, %v3382
  %v3439 = vadd.f32 %v3369, %v3382
  %v3440 = vadd.f32 %v3370, %v3382
  %v3441 = vadd.f32 %v3371, %v3382
  %v3442 = vadd.f32 %v3372, %v3382
  %v3443 = vadd.f32 %v3373, %v3382
  %v3444 = vadd.f32 %v3374, %v3382
  %v3445 = vadd.f32 %v3375, %v3382
  %v3446 = vadd.f32 %v3376, %v3382
  %v3447 = vadd.f32 %v3377, %v3382
  %v3448 = vmax.f32 %v3384, 0.0
  %v3449 = vmax.f32 %v3385, 0.0
  %v3450 = vmax.f32 %v3386, 0.0
  %v3451 = vmax.f32 %v3387, 0.0
  %v3452 = vmax.f32 %v3388, 0.0
  %v3453 = vmax.f32 %v3389, 0.0
  %v3454 = vmax.f32 %v3390, 0.0
  %v3455 = vmax.f32 %v3391, 0.0
  %v3456 = vmax.f32 %v3392, 0.0
  %v3457 = vmax.f32 %v3393, 0.0
  %v3458 = vmax.f32 %v3394, 0.0
  %v3459 = vmax.f32 %v3395, 0.0
  %v3460 = vmax.f32 %v3396, 0.0
  %v3461 = vmax.f32 %v3397, 0.0
  %v3462 = vmax.f32 %v3398, 0.0
  %v3463 = vmax.f32 %v3399, 0.0
  %v3464 = vmax.f32 %v3400, 0.0
  %v3465 = vmax.f32 %v3401, 0.0
  %v3466 = vmax.f32 %v3402, 0.0
  %v3467 = vmax.f32 %v3403, 0.0
  %v3468 = vmax.f32 %v3404, 0.0
  %v3469 = vmax.f32 %v3405, 0.0
  %v3470 = vmax.f32 %v3406, 0.0
  %v3471 = vmax.f32 %v3407, 0.0
  %v3472 = vmax.f32 %v3408, 0.0
  %v3473 = vmax.f32 %v3409, 0.0
  %v3474 = vmax.f32 %v3410, 0.0
  %v3475 = vmax.f32 %v3411, 0.0
  %v3476 = vmax.f32 %v3412, 0.0
  %v3477 = vmax.f32 %v3413, 0.0
  %v3478 = vmax.f32 %v3414, 0.0
  %v3479 = vmax.f32 %v3415, 0.0
  %v3480 = vmax.f32 %v3416, 0.0
  %v3481 = vmax.f32 %v3417, 0.0
  %v3482 = vmax.f32 %v3418, 0.0
  %v3483 = vmax.f32 %v3419, 0.0
  %v3484 = vmax.f32 %v3420, 0.0
  %v3485 = vmax.f32 %v3421, 0.0
  %v3486 = vmax.f32 %v3422, 0.0
  %v3487 = vmax.f32 %v3423, 0.0
  %v3488 = vmax.f32 %v3424, 0.0
  %v3489 = vmax.f32 %v3425, 0.0
  %v3490 = vmax.f32 %v3426, 0.0
  %v3491 = vmax.f32 %v3427, 0.0
  %v3492 = vmax.f32 %v3428, 0.0
  %v3493 = vmax.f32 %v3429, 0.0
  %v3494 = vmax.f32 %v3430, 0.0
  %v3495 = vmax.f32 %v3431, 0.0
  %v3496 = vmax.f32 %v3432, 0.0
  %v3497 = vmax.f32 %v3433, 0.0
  %v3498 = vmax.f32 %v3434, 0.0
  %v3499 = vmax.f32 %v3435, 0.0
  %v3500 = vmax.f32 %v3436, 0.0
  %v3501 = vmax.f32 %v3437, 0.0
  %v3502 = vmax.f32 %v3438, 0.0
  %v3503 = vmax.f32 %v3439, 0.0
  %v3504 = vmax.f32 %v3440, 0.0
  %v3505 = vmax.f32 %v3441, 0.0
  %v3506 = vmax.f32 %v3442, 0.0
  %v3507 = vmax.f32 %v3443, 0.0
  %v3508 = vmax.f32 %v3444, 0.0
  %v3509 = vmax.f32 %v3445, 0.0
  %v3510 = vmax.f32 %v3446, 0.0
  %v3511 = vmax.f32 %v3447, 0.0
  %v3512 = vmax.f32 %v3448, %v3450
  %v3513 = vmax.f32 %v3449, %v3451
  %v3514 = vmax.f32 %v3452, %v3454
  %v3515 = vmax.f32 %v3453, %v3455
  %v3516 = vmax.f32 %v3456, %v3458
  %v3517 = vmax.f32 %v3457, %v3459
  %v3518 = vmax.f32 %v3460, %v3462
  %v3519 = vmax.f32 %v3461, %v3463
  %v3520 = vmax.f32 %v3464, %v3466
  %v3521 = vmax.f32 %v3465, %v3467
  %v3522 = vmax.f32 %v3468, %v3470
  %v3523 = vmax.f32 %v3469, %v3471
  %v3524 = vmax.f32 %v3472, %v3474
  %v3525 = vmax.f32 %v3473, %v3475
  %v3526 = vmax.f32 %v3476, %v3478
  %v3527 = vmax.f32 %v3477, %v3479
  %v3528 = vmax.f32 %v3480, %v3482
  %v3529 = vmax.f32 %v3481, %v3483
  %v3530 = vmax.f32 %v3484, %v3486
  %v3531 = vmax.f32 %v3485, %v3487
  %v3532 = vmax.f32 %v3488, %v3490
  %v3533 = vmax.f32 %v3489, %v3491
  %v3534 = vmax.f32 %v3492, %v3494
  %v3535 = vmax.f32 %v3493, %v3495
  %v3536 = vmax.f32 %v3496, %v3498
  %v3537 = vmax.f32 %v3497, %v3499
  %v3538 = vmax.f32 %v3500, %v3502
  %v3539 = vmax.f32 %v3501, %v3503
  %v3540 = vmax.f32 %v3504, %v3506
  %v3541 = vmax.f32 %v3505, %v3507
  %v3542 = vmax.f32 %v3508, %v3510
  %v3543 = vmax.f32 %v3509, %v3511
  %v3576 = vcombine.high %v3512, %v3512
  %v3578 = vunpack.c.l.s4 1983009808
  %v3579 = vunpack.c.0.s8 %v3578
  %v3580 = vlaneseq
  %v3581 = vshrl.u32 %v3580, 7
  %v3582 = vsub.s32 %v3579, %v3581
  %v3583 = vrot.slane %v3512, %v3582
  %v3585 = vunpack.c.l.s4 1983009808
  %v3586 = vunpack.c.0.s8 %v3585
  %v3587 = vlaneseq
  %v3588 = vshrl.u32 %v3587, 7
  %v3589 = vsub.s32 %v3586, %v3588
  %v3590 = vrot.slane %v3576, %v3589
  %v3591 = vcombine.high %v3583, %v3583
  %v3592 = vcombine.high %v3590, %v3590
  %v3593 = vcombine.high %v3513, %v3513
  %v3595 = vunpack.c.l.s4 1983009808
  %v3596 = vunpack.c.0.s8 %v3595
  %v3597 = vlaneseq
  %v3598 = vshrl.u32 %v3597, 7
  %v3599 = vsub.s32 %v3596, %v3598
  %v3600 = vrot.slane %v3513, %v3599
  %v3602 = vunpack.c.l.s4 1983009808
  %v3603 = vunpack.c.0.s8 %v3602
  %v3604 = vlaneseq
  %v3605 = vshrl.u32 %v3604, 7
  %v3606 = vsub.s32 %v3603, %v3605
  %v3607 = vrot.slane %v3593, %v3606
  %v3608 = vcombine.high %v3600, %v3600
  %v3609 = vcombine.high %v3607, %v3607
  %v3610 = vcombine.high %v3514, %v3514
  %v3612 = vunpack.c.l.s4 1983009808
  %v3613 = vunpack.c.0.s8 %v3612
  %v3614 = vlaneseq
  %v3615 = vshrl.u32 %v3614, 7
  %v3616 = vsub.s32 %v3613, %v3615
  %v3617 = vrot.slane %v3514, %v3616
  %v3619 = vunpack.c.l.s4 1983009808
  %v3620 = vunpack.c.0.s8 %v3619
  %v3621 = vlaneseq
  %v3622 = vshrl.u32 %v3621, 7
  %v3623 = vsub.s32 %v3620, %v3622
  %v3624 = vrot.slane %v3610, %v3623
  %v3625 = vcombine.high %v3617, %v3617
  %v3626 = vcombine.high %v3624, %v3624
  %v3627 = vcombine.high %v3515, %v3515
  %v3629 = vunpack.c.l.s4 1983009808
  %v3630 = vunpack.c.0.s8 %v3629
  %v3631 = vlaneseq
  %v3632 = vshrl.u32 %v3631, 7
  %v3633 = vsub.s32 %v3630, %v3632
  %v3634 = vrot.slane %v3515, %v3633
  %v3636 = vunpack.c.l.s4 1983009808
  %v3637 = vunpack.c.0.s8 %v3636
  %v3638 = vlaneseq
  %v3639 = vshrl.u32 %v3638, 7
  %v3640 = vsub.s32 %v3637, %v3639
  %v3641 = vrot.slane %v3627, %v3640
  %v3642 = vcombine.high %v3634, %v3634
  %v3643 = vcombine.high %v3641, %v3641
  %v3644 = vcombine.high %v3516, %v3516
  %v3646 = vunpack.c.l.s4 1983009808
  %v3647 = vunpack.c.0.s8 %v3646
  %v3648 = vlaneseq
  %v3649 = vshrl.u32 %v3648, 7
  %v3650 = vsub.s32 %v3647, %v3649
  %v3651 = vrot.slane %v3516, %v3650
  %v3653 = vunpack.c.l.s4 1983009808
  %v3654 = vunpack.c.0.s8 %v3653
  %v3655 = vlaneseq
  %v3656 = vshrl.u32 %v3655, 7
  %v3657 = vsub.s32 %v3654, %v3656
  %v3658 = vrot.slane %v3644, %v3657
  %v3659 = vcombine.high %v3651, %v3651
  %v3660 = vcombine.high %v3658, %v3658
  %v3661 = vcombine.high %v3517, %v3517
  %v3663 = vunpack.c.l.s4 1983009808
  %v3664 = vunpack.c.0.s8 %v3663
  %v3665 = vlaneseq
  %v3666 = vshrl.u32 %v3665, 7
  %v3667 = vsub.s32 %v3664, %v3666
  %v3668 = vrot.slane %v3517, %v3667
  %v3670 = vunpack.c.l.s4 1983009808
  %v3671 = vunpack.c.0.s8 %v3670
  %v3672 = vlaneseq
  %v3673 = vshrl.u32 %v3672, 7
  %v3674 = vsub.s32 %v3671, %v3673
  %v3675 = vrot.slane %v3661, %v3674
  %v3676 = vcombine.high %v3668, %v3668
  %v3677 = vcombine.high %v3675, %v3675
  %v3678 = vcombine.high %v3518, %v3518
  %v3680 = vunpack.c.l.s4 1983009808
  %v3681 = vunpack.c.0.s8 %v3680
  %v3682 = vlaneseq
  %v3683 = vshrl.u32 %v3682, 7
  %v3684 = vsub.s32 %v3681, %v3683
  %v3685 = vrot.slane %v3518, %v3684
  %v3687 = vunpack.c.l.s4 1983009808
  %v3688 = vunpack.c.0.s8 %v3687
  %v3689 = vlaneseq
  %v3690 = vshrl.u32 %v3689, 7
  %v3691 = vsub.s32 %v3688, %v3690
  %v3692 = vrot.slane %v3678, %v3691
  %v3693 = vcombine.high %v3685, %v3685
  %v3694 = vcombine.high %v3692, %v3692
  %v3695 = vcombine.high %v3519, %v3519
  %v3697 = vunpack.c.l.s4 1983009808
  %v3698 = vunpack.c.0.s8 %v3697
  %v3699 = vlaneseq
  %v3700 = vshrl.u32 %v3699, 7
  %v3701 = vsub.s32 %v3698, %v3700
  %v3702 = vrot.slane %v3519, %v3701
  %v3704 = vunpack.c.l.s4 1983009808
  %v3705 = vunpack.c.0.s8 %v3704
  %v3706 = vlaneseq
  %v3707 = vshrl.u32 %v3706, 7
  %v3708 = vsub.s32 %v3705, %v3707
  %v3709 = vrot.slane %v3695, %v3708
  %v3710 = vcombine.high %v3702, %v3702
  %v3711 = vcombine.high %v3709, %v3709
  %v3712 = vcombine.high %v3520, %v3520
  %v3714 = vunpack.c.l.s4 1983009808
  %v3715 = vunpack.c.0.s8 %v3714
  %v3716 = vlaneseq
  %v3717 = vshrl.u32 %v3716, 7
  %v3718 = vsub.s32 %v3715, %v3717
  %v3719 = vrot.slane %v3520, %v3718
  %v3721 = vunpack.c.l.s4 1983009808
  %v3722 = vunpack.c.0.s8 %v3721
  %v3723 = vlaneseq
  %v3724 = vshrl.u32 %v3723, 7
  %v3725 = vsub.s32 %v3722, %v3724
  %v3726 = vrot.slane %v3712, %v3725
  %v3727 = vcombine.high %v3719, %v3719
  %v3728 = vcombine.high %v3726, %v3726
  %v3729 = vcombine.high %v3521, %v3521
  %v3731 = vunpack.c.l.s4 1983009808
  %v3732 = vunpack.c.0.s8 %v3731
  %v3733 = vlaneseq
  %v3734 = vshrl.u32 %v3733, 7
  %v3735 = vsub.s32 %v3732, %v3734
  %v3736 = vrot.slane %v3521, %v3735
  %v3738 = vunpack.c.l.s4 1983009808
  %v3739 = vunpack.c.0.s8 %v3738
  %v3740 = vlaneseq
  %v3741 = vshrl.u32 %v3740, 7
  %v3742 = vsub.s32 %v3739, %v3741
  %v3743 = vrot.slane %v3729, %v3742
  %v3744 = vcombine.high %v3736, %v3736
  %v3745 = vcombine.high %v3743, %v3743
  %v3746 = vcombine.high %v3522, %v3522
  %v3748 = vunpack.c.l.s4 1983009808
  %v3749 = vunpack.c.0.s8 %v3748
  %v3750 = vlaneseq
  %v3751 = vshrl.u32 %v3750, 7
  %v3752 = vsub.s32 %v3749, %v3751
  %v3753 = vrot.slane %v3522, %v3752
  %v3755 = vunpack.c.l.s4 1983009808
  %v3756 = vunpack.c.0.s8 %v3755
  %v3757 = vlaneseq
  %v3758 = vshrl.u32 %v3757, 7
  %v3759 = vsub.s32 %v3756, %v3758
  %v3760 = vrot.slane %v3746, %v3759
  %v3761 = vcombine.high %v3753, %v3753
  %v3762 = vcombine.high %v3760, %v3760
  %v3763 = vcombine.high %v3523, %v3523
  %v3765 = vunpack.c.l.s4 1983009808
  %v3766 = vunpack.c.0.s8 %v3765
  %v3767 = vlaneseq
  %v3768 = vshrl.u32 %v3767, 7
  %v3769 = vsub.s32 %v3766, %v3768
  %v3770 = vrot.slane %v3523, %v3769
  %v3772 = vunpack.c.l.s4 1983009808
  %v3773 = vunpack.c.0.s8 %v3772
  %v3774 = vlaneseq
  %v3775 = vshrl.u32 %v3774, 7
  %v3776 = vsub.s32 %v3773, %v3775
  %v3777 = vrot.slane %v3763, %v3776
  %v3778 = vcombine.high %v3770, %v3770
  %v3779 = vcombine.high %v3777, %v3777
  %v3780 = vcombine.high %v3524, %v3524
  %v3782 = vunpack.c.l.s4 1983009808
  %v3783 = vunpack.c.0.s8 %v3782
  %v3784 = vlaneseq
  %v3785 = vshrl.u32 %v3784, 7
  %v3786 = vsub.s32 %v3783, %v3785
  %v3787 = vrot.slane %v3524, %v3786
  %v3789 = vunpack.c.l.s4 1983009808
  %v3790 = vunpack.c.0.s8 %v3789
  %v3791 = vlaneseq
  %v3792 = vshrl.u32 %v3791, 7
  %v3793 = vsub.s32 %v3790, %v3792
  %v3794 = vrot.slane %v3780, %v3793
  %v3795 = vcombine.high %v3787, %v3787
  %v3796 = vcombine.high %v3794, %v3794
  %v3797 = vcombine.high %v3525, %v3525
  %v3799 = vunpack.c.l.s4 1983009808
  %v3800 = vunpack.c.0.s8 %v3799
  %v3801 = vlaneseq
  %v3802 = vshrl.u32 %v3801, 7
  %v3803 = vsub.s32 %v3800, %v3802
  %v3804 = vrot.slane %v3525, %v3803
  %v3806 = vunpack.c.l.s4 1983009808
  %v3807 = vunpack.c.0.s8 %v3806
  %v3808 = vlaneseq
  %v3809 = vshrl.u32 %v3808, 7
  %v3810 = vsub.s32 %v3807, %v3809
  %v3811 = vrot.slane %v3797, %v3810
  %v3812 = vcombine.high %v3804, %v3804
  %v3813 = vcombine.high %v3811, %v3811
  %v3814 = vcombine.high %v3526, %v3526
  %v3816 = vunpack.c.l.s4 1983009808
  %v3817 = vunpack.c.0.s8 %v3816
  %v3818 = vlaneseq
  %v3819 = vshrl.u32 %v3818, 7
  %v3820 = vsub.s32 %v3817, %v3819
  %v3821 = vrot.slane %v3526, %v3820
  %v3823 = vunpack.c.l.s4 1983009808
  %v3824 = vunpack.c.0.s8 %v3823
  %v3825 = vlaneseq
  %v3826 = vshrl.u32 %v3825, 7
  %v3827 = vsub.s32 %v3824, %v3826
  %v3828 = vrot.slane %v3814, %v3827
  %v3829 = vcombine.high %v3821, %v3821
  %v3830 = vcombine.high %v3828, %v3828
  %v3831 = vcombine.high %v3527, %v3527
  %v3833 = vunpack.c.l.s4 1983009808
  %v3834 = vunpack.c.0.s8 %v3833
  %v3835 = vlaneseq
  %v3836 = vshrl.u32 %v3835, 7
  %v3837 = vsub.s32 %v3834, %v3836
  %v3838 = vrot.slane %v3527, %v3837
  %v3840 = vunpack.c.l.s4 1983009808
  %v3841 = vunpack.c.0.s8 %v3840
  %v3842 = vlaneseq
  %v3843 = vshrl.u32 %v3842, 7
  %v3844 = vsub.s32 %v3841, %v3843
  %v3845 = vrot.slane %v3831, %v3844
  %v3846 = vcombine.high %v3838, %v3838
  %v3847 = vcombine.high %v3845, %v3845
  %v3848 = vcombine.high %v3528, %v3528
  %v3850 = vunpack.c.l.s4 1983009808
  %v3851 = vunpack.c.0.s8 %v3850
  %v3852 = vlaneseq
  %v3853 = vshrl.u32 %v3852, 7
  %v3854 = vsub.s32 %v3851, %v3853
  %v3855 = vrot.slane %v3528, %v3854
  %v3857 = vunpack.c.l.s4 1983009808
  %v3858 = vunpack.c.0.s8 %v3857
  %v3859 = vlaneseq
  %v3860 = vshrl.u32 %v3859, 7
  %v3861 = vsub.s32 %v3858, %v3860
  %v3862 = vrot.slane %v3848, %v3861
  %v3863 = vcombine.high %v3855, %v3855
  %v3864 = vcombine.high %v3862, %v3862
  %v3865 = vcombine.high %v3529, %v3529
  %v3867 = vunpack.c.l.s4 1983009808
  %v3868 = vunpack.c.0.s8 %v3867
  %v3869 = vlaneseq
  %v3870 = vshrl.u32 %v3869, 7
  %v3871 = vsub.s32 %v3868, %v3870
  %v3872 = vrot.slane %v3529, %v3871
  %v3874 = vunpack.c.l.s4 1983009808
  %v3875 = vunpack.c.0.s8 %v3874
  %v3876 = vlaneseq
  %v3877 = vshrl.u32 %v3876, 7
  %v3878 = vsub.s32 %v3875, %v3877
  %v3879 = vrot.slane %v3865, %v3878
  %v3880 = vcombine.high %v3872, %v3872
  %v3881 = vcombine.high %v3879, %v3879
  %v3882 = vcombine.high %v3530, %v3530
  %v3884 = vunpack.c.l.s4 1983009808
  %v3885 = vunpack.c.0.s8 %v3884
  %v3886 = vlaneseq
  %v3887 = vshrl.u32 %v3886, 7
  %v3888 = vsub.s32 %v3885, %v3887
  %v3889 = vrot.slane %v3530, %v3888
  %v3891 = vunpack.c.l.s4 1983009808
  %v3892 = vunpack.c.0.s8 %v3891
  %v3893 = vlaneseq
  %v3894 = vshrl.u32 %v3893, 7
  %v3895 = vsub.s32 %v3892, %v3894
  %v3896 = vrot.slane %v3882, %v3895
  %v3897 = vcombine.high %v3889, %v3889
  %v3898 = vcombine.high %v3896, %v3896
  %v3899 = vcombine.high %v3531, %v3531
  %v3901 = vunpack.c.l.s4 1983009808
  %v3902 = vunpack.c.0.s8 %v3901
  %v3903 = vlaneseq
  %v3904 = vshrl.u32 %v3903, 7
  %v3905 = vsub.s32 %v3902, %v3904
  %v3906 = vrot.slane %v3531, %v3905
  %v3908 = vunpack.c.l.s4 1983009808
  %v3909 = vunpack.c.0.s8 %v3908
  %v3910 = vlaneseq
  %v3911 = vshrl.u32 %v3910, 7
  %v3912 = vsub.s32 %v3909, %v3911
  %v3913 = vrot.slane %v3899, %v3912
  %v3914 = vcombine.high %v3906, %v3906
  %v3915 = vcombine.high %v3913, %v3913
  %v3916 = vcombine.high %v3532, %v3532
  %v3918 = vunpack.c.l.s4 1983009808
  %v3919 = vunpack.c.0.s8 %v3918
  %v3920 = vlaneseq
  %v3921 = vshrl.u32 %v3920, 7
  %v3922 = vsub.s32 %v3919, %v3921
  %v3923 = vrot.slane %v3532, %v3922
  %v3925 = vunpack.c.l.s4 1983009808
  %v3926 = vunpack.c.0.s8 %v3925
  %v3927 = vlaneseq
  %v3928 = vshrl.u32 %v3927, 7
  %v3929 = vsub.s32 %v3926, %v3928
  %v3930 = vrot.slane %v3916, %v3929
  %v3931 = vcombine.high %v3923, %v3923
  %v3932 = vcombine.high %v3930, %v3930
  %v3933 = vcombine.high %v3533, %v3533
  %v3935 = vunpack.c.l.s4 1983009808
  %v3936 = vunpack.c.0.s8 %v3935
  %v3937 = vlaneseq
  %v3938 = vshrl.u32 %v3937, 7
  %v3939 = vsub.s32 %v3936, %v3938
  %v3940 = vrot.slane %v3533, %v3939
  %v3942 = vunpack.c.l.s4 1983009808
  %v3943 = vunpack.c.0.s8 %v3942
  %v3944 = vlaneseq
  %v3945 = vshrl.u32 %v3944, 7
  %v3946 = vsub.s32 %v3943, %v3945
  %v3947 = vrot.slane %v3933, %v3946
  %v3948 = vcombine.high %v3940, %v3940
  %v3949 = vcombine.high %v3947, %v3947
  %v3950 = vcombine.high %v3534, %v3534
  %v3952 = vunpack.c.l.s4 1983009808
  %v3953 = vunpack.c.0.s8 %v3952
  %v3954 = vlaneseq
  %v3955 = vshrl.u32 %v3954, 7
  %v3956 = vsub.s32 %v3953, %v3955
  %v3957 = vrot.slane %v3534, %v3956
  %v3959 = vunpack.c.l.s4 1983009808
  %v3960 = vunpack.c.0.s8 %v3959
  %v3961 = vlaneseq
  %v3962 = vshrl.u32 %v3961, 7
  %v3963 = vsub.s32 %v3960, %v3962
  %v3964 = vrot.slane %v3950, %v3963
  %v3965 = vcombine.high %v3957, %v3957
  %v3966 = vcombine.high %v3964, %v3964
  %v3967 = vcombine.high %v3535, %v3535
  %v3969 = vunpack.c.l.s4 1983009808
  %v3970 = vunpack.c.0.s8 %v3969
  %v3971 = vlaneseq
  %v3972 = vshrl.u32 %v3971, 7
  %v3973 = vsub.s32 %v3970, %v3972
  %v3974 = vrot.slane %v3535, %v3973
  %v3976 = vunpack.c.l.s4 1983009808
  %v3977 = vunpack.c.0.s8 %v3976
  %v3978 = vlaneseq
  %v3979 = vshrl.u32 %v3978, 7
  %v3980 = vsub.s32 %v3977, %v3979
  %v3981 = vrot.slane %v3967, %v3980
  %v3982 = vcombine.high %v3974, %v3974
  %v3983 = vcombine.high %v3981, %v3981
  %v3984 = vcombine.high %v3536, %v3536
  %v3986 = vunpack.c.l.s4 1983009808
  %v3987 = vunpack.c.0.s8 %v3986
  %v3988 = vlaneseq
  %v3989 = vshrl.u32 %v3988, 7
  %v3990 = vsub.s32 %v3987, %v3989
  %v3991 = vrot.slane %v3536, %v3990
  %v3993 = vunpack.c.l.s4 1983009808
  %v3994 = vunpack.c.0.s8 %v3993
  %v3995 = vlaneseq
  %v3996 = vshrl.u32 %v3995, 7
  %v3997 = vsub.s32 %v3994, %v3996
  %v3998 = vrot.slane %v3984, %v3997
  %v3999 = vcombine.high %v3991, %v3991
  %v4000 = vcombine.high %v3998, %v3998
  %v4001 = vcombine.high %v3537, %v3537
  %v4003 = vunpack.c.l.s4 1983009808
  %v4004 = vunpack.c.0.s8 %v4003
  %v4005 = vlaneseq
  %v4006 = vshrl.u32 %v4005, 7
  %v4007 = vsub.s32 %v4004, %v4006
  %v4008 = vrot.slane %v3537, %v4007
  %v4010 = vunpack.c.l.s4 1983009808
  %v4011 = vunpack.c.0.s8 %v4010
  %v4012 = vlaneseq
  %v4013 = vshrl.u32 %v4012, 7
  %v4014 = vsub.s32 %v4011, %v4013
  %v4015 = vrot.slane %v4001, %v4014
  %v4016 = vcombine.high %v4008, %v4008
  %v4017 = vcombine.high %v4015, %v4015
  %v4018 = vcombine.high %v3538, %v3538
  %v4020 = vunpack.c.l.s4 1983009808
  %v4021 = vunpack.c.0.s8 %v4020
  %v4022 = vlaneseq
  %v4023 = vshrl.u32 %v4022, 7
  %v4024 = vsub.s32 %v4021, %v4023
  %v4025 = vrot.slane %v3538, %v4024
  %v4027 = vunpack.c.l.s4 1983009808
  %v4028 = vunpack.c.0.s8 %v4027
  %v4029 = vlaneseq
  %v4030 = vshrl.u32 %v4029, 7
  %v4031 = vsub.s32 %v4028, %v4030
  %v4032 = vrot.slane %v4018, %v4031
  %v4033 = vcombine.high %v4025, %v4025
  %v4034 = vcombine.high %v4032, %v4032
  %v4035 = vcombine.high %v3539, %v3539
  %v4037 = vunpack.c.l.s4 1983009808
  %v4038 = vunpack.c.0.s8 %v4037
  %v4039 = vlaneseq
  %v4040 = vshrl.u32 %v4039, 7
  %v4041 = vsub.s32 %v4038, %v4040
  %v4042 = vrot.slane %v3539, %v4041
  %v4044 = vunpack.c.l.s4 1983009808
  %v4045 = vunpack.c.0.s8 %v4044
  %v4046 = vlaneseq
  %v4047 = vshrl.u32 %v4046, 7
  %v4048 = vsub.s32 %v4045, %v4047
  %v4049 = vrot.slane %v4035, %v4048
  %v4050 = vcombine.high %v4042, %v4042
  %v4051 = vcombine.high %v4049, %v4049
  %v4052 = vcombine.high %v3540, %v3540
  %v4054 = vunpack.c.l.s4 1983009808
  %v4055 = vunpack.c.0.s8 %v4054
  %v4056 = vlaneseq
  %v4057 = vshrl.u32 %v4056, 7
  %v4058 = vsub.s32 %v4055, %v4057
  %v4059 = vrot.slane %v3540, %v4058
  %v4061 = vunpack.c.l.s4 1983009808
  %v4062 = vunpack.c.0.s8 %v4061
  %v4063 = vlaneseq
  %v4064 = vshrl.u32 %v4063, 7
  %v4065 = vsub.s32 %v4062, %v4064
  %v4066 = vrot.slane %v4052, %v4065
  %v4067 = vcombine.high %v4059, %v4059
  %v4068 = vcombine.high %v4066, %v4066
  %v4069 = vcombine.high %v3541, %v3541
  %v4071 = vunpack.c.l.s4 1983009808
  %v4072 = vunpack.c.0.s8 %v4071
  %v4073 = vlaneseq
  %v4074 = vshrl.u32 %v4073, 7
  %v4075 = vsub.s32 %v4072, %v4074
  %v4076 = vrot.slane %v3541, %v4075
  %v4078 = vunpack.c.l.s4 1983009808
  %v4079 = vunpack.c.0.s8 %v4078
  %v4080 = vlaneseq
  %v4081 = vshrl.u32 %v4080, 7
  %v4082 = vsub.s32 %v4079, %v4081
  %v4083 = vrot.slane %v4069, %v4082
  %v4084 = vcombine.high %v4076, %v4076
  %v4085 = vcombine.high %v4083, %v4083
  %v4086 = vcombine.high %v3542, %v3542
  %v4088 = vunpack.c.l.s4 1983009808
  %v4089 = vunpack.c.0.s8 %v4088
  %v4090 = vlaneseq
  %v4091 = vshrl.u32 %v4090, 7
  %v4092 = vsub.s32 %v4089, %v4091
  %v4093 = vrot.slane %v3542, %v4092
  %v4095 = vunpack.c.l.s4 1983009808
  %v4096 = vunpack.c.0.s8 %v4095
  %v4097 = vlaneseq
  %v4098 = vshrl.u32 %v4097, 7
  %v4099 = vsub.s32 %v4096, %v4098
  %v4100 = vrot.slane %v4086, %v4099
  %v4101 = vcombine.high %v4093, %v4093
  %v4102 = vcombine.high %v4100, %v4100
  %v4103 = vcombine.high %v3543, %v3543
  %v4105 = vunpack.c.l.s4 1983009808
  %v4106 = vunpack.c.0.s8 %v4105
  %v4107 = vlaneseq
  %v4108 = vshrl.u32 %v4107, 7
  %v4109 = vsub.s32 %v4106, %v4108
  %v4110 = vrot.slane %v3543, %v4109
  %v4112 = vunpack.c.l.s4 1983009808
  %v4113 = vunpack.c.0.s8 %v4112
  %v4114 = vlaneseq
  %v4115 = vshrl.u32 %v4114, 7
  %v4116 = vsub.s32 %v4113, %v4115
  %v4117 = vrot.slane %v4103, %v4116
  %v4118 = vcombine.high %v4110, %v4110
  %v4119 = vcombine.high %v4117, %v4117
  %v4248 = vrot.slane %v3583, 7
  %v4249 = vrot.slane %v4248, 2
  %v4250 = vrot.slane %v3591, 7
  %v4251 = vrot.slane %v4250, 2
  %v4252 = vrot.slane %v3590, 7
  %v4253 = vrot.slane %v4252, 2
  %v4254 = vrot.slane %v3592, 7
  %v4255 = vrot.slane %v4254, 2
  %v4256 = vrot.slane %v3600, 7
  %v4257 = vrot.slane %v4256, 2
  %v4258 = vrot.slane %v3608, 7
  %v4259 = vrot.slane %v4258, 2
  %v4260 = vrot.slane %v3607, 7
  %v4261 = vrot.slane %v4260, 2
  %v4262 = vrot.slane %v3609, 7
  %v4263 = vrot.slane %v4262, 2
  %v4264 = vrot.slane %v3617, 7
  %v4265 = vrot.slane %v4264, 2
  %v4266 = vrot.slane %v3625, 7
  %v4267 = vrot.slane %v4266, 2
  %v4268 = vrot.slane %v3624, 7
  %v4269 = vrot.slane %v4268, 2
  %v4270 = vrot.slane %v3626, 7
  %v4271 = vrot.slane %v4270, 2
  %v4272 = vrot.slane %v3634, 7
  %v4273 = vrot.slane %v4272, 2
  %v4274 = vrot.slane %v3642, 7
  %v4275 = vrot.slane %v4274, 2
  %v4276 = vrot.slane %v3641, 7
  %v4277 = vrot.slane %v4276, 2
  %v4278 = vrot.slane %v3643, 7
  %v4279 = vrot.slane %v4278, 2
  %v4280 = vrot.slane %v3651, 7
  %v4281 = vrot.slane %v4280, 2
  %v4282 = vrot.slane %v3659, 7
  %v4283 = vrot.slane %v4282, 2
  %v4284 = vrot.slane %v3658, 7
  %v4285 = vrot.slane %v4284, 2
  %v4286 = vrot.slane %v3660, 7
  %v4287 = vrot.slane %v4286, 2
  %v4288 = vrot.slane %v3668, 7
  %v4289 = vrot.slane %v4288, 2
  %v4290 = vrot.slane %v3676, 7
  %v4291 = vrot.slane %v4290, 2
  %v4292 = vrot.slane %v3675, 7
  %v4293 = vrot.slane %v4292, 2
  %v4294 = vrot.slane %v3677, 7
  %v4295 = vrot.slane %v4294, 2
  %v4296 = vrot.slane %v3685, 7
  %v4297 = vrot.slane %v4296, 2
  %v4298 = vrot.slane %v3693, 7
  %v4299 = vrot.slane %v4298, 2
  %v4300 = vrot.slane %v3692, 7
  %v4301 = vrot.slane %v4300, 2
  %v4302 = vrot.slane %v3694, 7
  %v4303 = vrot.slane %v4302, 2
  %v4304 = vrot.slane %v3702, 7
  %v4305 = vrot.slane %v4304, 2
  %v4306 = vrot.slane %v3710, 7
  %v4307 = vrot.slane %v4306, 2
  %v4308 = vrot.slane %v3709, 7
  %v4309 = vrot.slane %v4308, 2
  %v4310 = vrot.slane %v3711, 7
  %v4311 = vrot.slane %v4310, 2
  %v4312 = vrot.slane %v3719, 7
  %v4313 = vrot.slane %v4312, 2
  %v4314 = vrot.slane %v3727, 7
  %v4315 = vrot.slane %v4314, 2
  %v4316 = vrot.slane %v3726, 7
  %v4317 = vrot.slane %v4316, 2
  %v4318 = vrot.slane %v3728, 7
  %v4319 = vrot.slane %v4318, 2
  %v4320 = vrot.slane %v3736, 7
  %v4321 = vrot.slane %v4320, 2
  %v4322 = vrot.slane %v3744, 7
  %v4323 = vrot.slane %v4322, 2
  %v4324 = vrot.slane %v3743, 7
  %v4325 = vrot.slane %v4324, 2
  %v4326 = vrot.slane %v3745, 7
  %v4327 = vrot.slane %v4326, 2
  %v4328 = vrot.slane %v3753, 7
  %v4329 = vrot.slane %v4328, 2
  %v4330 = vrot.slane %v3761, 7
  %v4331 = vrot.slane %v4330, 2
  %v4332 = vrot.slane %v3760, 7
  %v4333 = vrot.slane %v4332, 2
  %v4334 = vrot.slane %v3762, 7
  %v4335 = vrot.slane %v4334, 2
  %v4336 = vrot.slane %v3770, 7
  %v4337 = vrot.slane %v4336, 2
  %v4338 = vrot.slane %v3778, 7
  %v4339 = vrot.slane %v4338, 2
  %v4340 = vrot.slane %v3777, 7
  %v4341 = vrot.slane %v4340, 2
  %v4342 = vrot.slane %v3779, 7
  %v4343 = vrot.slane %v4342, 2
  %v4344 = vrot.slane %v3787, 7
  %v4345 = vrot.slane %v4344, 2
  %v4346 = vrot.slane %v3795, 7
  %v4347 = vrot.slane %v4346, 2
  %v4348 = vrot.slane %v3794, 7
  %v4349 = vrot.slane %v4348, 2
  %v4350 = vrot.slane %v3796, 7
  %v4351 = vrot.slane %v4350, 2
  %v4352 = vrot.slane %v3804, 7
  %v4353 = vrot.slane %v4352, 2
  %v4354 = vrot.slane %v3812, 7
  %v4355 = vrot.slane %v4354, 2
  %v4356 = vrot.slane %v3811, 7
  %v4357 = vrot.slane %v4356, 2
  %v4358 = vrot.slane %v3813, 7
  %v4359 = vrot.slane %v4358, 2
  %v4360 = vrot.slane %v3821, 7
  %v4361 = vrot.slane %v4360, 2
  %v4362 = vrot.slane %v3829, 7
  %v4363 = vrot.slane %v4362, 2
  %v4364 = vrot.slane %v3828, 7
  %v4365 = vrot.slane %v4364, 2
  %v4366 = vrot.slane %v3830, 7
  %v4367 = vrot.slane %v4366, 2
  %v4368 = vrot.slane %v3838, 7
  %v4369 = vrot.slane %v4368, 2
  %v4370 = vrot.slane %v3846, 7
  %v4371 = vrot.slane %v4370, 2
  %v4372 = vrot.slane %v3845, 7
  %v4373 = vrot.slane %v4372, 2
  %v4374 = vrot.slane %v3847, 7
  %v4375 = vrot.slane %v4374, 2
  %v4376 = vrot.slane %v3855, 7
  %v4377 = vrot.slane %v4376, 2
  %v4378 = vrot.slane %v3863, 7
  %v4379 = vrot.slane %v4378, 2
  %v4380 = vrot.slane %v3862, 7
  %v4381 = vrot.slane %v4380, 2
  %v4382 = vrot.slane %v3864, 7
  %v4383 = vrot.slane %v4382, 2
  %v4384 = vrot.slane %v3872, 7
  %v4385 = vrot.slane %v4384, 2
  %v4386 = vrot.slane %v3880, 7
  %v4387 = vrot.slane %v4386, 2
  %v4388 = vrot.slane %v3879, 7
  %v4389 = vrot.slane %v4388, 2
  %v4390 = vrot.slane %v3881, 7
  %v4391 = vrot.slane %v4390, 2
  %v4392 = vrot.slane %v3889, 7
  %v4393 = vrot.slane %v4392, 2
  %v4394 = vrot.slane %v3897, 7
  %v4395 = vrot.slane %v4394, 2
  %v4396 = vrot.slane %v3896, 7
  %v4397 = vrot.slane %v4396, 2
  %v4398 = vrot.slane %v3898, 7
  %v4399 = vrot.slane %v4398, 2
  %v4400 = vrot.slane %v3906, 7
  %v4401 = vrot.slane %v4400, 2
  %v4402 = vrot.slane %v3914, 7
  %v4403 = vrot.slane %v4402, 2
  %v4404 = vrot.slane %v3913, 7
  %v4405 = vrot.slane %v4404, 2
  %v4406 = vrot.slane %v3915, 7
  %v4407 = vrot.slane %v4406, 2
  %v4408 = vrot.slane %v3923, 7
  %v4409 = vrot.slane %v4408, 2
  %v4410 = vrot.slane %v3931, 7
  %v4411 = vrot.slane %v4410, 2
  %v4412 = vrot.slane %v3930, 7
  %v4413 = vrot.slane %v4412, 2
  %v4414 = vrot.slane %v3932, 7
  %v4415 = vrot.slane %v4414, 2
  %v4416 = vrot.slane %v3940, 7
  %v4417 = vrot.slane %v4416, 2
  %v4418 = vrot.slane %v3948, 7
  %v4419 = vrot.slane %v4418, 2
  %v4420 = vrot.slane %v3947, 7
  %v4421 = vrot.slane %v4420, 2
  %v4422 = vrot.slane %v3949, 7
  %v4423 = vrot.slane %v4422, 2
  %v4424 = vrot.slane %v3957, 7
  %v4425 = vrot.slane %v4424, 2
  %v4426 = vrot.slane %v3965, 7
  %v4427 = vrot.slane %v4426, 2
  %v4428 = vrot.slane %v3964, 7
  %v4429 = vrot.slane %v4428, 2
  %v4430 = vrot.slane %v3966, 7
  %v4431 = vrot.slane %v4430, 2
  %v4432 = vrot.slane %v3974, 7
  %v4433 = vrot.slane %v4432, 2
  %v4434 = vrot.slane %v3982, 7
  %v4435 = vrot.slane %v4434, 2
  %v4436 = vrot.slane %v3981, 7
  %v4437 = vrot.slane %v4436, 2
  %v4438 = vrot.slane %v3983, 7
  %v4439 = vrot.slane %v4438, 2
  %v4440 = vrot.slane %v3991, 7
  %v4441 = vrot.slane %v4440, 2
  %v4442 = vrot.slane %v3999, 7
  %v4443 = vrot.slane %v4442, 2
  %v4444 = vrot.slane %v3998, 7
  %v4445 = vrot.slane %v4444, 2
  %v4446 = vrot.slane %v4000, 7
  %v4447 = vrot.slane %v4446, 2
  %v4448 = vrot.slane %v4008, 7
  %v4449 = vrot.slane %v4448, 2
  %v4450 = vrot.slane %v4016, 7
  %v4451 = vrot.slane %v4450, 2
  %v4452 = vrot.slane %v4015, 7
  %v4453 = vrot.slane %v4452, 2
  %v4454 = vrot.slane %v4017, 7
  %v4455 = vrot.slane %v4454, 2
  %v4456 = vrot.slane %v4025, 7
  %v4457 = vrot.slane %v4456, 2
  %v4458 = vrot.slane %v4033, 7
  %v4459 = vrot.slane %v4458, 2
  %v4460 = vrot.slane %v4032, 7
  %v4461 = vrot.slane %v4460, 2
  %v4462 = vrot.slane %v4034, 7
  %v4463 = vrot.slane %v4462, 2
  %v4464 = vrot.slane %v4042, 7
  %v4465 = vrot.slane %v4464, 2
  %v4466 = vrot.slane %v4050, 7
  %v4467 = vrot.slane %v4466, 2
  %v4468 = vrot.slane %v4049, 7
  %v4469 = vrot.slane %v4468, 2
  %v4470 = vrot.slane %v4051, 7
  %v4471 = vrot.slane %v4470, 2
  %v4472 = vrot.slane %v4059, 7
  %v4473 = vrot.slane %v4472, 2
  %v4474 = vrot.slane %v4067, 7
  %v4475 = vrot.slane %v4474, 2
  %v4476 = vrot.slane %v4066, 7
  %v4477 = vrot.slane %v4476, 2
  %v4478 = vrot.slane %v4068, 7
  %v4479 = vrot.slane %v4478, 2
  %v4480 = vrot.slane %v4076, 7
  %v4481 = vrot.slane %v4480, 2
  %v4482 = vrot.slane %v4084, 7
  %v4483 = vrot.slane %v4482, 2
  %v4484 = vrot.slane %v4083, 7
  %v4485 = vrot.slane %v4484, 2
  %v4486 = vrot.slane %v4085, 7
  %v4487 = vrot.slane %v4486, 2
  %v4488 = vrot.slane %v4093, 7
  %v4489 = vrot.slane %v4488, 2
  %v4490 = vrot.slane %v4101, 7
  %v4491 = vrot.slane %v4490, 2
  %v4492 = vrot.slane %v4100, 7
  %v4493 = vrot.slane %v4492, 2
  %v4494 = vrot.slane %v4102, 7
  %v4495 = vrot.slane %v4494, 2
  %v4496 = vrot.slane %v4110, 7
  %v4497 = vrot.slane %v4496, 2
  %v4498 = vrot.slane %v4118, 7
  %v4499 = vrot.slane %v4498, 2
  %v4500 = vrot.slane %v4117, 7
  %v4501 = vrot.slane %v4500, 2
  %v4502 = vrot.slane %v4119, 7
  %v4503 = vrot.slane %v4502, 2
  %v4632 = vmax.f32 %v3583, %v4249
  %v4633 = vmax.f32 %v3591, %v4251
  %v4634 = vmax.f32 %v3590, %v4253
  %v4635 = vmax.f32 %v3592, %v4255
  %v4636 = vmax.f32 %v3600, %v4257
  %v4637 = vmax.f32 %v3608, %v4259
  %v4638 = vmax.f32 %v3607, %v4261
  %v4639 = vmax.f32 %v3609, %v4263
  %v4640 = vmax.f32 %v3617, %v4265
  %v4641 = vmax.f32 %v3625, %v4267
  %v4642 = vmax.f32 %v3624, %v4269
  %v4643 = vmax.f32 %v3626, %v4271
  %v4644 = vmax.f32 %v3634, %v4273
  %v4645 = vmax.f32 %v3642, %v4275
  %v4646 = vmax.f32 %v3641, %v4277
  %v4647 = vmax.f32 %v3643, %v4279
  %v4648 = vmax.f32 %v3651, %v4281
  %v4649 = vmax.f32 %v3659, %v4283
  %v4650 = vmax.f32 %v3658, %v4285
  %v4651 = vmax.f32 %v3660, %v4287
  %v4652 = vmax.f32 %v3668, %v4289
  %v4653 = vmax.f32 %v3676, %v4291
  %v4654 = vmax.f32 %v3675, %v4293
  %v4655 = vmax.f32 %v3677, %v4295
  %v4656 = vmax.f32 %v3685, %v4297
  %v4657 = vmax.f32 %v3693, %v4299
  %v4658 = vmax.f32 %v3692, %v4301
  %v4659 = vmax.f32 %v3694, %v4303
  %v4660 = vmax.f32 %v3702, %v4305
  %v4661 = vmax.f32 %v3710, %v4307
  %v4662 = vmax.f32 %v3709, %v4309
  %v4663 = vmax.f32 %v3711, %v4311
  %v4664 = vmax.f32 %v3719, %v4313
  %v4665 = vmax.f32 %v3727, %v4315
  %v4666 = vmax.f32 %v3726, %v4317
  %v4667 = vmax.f32 %v3728, %v4319
  %v4668 = vmax.f32 %v3736, %v4321
  %v4669 = vmax.f32 %v3744, %v4323
  %v4670 = vmax.f32 %v3743, %v4325
  %v4671 = vmax.f32 %v3745, %v4327
  %v4672 = vmax.f32 %v3753, %v4329
  %v4673 = vmax.f32 %v3761, %v4331
  %v4674 = vmax.f32 %v3760, %v4333
  %v4675 = vmax.f32 %v3762, %v4335
  %v4676 = vmax.f32 %v3770, %v4337
  %v4677 = vmax.f32 %v3778, %v4339
  %v4678 = vmax.f32 %v3777, %v4341
  %v4679 = vmax.f32 %v3779, %v4343
  %v4680 = vmax.f32 %v3787, %v4345
  %v4681 = vmax.f32 %v3795, %v4347
  %v4682 = vmax.f32 %v3794, %v4349
  %v4683 = vmax.f32 %v3796, %v4351
  %v4684 = vmax.f32 %v3804, %v4353
  %v4685 = vmax.f32 %v3812, %v4355
  %v4686 = vmax.f32 %v3811, %v4357
  %v4687 = vmax.f32 %v3813, %v4359
  %v4688 = vmax.f32 %v3821, %v4361
  %v4689 = vmax.f32 %v3829, %v4363
  %v4690 = vmax.f32 %v3828, %v4365
  %v4691 = vmax.f32 %v3830, %v4367
  %v4692 = vmax.f32 %v3838, %v4369
  %v4693 = vmax.f32 %v3846, %v4371
  %v4694 = vmax.f32 %v3845, %v4373
  %v4695 = vmax.f32 %v3847, %v4375
  %v4696 = vmax.f32 %v3855, %v4377
  %v4697 = vmax.f32 %v3863, %v4379
  %v4698 = vmax.f32 %v3862, %v4381
  %v4699 = vmax.f32 %v3864, %v4383
  %v4700 = vmax.f32 %v3872, %v4385
  %v4701 = vmax.f32 %v3880, %v4387
  %v4702 = vmax.f32 %v3879, %v4389
  %v4703 = vmax.f32 %v3881, %v4391
  %v4704 = vmax.f32 %v3889, %v4393
  %v4705 = vmax.f32 %v3897, %v4395
  %v4706 = vmax.f32 %v3896, %v4397
  %v4707 = vmax.f32 %v3898, %v4399
  %v4708 = vmax.f32 %v3906, %v4401
  %v4709 = vmax.f32 %v3914, %v4403
  %v4710 = vmax.f32 %v3913, %v4405
  %v4711 = vmax.f32 %v3915, %v4407
  %v4712 = vmax.f32 %v3923, %v4409
  %v4713 = vmax.f32 %v3931, %v4411
  %v4714 = vmax.f32 %v3930, %v4413
  %v4715 = vmax.f32 %v3932, %v4415
  %v4716 = vmax.f32 %v3940, %v4417
  %v4717 = vmax.f32 %v3948, %v4419
  %v4718 = vmax.f32 %v3947, %v4421
  %v4719 = vmax.f32 %v3949, %v4423
  %v4720 = vmax.f32 %v3957, %v4425
  %v4721 = vmax.f32 %v3965, %v4427
  %v4722 = vmax.f32 %v3964, %v4429
  %v4723 = vmax.f32 %v3966, %v4431
  %v4724 = vmax.f32 %v3974, %v4433
  %v4725 = vmax.f32 %v3982, %v4435
  %v4726 = vmax.f32 %v3981, %v4437
  %v4727 = vmax.f32 %v3983, %v4439
  %v4728 = vmax.f32 %v3991, %v4441
  %v4729 = vmax.f32 %v3999, %v4443
  %v4730 = vmax.f32 %v3998, %v4445
  %v4731 = vmax.f32 %v4000, %v4447
  %v4732 = vmax.f32 %v4008, %v4449
  %v4733 = vmax.f32 %v4016, %v4451
  %v4734 = vmax.f32 %v4015, %v4453
  %v4735 = vmax.f32 %v4017, %v4455
  %v4736 = vmax.f32 %v4025, %v4457
  %v4737 = vmax.f32 %v4033, %v4459
  %v4738 = vmax.f32 %v4032, %v4461
  %v4739 = vmax.f32 %v4034, %v4463
  %v4740 = vmax.f32 %v4042, %v4465
  %v4741 = vmax.f32 %v4050, %v4467
  %v4742 = vmax.f32 %v4049, %v4469
  %v4743 = vmax.f32 %v4051, %v4471
  %v4744 = vmax.f32 %v4059, %v4473
  %v4745 = vmax.f32 %v4067, %v4475
  %v4746 = vmax.f32 %v4066, %v4477
  %v4747 = vmax.f32 %v4068, %v4479
  %v4748 = vmax.f32 %v4076, %v4481
  %v4749 = vmax.f32 %v4084, %v4483
  %v4750 = vmax.f32 %v4083, %v4485
  %v4751 = vmax.f32 %v4085, %v4487
  %v4752 = vmax.f32 %v4093, %v4489
  %v4753 = vmax.f32 %v4101, %v4491
  %v4754 = vmax.f32 %v4100, %v4493
  %v4755 = vmax.f32 %v4102, %v4495
  %v4756 = vmax.f32 %v4110, %v4497
  %v4757 = vmax.f32 %v4118, %v4499
  %v4758 = vmax.f32 %v4117, %v4501
  %v4759 = vmax.f32 %v4119, %v4503
  %v4760 = vld [vmem:[%s5] sm:$0xf]
  %v4761 = vld [vmem:[%s5 + $0x4] sm:$0xf]
  %v4762 = vld [vmem:[%s5 + $0x8] sm:$0xf]
  %v4763 = vld [vmem:[%s5 + $0xc] sm:$0xf]
  %v4764 = vld [vmem:[%s5 + $0x10] sm:$0xf]
  %v4765 = vld [vmem:[%s5 + $0x14] sm:$0xf]
  %v4766 = vld [vmem:[%s5 + $0x18] sm:$0xf]
  %v4767 = vld [vmem:[%s5 + $0x1c] sm:$0xf]
  %v4768 = vld [vmem:[%s5 + $0x20] sm:$0xf]
  %v4769 = vld [vmem:[%s5 + $0x24] sm:$0xf]
  %v4770 = vld [vmem:[%s5 + $0x28] sm:$0xf]
  %v4771 = vld [vmem:[%s5 + $0x2c] sm:$0xf]
  %v4772 = vld [vmem:[%s5 + $0x30] sm:$0xf]
  %v4773 = vld [vmem:[%s5 + $0x34] sm:$0xf]
  %v4774 = vld [vmem:[%s5 + $0x38] sm:$0xf]
  %v4775 = vld [vmem:[%s5 + $0x3c] sm:$0xf]
  %v4776 = vld [vmem:[%s5 + $0x40] sm:$0xf]
  %v4777 = vld [vmem:[%s5 + $0x44] sm:$0xf]
  %v4778 = vld [vmem:[%s5 + $0x48] sm:$0xf]
  %v4779 = vld [vmem:[%s5 + $0x4c] sm:$0xf]
  %v4780 = vld [vmem:[%s5 + $0x50] sm:$0xf]
  %v4781 = vld [vmem:[%s5 + $0x54] sm:$0xf]
  %v4782 = vld [vmem:[%s5 + $0x58] sm:$0xf]
  %v4783 = vld [vmem:[%s5 + $0x5c] sm:$0xf]
  %v4784 = vld [vmem:[%s5 + $0x60] sm:$0xf]
  %v4785 = vld [vmem:[%s5 + $0x64] sm:$0xf]
  %v4786 = vld [vmem:[%s5 + $0x68] sm:$0xf]
  %v4787 = vld [vmem:[%s5 + $0x6c] sm:$0xf]
  %v4788 = vld [vmem:[%s5 + $0x70] sm:$0xf]
  %v4789 = vld [vmem:[%s5 + $0x74] sm:$0xf]
  %v4790 = vld [vmem:[%s5 + $0x78] sm:$0xf]
  %v4791 = vld [vmem:[%s5 + $0x7c] sm:$0xf]
  %v4792 = vld [vmem:[%s5 + $0x80] sm:$0xf]
  %v4793 = vld [vmem:[%s5 + $0x84] sm:$0xf]
  %v4794 = vld [vmem:[%s5 + $0x88] sm:$0xf]
  %v4795 = vld [vmem:[%s5 + $0x8c] sm:$0xf]
  %v4796 = vld [vmem:[%s5 + $0x90] sm:$0xf]
  %v4797 = vld [vmem:[%s5 + $0x94] sm:$0xf]
  %v4798 = vld [vmem:[%s5 + $0x98] sm:$0xf]
  %v4799 = vld [vmem:[%s5 + $0x9c] sm:$0xf]
  %v4800 = vld [vmem:[%s5 + $0xa0] sm:$0xf]
  %v4801 = vld [vmem:[%s5 + $0xa4] sm:$0xf]
  %v4802 = vld [vmem:[%s5 + $0xa8] sm:$0xf]
  %v4803 = vld [vmem:[%s5 + $0xac] sm:$0xf]
  %v4804 = vld [vmem:[%s5 + $0xb0] sm:$0xf]
  %v4805 = vld [vmem:[%s5 + $0xb4] sm:$0xf]
  %v4806 = vld [vmem:[%s5 + $0xb8] sm:$0xf]
  %v4807 = vld [vmem:[%s5 + $0xbc] sm:$0xf]
  %v4808 = vld [vmem:[%s5 + $0xc0] sm:$0xf]
  %v4809 = vld [vmem:[%s5 + $0xc4] sm:$0xf]
  %v4810 = vld [vmem:[%s5 + $0xc8] sm:$0xf]
  %v4811 = vld [vmem:[%s5 + $0xcc] sm:$0xf]
  %v4812 = vld [vmem:[%s5 + $0xd0] sm:$0xf]
  %v4813 = vld [vmem:[%s5 + $0xd4] sm:$0xf]
  %v4814 = vld [vmem:[%s5 + $0xd8] sm:$0xf]
  %v4815 = vld [vmem:[%s5 + $0xdc] sm:$0xf]
  %v4816 = vld [vmem:[%s5 + $0xe0] sm:$0xf]
  %v4817 = vld [vmem:[%s5 + $0xe4] sm:$0xf]
  %v4818 = vld [vmem:[%s5 + $0xe8] sm:$0xf]
  %v4819 = vld [vmem:[%s5 + $0xec] sm:$0xf]
  %v4820 = vld [vmem:[%s5 + $0xf0] sm:$0xf]
  %v4821 = vld [vmem:[%s5 + $0xf4] sm:$0xf]
  %v4822 = vld [vmem:[%s5 + $0xf8] sm:$0xf]
  %v4823 = vld [vmem:[%s5 + $0xfc] sm:$0xf]
  %v4824 = vld [vmem:[%s5 + $0x100] sm:$0xf]
  %v4825 = vld [vmem:[%s5 + $0x104] sm:$0xf]
  %v4826 = vld [vmem:[%s5 + $0x108] sm:$0xf]
  %v4827 = vld [vmem:[%s5 + $0x10c] sm:$0xf]
  %v4828 = vld [vmem:[%s5 + $0x110] sm:$0xf]
  %v4829 = vld [vmem:[%s5 + $0x114] sm:$0xf]
  %v4830 = vld [vmem:[%s5 + $0x118] sm:$0xf]
  %v4831 = vld [vmem:[%s5 + $0x11c] sm:$0xf]
  %v4832 = vld [vmem:[%s6] sm:$0x1]
  %v4833 = vld [vmem:[%s7] sm:$0x1]
  %v4834 = vld [vmem:[%s8] sm:$0x1]
  %v4835 = vpack.c.bf16 %v4632, %v4632
  %v4836 = vpack.c.bf16 %v4633, %v4633
  %v4837 = vpack.c.bf16 %v4634, %v4634
  %v4838 = vpack.c.bf16 %v4635, %v4635
  %v4839 = vpack.c.bf16 %v4636, %v4636
  %v4840 = vpack.c.bf16 %v4637, %v4637
  %v4841 = vpack.c.bf16 %v4640, %v4640
  %v4842 = vpack.c.bf16 %v4641, %v4641
  %v4843 = vpack.c.bf16 %v4642, %v4642
  %v4844 = vpack.c.bf16 %v4643, %v4643
  %v4845 = vpack.c.bf16 %v4644, %v4644
  %v4846 = vpack.c.bf16 %v4645, %v4645
  %v4847 = vpack.c.bf16 %v4648, %v4648
  %v4848 = vpack.c.bf16 %v4649, %v4649
  %v4849 = vpack.c.bf16 %v4650, %v4650
  %v4850 = vpack.c.bf16 %v4651, %v4651
  %v4851 = vpack.c.bf16 %v4652, %v4652
  %v4852 = vpack.c.bf16 %v4653, %v4653
  %v4853 = vpack.c.bf16 %v4656, %v4656
  %v4854 = vpack.c.bf16 %v4657, %v4657
  %v4855 = vpack.c.bf16 %v4658, %v4658
  %v4856 = vpack.c.bf16 %v4659, %v4659
  %v4857 = vpack.c.bf16 %v4660, %v4660
  %v4858 = vpack.c.bf16 %v4661, %v4661
  %v4859 = vpack.c.bf16 %v4664, %v4664
  %v4860 = vpack.c.bf16 %v4665, %v4665
  %v4861 = vpack.c.bf16 %v4666, %v4666
  %v4862 = vpack.c.bf16 %v4667, %v4667
  %v4863 = vpack.c.bf16 %v4668, %v4668
  %v4864 = vpack.c.bf16 %v4669, %v4669
  %v4865 = vpack.c.bf16 %v4672, %v4672
  %v4866 = vpack.c.bf16 %v4673, %v4673
  %v4867 = vpack.c.bf16 %v4674, %v4674
  %v4868 = vpack.c.bf16 %v4675, %v4675
  %v4869 = vpack.c.bf16 %v4676, %v4676
  %v4870 = vpack.c.bf16 %v4677, %v4677
  %v4871 = vpack.c.bf16 %v4696, %v4696
  %v4872 = vpack.c.bf16 %v4697, %v4697
  %v4873 = vpack.c.bf16 %v4698, %v4698
  %v4874 = vpack.c.bf16 %v4699, %v4699
  %v4875 = vpack.c.bf16 %v4700, %v4700
  %v4876 = vpack.c.bf16 %v4701, %v4701
  %v4877 = vpack.c.bf16 %v4704, %v4704
  %v4878 = vpack.c.bf16 %v4705, %v4705
  %v4879 = vpack.c.bf16 %v4706, %v4706
  %v4880 = vpack.c.bf16 %v4707, %v4707
  %v4881 = vpack.c.bf16 %v4708, %v4708
  %v4882 = vpack.c.bf16 %v4709, %v4709
  %v4883 = vpack.c.bf16 %v4712, %v4712
  %v4884 = vpack.c.bf16 %v4713, %v4713
  %v4885 = vpack.c.bf16 %v4714, %v4714
  %v4886 = vpack.c.bf16 %v4715, %v4715
  %v4887 = vpack.c.bf16 %v4716, %v4716
  %v4888 = vpack.c.bf16 %v4717, %v4717
  %v4889 = vpack.c.bf16 %v4720, %v4720
  %v4890 = vpack.c.bf16 %v4721, %v4721
  %v4891 = vpack.c.bf16 %v4722, %v4722
  %v4892 = vpack.c.bf16 %v4723, %v4723
  %v4893 = vpack.c.bf16 %v4724, %v4724
  %v4894 = vpack.c.bf16 %v4725, %v4725
  %v4895 = vpack.c.bf16 %v4728, %v4728
  %v4896 = vpack.c.bf16 %v4729, %v4729
  %v4897 = vpack.c.bf16 %v4730, %v4730
  %v4898 = vpack.c.bf16 %v4731, %v4731
  %v4899 = vpack.c.bf16 %v4732, %v4732
  %v4900 = vpack.c.bf16 %v4733, %v4733
  %v4901 = vpack.c.bf16 %v4736, %v4736
  %v4902 = vpack.c.bf16 %v4737, %v4737
  %v4903 = vpack.c.bf16 %v4738, %v4738
  %v4904 = vpack.c.bf16 %v4739, %v4739
  %v4905 = vpack.c.bf16 %v4740, %v4740
  %v4906 = vpack.c.bf16 %v4741, %v4741
  %v4907 = vpack.c.bf16 %v4638, %v4638
  %v4908 = vpack.c.bf16 %v4646, %v4646
  %v4909 = vpack.c.bf16 %v4654, %v4654
  %v4910 = vpack.c.bf16 %v4662, %v4662
  %v4911 = vpack.c.bf16 %v4670, %v4670
  %v4912 = vpack.c.bf16 %v4678, %v4678
  %v4913 = vpack.c.bf16 %v4702, %v4702
  %v4914 = vpack.c.bf16 %v4710, %v4710
  %v4915 = vpack.c.bf16 %v4718, %v4718
  %v4916 = vpack.c.bf16 %v4726, %v4726
  %v4917 = vpack.c.bf16 %v4734, %v4734
  %v4918 = vpack.c.bf16 %v4742, %v4742
  %v4919 = vpack.c.bf16 %v4639, %v4639
  %v4920 = vpack.c.bf16 %v4647, %v4647
  %v4921 = vpack.c.bf16 %v4655, %v4655
  %v4922 = vpack.c.bf16 %v4663, %v4663
  %v4923 = vpack.c.bf16 %v4671, %v4671
  %v4924 = vpack.c.bf16 %v4679, %v4679
  %v4925 = vpack.c.bf16 %v4703, %v4703
  %v4926 = vpack.c.bf16 %v4711, %v4711
  %v4927 = vpack.c.bf16 %v4719, %v4719
  %v4928 = vpack.c.bf16 %v4727, %v4727
  %v4929 = vpack.c.bf16 %v4735, %v4735
  %v4930 = vpack.c.bf16 %v4743, %v4743
  %v4931 = vpack.c.bf16 %v4680, %v4680
  %v4932 = vpack.c.bf16 %v4681, %v4681
  %v4933 = vpack.c.bf16 %v4682, %v4682
  %v4934 = vpack.c.bf16 %v4683, %v4683
  %v4935 = vpack.c.bf16 %v4684, %v4684
  %v4936 = vpack.c.bf16 %v4685, %v4685
  %v4937 = vpack.c.bf16 %v4744, %v4744
  %v4938 = vpack.c.bf16 %v4745, %v4745
  %v4939 = vpack.c.bf16 %v4746, %v4746
  %v4940 = vpack.c.bf16 %v4747, %v4747
  %v4941 = vpack.c.bf16 %v4748, %v4748
  %v4942 = vpack.c.bf16 %v4749, %v4749
  %v4943 = vpack.c.bf16 %v4686, %v4686
  %v4944 = vpack.c.bf16 %v4750, %v4750
  %v4945 = vpack.c.bf16 %v4687, %v4687
  %v4946 = vpack.c.bf16 %v4751, %v4751
  %v4947 = vpack.c.bf16 %v4688, %v4688
  %v4948 = vpack.c.bf16 %v4689, %v4689
  %v4949 = vpack.c.bf16 %v4690, %v4690
  %v4950 = vpack.c.bf16 %v4691, %v4691
  %v4951 = vpack.c.bf16 %v4692, %v4692
  %v4952 = vpack.c.bf16 %v4693, %v4693
  %v4953 = vpack.c.bf16 %v4752, %v4752
  %v4954 = vpack.c.bf16 %v4753, %v4753
  %v4955 = vpack.c.bf16 %v4754, %v4754
  %v4956 = vpack.c.bf16 %v4755, %v4755
  %v4957 = vpack.c.bf16 %v4756, %v4756
  %v4958 = vpack.c.bf16 %v4757, %v4757
  %v4959 = vpack.c.bf16 %v4694, %v4694
  %v4960 = vpack.c.bf16 %v4758, %v4758
  %v4961 = vpack.c.bf16 %v4695, %v4695
  %v4962 = vpack.c.bf16 %v4759, %v4759
  %v5035 = vunpack.c.l.b16 %v4835
  %v5036 = vunpack.c.l.b16 %v4836
  %v5037 = vunpack.c.l.b16 %v4837
  %v5038 = vunpack.c.l.b16 %v4838
  %v5039 = vunpack.c.l.b16 %v4839
  %v5040 = vunpack.c.l.b16 %v4840
  %v5041 = vunpack.c.l.b16 %v4841
  %v5042 = vunpack.c.l.b16 %v4842
  %v5043 = vunpack.c.l.b16 %v4843
  %v5044 = vunpack.c.l.b16 %v4844
  %v5045 = vunpack.c.l.b16 %v4845
  %v5046 = vunpack.c.l.b16 %v4846
  %v5047 = vunpack.c.l.b16 %v4847
  %v5048 = vunpack.c.l.b16 %v4848
  %v5049 = vunpack.c.l.b16 %v4849
  %v5050 = vunpack.c.l.b16 %v4850
  %v5051 = vunpack.c.l.b16 %v4851
  %v5052 = vunpack.c.l.b16 %v4852
  %v5053 = vunpack.c.l.b16 %v4853
  %v5054 = vunpack.c.l.b16 %v4854
  %v5055 = vunpack.c.l.b16 %v4855
  %v5056 = vunpack.c.l.b16 %v4856
  %v5057 = vunpack.c.l.b16 %v4857
  %v5058 = vunpack.c.l.b16 %v4858
  %v5059 = vunpack.c.l.b16 %v4859
  %v5060 = vunpack.c.l.b16 %v4860
  %v5061 = vunpack.c.l.b16 %v4861
  %v5062 = vunpack.c.l.b16 %v4862
  %v5063 = vunpack.c.l.b16 %v4863
  %v5064 = vunpack.c.l.b16 %v4864
  %v5065 = vunpack.c.l.b16 %v4865
  %v5066 = vunpack.c.l.b16 %v4866
  %v5067 = vunpack.c.l.b16 %v4867
  %v5068 = vunpack.c.l.b16 %v4868
  %v5069 = vunpack.c.l.b16 %v4869
  %v5070 = vunpack.c.l.b16 %v4870
  %v5071 = vunpack.c.l.b16 %v4871
  %v5072 = vunpack.c.l.b16 %v4872
  %v5073 = vunpack.c.l.b16 %v4873
  %v5074 = vunpack.c.l.b16 %v4874
  %v5075 = vunpack.c.l.b16 %v4875
  %v5076 = vunpack.c.l.b16 %v4876
  %v5077 = vunpack.c.l.b16 %v4877
  %v5078 = vunpack.c.l.b16 %v4878
  %v5079 = vunpack.c.l.b16 %v4879
  %v5080 = vunpack.c.l.b16 %v4880
  %v5081 = vunpack.c.l.b16 %v4881
  %v5082 = vunpack.c.l.b16 %v4882
  %v5083 = vunpack.c.l.b16 %v4883
  %v5084 = vunpack.c.l.b16 %v4884
  %v5085 = vunpack.c.l.b16 %v4885
  %v5086 = vunpack.c.l.b16 %v4886
  %v5087 = vunpack.c.l.b16 %v4887
  %v5088 = vunpack.c.l.b16 %v4888
  %v5089 = vunpack.c.l.b16 %v4889
  %v5090 = vunpack.c.l.b16 %v4890
  %v5091 = vunpack.c.l.b16 %v4891
  %v5092 = vunpack.c.l.b16 %v4892
  %v5093 = vunpack.c.l.b16 %v4893
  %v5094 = vunpack.c.l.b16 %v4894
  %v5095 = vunpack.c.l.b16 %v4895
  %v5096 = vunpack.c.l.b16 %v4896
  %v5097 = vunpack.c.l.b16 %v4897
  %v5098 = vunpack.c.l.b16 %v4898
  %v5099 = vunpack.c.l.b16 %v4899
  %v5100 = vunpack.c.l.b16 %v4900
  %v5101 = vunpack.c.l.b16 %v4901
  %v5102 = vunpack.c.l.b16 %v4902
  %v5103 = vunpack.c.l.b16 %v4903
  %v5104 = vunpack.c.l.b16 %v4904
  %v5105 = vunpack.c.l.b16 %v4905
  %v5106 = vunpack.c.l.b16 %v4906
  %v5107 = vrot.slane %v5036, 7
  %vm5108 = vcmask 1041409
  %v5109 = vsel %vm5108, %v5107, %v5035
  %v5110 = vrot.slane %v5037, 6
  %vm5111 = vcmask 1042434
  %v5112 = vsel %vm5111, %v5110, %v5109
  %v5113 = vrot.slane %v5038, 5
  %vm5114 = vcmask 1043459
  %v5115 = vsel %vm5114, %v5113, %v5112
  %v5116 = vrot.slane %v5039, 4
  %vm5117 = vcmask 1044484
  %v5118 = vsel %vm5117, %v5116, %v5115
  %v5119 = vrot.slane %v5040, 3
  %vm5120 = vcmask 1045509
  %v5121 = vsel %vm5120, %v5119, %v5118
  %v5122 = vrot.slane %v5041, 2
  %vm5123 = vcmask 1046534
  %v5124 = vsel %vm5123, %v5122, %v5121
  %v5125 = vrot.slane %v5042, 1
  %vm5126 = vcmask 1047559
  %v5127 = vsel %vm5126, %v5125, %v5124
  %v5128 = vrot.slane %v5044, 7
  %v5129 = vsel %vm5108, %v5128, %v5043
  %v5130 = vrot.slane %v5045, 6
  %v5131 = vsel %vm5111, %v5130, %v5129
  %v5132 = vrot.slane %v5046, 5
  %v5133 = vsel %vm5114, %v5132, %v5131
  %v5134 = vrot.slane %v5047, 4
  %v5135 = vsel %vm5117, %v5134, %v5133
  %v5136 = vrot.slane %v5048, 3
  %v5137 = vsel %vm5120, %v5136, %v5135
  %v5138 = vrot.slane %v5049, 2
  %v5139 = vsel %vm5123, %v5138, %v5137
  %v5140 = vrot.slane %v5050, 1
  %v5141 = vsel %vm5126, %v5140, %v5139
  %v5142 = vrot.slane %v5052, 7
  %v5143 = vsel %vm5108, %v5142, %v5051
  %v5144 = vrot.slane %v5053, 6
  %v5145 = vsel %vm5111, %v5144, %v5143
  %v5146 = vrot.slane %v5054, 5
  %v5147 = vsel %vm5114, %v5146, %v5145
  %v5148 = vrot.slane %v5055, 4
  %v5149 = vsel %vm5117, %v5148, %v5147
  %v5150 = vrot.slane %v5056, 3
  %v5151 = vsel %vm5120, %v5150, %v5149
  %v5152 = vrot.slane %v5057, 2
  %v5153 = vsel %vm5123, %v5152, %v5151
  %v5154 = vrot.slane %v5058, 1
  %v5155 = vsel %vm5126, %v5154, %v5153
  %v5156 = vrot.slane %v5060, 7
  %v5157 = vsel %vm5108, %v5156, %v5059
  %v5158 = vrot.slane %v5061, 6
  %v5159 = vsel %vm5111, %v5158, %v5157
  %v5160 = vrot.slane %v5062, 5
  %v5161 = vsel %vm5114, %v5160, %v5159
  %v5162 = vrot.slane %v5063, 4
  %v5163 = vsel %vm5117, %v5162, %v5161
  %v5164 = vrot.slane %v5064, 3
  %v5165 = vsel %vm5120, %v5164, %v5163
  %v5166 = vrot.slane %v5065, 2
  %v5167 = vsel %vm5123, %v5166, %v5165
  %v5168 = vrot.slane %v5066, 1
  %v5169 = vsel %vm5126, %v5168, %v5167
  %v5170 = vrot.slane %v5068, 7
  %v5171 = vsel %vm5108, %v5170, %v5067
  %v5172 = vrot.slane %v5069, 6
  %v5173 = vsel %vm5111, %v5172, %v5171
  %v5174 = vrot.slane %v5070, 5
  %v5175 = vsel %vm5114, %v5174, %v5173
  %v5176 = vrot.slane %v5071, 4
  %v5177 = vsel %vm5117, %v5176, %v5175
  %v5178 = vrot.slane %v5072, 3
  %v5179 = vsel %vm5120, %v5178, %v5177
  %v5180 = vrot.slane %v5073, 2
  %v5181 = vsel %vm5123, %v5180, %v5179
  %v5182 = vrot.slane %v5074, 1
  %v5183 = vsel %vm5126, %v5182, %v5181
  %v5184 = vrot.slane %v5076, 7
  %v5185 = vsel %vm5108, %v5184, %v5075
  %v5186 = vrot.slane %v5077, 6
  %v5187 = vsel %vm5111, %v5186, %v5185
  %v5188 = vrot.slane %v5078, 5
  %v5189 = vsel %vm5114, %v5188, %v5187
  %v5190 = vrot.slane %v5079, 4
  %v5191 = vsel %vm5117, %v5190, %v5189
  %v5192 = vrot.slane %v5080, 3
  %v5193 = vsel %vm5120, %v5192, %v5191
  %v5194 = vrot.slane %v5081, 2
  %v5195 = vsel %vm5123, %v5194, %v5193
  %v5196 = vrot.slane %v5082, 1
  %v5197 = vsel %vm5126, %v5196, %v5195
  %v5198 = vrot.slane %v5084, 7
  %v5199 = vsel %vm5108, %v5198, %v5083
  %v5200 = vrot.slane %v5085, 6
  %v5201 = vsel %vm5111, %v5200, %v5199
  %v5202 = vrot.slane %v5086, 5
  %v5203 = vsel %vm5114, %v5202, %v5201
  %v5204 = vrot.slane %v5087, 4
  %v5205 = vsel %vm5117, %v5204, %v5203
  %v5206 = vrot.slane %v5088, 3
  %v5207 = vsel %vm5120, %v5206, %v5205
  %v5208 = vrot.slane %v5089, 2
  %v5209 = vsel %vm5123, %v5208, %v5207
  %v5210 = vrot.slane %v5090, 1
  %v5211 = vsel %vm5126, %v5210, %v5209
  %v5212 = vrot.slane %v5092, 7
  %v5213 = vsel %vm5108, %v5212, %v5091
  %v5214 = vrot.slane %v5093, 6
  %v5215 = vsel %vm5111, %v5214, %v5213
  %v5216 = vrot.slane %v5094, 5
  %v5217 = vsel %vm5114, %v5216, %v5215
  %v5218 = vrot.slane %v5095, 4
  %v5219 = vsel %vm5117, %v5218, %v5217
  %v5220 = vrot.slane %v5096, 3
  %v5221 = vsel %vm5120, %v5220, %v5219
  %v5222 = vrot.slane %v5097, 2
  %v5223 = vsel %vm5123, %v5222, %v5221
  %v5224 = vrot.slane %v5098, 1
  %v5225 = vsel %vm5126, %v5224, %v5223
  %v5226 = vrot.slane %v5100, 7
  %v5227 = vsel %vm5108, %v5226, %v5099
  %v5228 = vrot.slane %v5101, 6
  %v5229 = vsel %vm5111, %v5228, %v5227
  %v5230 = vrot.slane %v5102, 5
  %v5231 = vsel %vm5114, %v5230, %v5229
  %v5232 = vrot.slane %v5103, 4
  %v5233 = vsel %vm5117, %v5232, %v5231
  %v5234 = vrot.slane %v5104, 3
  %v5235 = vsel %vm5120, %v5234, %v5233
  %v5236 = vrot.slane %v5105, 2
  %v5237 = vsel %vm5123, %v5236, %v5235
  %v5238 = vrot.slane %v5106, 1
  %v5239 = vsel %vm5126, %v5238, %v5237
  %v5240 = vpack.c.b16 %v5141, %v5127
  %v5241 = vpack.c.b16 %v5169, %v5155
  %v5242 = vpack.c.b16 %v5197, %v5183
  %v5243 = vpack.c.b16 %v5225, %v5211
  %v5244 = vpack.c.b16 %v5239, %v5239
  %v5257 = vunpack.c.l.b16 %v4907
  %v5258 = vunpack.c.l.b16 %v4908
  %v5259 = vunpack.c.l.b16 %v4909
  %v5260 = vunpack.c.l.b16 %v4910
  %v5261 = vunpack.c.l.b16 %v4911
  %v5262 = vunpack.c.l.b16 %v4912
  %v5263 = vunpack.c.l.b16 %v4913
  %v5264 = vunpack.c.l.b16 %v4914
  %v5265 = vunpack.c.l.b16 %v4915
  %v5266 = vunpack.c.l.b16 %v4916
  %v5267 = vunpack.c.l.b16 %v4917
  %v5268 = vunpack.c.l.b16 %v4918
  %v5269 = vrot.slane %v5037, 7
  %v5270 = vsel %vm5108, %v5269, %v5036
  %v5271 = vrot.slane %v5038, 6
  %v5272 = vsel %vm5111, %v5271, %v5270
  %v5273 = vrot.slane %v5039, 5
  %v5274 = vsel %vm5114, %v5273, %v5272
  %v5275 = vrot.slane %v5040, 4
  %v5276 = vsel %vm5117, %v5275, %v5274
  %v5277 = vrot.slane %v5257, 3
  %v5278 = vsel %vm5120, %v5277, %v5276
  %v5279 = vrot.slane %v5042, 2
  %v5280 = vsel %vm5123, %v5279, %v5278
  %v5281 = vrot.slane %v5043, 1
  %v5282 = vsel %vm5126, %v5281, %v5280
  %v5283 = vrot.slane %v5045, 7
  %v5284 = vsel %vm5108, %v5283, %v5044
  %v5285 = vrot.slane %v5046, 6
  %v5286 = vsel %vm5111, %v5285, %v5284
  %v5287 = vrot.slane %v5258, 5
  %v5288 = vsel %vm5114, %v5287, %v5286
  %v5289 = vrot.slane %v5048, 4
  %v5290 = vsel %vm5117, %v5289, %v5288
  %v5291 = vrot.slane %v5049, 3
  %v5292 = vsel %vm5120, %v5291, %v5290
  %v5293 = vrot.slane %v5050, 2
  %v5294 = vsel %vm5123, %v5293, %v5292
  %v5295 = vrot.slane %v5051, 1
  %v5296 = vsel %vm5126, %v5295, %v5294
  %v5297 = vrot.slane %v5259, 7
  %v5298 = vsel %vm5108, %v5297, %v5052
  %v5299 = vrot.slane %v5054, 6
  %v5300 = vsel %vm5111, %v5299, %v5298
  %v5301 = vrot.slane %v5055, 5
  %v5302 = vsel %vm5114, %v5301, %v5300
  %v5303 = vrot.slane %v5056, 4
  %v5304 = vsel %vm5117, %v5303, %v5302
  %v5305 = vrot.slane %v5057, 3
  %v5306 = vsel %vm5120, %v5305, %v5304
  %v5307 = vrot.slane %v5058, 2
  %v5308 = vsel %vm5123, %v5307, %v5306
  %v5309 = vrot.slane %v5260, 1
  %v5310 = vsel %vm5126, %v5309, %v5308
  %v5311 = vrot.slane %v5061, 7
  %v5312 = vsel %vm5108, %v5311, %v5060
  %v5313 = vrot.slane %v5062, 6
  %v5314 = vsel %vm5111, %v5313, %v5312
  %v5315 = vrot.slane %v5063, 5
  %v5316 = vsel %vm5114, %v5315, %v5314
  %v5317 = vrot.slane %v5064, 4
  %v5318 = vsel %vm5117, %v5317, %v5316
  %v5319 = vrot.slane %v5261, 3
  %v5320 = vsel %vm5120, %v5319, %v5318
  %v5321 = vrot.slane %v5066, 2
  %v5322 = vsel %vm5123, %v5321, %v5320
  %v5323 = vrot.slane %v5067, 1
  %v5324 = vsel %vm5126, %v5323, %v5322
  %v5325 = vrot.slane %v5069, 7
  %v5326 = vsel %vm5108, %v5325, %v5068
  %v5327 = vrot.slane %v5070, 6
  %v5328 = vsel %vm5111, %v5327, %v5326
  %v5329 = vrot.slane %v5262, 5
  %v5330 = vsel %vm5114, %v5329, %v5328
  %v5331 = vrot.slane %v5072, 4
  %v5332 = vsel %vm5117, %v5331, %v5330
  %v5333 = vrot.slane %v5073, 3
  %v5334 = vsel %vm5120, %v5333, %v5332
  %v5335 = vrot.slane %v5074, 2
  %v5336 = vsel %vm5123, %v5335, %v5334
  %v5337 = vrot.slane %v5075, 1
  %v5338 = vsel %vm5126, %v5337, %v5336
  %v5339 = vrot.slane %v5263, 7
  %v5340 = vsel %vm5108, %v5339, %v5076
  %v5341 = vrot.slane %v5078, 6
  %v5342 = vsel %vm5111, %v5341, %v5340
  %v5343 = vrot.slane %v5079, 5
  %v5344 = vsel %vm5114, %v5343, %v5342
  %v5345 = vrot.slane %v5080, 4
  %v5346 = vsel %vm5117, %v5345, %v5344
  %v5347 = vrot.slane %v5081, 3
  %v5348 = vsel %vm5120, %v5347, %v5346
  %v5349 = vrot.slane %v5082, 2
  %v5350 = vsel %vm5123, %v5349, %v5348
  %v5351 = vrot.slane %v5264, 1
  %v5352 = vsel %vm5126, %v5351, %v5350
  %v5353 = vrot.slane %v5085, 7
  %v5354 = vsel %vm5108, %v5353, %v5084
  %v5355 = vrot.slane %v5086, 6
  %v5356 = vsel %vm5111, %v5355, %v5354
  %v5357 = vrot.slane %v5087, 5
  %v5358 = vsel %vm5114, %v5357, %v5356
  %v5359 = vrot.slane %v5088, 4
  %v5360 = vsel %vm5117, %v5359, %v5358
  %v5361 = vrot.slane %v5265, 3
  %v5362 = vsel %vm5120, %v5361, %v5360
  %v5363 = vrot.slane %v5090, 2
  %v5364 = vsel %vm5123, %v5363, %v5362
  %v5365 = vrot.slane %v5091, 1
  %v5366 = vsel %vm5126, %v5365, %v5364
  %v5367 = vrot.slane %v5093, 7
  %v5368 = vsel %vm5108, %v5367, %v5092
  %v5369 = vrot.slane %v5094, 6
  %v5370 = vsel %vm5111, %v5369, %v5368
  %v5371 = vrot.slane %v5266, 5
  %v5372 = vsel %vm5114, %v5371, %v5370
  %v5373 = vrot.slane %v5096, 4
  %v5374 = vsel %vm5117, %v5373, %v5372
  %v5375 = vrot.slane %v5097, 3
  %v5376 = vsel %vm5120, %v5375, %v5374
  %v5377 = vrot.slane %v5098, 2
  %v5378 = vsel %vm5123, %v5377, %v5376
  %v5379 = vrot.slane %v5099, 1
  %v5380 = vsel %vm5126, %v5379, %v5378
  %v5381 = vrot.slane %v5267, 7
  %v5382 = vsel %vm5108, %v5381, %v5100
  %v5383 = vrot.slane %v5102, 6
  %v5384 = vsel %vm5111, %v5383, %v5382
  %v5385 = vrot.slane %v5103, 5
  %v5386 = vsel %vm5114, %v5385, %v5384
  %v5387 = vrot.slane %v5104, 4
  %v5388 = vsel %vm5117, %v5387, %v5386
  %v5389 = vrot.slane %v5105, 3
  %v5390 = vsel %vm5120, %v5389, %v5388
  %v5391 = vrot.slane %v5106, 2
  %v5392 = vsel %vm5123, %v5391, %v5390
  %v5393 = vrot.slane %v5268, 1
  %v5394 = vsel %vm5126, %v5393, %v5392
  %v5395 = vpack.c.b16 %v5296, %v5282
  %v5396 = vpack.c.b16 %v5324, %v5310
  %v5397 = vpack.c.b16 %v5352, %v5338
  %v5398 = vpack.c.b16 %v5380, %v5366
  %v5399 = vpack.c.b16 %v5394, %v5394
  %5400 = vrot.lane.b32.xlu0 %v5395, 64
  %v5401 = vpop.permute.xlu0 %5400
  %5402 = vrot.lane.b32.xlu0 %v5396, 64
  %v5403 = vpop.permute.xlu0 %5402
  %5404 = vrot.lane.b32.xlu0 %v5397, 64
  %v5405 = vpop.permute.xlu0 %5404
  %5406 = vrot.lane.b32.xlu0 %v5398, 64
  %v5407 = vpop.permute.xlu0 %5406
  %5408 = vrot.lane.b32.xlu0 %v5399, 64
  %v5409 = vpop.permute.xlu0 %5408
  %v5422 = vunpack.c.l.b16 %v4919
  %v5423 = vunpack.c.l.b16 %v4920
  %v5424 = vunpack.c.l.b16 %v4921
  %v5425 = vunpack.c.l.b16 %v4922
  %v5426 = vunpack.c.l.b16 %v4923
  %v5427 = vunpack.c.l.b16 %v4924
  %v5428 = vunpack.c.l.b16 %v4925
  %v5429 = vunpack.c.l.b16 %v4926
  %v5430 = vunpack.c.l.b16 %v4927
  %v5431 = vunpack.c.l.b16 %v4928
  %v5432 = vunpack.c.l.b16 %v4929
  %v5433 = vunpack.c.l.b16 %v4930
  %v5434 = vrot.slane %v5038, 7
  %v5435 = vsel %vm5108, %v5434, %v5037
  %v5436 = vrot.slane %v5039, 6
  %v5437 = vsel %vm5111, %v5436, %v5435
  %v5438 = vrot.slane %v5040, 5
  %v5439 = vsel %vm5114, %v5438, %v5437
  %v5440 = vrot.slane %v5257, 4
  %v5441 = vsel %vm5117, %v5440, %v5439
  %v5442 = vrot.slane %v5422, 3
  %v5443 = vsel %vm5120, %v5442, %v5441
  %v5444 = vrot.slane %v5043, 2
  %v5445 = vsel %vm5123, %v5444, %v5443
  %v5446 = vrot.slane %v5044, 1
  %v5447 = vsel %vm5126, %v5446, %v5445
  %v5448 = vrot.slane %v5046, 7
  %v5449 = vsel %vm5108, %v5448, %v5045
  %v5450 = vrot.slane %v5258, 6
  %v5451 = vsel %vm5111, %v5450, %v5449
  %v5452 = vrot.slane %v5423, 5
  %v5453 = vsel %vm5114, %v5452, %v5451
  %v5454 = vrot.slane %v5049, 4
  %v5455 = vsel %vm5117, %v5454, %v5453
  %v5456 = vrot.slane %v5050, 3
  %v5457 = vsel %vm5120, %v5456, %v5455
  %v5458 = vrot.slane %v5051, 2
  %v5459 = vsel %vm5123, %v5458, %v5457
  %v5460 = vrot.slane %v5052, 1
  %v5461 = vsel %vm5126, %v5460, %v5459
  %v5462 = vrot.slane %v5424, 7
  %v5463 = vsel %vm5108, %v5462, %v5259
  %v5464 = vrot.slane %v5055, 6
  %v5465 = vsel %vm5111, %v5464, %v5463
  %v5466 = vrot.slane %v5056, 5
  %v5467 = vsel %vm5114, %v5466, %v5465
  %v5468 = vrot.slane %v5057, 4
  %v5469 = vsel %vm5117, %v5468, %v5467
  %v5470 = vrot.slane %v5058, 3
  %v5471 = vsel %vm5120, %v5470, %v5469
  %v5472 = vrot.slane %v5260, 2
  %v5473 = vsel %vm5123, %v5472, %v5471
  %v5474 = vrot.slane %v5425, 1
  %v5475 = vsel %vm5126, %v5474, %v5473
  %v5476 = vrot.slane %v5062, 7
  %v5477 = vsel %vm5108, %v5476, %v5061
  %v5478 = vrot.slane %v5063, 6
  %v5479 = vsel %vm5111, %v5478, %v5477
  %v5480 = vrot.slane %v5064, 5
  %v5481 = vsel %vm5114, %v5480, %v5479
  %v5482 = vrot.slane %v5261, 4
  %v5483 = vsel %vm5117, %v5482, %v5481
  %v5484 = vrot.slane %v5426, 3
  %v5485 = vsel %vm5120, %v5484, %v5483
  %v5486 = vrot.slane %v5067, 2
  %v5487 = vsel %vm5123, %v5486, %v5485
  %v5488 = vrot.slane %v5068, 1
  %v5489 = vsel %vm5126, %v5488, %v5487
  %v5490 = vrot.slane %v5070, 7
  %v5491 = vsel %vm5108, %v5490, %v5069
  %v5492 = vrot.slane %v5262, 6
  %v5493 = vsel %vm5111, %v5492, %v5491
  %v5494 = vrot.slane %v5427, 5
  %v5495 = vsel %vm5114, %v5494, %v5493
  %v5496 = vrot.slane %v5073, 4
  %v5497 = vsel %vm5117, %v5496, %v5495
  %v5498 = vrot.slane %v5074, 3
  %v5499 = vsel %vm5120, %v5498, %v5497
  %v5500 = vrot.slane %v5075, 2
  %v5501 = vsel %vm5123, %v5500, %v5499
  %v5502 = vrot.slane %v5076, 1
  %v5503 = vsel %vm5126, %v5502, %v5501
  %v5504 = vrot.slane %v5428, 7
  %v5505 = vsel %vm5108, %v5504, %v5263
  %v5506 = vrot.slane %v5079, 6
  %v5507 = vsel %vm5111, %v5506, %v5505
  %v5508 = vrot.slane %v5080, 5
  %v5509 = vsel %vm5114, %v5508, %v5507
  %v5510 = vrot.slane %v5081, 4
  %v5511 = vsel %vm5117, %v5510, %v5509
  %v5512 = vrot.slane %v5082, 3
  %v5513 = vsel %vm5120, %v5512, %v5511
  %v5514 = vrot.slane %v5264, 2
  %v5515 = vsel %vm5123, %v5514, %v5513
  %v5516 = vrot.slane %v5429, 1
  %v5517 = vsel %vm5126, %v5516, %v5515
  %v5518 = vrot.slane %v5086, 7
  %v5519 = vsel %vm5108, %v5518, %v5085
  %v5520 = vrot.slane %v5087, 6
  %v5521 = vsel %vm5111, %v5520, %v5519
  %v5522 = vrot.slane %v5088, 5
  %v5523 = vsel %vm5114, %v5522, %v5521
  %v5524 = vrot.slane %v5265, 4
  %v5525 = vsel %vm5117, %v5524, %v5523
  %v5526 = vrot.slane %v5430, 3
  %v5527 = vsel %vm5120, %v5526, %v5525
  %v5528 = vrot.slane %v5091, 2
  %v5529 = vsel %vm5123, %v5528, %v5527
  %v5530 = vrot.slane %v5092, 1
  %v5531 = vsel %vm5126, %v5530, %v5529
  %v5532 = vrot.slane %v5094, 7
  %v5533 = vsel %vm5108, %v5532, %v5093
  %v5534 = vrot.slane %v5266, 6
  %v5535 = vsel %vm5111, %v5534, %v5533
  %v5536 = vrot.slane %v5431, 5
  %v5537 = vsel %vm5114, %v5536, %v5535
  %v5538 = vrot.slane %v5097, 4
  %v5539 = vsel %vm5117, %v5538, %v5537
  %v5540 = vrot.slane %v5098, 3
  %v5541 = vsel %vm5120, %v5540, %v5539
  %v5542 = vrot.slane %v5099, 2
  %v5543 = vsel %vm5123, %v5542, %v5541
  %v5544 = vrot.slane %v5100, 1
  %v5545 = vsel %vm5126, %v5544, %v5543
  %v5546 = vrot.slane %v5432, 7
  %v5547 = vsel %vm5108, %v5546, %v5267
  %v5548 = vrot.slane %v5103, 6
  %v5549 = vsel %vm5111, %v5548, %v5547
  %v5550 = vrot.slane %v5104, 5
  %v5551 = vsel %vm5114, %v5550, %v5549
  %v5552 = vrot.slane %v5105, 4
  %v5553 = vsel %vm5117, %v5552, %v5551
  %v5554 = vrot.slane %v5106, 3
  %v5555 = vsel %vm5120, %v5554, %v5553
  %v5556 = vrot.slane %v5268, 2
  %v5557 = vsel %vm5123, %v5556, %v5555
  %v5558 = vrot.slane %v5433, 1
  %v5559 = vsel %vm5126, %v5558, %v5557
  %v5560 = vpack.c.b16 %v5461, %v5447
  %v5561 = vpack.c.b16 %v5489, %v5475
  %v5562 = vpack.c.b16 %v5517, %v5503
  %v5563 = vpack.c.b16 %v5545, %v5531
  %v5564 = vpack.c.b16 %v5559, %v5559
  %v5577 = vunpack.c.l.b16 %v4931
  %v5578 = vunpack.c.l.b16 %v4932
  %v5579 = vunpack.c.l.b16 %v4933
  %v5580 = vunpack.c.l.b16 %v4934
  %v5581 = vunpack.c.l.b16 %v4935
  %v5582 = vunpack.c.l.b16 %v4936
  %v5583 = vunpack.c.l.b16 %v4937
  %v5584 = vunpack.c.l.b16 %v4938
  %v5585 = vunpack.c.l.b16 %v4939
  %v5586 = vunpack.c.l.b16 %v4940
  %v5587 = vunpack.c.l.b16 %v4941
  %v5588 = vunpack.c.l.b16 %v4942
  %v5589 = vrot.slane %v5042, 7
  %v5590 = vsel %vm5108, %v5589, %v5041
  %v5591 = vrot.slane %v5043, 6
  %v5592 = vsel %vm5111, %v5591, %v5590
  %v5593 = vrot.slane %v5044, 5
  %v5594 = vsel %vm5114, %v5593, %v5592
  %v5595 = vrot.slane %v5045, 4
  %v5596 = vsel %vm5117, %v5595, %v5594
  %v5597 = vrot.slane %v5046, 3
  %v5598 = vsel %vm5120, %v5597, %v5596
  %v5599 = vrot.slane %v5047, 2
  %v5600 = vsel %vm5123, %v5599, %v5598
  %v5601 = vrot.slane %v5048, 1
  %v5602 = vsel %vm5126, %v5601, %v5600
  %v5603 = vrot.slane %v5050, 7
  %v5604 = vsel %vm5108, %v5603, %v5049
  %v5605 = vrot.slane %v5051, 6
  %v5606 = vsel %vm5111, %v5605, %v5604
  %v5607 = vrot.slane %v5052, 5
  %v5608 = vsel %vm5114, %v5607, %v5606
  %v5609 = vrot.slane %v5053, 4
  %v5610 = vsel %vm5117, %v5609, %v5608
  %v5611 = vrot.slane %v5054, 3
  %v5612 = vsel %vm5120, %v5611, %v5610
  %v5613 = vrot.slane %v5055, 2
  %v5614 = vsel %vm5123, %v5613, %v5612
  %v5615 = vrot.slane %v5056, 1
  %v5616 = vsel %vm5126, %v5615, %v5614
  %v5617 = vrot.slane %v5058, 7
  %v5618 = vsel %vm5108, %v5617, %v5057
  %v5619 = vrot.slane %v5059, 6
  %v5620 = vsel %vm5111, %v5619, %v5618
  %v5621 = vrot.slane %v5060, 5
  %v5622 = vsel %vm5114, %v5621, %v5620
  %v5623 = vrot.slane %v5061, 4
  %v5624 = vsel %vm5117, %v5623, %v5622
  %v5625 = vrot.slane %v5062, 3
  %v5626 = vsel %vm5120, %v5625, %v5624
  %v5627 = vrot.slane %v5063, 2
  %v5628 = vsel %vm5123, %v5627, %v5626
  %v5629 = vrot.slane %v5064, 1
  %v5630 = vsel %vm5126, %v5629, %v5628
  %v5631 = vrot.slane %v5066, 7
  %v5632 = vsel %vm5108, %v5631, %v5065
  %v5633 = vrot.slane %v5067, 6
  %v5634 = vsel %vm5111, %v5633, %v5632
  %v5635 = vrot.slane %v5068, 5
  %v5636 = vsel %vm5114, %v5635, %v5634
  %v5637 = vrot.slane %v5069, 4
  %v5638 = vsel %vm5117, %v5637, %v5636
  %v5639 = vrot.slane %v5070, 3
  %v5640 = vsel %vm5120, %v5639, %v5638
  %v5641 = vrot.slane %v5577, 2
  %v5642 = vsel %vm5123, %v5641, %v5640
  %v5643 = vrot.slane %v5578, 1
  %v5644 = vsel %vm5126, %v5643, %v5642
  %v5645 = vrot.slane %v5580, 7
  %v5646 = vsel %vm5108, %v5645, %v5579
  %v5647 = vrot.slane %v5581, 6
  %v5648 = vsel %vm5111, %v5647, %v5646
  %v5649 = vrot.slane %v5582, 5
  %v5650 = vsel %vm5114, %v5649, %v5648
  %v5651 = vrot.slane %v5077, 4
  %v5652 = vsel %vm5117, %v5651, %v5650
  %v5653 = vrot.slane %v5078, 3
  %v5654 = vsel %vm5120, %v5653, %v5652
  %v5655 = vrot.slane %v5079, 2
  %v5656 = vsel %vm5123, %v5655, %v5654
  %v5657 = vrot.slane %v5080, 1
  %v5658 = vsel %vm5126, %v5657, %v5656
  %v5659 = vrot.slane %v5082, 7
  %v5660 = vsel %vm5108, %v5659, %v5081
  %v5661 = vrot.slane %v5083, 6
  %v5662 = vsel %vm5111, %v5661, %v5660
  %v5663 = vrot.slane %v5084, 5
  %v5664 = vsel %vm5114, %v5663, %v5662
  %v5665 = vrot.slane %v5085, 4
  %v5666 = vsel %vm5117, %v5665, %v5664
  %v5667 = vrot.slane %v5086, 3
  %v5668 = vsel %vm5120, %v5667, %v5666
  %v5669 = vrot.slane %v5087, 2
  %v5670 = vsel %vm5123, %v5669, %v5668
  %v5671 = vrot.slane %v5088, 1
  %v5672 = vsel %vm5126, %v5671, %v5670
  %v5673 = vrot.slane %v5090, 7
  %v5674 = vsel %vm5108, %v5673, %v5089
  %v5675 = vrot.slane %v5091, 6
  %v5676 = vsel %vm5111, %v5675, %v5674
  %v5677 = vrot.slane %v5092, 5
  %v5678 = vsel %vm5114, %v5677, %v5676
  %v5679 = vrot.slane %v5093, 4
  %v5680 = vsel %vm5117, %v5679, %v5678
  %v5681 = vrot.slane %v5094, 3
  %v5682 = vsel %vm5120, %v5681, %v5680
  %v5683 = vrot.slane %v5095, 2
  %v5684 = vsel %vm5123, %v5683, %v5682
  %v5685 = vrot.slane %v5096, 1
  %v5686 = vsel %vm5126, %v5685, %v5684
  %v5687 = vrot.slane %v5098, 7
  %v5688 = vsel %vm5108, %v5687, %v5097
  %v5689 = vrot.slane %v5099, 6
  %v5690 = vsel %vm5111, %v5689, %v5688
  %v5691 = vrot.slane %v5100, 5
  %v5692 = vsel %vm5114, %v5691, %v5690
  %v5693 = vrot.slane %v5101, 4
  %v5694 = vsel %vm5117, %v5693, %v5692
  %v5695 = vrot.slane %v5102, 3
  %v5696 = vsel %vm5120, %v5695, %v5694
  %v5697 = vrot.slane %v5103, 2
  %v5698 = vsel %vm5123, %v5697, %v5696
  %v5699 = vrot.slane %v5104, 1
  %v5700 = vsel %vm5126, %v5699, %v5698
  %v5701 = vrot.slane %v5106, 7
  %v5702 = vsel %vm5108, %v5701, %v5105
  %v5703 = vrot.slane %v5583, 6
  %v5704 = vsel %vm5111, %v5703, %v5702
  %v5705 = vrot.slane %v5584, 5
  %v5706 = vsel %vm5114, %v5705, %v5704
  %v5707 = vrot.slane %v5585, 4
  %v5708 = vsel %vm5117, %v5707, %v5706
  %v5709 = vrot.slane %v5586, 3
  %v5710 = vsel %vm5120, %v5709, %v5708
  %v5711 = vrot.slane %v5587, 2
  %v5712 = vsel %vm5123, %v5711, %v5710
  %v5713 = vrot.slane %v5588, 1
  %v5714 = vsel %vm5126, %v5713, %v5712
  %v5715 = vpack.c.b16 %v5616, %v5602
  %v5716 = vpack.c.b16 %v5644, %v5630
  %v5717 = vpack.c.b16 %v5672, %v5658
  %v5718 = vpack.c.b16 %v5700, %v5686
  %v5719 = vpack.c.b16 %v5714, %v5714
  %5720 = vrot.lane.b32.xlu0 %v5715, 64
  %v5721 = vpop.permute.xlu0 %5720
  %5722 = vrot.lane.b32.xlu0 %v5716, 64
  %v5723 = vpop.permute.xlu0 %5722
  %5724 = vrot.lane.b32.xlu0 %v5717, 64
  %v5725 = vpop.permute.xlu0 %5724
  %5726 = vrot.lane.b32.xlu0 %v5718, 64
  %v5727 = vpop.permute.xlu0 %5726
  %5728 = vrot.lane.b32.xlu0 %v5719, 64
  %v5729 = vpop.permute.xlu0 %5728
  %v5732 = vunpack.c.l.b16 %v4943
  %v5733 = vunpack.c.l.b16 %v4944
  %v5734 = vrot.slane %v5043, 7
  %v5735 = vsel %vm5108, %v5734, %v5042
  %v5736 = vrot.slane %v5044, 6
  %v5737 = vsel %vm5111, %v5736, %v5735
  %v5738 = vrot.slane %v5045, 5
  %v5739 = vsel %vm5114, %v5738, %v5737
  %v5740 = vrot.slane %v5046, 4
  %v5741 = vsel %vm5117, %v5740, %v5739
  %v5742 = vrot.slane %v5258, 3
  %v5743 = vsel %vm5120, %v5742, %v5741
  %v5744 = vrot.slane %v5048, 2
  %v5745 = vsel %vm5123, %v5744, %v5743
  %v5746 = vrot.slane %v5049, 1
  %v5747 = vsel %vm5126, %v5746, %v5745
  %v5748 = vrot.slane %v5051, 7
  %v5749 = vsel %vm5108, %v5748, %v5050
  %v5750 = vrot.slane %v5052, 6
  %v5751 = vsel %vm5111, %v5750, %v5749
  %v5752 = vrot.slane %v5259, 5
  %v5753 = vsel %vm5114, %v5752, %v5751
  %v5754 = vrot.slane %v5054, 4
  %v5755 = vsel %vm5117, %v5754, %v5753
  %v5756 = vrot.slane %v5055, 3
  %v5757 = vsel %vm5120, %v5756, %v5755
  %v5758 = vrot.slane %v5056, 2
  %v5759 = vsel %vm5123, %v5758, %v5757
  %v5760 = vrot.slane %v5057, 1
  %v5761 = vsel %vm5126, %v5760, %v5759
  %v5762 = vrot.slane %v5260, 7
  %v5763 = vsel %vm5108, %v5762, %v5058
  %v5764 = vrot.slane %v5060, 6
  %v5765 = vsel %vm5111, %v5764, %v5763
  %v5766 = vrot.slane %v5061, 5
  %v5767 = vsel %vm5114, %v5766, %v5765
  %v5768 = vrot.slane %v5062, 4
  %v5769 = vsel %vm5117, %v5768, %v5767
  %v5770 = vrot.slane %v5063, 3
  %v5771 = vsel %vm5120, %v5770, %v5769
  %v5772 = vrot.slane %v5064, 2
  %v5773 = vsel %vm5123, %v5772, %v5771
  %v5774 = vrot.slane %v5261, 1
  %v5775 = vsel %vm5126, %v5774, %v5773
  %v5776 = vrot.slane %v5067, 7
  %v5777 = vsel %vm5108, %v5776, %v5066
  %v5778 = vrot.slane %v5068, 6
  %v5779 = vsel %vm5111, %v5778, %v5777
  %v5780 = vrot.slane %v5069, 5
  %v5781 = vsel %vm5114, %v5780, %v5779
  %v5782 = vrot.slane %v5070, 4
  %v5783 = vsel %vm5117, %v5782, %v5781
  %v5784 = vrot.slane %v5262, 3
  %v5785 = vsel %vm5120, %v5784, %v5783
  %v5786 = vrot.slane %v5578, 2
  %v5787 = vsel %vm5123, %v5786, %v5785
  %v5788 = vrot.slane %v5579, 1
  %v5789 = vsel %vm5126, %v5788, %v5787
  %v5790 = vrot.slane %v5581, 7
  %v5791 = vsel %vm5108, %v5790, %v5580
  %v5792 = vrot.slane %v5582, 6
  %v5793 = vsel %vm5111, %v5792, %v5791
  %v5794 = vrot.slane %v5732, 5
  %v5795 = vsel %vm5114, %v5794, %v5793
  %v5796 = vrot.slane %v5078, 4
  %v5797 = vsel %vm5117, %v5796, %v5795
  %v5798 = vrot.slane %v5079, 3
  %v5799 = vsel %vm5120, %v5798, %v5797
  %v5800 = vrot.slane %v5080, 2
  %v5801 = vsel %vm5123, %v5800, %v5799
  %v5802 = vrot.slane %v5081, 1
  %v5803 = vsel %vm5126, %v5802, %v5801
  %v5804 = vrot.slane %v5264, 7
  %v5805 = vsel %vm5108, %v5804, %v5082
  %v5806 = vrot.slane %v5084, 6
  %v5807 = vsel %vm5111, %v5806, %v5805
  %v5808 = vrot.slane %v5085, 5
  %v5809 = vsel %vm5114, %v5808, %v5807
  %v5810 = vrot.slane %v5086, 4
  %v5811 = vsel %vm5117, %v5810, %v5809
  %v5812 = vrot.slane %v5087, 3
  %v5813 = vsel %vm5120, %v5812, %v5811
  %v5814 = vrot.slane %v5088, 2
  %v5815 = vsel %vm5123, %v5814, %v5813
  %v5816 = vrot.slane %v5265, 1
  %v5817 = vsel %vm5126, %v5816, %v5815
  %v5818 = vrot.slane %v5091, 7
  %v5819 = vsel %vm5108, %v5818, %v5090
  %v5820 = vrot.slane %v5092, 6
  %v5821 = vsel %vm5111, %v5820, %v5819
  %v5822 = vrot.slane %v5093, 5
  %v5823 = vsel %vm5114, %v5822, %v5821
  %v5824 = vrot.slane %v5094, 4
  %v5825 = vsel %vm5117, %v5824, %v5823
  %v5826 = vrot.slane %v5266, 3
  %v5827 = vsel %vm5120, %v5826, %v5825
  %v5828 = vrot.slane %v5096, 2
  %v5829 = vsel %vm5123, %v5828, %v5827
  %v5830 = vrot.slane %v5097, 1
  %v5831 = vsel %vm5126, %v5830, %v5829
  %v5832 = vrot.slane %v5099, 7
  %v5833 = vsel %vm5108, %v5832, %v5098
  %v5834 = vrot.slane %v5100, 6
  %v5835 = vsel %vm5111, %v5834, %v5833
  %v5836 = vrot.slane %v5267, 5
  %v5837 = vsel %vm5114, %v5836, %v5835
  %v5838 = vrot.slane %v5102, 4
  %v5839 = vsel %vm5117, %v5838, %v5837
  %v5840 = vrot.slane %v5103, 3
  %v5841 = vsel %vm5120, %v5840, %v5839
  %v5842 = vrot.slane %v5104, 2
  %v5843 = vsel %vm5123, %v5842, %v5841
  %v5844 = vrot.slane %v5105, 1
  %v5845 = vsel %vm5126, %v5844, %v5843
  %v5846 = vrot.slane %v5268, 7
  %v5847 = vsel %vm5108, %v5846, %v5106
  %v5848 = vrot.slane %v5584, 6
  %v5849 = vsel %vm5111, %v5848, %v5847
  %v5850 = vrot.slane %v5585, 5
  %v5851 = vsel %vm5114, %v5850, %v5849
  %v5852 = vrot.slane %v5586, 4
  %v5853 = vsel %vm5117, %v5852, %v5851
  %v5854 = vrot.slane %v5587, 3
  %v5855 = vsel %vm5120, %v5854, %v5853
  %v5856 = vrot.slane %v5588, 2
  %v5857 = vsel %vm5123, %v5856, %v5855
  %v5858 = vrot.slane %v5733, 1
  %v5859 = vsel %vm5126, %v5858, %v5857
  %v5860 = vpack.c.b16 %v5761, %v5747
  %v5861 = vpack.c.b16 %v5789, %v5775
  %v5862 = vpack.c.b16 %v5817, %v5803
  %v5863 = vpack.c.b16 %v5845, %v5831
  %v5864 = vpack.c.b16 %v5859, %v5859
  %v5867 = vunpack.c.l.b16 %v4945
  %v5868 = vunpack.c.l.b16 %v4946
  %v5869 = vrot.slane %v5258, 4
  %v5870 = vsel %vm5117, %v5869, %v5133
  %v5871 = vrot.slane %v5423, 3
  %v5872 = vsel %vm5120, %v5871, %v5870
  %v5873 = vsel %vm5123, %v5138, %v5872
  %v5874 = vsel %vm5126, %v5140, %v5873
  %v5875 = vrot.slane %v5259, 6
  %v5876 = vsel %vm5111, %v5875, %v5143
  %v5877 = vrot.slane %v5424, 5
  %v5878 = vsel %vm5114, %v5877, %v5876
  %v5879 = vsel %vm5117, %v5148, %v5878
  %v5880 = vsel %vm5120, %v5150, %v5879
  %v5881 = vsel %vm5123, %v5152, %v5880
  %v5882 = vsel %vm5126, %v5154, %v5881
  %v5883 = vrot.slane %v5425, 7
  %v5884 = vsel %vm5108, %v5883, %v5260
  %v5885 = vsel %vm5111, %v5158, %v5884
  %v5886 = vsel %vm5114, %v5160, %v5885
  %v5887 = vsel %vm5117, %v5162, %v5886
  %v5888 = vsel %vm5120, %v5164, %v5887
  %v5889 = vrot.slane %v5261, 2
  %v5890 = vsel %vm5123, %v5889, %v5888
  %v5891 = vrot.slane %v5426, 1
  %v5892 = vsel %vm5126, %v5891, %v5890
  %v5893 = vrot.slane %v5262, 4
  %v5894 = vsel %vm5117, %v5893, %v5175
  %v5895 = vrot.slane %v5427, 3
  %v5896 = vsel %vm5120, %v5895, %v5894
  %v5897 = vrot.slane %v5579, 2
  %v5898 = vsel %vm5123, %v5897, %v5896
  %v5899 = vrot.slane %v5580, 1
  %v5900 = vsel %vm5126, %v5899, %v5898
  %v5901 = vrot.slane %v5582, 7
  %v5902 = vsel %vm5108, %v5901, %v5581
  %v5903 = vrot.slane %v5732, 6
  %v5904 = vsel %vm5111, %v5903, %v5902
  %v5905 = vrot.slane %v5867, 5
  %v5906 = vsel %vm5114, %v5905, %v5904
  %v5907 = vsel %vm5117, %v5190, %v5906
  %v5908 = vsel %vm5120, %v5192, %v5907
  %v5909 = vsel %vm5123, %v5194, %v5908
  %v5910 = vsel %vm5126, %v5196, %v5909
  %v5911 = vrot.slane %v5429, 7
  %v5912 = vsel %vm5108, %v5911, %v5264
  %v5913 = vsel %vm5111, %v5200, %v5912
  %v5914 = vsel %vm5114, %v5202, %v5913
  %v5915 = vsel %vm5117, %v5204, %v5914
  %v5916 = vsel %vm5120, %v5206, %v5915
  %v5917 = vrot.slane %v5265, 2
  %v5918 = vsel %vm5123, %v5917, %v5916
  %v5919 = vrot.slane %v5430, 1
  %v5920 = vsel %vm5126, %v5919, %v5918
  %v5921 = vrot.slane %v5266, 4
  %v5922 = vsel %vm5117, %v5921, %v5217
  %v5923 = vrot.slane %v5431, 3
  %v5924 = vsel %vm5120, %v5923, %v5922
  %v5925 = vsel %vm5123, %v5222, %v5924
  %v5926 = vsel %vm5126, %v5224, %v5925
  %v5927 = vrot.slane %v5267, 6
  %v5928 = vsel %vm5111, %v5927, %v5227
  %v5929 = vrot.slane %v5432, 5
  %v5930 = vsel %vm5114, %v5929, %v5928
  %v5931 = vsel %vm5117, %v5232, %v5930
  %v5932 = vsel %vm5120, %v5234, %v5931
  %v5933 = vsel %vm5123, %v5236, %v5932
  %v5934 = vsel %vm5126, %v5238, %v5933
  %v5935 = vrot.slane %v5433, 7
  %v5936 = vsel %vm5108, %v5935, %v5268
  %v5937 = vrot.slane %v5585, 6
  %v5938 = vsel %vm5111, %v5937, %v5936
  %v5939 = vrot.slane %v5586, 5
  %v5940 = vsel %vm5114, %v5939, %v5938
  %v5941 = vrot.slane %v5587, 4
  %v5942 = vsel %vm5117, %v5941, %v5940
  %v5943 = vrot.slane %v5588, 3
  %v5944 = vsel %vm5120, %v5943, %v5942
  %v5945 = vrot.slane %v5733, 2
  %v5946 = vsel %vm5123, %v5945, %v5944
  %v5947 = vrot.slane %v5868, 1
  %v5948 = vsel %vm5126, %v5947, %v5946
  %v5949 = vpack.c.b16 %v5882, %v5874
  %v5950 = vpack.c.b16 %v5900, %v5892
  %v5951 = vpack.c.b16 %v5920, %v5910
  %v5952 = vpack.c.b16 %v5934, %v5926
  %v5953 = vpack.c.b16 %v5948, %v5948
  %5954 = vrot.lane.b32.xlu0 %v5949, 64
  %v5955 = vpop.permute.xlu0 %5954
  %5956 = vrot.lane.b32.xlu0 %v5950, 64
  %v5957 = vpop.permute.xlu0 %5956
  %5958 = vrot.lane.b32.xlu0 %v5951, 64
  %v5959 = vpop.permute.xlu0 %5958
  %5960 = vrot.lane.b32.xlu0 %v5952, 64
  %v5961 = vpop.permute.xlu0 %5960
  %5962 = vrot.lane.b32.xlu0 %v5953, 64
  %v5963 = vpop.permute.xlu0 %5962
  %v5976 = vunpack.c.l.b16 %v4947
  %v5977 = vunpack.c.l.b16 %v4948
  %v5978 = vunpack.c.l.b16 %v4949
  %v5979 = vunpack.c.l.b16 %v4950
  %v5980 = vunpack.c.l.b16 %v4951
  %v5981 = vunpack.c.l.b16 %v4952
  %v5982 = vunpack.c.l.b16 %v4953
  %v5983 = vunpack.c.l.b16 %v4954
  %v5984 = vunpack.c.l.b16 %v4955
  %v5985 = vunpack.c.l.b16 %v4956
  %v5986 = vunpack.c.l.b16 %v4957
  %v5987 = vunpack.c.l.b16 %v4958
  %v5988 = vrot.slane %v5048, 7
  %v5989 = vsel %vm5108, %v5988, %v5047
  %v5990 = vrot.slane %v5049, 6
  %v5991 = vsel %vm5111, %v5990, %v5989
  %v5992 = vrot.slane %v5050, 5
  %v5993 = vsel %vm5114, %v5992, %v5991
  %v5994 = vrot.slane %v5051, 4
  %v5995 = vsel %vm5117, %v5994, %v5993
  %v5996 = vrot.slane %v5052, 3
  %v5997 = vsel %vm5120, %v5996, %v5995
  %v5998 = vrot.slane %v5053, 2
  %v5999 = vsel %vm5123, %v5998, %v5997
  %v6000 = vrot.slane %v5054, 1
  %v6001 = vsel %vm5126, %v6000, %v5999
  %v6002 = vrot.slane %v5056, 7
  %v6003 = vsel %vm5108, %v6002, %v5055
  %v6004 = vrot.slane %v5057, 6
  %v6005 = vsel %vm5111, %v6004, %v6003
  %v6006 = vrot.slane %v5058, 5
  %v6007 = vsel %vm5114, %v6006, %v6005
  %v6008 = vrot.slane %v5059, 4
  %v6009 = vsel %vm5117, %v6008, %v6007
  %v6010 = vrot.slane %v5060, 3
  %v6011 = vsel %vm5120, %v6010, %v6009
  %v6012 = vrot.slane %v5061, 2
  %v6013 = vsel %vm5123, %v6012, %v6011
  %v6014 = vrot.slane %v5062, 1
  %v6015 = vsel %vm5126, %v6014, %v6013
  %v6016 = vrot.slane %v5064, 7
  %v6017 = vsel %vm5108, %v6016, %v5063
  %v6018 = vrot.slane %v5065, 6
  %v6019 = vsel %vm5111, %v6018, %v6017
  %v6020 = vrot.slane %v5066, 5
  %v6021 = vsel %vm5114, %v6020, %v6019
  %v6022 = vrot.slane %v5067, 4
  %v6023 = vsel %vm5117, %v6022, %v6021
  %v6024 = vrot.slane %v5068, 3
  %v6025 = vsel %vm5120, %v6024, %v6023
  %v6026 = vrot.slane %v5069, 2
  %v6027 = vsel %vm5123, %v6026, %v6025
  %v6028 = vrot.slane %v5070, 1
  %v6029 = vsel %vm5126, %v6028, %v6027
  %v6030 = vrot.slane %v5578, 7
  %v6031 = vsel %vm5108, %v6030, %v5577
  %v6032 = vrot.slane %v5579, 6
  %v6033 = vsel %vm5111, %v6032, %v6031
  %v6034 = vrot.slane %v5580, 5
  %v6035 = vsel %vm5114, %v6034, %v6033
  %v6036 = vrot.slane %v5581, 4
  %v6037 = vsel %vm5117, %v6036, %v6035
  %v6038 = vrot.slane %v5582, 3
  %v6039 = vsel %vm5120, %v6038, %v6037
  %v6040 = vrot.slane %v5976, 2
  %v6041 = vsel %vm5123, %v6040, %v6039
  %v6042 = vrot.slane %v5977, 1
  %v6043 = vsel %vm5126, %v6042, %v6041
  %v6044 = vrot.slane %v5979, 7
  %v6045 = vsel %vm5108, %v6044, %v5978
  %v6046 = vrot.slane %v5980, 6
  %v6047 = vsel %vm5111, %v6046, %v6045
  %v6048 = vrot.slane %v5981, 5
  %v6049 = vsel %vm5114, %v6048, %v6047
  %v6050 = vrot.slane %v5083, 4
  %v6051 = vsel %vm5117, %v6050, %v6049
  %v6052 = vrot.slane %v5084, 3
  %v6053 = vsel %vm5120, %v6052, %v6051
  %v6054 = vrot.slane %v5085, 2
  %v6055 = vsel %vm5123, %v6054, %v6053
  %v6056 = vrot.slane %v5086, 1
  %v6057 = vsel %vm5126, %v6056, %v6055
  %v6058 = vrot.slane %v5088, 7
  %v6059 = vsel %vm5108, %v6058, %v5087
  %v6060 = vrot.slane %v5089, 6
  %v6061 = vsel %vm5111, %v6060, %v6059
  %v6062 = vrot.slane %v5090, 5
  %v6063 = vsel %vm5114, %v6062, %v6061
  %v6064 = vrot.slane %v5091, 4
  %v6065 = vsel %vm5117, %v6064, %v6063
  %v6066 = vrot.slane %v5092, 3
  %v6067 = vsel %vm5120, %v6066, %v6065
  %v6068 = vrot.slane %v5093, 2
  %v6069 = vsel %vm5123, %v6068, %v6067
  %v6070 = vrot.slane %v5094, 1
  %v6071 = vsel %vm5126, %v6070, %v6069
  %v6072 = vrot.slane %v5096, 7
  %v6073 = vsel %vm5108, %v6072, %v5095
  %v6074 = vrot.slane %v5097, 6
  %v6075 = vsel %vm5111, %v6074, %v6073
  %v6076 = vrot.slane %v5098, 5
  %v6077 = vsel %vm5114, %v6076, %v6075
  %v6078 = vrot.slane %v5099, 4
  %v6079 = vsel %vm5117, %v6078, %v6077
  %v6080 = vrot.slane %v5100, 3
  %v6081 = vsel %vm5120, %v6080, %v6079
  %v6082 = vrot.slane %v5101, 2
  %v6083 = vsel %vm5123, %v6082, %v6081
  %v6084 = vrot.slane %v5102, 1
  %v6085 = vsel %vm5126, %v6084, %v6083
  %v6086 = vrot.slane %v5104, 7
  %v6087 = vsel %vm5108, %v6086, %v5103
  %v6088 = vrot.slane %v5105, 6
  %v6089 = vsel %vm5111, %v6088, %v6087
  %v6090 = vrot.slane %v5106, 5
  %v6091 = vsel %vm5114, %v6090, %v6089
  %v6092 = vrot.slane %v5583, 4
  %v6093 = vsel %vm5117, %v6092, %v6091
  %v6094 = vrot.slane %v5584, 3
  %v6095 = vsel %vm5120, %v6094, %v6093
  %v6096 = vrot.slane %v5585, 2
  %v6097 = vsel %vm5123, %v6096, %v6095
  %v6098 = vrot.slane %v5586, 1
  %v6099 = vsel %vm5126, %v6098, %v6097
  %v6100 = vrot.slane %v5588, 7
  %v6101 = vsel %vm5108, %v6100, %v5587
  %v6102 = vrot.slane %v5982, 6
  %v6103 = vsel %vm5111, %v6102, %v6101
  %v6104 = vrot.slane %v5983, 5
  %v6105 = vsel %vm5114, %v6104, %v6103
  %v6106 = vrot.slane %v5984, 4
  %v6107 = vsel %vm5117, %v6106, %v6105
  %v6108 = vrot.slane %v5985, 3
  %v6109 = vsel %vm5120, %v6108, %v6107
  %v6110 = vrot.slane %v5986, 2
  %v6111 = vsel %vm5123, %v6110, %v6109
  %v6112 = vrot.slane %v5987, 1
  %v6113 = vsel %vm5126, %v6112, %v6111
  %v6114 = vpack.c.b16 %v6015, %v6001
  %v6115 = vpack.c.b16 %v6043, %v6029
  %v6116 = vpack.c.b16 %v6071, %v6057
  %v6117 = vpack.c.b16 %v6099, %v6085
  %v6118 = vpack.c.b16 %v6113, %v6113
  %v6121 = vunpack.c.l.b16 %v4959
  %v6122 = vunpack.c.l.b16 %v4960
  %v6123 = vrot.slane %v5049, 7
  %v6124 = vsel %vm5108, %v6123, %v5048
  %v6125 = vrot.slane %v5050, 6
  %v6126 = vsel %vm5111, %v6125, %v6124
  %v6127 = vrot.slane %v5051, 5
  %v6128 = vsel %vm5114, %v6127, %v6126
  %v6129 = vrot.slane %v5052, 4
  %v6130 = vsel %vm5117, %v6129, %v6128
  %v6131 = vrot.slane %v5259, 3
  %v6132 = vsel %vm5120, %v6131, %v6130
  %v6133 = vrot.slane %v5054, 2
  %v6134 = vsel %vm5123, %v6133, %v6132
  %v6135 = vrot.slane %v5055, 1
  %v6136 = vsel %vm5126, %v6135, %v6134
  %v6137 = vrot.slane %v5057, 7
  %v6138 = vsel %vm5108, %v6137, %v5056
  %v6139 = vrot.slane %v5058, 6
  %v6140 = vsel %vm5111, %v6139, %v6138
  %v6141 = vrot.slane %v5260, 5
  %v6142 = vsel %vm5114, %v6141, %v6140
  %v6143 = vrot.slane %v5060, 4
  %v6144 = vsel %vm5117, %v6143, %v6142
  %v6145 = vrot.slane %v5061, 3
  %v6146 = vsel %vm5120, %v6145, %v6144
  %v6147 = vrot.slane %v5062, 2
  %v6148 = vsel %vm5123, %v6147, %v6146
  %v6149 = vrot.slane %v5063, 1
  %v6150 = vsel %vm5126, %v6149, %v6148
  %v6151 = vrot.slane %v5261, 7
  %v6152 = vsel %vm5108, %v6151, %v5064
  %v6153 = vrot.slane %v5066, 6
  %v6154 = vsel %vm5111, %v6153, %v6152
  %v6155 = vrot.slane %v5067, 5
  %v6156 = vsel %vm5114, %v6155, %v6154
  %v6157 = vrot.slane %v5068, 4
  %v6158 = vsel %vm5117, %v6157, %v6156
  %v6159 = vrot.slane %v5069, 3
  %v6160 = vsel %vm5120, %v6159, %v6158
  %v6161 = vrot.slane %v5070, 2
  %v6162 = vsel %vm5123, %v6161, %v6160
  %v6163 = vrot.slane %v5262, 1
  %v6164 = vsel %vm5126, %v6163, %v6162
  %v6165 = vrot.slane %v5579, 7
  %v6166 = vsel %vm5108, %v6165, %v5578
  %v6167 = vrot.slane %v5580, 6
  %v6168 = vsel %vm5111, %v6167, %v6166
  %v6169 = vrot.slane %v5581, 5
  %v6170 = vsel %vm5114, %v6169, %v6168
  %v6171 = vrot.slane %v5582, 4
  %v6172 = vsel %vm5117, %v6171, %v6170
  %v6173 = vrot.slane %v5732, 3
  %v6174 = vsel %vm5120, %v6173, %v6172
  %v6175 = vrot.slane %v5977, 2
  %v6176 = vsel %vm5123, %v6175, %v6174
  %v6177 = vrot.slane %v5978, 1
  %v6178 = vsel %vm5126, %v6177, %v6176
  %v6179 = vrot.slane %v5980, 7
  %v6180 = vsel %vm5108, %v6179, %v5979
  %v6181 = vrot.slane %v5981, 6
  %v6182 = vsel %vm5111, %v6181, %v6180
  %v6183 = vrot.slane %v6121, 5
  %v6184 = vsel %vm5114, %v6183, %v6182
  %v6185 = vrot.slane %v5084, 4
  %v6186 = vsel %vm5117, %v6185, %v6184
  %v6187 = vrot.slane %v5085, 3
  %v6188 = vsel %vm5120, %v6187, %v6186
  %v6189 = vrot.slane %v5086, 2
  %v6190 = vsel %vm5123, %v6189, %v6188
  %v6191 = vrot.slane %v5087, 1
  %v6192 = vsel %vm5126, %v6191, %v6190
  %v6193 = vrot.slane %v5265, 7
  %v6194 = vsel %vm5108, %v6193, %v5088
  %v6195 = vrot.slane %v5090, 6
  %v6196 = vsel %vm5111, %v6195, %v6194
  %v6197 = vrot.slane %v5091, 5
  %v6198 = vsel %vm5114, %v6197, %v6196
  %v6199 = vrot.slane %v5092, 4
  %v6200 = vsel %vm5117, %v6199, %v6198
  %v6201 = vrot.slane %v5093, 3
  %v6202 = vsel %vm5120, %v6201, %v6200
  %v6203 = vrot.slane %v5094, 2
  %v6204 = vsel %vm5123, %v6203, %v6202
  %v6205 = vrot.slane %v5266, 1
  %v6206 = vsel %vm5126, %v6205, %v6204
  %v6207 = vrot.slane %v5097, 7
  %v6208 = vsel %vm5108, %v6207, %v5096
  %v6209 = vrot.slane %v5098, 6
  %v6210 = vsel %vm5111, %v6209, %v6208
  %v6211 = vrot.slane %v5099, 5
  %v6212 = vsel %vm5114, %v6211, %v6210
  %v6213 = vrot.slane %v5100, 4
  %v6214 = vsel %vm5117, %v6213, %v6212
  %v6215 = vrot.slane %v5267, 3
  %v6216 = vsel %vm5120, %v6215, %v6214
  %v6217 = vrot.slane %v5102, 2
  %v6218 = vsel %vm5123, %v6217, %v6216
  %v6219 = vrot.slane %v5103, 1
  %v6220 = vsel %vm5126, %v6219, %v6218
  %v6221 = vrot.slane %v5105, 7
  %v6222 = vsel %vm5108, %v6221, %v5104
  %v6223 = vrot.slane %v5106, 6
  %v6224 = vsel %vm5111, %v6223, %v6222
  %v6225 = vrot.slane %v5268, 5
  %v6226 = vsel %vm5114, %v6225, %v6224
  %v6227 = vrot.slane %v5584, 4
  %v6228 = vsel %vm5117, %v6227, %v6226
  %v6229 = vrot.slane %v5585, 3
  %v6230 = vsel %vm5120, %v6229, %v6228
  %v6231 = vrot.slane %v5586, 2
  %v6232 = vsel %vm5123, %v6231, %v6230
  %v6233 = vrot.slane %v5587, 1
  %v6234 = vsel %vm5126, %v6233, %v6232
  %v6235 = vrot.slane %v5733, 7
  %v6236 = vsel %vm5108, %v6235, %v5588
  %v6237 = vrot.slane %v5983, 6
  %v6238 = vsel %vm5111, %v6237, %v6236
  %v6239 = vrot.slane %v5984, 5
  %v6240 = vsel %vm5114, %v6239, %v6238
  %v6241 = vrot.slane %v5985, 4
  %v6242 = vsel %vm5117, %v6241, %v6240
  %v6243 = vrot.slane %v5986, 3
  %v6244 = vsel %vm5120, %v6243, %v6242
  %v6245 = vrot.slane %v5987, 2
  %v6246 = vsel %vm5123, %v6245, %v6244
  %v6247 = vrot.slane %v6122, 1
  %v6248 = vsel %vm5126, %v6247, %v6246
  %v6249 = vpack.c.b16 %v6150, %v6136
  %v6250 = vpack.c.b16 %v6178, %v6164
  %v6251 = vpack.c.b16 %v6206, %v6192
  %v6252 = vpack.c.b16 %v6234, %v6220
  %v6253 = vpack.c.b16 %v6248, %v6248
  %6254 = vrot.lane.b32.xlu0 %v6249, 64
  %v6255 = vpop.permute.xlu0 %6254
  %6256 = vrot.lane.b32.xlu0 %v6250, 64
  %v6257 = vpop.permute.xlu0 %6256
  %6258 = vrot.lane.b32.xlu0 %v6251, 64
  %v6259 = vpop.permute.xlu0 %6258
  %6260 = vrot.lane.b32.xlu0 %v6252, 64
  %v6261 = vpop.permute.xlu0 %6260
  %6262 = vrot.lane.b32.xlu0 %v6253, 64
  %v6263 = vpop.permute.xlu0 %6262
  %v6266 = vunpack.c.l.b16 %v4961
  %v6267 = vunpack.c.l.b16 %v4962
  %v6268 = vrot.slane %v5259, 4
  %v6269 = vsel %vm5117, %v6268, %v5608
  %v6270 = vrot.slane %v5424, 3
  %v6271 = vsel %vm5120, %v6270, %v6269
  %v6272 = vsel %vm5123, %v5613, %v6271
  %v6273 = vsel %vm5126, %v5615, %v6272
  %v6274 = vrot.slane %v5260, 6
  %v6275 = vsel %vm5111, %v6274, %v5618
  %v6276 = vrot.slane %v5425, 5
  %v6277 = vsel %vm5114, %v6276, %v6275
  %v6278 = vsel %vm5117, %v5623, %v6277
  %v6279 = vsel %vm5120, %v5625, %v6278
  %v6280 = vsel %vm5123, %v5627, %v6279
  %v6281 = vsel %vm5126, %v5629, %v6280
  %v6282 = vrot.slane %v5426, 7
  %v6283 = vsel %vm5108, %v6282, %v5261
  %v6284 = vsel %vm5111, %v5633, %v6283
  %v6285 = vsel %vm5114, %v5635, %v6284
  %v6286 = vsel %vm5117, %v5637, %v6285
  %v6287 = vsel %vm5120, %v5639, %v6286
  %v6288 = vrot.slane %v5262, 2
  %v6289 = vsel %vm5123, %v6288, %v6287
  %v6290 = vrot.slane %v5427, 1
  %v6291 = vsel %vm5126, %v6290, %v6289
  %v6292 = vrot.slane %v5732, 4
  %v6293 = vsel %vm5117, %v6292, %v5650
  %v6294 = vrot.slane %v5867, 3
  %v6295 = vsel %vm5120, %v6294, %v6293
  %v6296 = vrot.slane %v5978, 2
  %v6297 = vsel %vm5123, %v6296, %v6295
  %v6298 = vrot.slane %v5979, 1
  %v6299 = vsel %vm5126, %v6298, %v6297
  %v6300 = vrot.slane %v5981, 7
  %v6301 = vsel %vm5108, %v6300, %v5980
  %v6302 = vrot.slane %v6121, 6
  %v6303 = vsel %vm5111, %v6302, %v6301
  %v6304 = vrot.slane %v6266, 5
  %v6305 = vsel %vm5114, %v6304, %v6303
  %v6306 = vsel %vm5117, %v5665, %v6305
  %v6307 = vsel %vm5120, %v5667, %v6306
  %v6308 = vsel %vm5123, %v5669, %v6307
  %v6309 = vsel %vm5126, %v5671, %v6308
  %v6310 = vrot.slane %v5430, 7
  %v6311 = vsel %vm5108, %v6310, %v5265
  %v6312 = vsel %vm5111, %v5675, %v6311
  %v6313 = vsel %vm5114, %v5677, %v6312
  %v6314 = vsel %vm5117, %v5679, %v6313
  %v6315 = vsel %vm5120, %v5681, %v6314
  %v6316 = vrot.slane %v5266, 2
  %v6317 = vsel %vm5123, %v6316, %v6315
  %v6318 = vrot.slane %v5431, 1
  %v6319 = vsel %vm5126, %v6318, %v6317
  %v6320 = vrot.slane %v5267, 4
  %v6321 = vsel %vm5117, %v6320, %v5692
  %v6322 = vrot.slane %v5432, 3
  %v6323 = vsel %vm5120, %v6322, %v6321
  %v6324 = vsel %vm5123, %v5697, %v6323
  %v6325 = vsel %vm5126, %v5699, %v6324
  %v6326 = vrot.slane %v5268, 6
  %v6327 = vsel %vm5111, %v6326, %v5702
  %v6328 = vrot.slane %v5433, 5
  %v6329 = vsel %vm5114, %v6328, %v6327
  %v6330 = vsel %vm5117, %v5707, %v6329
  %v6331 = vsel %vm5120, %v5709, %v6330
  %v6332 = vsel %vm5123, %v5711, %v6331
  %v6333 = vsel %vm5126, %v5713, %v6332
  %v6334 = vrot.slane %v5868, 7
  %v6335 = vsel %vm5108, %v6334, %v5733
  %v6336 = vrot.slane %v5984, 6
  %v6337 = vsel %vm5111, %v6336, %v6335
  %v6338 = vrot.slane %v5985, 5
  %v6339 = vsel %vm5114, %v6338, %v6337
  %v6340 = vrot.slane %v5986, 4
  %v6341 = vsel %vm5117, %v6340, %v6339
  %v6342 = vrot.slane %v5987, 3
  %v6343 = vsel %vm5120, %v6342, %v6341
  %v6344 = vrot.slane %v6122, 2
  %v6345 = vsel %vm5123, %v6344, %v6343
  %v6346 = vrot.slane %v6267, 1
  %v6347 = vsel %vm5126, %v6346, %v6345
  %v6348 = vpack.c.b16 %v6281, %v6273
  %v6349 = vpack.c.b16 %v6299, %v6291
  %v6350 = vpack.c.b16 %v6319, %v6309
  %v6351 = vpack.c.b16 %v6333, %v6325
  %v6352 = vpack.c.b16 %v6347, %v6347
  %v6355 = vsel %vm2907, %v5240, %v5401
  %v6359 = vsel %vm2907, %v5241, %v5403
  %v6363 = vsel %vm2907, %v5242, %v5405
  %v6367 = vsel %vm2907, %v5243, %v5407
  %v6371 = vsel %vm2907, %v5244, %v5409
  %v6375 = vsel %vm2907, %v5560, %v5721
  %v6379 = vsel %vm2907, %v5561, %v5723
  %v6383 = vsel %vm2907, %v5562, %v5725
  %v6387 = vsel %vm2907, %v5563, %v5727
  %v6391 = vsel %vm2907, %v5564, %v5729
  %v6395 = vsel %vm2907, %v5860, %v5955
  %v6399 = vsel %vm2907, %v5861, %v5957
  %v6403 = vsel %vm2907, %v5862, %v5959
  %v6407 = vsel %vm2907, %v5863, %v5961
  %v6411 = vsel %vm2907, %v5864, %v5963
  %v6415 = vsel %vm2907, %v6114, %v6255
  %v6419 = vsel %vm2907, %v6115, %v6257
  %v6423 = vsel %vm2907, %v6116, %v6259
  %v6427 = vsel %vm2907, %v6117, %v6261
  %v6431 = vsel %vm2907, %v6118, %v6263
  %v6434 = vlaneseq
  %v6435 = vshrl.u32 %v6434, 7
  %v6436 = vsub.s32 0, %v6435
  %v6437 = vrot.slane %v4832, %v6436
  %v6511 = vunpack.c.l.b16 %v4760
  %v6512 = vunpack.c.l.b16 %v4761
  %v6513 = vunpack.c.l.b16 %v4762
  %v6514 = vunpack.c.l.b16 %v4763
  %v6515 = vunpack.c.l.b16 %v4764
  %v6516 = vunpack.c.l.b16 %v4765
  %v6517 = vunpack.c.l.b16 %v4766
  %v6518 = vunpack.c.l.b16 %v4767
  %v6519 = vunpack.c.l.b16 %v4768
  %v6520 = vunpack.c.l.b16 %v4769
  %v6521 = vunpack.c.l.b16 %v4770
  %v6522 = vunpack.c.l.b16 %v4771
  %v6523 = vunpack.c.l.b16 %v4772
  %v6524 = vunpack.c.l.b16 %v4773
  %v6525 = vunpack.c.l.b16 %v4774
  %v6526 = vunpack.c.l.b16 %v4775
  %v6527 = vunpack.c.l.b16 %v4776
  %v6528 = vunpack.c.l.b16 %v4777
  %v6529 = vunpack.c.l.b16 %v4778
  %v6530 = vunpack.c.l.b16 %v4779
  %v6531 = vunpack.c.l.b16 %v4780
  %v6532 = vunpack.c.l.b16 %v4781
  %v6533 = vunpack.c.l.b16 %v4782
  %v6534 = vunpack.c.l.b16 %v4783
  %v6535 = vunpack.c.l.b16 %v4784
  %v6536 = vunpack.c.l.b16 %v4785
  %v6537 = vunpack.c.l.b16 %v4786
  %v6538 = vunpack.c.l.b16 %v4787
  %v6539 = vunpack.c.l.b16 %v4788
  %v6540 = vunpack.c.l.b16 %v4789
  %v6541 = vunpack.c.l.b16 %v4790
  %v6542 = vunpack.c.l.b16 %v4791
  %v6543 = vunpack.c.l.b16 %v4792
  %v6544 = vunpack.c.l.b16 %v4793
  %v6545 = vunpack.c.l.b16 %v4794
  %v6546 = vunpack.c.l.b16 %v4795
  %v6547 = vunpack.c.l.b16 %v4796
  %v6548 = vunpack.c.l.b16 %v4797
  %v6549 = vunpack.c.l.b16 %v4798
  %v6550 = vunpack.c.l.b16 %v4799
  %v6551 = vunpack.c.l.b16 %v4800
  %v6552 = vunpack.c.l.b16 %v4801
  %v6553 = vunpack.c.l.b16 %v4802
  %v6554 = vunpack.c.l.b16 %v4803
  %v6555 = vunpack.c.l.b16 %v4804
  %v6556 = vunpack.c.l.b16 %v4805
  %v6557 = vunpack.c.l.b16 %v4806
  %v6558 = vunpack.c.l.b16 %v4807
  %v6559 = vunpack.c.l.b16 %v4808
  %v6560 = vunpack.c.l.b16 %v4809
  %v6561 = vunpack.c.l.b16 %v4810
  %v6562 = vunpack.c.l.b16 %v4811
  %v6563 = vunpack.c.l.b16 %v4812
  %v6564 = vunpack.c.l.b16 %v4813
  %v6565 = vunpack.c.l.b16 %v4814
  %v6566 = vunpack.c.l.b16 %v4815
  %v6567 = vunpack.c.l.b16 %v4816
  %v6568 = vunpack.c.l.b16 %v4817
  %v6569 = vunpack.c.l.b16 %v4818
  %v6570 = vunpack.c.l.b16 %v4819
  %v6571 = vunpack.c.l.b16 %v4820
  %v6572 = vunpack.c.l.b16 %v4821
  %v6573 = vunpack.c.l.b16 %v4822
  %v6574 = vunpack.c.l.b16 %v4823
  %v6575 = vunpack.c.l.b16 %v4824
  %v6576 = vunpack.c.l.b16 %v4825
  %v6577 = vunpack.c.l.b16 %v4826
  %v6578 = vunpack.c.l.b16 %v4827
  %v6579 = vunpack.c.l.b16 %v4828
  %v6580 = vunpack.c.l.b16 %v4829
  %v6581 = vunpack.c.l.b16 %v4830
  %v6582 = vunpack.c.l.b16 %v4831
  %v6583 = vpack.c.b16 %v6512, %v6511
  %v6584 = vpack.c.b16 %v6514, %v6513
  %v6585 = vpack.c.b16 %v6516, %v6515
  %v6586 = vpack.c.b16 %v6518, %v6517
  %v6587 = vpack.c.b16 %v6520, %v6519
  %v6588 = vpack.c.b16 %v6522, %v6521
  %v6589 = vpack.c.b16 %v6524, %v6523
  %v6590 = vpack.c.b16 %v6526, %v6525
  %v6591 = vpack.c.b16 %v6528, %v6527
  %v6592 = vpack.c.b16 %v6530, %v6529
  %v6593 = vpack.c.b16 %v6532, %v6531
  %v6594 = vpack.c.b16 %v6534, %v6533
  %v6595 = vpack.c.b16 %v6536, %v6535
  %v6596 = vpack.c.b16 %v6538, %v6537
  %v6597 = vpack.c.b16 %v6540, %v6539
  %v6598 = vpack.c.b16 %v6542, %v6541
  %v6599 = vpack.c.b16 %v6544, %v6543
  %v6600 = vpack.c.b16 %v6546, %v6545
  %v6601 = vpack.c.b16 %v6548, %v6547
  %v6602 = vpack.c.b16 %v6550, %v6549
  %v6603 = vpack.c.b16 %v6552, %v6551
  %v6604 = vpack.c.b16 %v6554, %v6553
  %v6605 = vpack.c.b16 %v6556, %v6555
  %v6606 = vpack.c.b16 %v6558, %v6557
  %v6607 = vpack.c.b16 %v6560, %v6559
  %v6608 = vpack.c.b16 %v6562, %v6561
  %v6609 = vpack.c.b16 %v6564, %v6563
  %v6610 = vpack.c.b16 %v6566, %v6565
  %v6611 = vpack.c.b16 %v6568, %v6567
  %v6612 = vpack.c.b16 %v6570, %v6569
  %v6613 = vpack.c.b16 %v6572, %v6571
  %v6614 = vpack.c.b16 %v6574, %v6573
  %v6615 = vpack.c.b16 %v6576, %v6575
  %v6616 = vpack.c.b16 %v6578, %v6577
  %v6617 = vpack.c.b16 %v6580, %v6579
  %v6618 = vpack.c.b16 %v6582, %v6581
  %v6656 = vsel %vm2907, %v6348, 0
  %v6659 = vsel %vm2907, %v6349, 0
  %v6662 = vsel %vm2907, %v6350, 0
  %v6665 = vsel %vm2907, %v6351, 0
  %v6668 = vsel %vm2907, %v6352, 0
  %6670 = vmatprep.subr.bf16.mxu0 0
  %6671 = vmatpush1.bf16.msra.mxu0 %v6583
  %6672 = vmatprep.subr.bf16.mxu0 0
  %6673 = vmatpush1.bf16.msra.mxu0 %v6584
  %6674 = vmatprep.subr.bf16.mxu0 0
  %6675 = vmatpush1.bf16.msra.mxu0 %v6585
  %6676 = vmatprep.subr.bf16.mxu0 0
  %6677 = vmatpush1.bf16.msra.mxu0 %v6586
  %6678 = vmatprep.subr.bf16.mxu0 0
  %6679 = vmatpush1.bf16.msra.mxu0 %v6587
  %6680 = vmatprep.subr.bf16.mxu0 0
  %6681 = vmatpush1.bf16.msra.mxu0 %v6588
  %6682 = vmatprep.subr.bf16.mxu0 0
  %6683 = vmatpush1.bf16.msra.mxu0 %v6589
  %6684 = vmatprep.subr.bf16.mxu0 0
  %6685 = vmatpush1.bf16.msra.mxu0 %v6590
  %6686 = vmatprep.subr.bf16.mxu0 0
  %6687 = vmatpush1.bf16.msra.mxu0 %v6591
  %6688 = vmatprep.subr.bf16.mxu0 0
  %6689 = vmatpush1.bf16.msra.mxu0 %v6592
  %6690 = vmatprep.subr.bf16.mxu0 0
  %6691 = vmatpush1.bf16.msra.mxu0 %v6593
  %6692 = vmatprep.subr.bf16.mxu0 0
  %6693 = vmatpush1.bf16.msra.mxu0 %v6594
  %6694 = vmatprep.subr.bf16.mxu0 0
  %6695 = vmatpush1.bf16.msra.mxu0 %v6595
  %6696 = vmatprep.subr.bf16.mxu0 0
  %6697 = vmatpush1.bf16.msra.mxu0 %v6596
  %6698 = vmatprep.subr.bf16.mxu0 0
  %6699 = vmatpush1.bf16.msra.mxu0 %v6597
  %6700 = vmatprep.subr.bf16.mxu0 0
  %6701 = vmatpush1.bf16.msra.mxu0 %v6598
  %6702 = vmatprep.mubr.bf16.mxu0 %v6375
  %6703 = vmatmul.mubr.bf16.gmra.mrb[0].mxu0 %v6355
  %v6704 = vpop.f32.mrb[0].mxu0
  %v6705 = vadd.f32 %v6437, %v6704
  %v6706 = vpop.f32.mrb[0].mxu0
  %v6707 = vpop.f32.mrb[0].mxu0
  %v6708 = vadd.f32 %v6437, %v6707
  %v6709 = vpop.f32.mrb[0].mxu0
  %6710 = vmatprep.mubr.bf16.mxu0 %v6379
  %6711 = vmatmul.mubr.bf16.gmra.mrb[0].mxu0 %v6359
  %v6712 = vpop.f32.mrb[0].mxu0
  %v6713 = vadd.f32 %v6437, %v6712
  %v6714 = vpop.f32.mrb[0].mxu0
  %v6715 = vpop.f32.mrb[0].mxu0
  %v6716 = vadd.f32 %v6437, %v6715
  %v6717 = vpop.f32.mrb[0].mxu0
  %6718 = vmatprep.mubr.bf16.mxu0 %v6383
  %6719 = vmatmul.mubr.bf16.gmra.mrb[0].mxu0 %v6363
  %v6720 = vpop.f32.mrb[0].mxu0
  %v6721 = vadd.f32 %v6437, %v6720
  %v6722 = vpop.f32.mrb[0].mxu0
  %v6723 = vpop.f32.mrb[0].mxu0
  %v6724 = vadd.f32 %v6437, %v6723
  %v6725 = vpop.f32.mrb[0].mxu0
  %6726 = vmatprep.mubr.bf16.mxu0 %v6387
  %6727 = vmatmul.mubr.bf16.gmra.mrb[0].mxu0 %v6367
  %v6728 = vpop.f32.mrb[0].mxu0
  %v6729 = vadd.f32 %v6437, %v6728
  %v6730 = vpop.f32.mrb[0].mxu0
  %v6731 = vpop.f32.mrb[0].mxu0
  %v6732 = vadd.f32 %v6437, %v6731
  %v6733 = vpop.f32.mrb[0].mxu0
  %6734 = vmatprep.mubr.bf16.mxu0 %v6391
  %6735 = vmatmul.mubr.bf16.gmra.mrb[0].mxu0 %v6371
  %v6736 = vpop.f32.mrb[0].mxu0
  %v6737 = vadd.f32 %v6437, %v6736
  %v6738 = vpop.f32.mrb[0].mxu0
  %v6739 = vpop.f32.mrb[0].mxu0
  %v6740 = vpop.f32.mrb[0].mxu0
  %6741 = vdwg.mxu0
  %6742 = vmatprep.subr.bf16.mxu0 0
  %6743 = vmatpush1.bf16.msra.mxu0 %v6599
  %6744 = vmatprep.subr.bf16.mxu0 0
  %6745 = vmatpush1.bf16.msra.mxu0 %v6600
  %6746 = vmatprep.subr.bf16.mxu0 0
  %6747 = vmatpush1.bf16.msra.mxu0 %v6601
  %6748 = vmatprep.subr.bf16.mxu0 0
  %6749 = vmatpush1.bf16.msra.mxu0 %v6602
  %6750 = vmatprep.subr.bf16.mxu0 0
  %6751 = vmatpush1.bf16.msra.mxu0 %v6603
  %6752 = vmatprep.subr.bf16.mxu0 0
  %6753 = vmatpush1.bf16.msra.mxu0 %v6604
  %6754 = vmatprep.subr.bf16.mxu0 0
  %6755 = vmatpush1.bf16.msra.mxu0 %v6605
  %6756 = vmatprep.subr.bf16.mxu0 0
  %6757 = vmatpush1.bf16.msra.mxu0 %v6606
  %6758 = vmatprep.subr.bf16.mxu0 0
  %6759 = vmatpush1.bf16.msra.mxu0 %v6607
  %6760 = vmatprep.subr.bf16.mxu0 0
  %6761 = vmatpush1.bf16.msra.mxu0 %v6608
  %6762 = vmatprep.subr.bf16.mxu0 0
  %6763 = vmatpush1.bf16.msra.mxu0 %v6609
  %6764 = vmatprep.subr.bf16.mxu0 0
  %6765 = vmatpush1.bf16.msra.mxu0 %v6610
  %6766 = vmatprep.subr.bf16.mxu0 0
  %6767 = vmatpush1.bf16.msra.mxu0 %v6611
  %6768 = vmatprep.subr.bf16.mxu0 0
  %6769 = vmatpush1.bf16.msra.mxu0 %v6612
  %6770 = vmatprep.subr.bf16.mxu0 0
  %6771 = vmatpush1.bf16.msra.mxu0 %v6613
  %6772 = vmatprep.subr.bf16.mxu0 0
  %6773 = vmatpush1.bf16.msra.mxu0 %v6614
  %6774 = vmatprep.mubr.bf16.mxu0 %v6415
  %6775 = vmatmul.mubr.bf16.gmra.mrb[0].mxu0 %v6395
  %v6776 = vpop.f32.mrb[0].mxu0
  %v6777 = vadd.f32 %v6705, %v6776
  %v6778 = vpop.f32.mrb[0].mxu0
  %v6779 = vpop.f32.mrb[0].mxu0
  %v6780 = vadd.f32 %v6708, %v6779
  %v6781 = vpop.f32.mrb[0].mxu0
  %6782 = vmatprep.mubr.bf16.mxu0 %v6419
  %6783 = vmatmul.mubr.bf16.gmra.mrb[0].mxu0 %v6399
  %v6784 = vpop.f32.mrb[0].mxu0
  %v6785 = vadd.f32 %v6713, %v6784
  %v6786 = vpop.f32.mrb[0].mxu0
  %v6787 = vpop.f32.mrb[0].mxu0
  %v6788 = vadd.f32 %v6716, %v6787
  %v6789 = vpop.f32.mrb[0].mxu0
  %6790 = vmatprep.mubr.bf16.mxu0 %v6423
  %6791 = vmatmul.mubr.bf16.gmra.mrb[0].mxu0 %v6403
  %v6792 = vpop.f32.mrb[0].mxu0
  %v6793 = vadd.f32 %v6721, %v6792
  %v6794 = vpop.f32.mrb[0].mxu0
  %v6795 = vpop.f32.mrb[0].mxu0
  %v6796 = vadd.f32 %v6724, %v6795
  %v6797 = vpop.f32.mrb[0].mxu0
  %6798 = vmatprep.mubr.bf16.mxu0 %v6427
  %6799 = vmatmul.mubr.bf16.gmra.mrb[0].mxu0 %v6407
  %v6800 = vpop.f32.mrb[0].mxu0
  %v6801 = vadd.f32 %v6729, %v6800
  %v6802 = vpop.f32.mrb[0].mxu0
  %v6803 = vpop.f32.mrb[0].mxu0
  %v6804 = vadd.f32 %v6732, %v6803
  %v6805 = vpop.f32.mrb[0].mxu0
  %6806 = vmatprep.mubr.bf16.mxu0 %v6431
  %6807 = vmatmul.mubr.bf16.gmra.mrb[0].mxu0 %v6411
  %v6808 = vpop.f32.mrb[0].mxu0
  %v6809 = vadd.f32 %v6737, %v6808
  %v6810 = vpop.f32.mrb[0].mxu0
  %v6811 = vpop.f32.mrb[0].mxu0
  %v6812 = vpop.f32.mrb[0].mxu0
  %6813 = vdwg.mxu0
  %6814 = vmatprep.subr.bf16.mxu0 0
  %6815 = vmatpush1.bf16.msra.mxu0 %v6615
  %6816 = vmatprep.subr.bf16.mxu0 0
  %6817 = vmatpush1.bf16.msra.mxu0 %v6616
  %6818 = vmatprep.subr.bf16.mxu0 0
  %6819 = vmatpush1.bf16.msra.mxu0 %v6617
  %6820 = vmatprep.subr.bf16.mxu0 0
  %6821 = vmatpush1.bf16.msra.mxu0 %v6618
  %6822 = vmatprep.subr.bf16.mxu0 0
  %6823 = vmatpush1.bf16.msra.mxu0 0
  %6824 = vmatprep.subr.bf16.mxu0 0
  %6825 = vmatpush1.bf16.msra.mxu0 0
  %6826 = vmatprep.subr.bf16.mxu0 0
  %6827 = vmatpush1.bf16.msra.mxu0 0
  %6828 = vmatprep.subr.bf16.mxu0 0
  %6829 = vmatpush1.bf16.msra.mxu0 0
  %6830 = vmatprep.subr.bf16.mxu0 0
  %6831 = vmatpush1.bf16.msra.mxu0 0
  %6832 = vmatprep.subr.bf16.mxu0 0
  %6833 = vmatpush1.bf16.msra.mxu0 0
  %6834 = vmatprep.subr.bf16.mxu0 0
  %6835 = vmatpush1.bf16.msra.mxu0 0
  %6836 = vmatprep.subr.bf16.mxu0 0
  %6837 = vmatpush1.bf16.msra.mxu0 0
  %6838 = vmatprep.subr.bf16.mxu0 0
  %6839 = vmatpush1.bf16.msra.mxu0 0
  %6840 = vmatprep.subr.bf16.mxu0 0
  %6841 = vmatpush1.bf16.msra.mxu0 0
  %6842 = vmatprep.subr.bf16.mxu0 0
  %6843 = vmatpush1.bf16.msra.mxu0 0
  %6844 = vmatprep.subr.bf16.mxu0 0
  %6845 = vmatpush1.bf16.msra.mxu0 0
  %6846 = vmatprep.mubr.bf16.mxu0 0
  %6847 = vmatmul.mubr.bf16.gmra.mrb[0].mxu0 %v6656
  %v6848 = vpop.f32.mrb[0].mxu0
  %v6849 = vadd.f32 %v6777, %v6848
  %v6850 = vpop.f32.mrb[0].mxu0
  %v6851 = vpop.f32.mrb[0].mxu0
  %v6852 = vadd.f32 %v6780, %v6851
  %v6853 = vpop.f32.mrb[0].mxu0
  %6854 = vmatprep.mubr.bf16.mxu0 0
  %6855 = vmatmul.mubr.bf16.gmra.mrb[0].mxu0 %v6659
  %v6856 = vpop.f32.mrb[0].mxu0
  %v6857 = vadd.f32 %v6785, %v6856
  %v6858 = vpop.f32.mrb[0].mxu0
  %v6859 = vpop.f32.mrb[0].mxu0
  %v6860 = vadd.f32 %v6788, %v6859
  %v6861 = vpop.f32.mrb[0].mxu0
  %6862 = vmatprep.mubr.bf16.mxu0 0
  %6863 = vmatmul.mubr.bf16.gmra.mrb[0].mxu0 %v6662
  %v6864 = vpop.f32.mrb[0].mxu0
  %v6865 = vadd.f32 %v6793, %v6864
  %v6866 = vpop.f32.mrb[0].mxu0
  %v6867 = vpop.f32.mrb[0].mxu0
  %v6868 = vadd.f32 %v6796, %v6867
  %v6869 = vpop.f32.mrb[0].mxu0
  %6870 = vmatprep.mubr.bf16.mxu0 0
  %6871 = vmatmul.mubr.bf16.gmra.mrb[0].mxu0 %v6665
  %v6872 = vpop.f32.mrb[0].mxu0
  %v6873 = vadd.f32 %v6801, %v6872
  %v6874 = vpop.f32.mrb[0].mxu0
  %v6875 = vpop.f32.mrb[0].mxu0
  %v6876 = vadd.f32 %v6804, %v6875
  %v6877 = vpop.f32.mrb[0].mxu0
  %6878 = vmatprep.mubr.bf16.mxu0 0
  %6879 = vmatmul.mubr.bf16.gmra.mrb[0].mxu0 %v6668
  %v6880 = vpop.f32.mrb[0].mxu0
  %v6881 = vadd.f32 %v6809, %v6880
  %v6882 = vpop.f32.mrb[0].mxu0
  %v6883 = vpop.f32.mrb[0].mxu0
  %v6884 = vpop.f32.mrb[0].mxu0
  %6885 = vdwg.mxu0
  %v6886 = vsel %vm2907, %v6849, 0.0
  %v6887 = vsel %vm2907, %v6852, 0.0
  %v6888 = vadd.f32 %v6886, %v6887
  %v6889 = vsel %vm2907, %v6857, 0.0
  %v6890 = vadd.f32 %v6888, %v6889
  %v6891 = vsel %vm2907, %v6860, 0.0
  %v6892 = vadd.f32 %v6890, %v6891
  %v6893 = vsel %vm2907, %v6865, 0.0
  %v6894 = vadd.f32 %v6892, %v6893
  %v6895 = vsel %vm2907, %v6868, 0.0
  %v6896 = vadd.f32 %v6894, %v6895
  %v6897 = vsel %vm2907, %v6873, 0.0
  %v6898 = vadd.f32 %v6896, %v6897
  %v6899 = vsel %vm2907, %v6876, 0.0
  %v6900 = vadd.f32 %v6898, %v6899
  %v6901 = vsel %vm2907, %v6881, 0.0
  %v6902 = vadd.f32 %v6900, %v6901
  %v6903 = vrot.slane %v6902, 4
  %v6904 = vadd.f32 %v6902, %v6903
  %v6905 = vrot.slane %v6904, 2
  %v6906 = vadd.f32 %v6904, %v6905
  %v6907 = vrot.slane %v6906, 1
  %v6908 = vadd.f32 %v6906, %v6907
  %v6909 = vrcp.pop 72.0
  %v6910 = vmul.f32 %v6908, %v6909
  %v6911 = vsub.f32 %v6849, %v6910
  %v6912 = vsub.f32 %v6852, %v6910
  %v6913 = vsub.f32 %v6857, %v6910
  %v6914 = vsub.f32 %v6860, %v6910
  %v6915 = vsub.f32 %v6865, %v6910
  %v6916 = vsub.f32 %v6868, %v6910
  %v6917 = vsub.f32 %v6873, %v6910
  %v6918 = vsub.f32 %v6876, %v6910
  %v6919 = vsub.f32 %v6881, %v6910
  %v6920 = vmul.f32 %v6911, %v6911
  %v6921 = vmul.f32 %v6912, %v6912
  %v6922 = vmul.f32 %v6913, %v6913
  %v6923 = vmul.f32 %v6914, %v6914
  %v6924 = vmul.f32 %v6915, %v6915
  %v6925 = vmul.f32 %v6916, %v6916
  %v6926 = vmul.f32 %v6917, %v6917
  %v6927 = vmul.f32 %v6918, %v6918
  %v6928 = vmul.f32 %v6919, %v6919
  %v6929 = vsel %vm2907, %v6920, 0.0
  %v6930 = vsel %vm2907, %v6921, 0.0
  %v6931 = vadd.f32 %v6929, %v6930
  %v6932 = vsel %vm2907, %v6922, 0.0
  %v6933 = vadd.f32 %v6931, %v6932
  %v6934 = vsel %vm2907, %v6923, 0.0
  %v6935 = vadd.f32 %v6933, %v6934
  %v6936 = vsel %vm2907, %v6924, 0.0
  %v6937 = vadd.f32 %v6935, %v6936
  %v6938 = vsel %vm2907, %v6925, 0.0
  %v6939 = vadd.f32 %v6937, %v6938
  %v6940 = vsel %vm2907, %v6926, 0.0
  %v6941 = vadd.f32 %v6939, %v6940
  %v6942 = vsel %vm2907, %v6927, 0.0
  %v6943 = vadd.f32 %v6941, %v6942
  %v6944 = vsel %vm2907, %v6928, 0.0
  %v6945 = vadd.f32 %v6943, %v6944
  %v6946 = vrot.slane %v6945, 4
  %v6947 = vadd.f32 %v6945, %v6946
  %v6948 = vrot.slane %v6947, 2
  %v6949 = vadd.f32 %v6947, %v6948
  %v6950 = vrot.slane %v6949, 1
  %v6951 = vadd.f32 %v6949, %v6950
  %v6952 = vmul.f32 %v6951, %v6909
  %v6953 = vadd.f32 %v6952, 1e-05
  %v6954 = vrsqrt.pop %v6953
  %v6955 = vmul.f32 %v4833, %v6954
  %v6957 = vlaneseq
  %v6958 = vshrl.u32 %v6957, 7
  %v6959 = vsub.s32 0, %v6958
  %v6960 = vrot.slane %v6955, %v6959
  %v6962 = vmul.f32 %v6911, %v6960
  %v6963 = vmul.f32 %v6912, %v6960
  %v6964 = vmul.f32 %v6913, %v6960
  %v6965 = vmul.f32 %v6914, %v6960
  %v6966 = vmul.f32 %v6915, %v6960
  %v6967 = vmul.f32 %v6916, %v6960
  %v6968 = vmul.f32 %v6917, %v6960
  %v6969 = vmul.f32 %v6918, %v6960
  %v6970 = vmul.f32 %v6919, %v6960
  %v6972 = vlaneseq
  %v6973 = vshrl.u32 %v6972, 7
  %v6974 = vsub.s32 0, %v6973
  %v6975 = vrot.slane %v4834, %v6974
  %v6977 = vadd.f32 %v6962, %v6975
  %v6978 = vadd.f32 %v6963, %v6975
  %v6979 = vadd.f32 %v6964, %v6975
  %v6980 = vadd.f32 %v6965, %v6975
  %v6981 = vadd.f32 %v6966, %v6975
  %v6982 = vadd.f32 %v6967, %v6975
  %v6983 = vadd.f32 %v6968, %v6975
  %v6984 = vadd.f32 %v6969, %v6975
  %v6985 = vadd.f32 %v6970, %v6975
  %v6986 = vmax.f32 %v6977, 0.0
  %v6987 = vmax.f32 %v6978, 0.0
  %v6988 = vmax.f32 %v6979, 0.0
  %v6989 = vmax.f32 %v6980, 0.0
  %v6990 = vmax.f32 %v6981, 0.0
  %v6991 = vmax.f32 %v6982, 0.0
  %v6992 = vmax.f32 %v6983, 0.0
  %v6993 = vmax.f32 %v6984, 0.0
  %v6994 = vmax.f32 %v6985, 0.0
  %v7004 = vcombine.high %v6986, %v6986
  %v7006 = vunpack.c.l.s4 1983009808
  %v7007 = vunpack.c.0.s8 %v7006
  %v7008 = vlaneseq
  %v7009 = vshrl.u32 %v7008, 7
  %v7010 = vsub.s32 %v7007, %v7009
  %v7011 = vrot.slane %v6986, %v7010
  %v7013 = vunpack.c.l.s4 1983009808
  %v7014 = vunpack.c.0.s8 %v7013
  %v7015 = vlaneseq
  %v7016 = vshrl.u32 %v7015, 7
  %v7017 = vsub.s32 %v7014, %v7016
  %v7018 = vrot.slane %v7004, %v7017
  %v7019 = vcombine.high %v7011, %v7011
  %v7020 = vcombine.high %v7018, %v7018
  %v7021 = vcombine.high %v6987, %v6987
  %v7023 = vunpack.c.l.s4 1983009808
  %v7024 = vunpack.c.0.s8 %v7023
  %v7025 = vlaneseq
  %v7026 = vshrl.u32 %v7025, 7
  %v7027 = vsub.s32 %v7024, %v7026
  %v7028 = vrot.slane %v6987, %v7027
  %v7030 = vunpack.c.l.s4 1983009808
  %v7031 = vunpack.c.0.s8 %v7030
  %v7032 = vlaneseq
  %v7033 = vshrl.u32 %v7032, 7
  %v7034 = vsub.s32 %v7031, %v7033
  %v7035 = vrot.slane %v7021, %v7034
  %v7036 = vcombine.high %v7028, %v7028
  %v7037 = vcombine.high %v7035, %v7035
  %v7038 = vcombine.high %v6988, %v6988
  %v7040 = vunpack.c.l.s4 1983009808
  %v7041 = vunpack.c.0.s8 %v7040
  %v7042 = vlaneseq
  %v7043 = vshrl.u32 %v7042, 7
  %v7044 = vsub.s32 %v7041, %v7043
  %v7045 = vrot.slane %v6988, %v7044
  %v7047 = vunpack.c.l.s4 1983009808
  %v7048 = vunpack.c.0.s8 %v7047
  %v7049 = vlaneseq
  %v7050 = vshrl.u32 %v7049, 7
  %v7051 = vsub.s32 %v7048, %v7050
  %v7052 = vrot.slane %v7038, %v7051
  %v7053 = vcombine.high %v7045, %v7045
  %v7054 = vcombine.high %v7052, %v7052
  %v7055 = vcombine.high %v6989, %v6989
  %v7057 = vunpack.c.l.s4 1983009808
  %v7058 = vunpack.c.0.s8 %v7057
  %v7059 = vlaneseq
  %v7060 = vshrl.u32 %v7059, 7
  %v7061 = vsub.s32 %v7058, %v7060
  %v7062 = vrot.slane %v6989, %v7061
  %v7064 = vunpack.c.l.s4 1983009808
  %v7065 = vunpack.c.0.s8 %v7064
  %v7066 = vlaneseq
  %v7067 = vshrl.u32 %v7066, 7
  %v7068 = vsub.s32 %v7065, %v7067
  %v7069 = vrot.slane %v7055, %v7068
  %v7070 = vcombine.high %v7062, %v7062
  %v7071 = vcombine.high %v7069, %v7069
  %v7072 = vcombine.high %v6990, %v6990
  %v7074 = vunpack.c.l.s4 1983009808
  %v7075 = vunpack.c.0.s8 %v7074
  %v7076 = vlaneseq
  %v7077 = vshrl.u32 %v7076, 7
  %v7078 = vsub.s32 %v7075, %v7077
  %v7079 = vrot.slane %v6990, %v7078
  %v7081 = vunpack.c.l.s4 1983009808
  %v7082 = vunpack.c.0.s8 %v7081
  %v7083 = vlaneseq
  %v7084 = vshrl.u32 %v7083, 7
  %v7085 = vsub.s32 %v7082, %v7084
  %v7086 = vrot.slane %v7072, %v7085
  %v7087 = vcombine.high %v7079, %v7079
  %v7088 = vcombine.high %v7086, %v7086
  %v7089 = vcombine.high %v6991, %v6991
  %v7091 = vunpack.c.l.s4 1983009808
  %v7092 = vunpack.c.0.s8 %v7091
  %v7093 = vlaneseq
  %v7094 = vshrl.u32 %v7093, 7
  %v7095 = vsub.s32 %v7092, %v7094
  %v7096 = vrot.slane %v6991, %v7095
  %v7098 = vunpack.c.l.s4 1983009808
  %v7099 = vunpack.c.0.s8 %v7098
  %v7100 = vlaneseq
  %v7101 = vshrl.u32 %v7100, 7
  %v7102 = vsub.s32 %v7099, %v7101
  %v7103 = vrot.slane %v7089, %v7102
  %v7104 = vcombine.high %v7096, %v7096
  %v7105 = vcombine.high %v7103, %v7103
  %v7106 = vcombine.high %v6992, %v6992
  %v7108 = vunpack.c.l.s4 1983009808
  %v7109 = vunpack.c.0.s8 %v7108
  %v7110 = vlaneseq
  %v7111 = vshrl.u32 %v7110, 7
  %v7112 = vsub.s32 %v7109, %v7111
  %v7113 = vrot.slane %v6992, %v7112
  %v7115 = vunpack.c.l.s4 1983009808
  %v7116 = vunpack.c.0.s8 %v7115
  %v7117 = vlaneseq
  %v7118 = vshrl.u32 %v7117, 7
  %v7119 = vsub.s32 %v7116, %v7118
  %v7120 = vrot.slane %v7106, %v7119
  %v7121 = vcombine.high %v7113, %v7113
  %v7122 = vcombine.high %v7120, %v7120
  %v7123 = vcombine.high %v6993, %v6993
  %v7125 = vunpack.c.l.s4 1983009808
  %v7126 = vunpack.c.0.s8 %v7125
  %v7127 = vlaneseq
  %v7128 = vshrl.u32 %v7127, 7
  %v7129 = vsub.s32 %v7126, %v7128
  %v7130 = vrot.slane %v6993, %v7129
  %v7132 = vunpack.c.l.s4 1983009808
  %v7133 = vunpack.c.0.s8 %v7132
  %v7134 = vlaneseq
  %v7135 = vshrl.u32 %v7134, 7
  %v7136 = vsub.s32 %v7133, %v7135
  %v7137 = vrot.slane %v7123, %v7136
  %v7138 = vcombine.high %v7130, %v7130
  %v7139 = vcombine.high %v7137, %v7137
  %v7140 = vcombine.high %v6994, %v6994
  %v7142 = vunpack.c.l.s4 1983009808
  %v7143 = vunpack.c.0.s8 %v7142
  %v7144 = vlaneseq
  %v7145 = vshrl.u32 %v7144, 7
  %v7146 = vsub.s32 %v7143, %v7145
  %v7147 = vrot.slane %v6994, %v7146
  %v7149 = vunpack.c.l.s4 1983009808
  %v7150 = vunpack.c.0.s8 %v7149
  %v7151 = vlaneseq
  %v7152 = vshrl.u32 %v7151, 7
  %v7153 = vsub.s32 %v7150, %v7152
  %v7154 = vrot.slane %v7140, %v7153
  %v7155 = vcombine.high %v7147, %v7147
  %v7156 = vcombine.high %v7154, %v7154
  %v7193 = vmax.f32 %v7011, %v7020
  %v7194 = vmax.f32 %v7019, %v7028
  %v7195 = vmax.f32 %v7018, %v7036
  %v7196 = vmax.f32 %v7035, %v7053
  %v7197 = vmax.f32 %v7037, %v7052
  %v7198 = vmax.f32 %v7045, %v7054
  %v7199 = vmax.f32 %v7062, %v7071
  %v7200 = vmax.f32 %v7070, %v7079
  %v7201 = vmax.f32 %v7069, %v7087
  %v7202 = vmax.f32 %v7086, %v7104
  %v7203 = vmax.f32 %v7088, %v7103
  %v7204 = vmax.f32 %v7096, %v7105
  %v7205 = vmax.f32 %v7113, %v7122
  %v7206 = vmax.f32 %v7121, %v7130
  %v7207 = vmax.f32 %v7120, %v7138
  %v7208 = vmax.f32 %v7137, %v7155
  %v7209 = vmax.f32 %v7139, %v7154
  %v7210 = vmax.f32 %v7147, %v7156
  %v7229 = vrot.slane %v7193, 7
  %v7230 = vrot.slane %v7229, 2
  %v7231 = vrot.slane %v7194, 7
  %v7232 = vrot.slane %v7231, 2
  %v7233 = vrot.slane %v7195, 7
  %v7234 = vrot.slane %v7233, 2
  %v7235 = vrot.slane %v7196, 7
  %v7236 = vrot.slane %v7235, 2
  %v7237 = vrot.slane %v7197, 7
  %v7238 = vrot.slane %v7237, 2
  %v7239 = vrot.slane %v7198, 7
  %v7240 = vrot.slane %v7239, 2
  %v7241 = vrot.slane %v7199, 7
  %v7242 = vrot.slane %v7241, 2
  %v7243 = vrot.slane %v7200, 7
  %v7244 = vrot.slane %v7243, 2
  %v7245 = vrot.slane %v7201, 7
  %v7246 = vrot.slane %v7245, 2
  %v7247 = vrot.slane %v7202, 7
  %v7248 = vrot.slane %v7247, 2
  %v7249 = vrot.slane %v7203, 7
  %v7250 = vrot.slane %v7249, 2
  %v7251 = vrot.slane %v7204, 7
  %v7252 = vrot.slane %v7251, 2
  %v7253 = vrot.slane %v7205, 7
  %v7254 = vrot.slane %v7253, 2
  %v7255 = vrot.slane %v7206, 7
  %v7256 = vrot.slane %v7255, 2
  %v7257 = vrot.slane %v7207, 7
  %v7258 = vrot.slane %v7257, 2
  %v7259 = vrot.slane %v7208, 7
  %v7260 = vrot.slane %v7259, 2
  %v7261 = vrot.slane %v7209, 7
  %v7262 = vrot.slane %v7261, 2
  %v7263 = vrot.slane %v7210, 7
  %v7264 = vrot.slane %v7263, 2
  %v7283 = vmax.f32 %v7193, %v7230
  %v7284 = vmax.f32 %v7194, %v7232
  %v7285 = vmax.f32 %v7195, %v7234
  %v7286 = vmax.f32 %v7196, %v7236
  %v7287 = vmax.f32 %v7197, %v7238
  %v7288 = vmax.f32 %v7198, %v7240
  %v7289 = vmax.f32 %v7199, %v7242
  %v7290 = vmax.f32 %v7200, %v7244
  %v7291 = vmax.f32 %v7201, %v7246
  %v7292 = vmax.f32 %v7202, %v7248
  %v7293 = vmax.f32 %v7203, %v7250
  %v7294 = vmax.f32 %v7204, %v7252
  %v7295 = vmax.f32 %v7205, %v7254
  %v7296 = vmax.f32 %v7206, %v7256
  %v7297 = vmax.f32 %v7207, %v7258
  %v7298 = vmax.f32 %v7208, %v7260
  %v7299 = vmax.f32 %v7209, %v7262
  %v7300 = vmax.f32 %v7210, %v7264
  %v7303 = vlaneseq
  %v7304 = vshrl.u32 %v7303, 7
  %v7305 = vsub.s32 0, %v7304
  %v7306 = vrot.slane %v7283, %v7305
  %v7307 = vlaneseq
  %v7308 = vshrl.u32 %v7307, 7
  %v7309 = vsub.s32 0, %v7308
  %v7310 = vrot.slane %v7292, %v7309
  %v7311 = vsel %vm5108, %v7310, %v7306
  %v7315 = vlaneseq
  %v7316 = vshrl.u32 %v7315, 7
  %v7317 = vsub.s32 0, %v7316
  %v7318 = vrot.slane %v7284, %v7317
  %v7319 = vlaneseq
  %v7320 = vshrl.u32 %v7319, 7
  %v7321 = vsub.s32 0, %v7320
  %v7322 = vrot.slane %v7293, %v7321
  %v7323 = vsel %vm5108, %v7322, %v7318
  %7324 = vrot.lane.b32.xlu0 %v7323, 64
  %v7325 = vpop.permute.xlu0 %7324
  %v7329 = vlaneseq
  %v7330 = vshrl.u32 %v7329, 7
  %v7331 = vsub.s32 0, %v7330
  %v7332 = vrot.slane %v7285, %v7331
  %v7333 = vlaneseq
  %v7334 = vshrl.u32 %v7333, 7
  %v7335 = vsub.s32 0, %v7334
  %v7336 = vrot.slane %v7294, %v7335
  %v7337 = vsel %vm5108, %v7336, %v7332
  %v7341 = vlaneseq
  %v7342 = vshrl.u32 %v7341, 7
  %v7343 = vsub.s32 0, %v7342
  %v7344 = vrot.slane %v7286, %v7343
  %v7345 = vlaneseq
  %v7346 = vshrl.u32 %v7345, 7
  %v7347 = vsub.s32 0, %v7346
  %v7348 = vrot.slane %v7295, %v7347
  %v7349 = vsel %vm5108, %v7348, %v7344
  %7350 = vrot.lane.b32.xlu0 %v7349, 64
  %v7351 = vpop.permute.xlu0 %7350
  %v7355 = vlaneseq
  %v7356 = vshrl.u32 %v7355, 7
  %v7357 = vsub.s32 0, %v7356
  %v7358 = vrot.slane %v7287, %v7357
  %v7359 = vlaneseq
  %v7360 = vshrl.u32 %v7359, 7
  %v7361 = vsub.s32 0, %v7360
  %v7362 = vrot.slane %v7296, %v7361
  %v7363 = vsel %vm5108, %v7362, %v7358
  %v7367 = vlaneseq
  %v7368 = vshrl.u32 %v7367, 7
  %v7369 = vsub.s32 0, %v7368
  %v7370 = vrot.slane %v7288, %v7369
  %v7371 = vlaneseq
  %v7372 = vshrl.u32 %v7371, 7
  %v7373 = vsub.s32 0, %v7372
  %v7374 = vrot.slane %v7297, %v7373
  %v7375 = vsel %vm5108, %v7374, %v7370
  %7376 = vrot.lane.b32.xlu0 %v7375, 64
  %v7377 = vpop.permute.xlu0 %7376
  %v7381 = vlaneseq
  %v7382 = vshrl.u32 %v7381, 7
  %v7383 = vsub.s32 0, %v7382
  %v7384 = vrot.slane %v7289, %v7383
  %v7385 = vlaneseq
  %v7386 = vshrl.u32 %v7385, 7
  %v7387 = vsub.s32 0, %v7386
  %v7388 = vrot.slane %v7298, %v7387
  %v7389 = vsel %vm5108, %v7388, %v7384
  %v7393 = vlaneseq
  %v7394 = vshrl.u32 %v7393, 7
  %v7395 = vsub.s32 0, %v7394
  %v7396 = vrot.slane %v7290, %v7395
  %v7397 = vlaneseq
  %v7398 = vshrl.u32 %v7397, 7
  %v7399 = vsub.s32 0, %v7398
  %v7400 = vrot.slane %v7299, %v7399
  %v7401 = vsel %vm5108, %v7400, %v7396
  %7402 = vrot.lane.b32.xlu0 %v7401, 64
  %v7403 = vpop.permute.xlu0 %7402
  %v7407 = vlaneseq
  %v7408 = vshrl.u32 %v7407, 7
  %v7409 = vsub.s32 0, %v7408
  %v7410 = vrot.slane %v7291, %v7409
  %v7411 = vlaneseq
  %v7412 = vshrl.u32 %v7411, 7
  %v7413 = vsub.s32 0, %v7412
  %v7414 = vrot.slane %v7300, %v7413
  %v7415 = vsel %vm5108, %v7414, %v7410
  %v7416 = vsel %vm2907, %v7311, %v7325
  %v7417 = vsel %vm2907, %v7337, %v7351
  %v7418 = vsel %vm2907, %v7363, %v7377
  %v7419 = vsel %vm2907, %v7389, %v7403
  %v7420 = vld [vmem:[%s9] sm:$0xff]
  %v7421 = vld [vmem:[%s9 + $0x8] sm:$0xff]
  %v7422 = vld [vmem:[%s9 + $0x10] sm:$0xff]
  %v7423 = vld [vmem:[%s9 + $0x18] sm:$0xff]
  %v7424 = vld [vmem:[%s9 + $0x20] sm:$0xff]
  %v7425 = vld [vmem:[%s9 + $0x28] sm:$0xff]
  %v7426 = vld [vmem:[%s9 + $0x30] sm:$0xff]
  %v7427 = vld [vmem:[%s9 + $0x38] sm:$0xff]
  %v7428 = vld [vmem:[%s9 + $0x40] sm:$0xff]
  %v7429 = vld [vmem:[%s9 + $0x48] sm:$0xff]
  %v7430 = vld [vmem:[%s9 + $0x50] sm:$0xff]
  %v7431 = vld [vmem:[%s9 + $0x58] sm:$0xff]
  %v7432 = vld [vmem:[%s9 + $0x60] sm:$0xff]
  %v7433 = vld [vmem:[%s9 + $0x68] sm:$0xff]
  %v7434 = vld [vmem:[%s9 + $0x70] sm:$0xff]
  %v7435 = vld [vmem:[%s9 + $0x78] sm:$0xff]
  %v7436 = vld [vmem:[%s9 + $0x80] sm:$0xff]
  %v7437 = vld [vmem:[%s9 + $0x88] sm:$0xff]
  %v7438 = vld [vmem:[%s9 + $0x90] sm:$0xff]
  %v7439 = vld [vmem:[%s9 + $0x98] sm:$0xff]
  %v7440 = vld [vmem:[%s9 + $0xa0] sm:$0xff]
  %v7441 = vld [vmem:[%s9 + $0xa8] sm:$0xff]
  %v7442 = vld [vmem:[%s9 + $0xb0] sm:$0xff]
  %v7443 = vld [vmem:[%s9 + $0xb8] sm:$0xff]
  %v7444 = vld [vmem:[%s9 + $0xc0] sm:$0xff]
  %v7445 = vld [vmem:[%s9 + $0xc8] sm:$0xff]
  %v7446 = vld [vmem:[%s9 + $0xd0] sm:$0xff]
  %v7447 = vld [vmem:[%s9 + $0xd8] sm:$0xff]
  %v7448 = vld [vmem:[%s9 + $0xe0] sm:$0xff]
  %v7449 = vld [vmem:[%s9 + $0xe8] sm:$0xff]
  %v7450 = vld [vmem:[%s9 + $0xf0] sm:$0xff]
  %v7451 = vld [vmem:[%s9 + $0xf8] sm:$0xff]
  %v7452 = vld [vmem:[%s9 + $0x100] sm:$0xff]
  %v7453 = vld [vmem:[%s9 + $0x108] sm:$0xff]
  %v7454 = vld [vmem:[%s9 + $0x110] sm:$0xff]
  %v7455 = vld [vmem:[%s9 + $0x118] sm:$0xff]
  %v7456 = vld [vmem:[%s9 + $0x120] sm:$0xff]
  %v7457 = vld [vmem:[%s9 + $0x128] sm:$0xff]
  %v7458 = vld [vmem:[%s9 + $0x130] sm:$0xff]
  %v7459 = vld [vmem:[%s9 + $0x138] sm:$0xff]
  %v7460 = vld [vmem:[%s9 + $0x140] sm:$0xff]
  %v7461 = vld [vmem:[%s9 + $0x148] sm:$0xff]
  %v7462 = vld [vmem:[%s9 + $0x150] sm:$0xff]
  %v7463 = vld [vmem:[%s9 + $0x158] sm:$0xff]
  %v7464 = vld [vmem:[%s9 + $0x160] sm:$0xff]
  %v7465 = vld [vmem:[%s9 + $0x168] sm:$0xff]
  %v7466 = vld [vmem:[%s9 + $0x170] sm:$0xff]
  %v7467 = vld [vmem:[%s9 + $0x178] sm:$0xff]
  %v7468 = vld [vmem:[%s9 + $0x180] sm:$0xff]
  %v7469 = vld [vmem:[%s9 + $0x188] sm:$0xff]
  %v7470 = vld [vmem:[%s9 + $0x190] sm:$0xff]
  %v7471 = vld [vmem:[%s9 + $0x198] sm:$0xff]
  %v7472 = vld [vmem:[%s9 + $0x1a0] sm:$0xff]
  %v7473 = vld [vmem:[%s9 + $0x1a8] sm:$0xff]
  %v7474 = vld [vmem:[%s9 + $0x1b0] sm:$0xff]
  %v7475 = vld [vmem:[%s9 + $0x1b8] sm:$0xff]
  %v7476 = vld [vmem:[%s9 + $0x1c0] sm:$0xff]
  %v7477 = vld [vmem:[%s9 + $0x1c8] sm:$0xff]
  %v7478 = vld [vmem:[%s9 + $0x1d0] sm:$0xff]
  %v7479 = vld [vmem:[%s9 + $0x1d8] sm:$0xff]
  %v7480 = vld [vmem:[%s9 + $0x1e0] sm:$0xff]
  %v7481 = vld [vmem:[%s9 + $0x1e8] sm:$0xff]
  %v7482 = vld [vmem:[%s9 + $0x1f0] sm:$0xff]
  %v7483 = vld [vmem:[%s9 + $0x1f8] sm:$0xff]
  %v7484 = vld [vmem:[%s9 + $0x200] sm:$0xff]
  %v7485 = vld [vmem:[%s9 + $0x208] sm:$0xff]
  %v7486 = vld [vmem:[%s9 + $0x210] sm:$0xff]
  %v7487 = vld [vmem:[%s9 + $0x218] sm:$0xff]
  %v7488 = vld [vmem:[%s9 + $0x220] sm:$0xff]
  %v7489 = vld [vmem:[%s9 + $0x228] sm:$0xff]
  %v7490 = vld [vmem:[%s9 + $0x230] sm:$0xff]
  %v7491 = vld [vmem:[%s9 + $0x238] sm:$0xff]
  %v7492 = vld [vmem:[%s10] sm:$0x1]
  %v7494 = vlaneseq
  %v7495 = vshrl.u32 %v7494, 7
  %v7496 = vsub.s32 0, %v7495
  %v7497 = vrot.slane %v7492, %v7496
  %v7499 = vsel %vm2907, %v7415, 0
  %7501 = vmatprep.subr.mxu0 0.0
  %7502 = vmatpush1.msra.mxu0 %v7420
  %7503 = vmatprep.subr.mxu0 0.0
  %7504 = vmatpush1.msra.mxu0 %v7421
  %7505 = vmatprep.subr.mxu0 0.0
  %7506 = vmatpush1.msra.mxu0 %v7422
  %7507 = vmatprep.subr.mxu0 0.0
  %7508 = vmatpush1.msra.mxu0 %v7423
  %7509 = vmatprep.subr.mxu0 0.0
  %7510 = vmatpush1.msra.mxu0 %v7424
  %7511 = vmatprep.subr.mxu0 0.0
  %7512 = vmatpush1.msra.mxu0 %v7425
  %7513 = vmatprep.subr.mxu0 0.0
  %7514 = vmatpush1.msra.mxu0 %v7426
  %7515 = vmatprep.subr.mxu0 0.0
  %7516 = vmatpush1.msra.mxu0 %v7427
  %7517 = vmatprep.subr.mxu0 0.0
  %7518 = vmatpush1.msra.mxu0 %v7428
  %7519 = vmatprep.subr.mxu0 0.0
  %7520 = vmatpush1.msra.mxu0 %v7429
  %7521 = vmatprep.subr.mxu0 0.0
  %7522 = vmatpush1.msra.mxu0 %v7430
  %7523 = vmatprep.subr.mxu0 0.0
  %7524 = vmatpush1.msra.mxu0 %v7431
  %7525 = vmatprep.subr.mxu0 0.0
  %7526 = vmatpush1.msra.mxu0 %v7432
  %7527 = vmatprep.subr.mxu0 0.0
  %7528 = vmatpush1.msra.mxu0 %v7433
  %7529 = vmatprep.subr.mxu0 0.0
  %7530 = vmatpush1.msra.mxu0 %v7434
  %7531 = vmatprep.subr.mxu0 0.0
  %7532 = vmatpush1.msra.mxu0 %v7435
  %7533 = vmatprep.subr.mxu0 0.0
  %7534 = vmatpush1.msra.mxu0 %v7436
  %7535 = vmatprep.subr.mxu0 0.0
  %7536 = vmatpush1.msra.mxu0 %v7437
  %7537 = vmatprep.subr.mxu0 0.0
  %7538 = vmatpush1.msra.mxu0 %v7438
  %7539 = vmatprep.subr.mxu0 0.0
  %7540 = vmatpush1.msra.mxu0 %v7439
  %7541 = vmatprep.subr.mxu0 0.0
  %7542 = vmatpush1.msra.mxu0 %v7440
  %7543 = vmatprep.subr.mxu0 0.0
  %7544 = vmatpush1.msra.mxu0 %v7441
  %7545 = vmatprep.subr.mxu0 0.0
  %7546 = vmatpush1.msra.mxu0 %v7442
  %7547 = vmatprep.subr.mxu0 0.0
  %7548 = vmatpush1.msra.mxu0 %v7443
  %7549 = vmatprep.subr.mxu0 0.0
  %7550 = vmatpush1.msra.mxu0 %v7444
  %7551 = vmatprep.subr.mxu0 0.0
  %7552 = vmatpush1.msra.mxu0 %v7445
  %7553 = vmatprep.subr.mxu0 0.0
  %7554 = vmatpush1.msra.mxu0 %v7446
  %7555 = vmatprep.subr.mxu0 0.0
  %7556 = vmatpush1.msra.mxu0 %v7447
  %7557 = vmatprep.subr.mxu0 0.0
  %7558 = vmatpush1.msra.mxu0 %v7448
  %7559 = vmatprep.subr.mxu0 0.0
  %7560 = vmatpush1.msra.mxu0 %v7449
  %7561 = vmatprep.subr.mxu0 0.0
  %7562 = vmatpush1.msra.mxu0 %v7450
  %7563 = vmatprep.subr.mxu0 0.0
  %7564 = vmatpush1.msra.mxu0 %v7451
  %7565 = vmatprep.mubr.f32.mxu0 %v7417
  %7566 = vmatmul.mubr.f32.gmra.mrb[0].mxu0 %v7416
  %v7567 = vpop.f32.mrb[0].mxu0
  %v7568 = vadd.f32 %v7497, %v7567
  %v7569 = vpop.f32.mrb[0].mxu0
  %7570 = vdwg.mxu0
  %7571 = vmatprep.subr.mxu0 0.0
  %7572 = vmatpush1.msra.mxu0 %v7452
  %7573 = vmatprep.subr.mxu0 0.0
  %7574 = vmatpush1.msra.mxu0 %v7453
  %7575 = vmatprep.subr.mxu0 0.0
  %7576 = vmatpush1.msra.mxu0 %v7454
  %7577 = vmatprep.subr.mxu0 0.0
  %7578 = vmatpush1.msra.mxu0 %v7455
  %7579 = vmatprep.subr.mxu0 0.0
  %7580 = vmatpush1.msra.mxu0 %v7456
  %7581 = vmatprep.subr.mxu0 0.0
  %7582 = vmatpush1.msra.mxu0 %v7457
  %7583 = vmatprep.subr.mxu0 0.0
  %7584 = vmatpush1.msra.mxu0 %v7458
  %7585 = vmatprep.subr.mxu0 0.0
  %7586 = vmatpush1.msra.mxu0 %v7459
  %7587 = vmatprep.subr.mxu0 0.0
  %7588 = vmatpush1.msra.mxu0 %v7460
  %7589 = vmatprep.subr.mxu0 0.0
  %7590 = vmatpush1.msra.mxu0 %v7461
  %7591 = vmatprep.subr.mxu0 0.0
  %7592 = vmatpush1.msra.mxu0 %v7462
  %7593 = vmatprep.subr.mxu0 0.0
  %7594 = vmatpush1.msra.mxu0 %v7463
  %7595 = vmatprep.subr.mxu0 0.0
  %7596 = vmatpush1.msra.mxu0 %v7464
  %7597 = vmatprep.subr.mxu0 0.0
  %7598 = vmatpush1.msra.mxu0 %v7465
  %7599 = vmatprep.subr.mxu0 0.0
  %7600 = vmatpush1.msra.mxu0 %v7466
  %7601 = vmatprep.subr.mxu0 0.0
  %7602 = vmatpush1.msra.mxu0 %v7467
  %7603 = vmatprep.subr.mxu0 0.0
  %7604 = vmatpush1.msra.mxu0 %v7468
  %7605 = vmatprep.subr.mxu0 0.0
  %7606 = vmatpush1.msra.mxu0 %v7469
  %7607 = vmatprep.subr.mxu0 0.0
  %7608 = vmatpush1.msra.mxu0 %v7470
  %7609 = vmatprep.subr.mxu0 0.0
  %7610 = vmatpush1.msra.mxu0 %v7471
  %7611 = vmatprep.subr.mxu0 0.0
  %7612 = vmatpush1.msra.mxu0 %v7472
  %7613 = vmatprep.subr.mxu0 0.0
  %7614 = vmatpush1.msra.mxu0 %v7473
  %7615 = vmatprep.subr.mxu0 0.0
  %7616 = vmatpush1.msra.mxu0 %v7474
  %7617 = vmatprep.subr.mxu0 0.0
  %7618 = vmatpush1.msra.mxu0 %v7475
  %7619 = vmatprep.subr.mxu0 0.0
  %7620 = vmatpush1.msra.mxu0 %v7476
  %7621 = vmatprep.subr.mxu0 0.0
  %7622 = vmatpush1.msra.mxu0 %v7477
  %7623 = vmatprep.subr.mxu0 0.0
  %7624 = vmatpush1.msra.mxu0 %v7478
  %7625 = vmatprep.subr.mxu0 0.0
  %7626 = vmatpush1.msra.mxu0 %v7479
  %7627 = vmatprep.subr.mxu0 0.0
  %7628 = vmatpush1.msra.mxu0 %v7480
  %7629 = vmatprep.subr.mxu0 0.0
  %7630 = vmatpush1.msra.mxu0 %v7481
  %7631 = vmatprep.subr.mxu0 0.0
  %7632 = vmatpush1.msra.mxu0 %v7482
  %7633 = vmatprep.subr.mxu0 0.0
  %7634 = vmatpush1.msra.mxu0 %v7483
  %7635 = vmatprep.mubr.f32.mxu0 %v7419
  %7636 = vmatmul.mubr.f32.gmra.mrb[0].mxu0 %v7418
  %v7637 = vpop.f32.mrb[0].mxu0
  %v7638 = vadd.f32 %v7568, %v7637
  %v7639 = vpop.f32.mrb[0].mxu0
  %7640 = vdwg.mxu0
  %7641 = vmatprep.subr.mxu0 0.0
  %7642 = vmatpush1.msra.mxu0 %v7484
  %7643 = vmatprep.subr.mxu0 0.0
  %7644 = vmatpush1.msra.mxu0 %v7485
  %7645 = vmatprep.subr.mxu0 0.0
  %7646 = vmatpush1.msra.mxu0 %v7486
  %7647 = vmatprep.subr.mxu0 0.0
  %7648 = vmatpush1.msra.mxu0 %v7487
  %7649 = vmatprep.subr.mxu0 0.0
  %7650 = vmatpush1.msra.mxu0 %v7488
  %7651 = vmatprep.subr.mxu0 0.0
  %7652 = vmatpush1.msra.mxu0 %v7489
  %7653 = vmatprep.subr.mxu0 0.0
  %7654 = vmatpush1.msra.mxu0 %v7490
  %7655 = vmatprep.subr.mxu0 0.0
  %7656 = vmatpush1.msra.mxu0 %v7491
  %7657 = vmatprep.subr.mxu0 0.0
  %7658 = vmatpush1.msra.mxu0 0.0
  %7659 = vmatprep.subr.mxu0 0.0
  %7660 = vmatpush1.msra.mxu0 0.0
  %7661 = vmatprep.subr.mxu0 0.0
  %7662 = vmatpush1.msra.mxu0 0.0
  %7663 = vmatprep.subr.mxu0 0.0
  %7664 = vmatpush1.msra.mxu0 0.0
  %7665 = vmatprep.subr.mxu0 0.0
  %7666 = vmatpush1.msra.mxu0 0.0
  %7667 = vmatprep.subr.mxu0 0.0
  %7668 = vmatpush1.msra.mxu0 0.0
  %7669 = vmatprep.subr.mxu0 0.0
  %7670 = vmatpush1.msra.mxu0 0.0
  %7671 = vmatprep.subr.mxu0 0.0
  %7672 = vmatpush1.msra.mxu0 0.0
  %7673 = vmatprep.subr.mxu0 0.0
  %7674 = vmatpush1.msra.mxu0 0.0
  %7675 = vmatprep.subr.mxu0 0.0
  %7676 = vmatpush1.msra.mxu0 0.0
  %7677 = vmatprep.subr.mxu0 0.0
  %7678 = vmatpush1.msra.mxu0 0.0
  %7679 = vmatprep.subr.mxu0 0.0
  %7680 = vmatpush1.msra.mxu0 0.0
  %7681 = vmatprep.subr.mxu0 0.0
  %7682 = vmatpush1.msra.mxu0 0.0
  %7683 = vmatprep.subr.mxu0 0.0
  %7684 = vmatpush1.msra.mxu0 0.0
  %7685 = vmatprep.subr.mxu0 0.0
  %7686 = vmatpush1.msra.mxu0 0.0
  %7687 = vmatprep.subr.mxu0 0.0
  %7688 = vmatpush1.msra.mxu0 0.0
  %7689 = vmatprep.subr.mxu0 0.0
  %7690 = vmatpush1.msra.mxu0 0.0
  %7691 = vmatprep.subr.mxu0 0.0
  %7692 = vmatpush1.msra.mxu0 0.0
  %7693 = vmatprep.subr.mxu0 0.0
  %7694 = vmatpush1.msra.mxu0 0.0
  %7695 = vmatprep.subr.mxu0 0.0
  %7696 = vmatpush1.msra.mxu0 0.0
  %7697 = vmatprep.subr.mxu0 0.0
  %7698 = vmatpush1.msra.mxu0 0.0
  %7699 = vmatprep.subr.mxu0 0.0
  %7700 = vmatpush1.msra.mxu0 0.0
  %7701 = vmatprep.subr.mxu0 0.0
  %7702 = vmatpush1.msra.mxu0 0.0
  %7703 = vmatprep.subr.mxu0 0.0
  %7704 = vmatpush1.msra.mxu0 0.0
  %7705 = vmatprep.mubr.f32.mxu0 0.0
  %7706 = vmatmul.mubr.f32.gmra.mrb[0].mxu0 %v7499
  %v7707 = vpop.f32.mrb[0].mxu0
  %v7708 = vadd.f32 %v7638, %v7707
  %v7709 = vpop.f32.mrb[0].mxu0
  %7710 = vdwg.mxu0
  %v7711 = vmax.f32 %v7708, 0.0
  %v7712 = vld [vmem:[%s11] sm:$0x1]
  %v7714 = vlaneseq
  %v7715 = vshrl.u32 %v7714, 7
  %v7716 = vsub.s32 0, %v7715
  %v7717 = vrot.slane %v7712, %v7716
  %v7719 = vmul.f32 %v7711, %v7717
  %vm7720 = vcmask 58368
  %v7721 = vsel %vm7720, %v7719, 0.0
  %7722 = vadd.xlane.f32.xlu0 %v7721
  %v7723 = vpop.xlane.xlu0 %7722
  %v7724 = vld [vmem:[#allocation2] sm:$0x1]
  %v7726 = vlaneseq
  %v7727 = vshrl.u32 %v7726, 7
  %v7728 = vsub.s32 0, %v7727
  %v7729 = vrot.slane %v7724, %v7728
  %v7731 = vadd.f32 %v7723, %v7729
  %v7732 = vsub.f32 0.0, %v7731
  %v7733 = vmul.f32 %v7732, 1.442695
  %v7734 = vpow.pop %v7733
  %v7735 = vadd.f32 %v7734, 1.0
  %v7736 = vrcp.pop %v7735
  %v7737 = vmul.f32 1.0, %v7736
  %vm7738 = vcmask 1024
  %7739 = vst.msk [vmem:[%s13] sm:$0x3] %vm7738, %v7737
  // Predicated region
  $region54: #{tpu_custom_call.1} parent=0 // pred_check
    _
  $region55: #{tpu_custom_call.1} parent=0 // pred_check_branch
    %7741 = sbr.rel (0) target = $region57
  $region56: #{tpu_custom_call.1} parent=0 // pred_region
    _
  $region57: #{tpu_custom_call.1} parent=0 // pred_fallthru
    _
  // Predicated region
  $region58: #{tpu_custom_call.1} parent=0 // pred_check
    _
  $region59: #{tpu_custom_call.1} parent=0 // pred_check_branch
    %7743 = sbr.rel (0) target = $region61
  $region60: #{tpu_custom_call.1} parent=0 // pred_region
    _
  $region61: #{tpu_custom_call.1} parent=0 // pred_fallthru
    _

</llo_original>
